<compile_context>
chip_gen: v7x
topology: tpu7x:2x2x1
jax: 0.10.0
libtpu: 0.0.40
codegen_flags: <defaults>
</compile_context>

<pallas_src>
import functools
import math

import jax
import jax.numpy as jnp
from jax.experimental import pallas as pl
from jax.experimental.pallas import tpu as pltpu

NUM_HEADS = 8
LN_EPS = 1e-5
NEG_INF = -1e9

# Explicit scoped-VMEM request (perf feedback).  48 MiB fits every generation
# (v5e/v6e: 128 MiB physical, v7x: 64 MiB).
VMEM_LIMIT_BYTES = 48 * 1024 * 1024


# --------------------------------------------------------------------------- #
# small helpers
# --------------------------------------------------------------------------- #
def _pick_block_b(batch, max_block=8):
    """Largest divisor of `batch` <= max_block that still leaves >= 2 grid steps.

    Folds batch elements into one block to amortize per-grid-step overhead while
    keeping at least 2 steps so both v7x TensorCores get work.
    """
    best = 1
    for cand in range(1, min(batch, max_block) + 1):
        if batch % cand == 0 and batch // cand >= 2:
            best = cand
    return best


def _full_spec(shape):
    """Whole-array block with a constant index map (fetched once, stays resident)."""
    zeros = (0,) * len(shape)
    return pl.BlockSpec(shape, lambda b, _z=zeros: _z)


def _layer_norm(h):
    """LayerNorm over the last dim, eps=1e-5, gamma=1 / beta=0 (AddNorm default)."""
    mu = jnp.mean(h, axis=-1, keepdims=True)
    c = h - mu
    var = jnp.mean(c * c, axis=-1, keepdims=True)
    return c * jax.lax.rsqrt(var + LN_EPS)


# --------------------------------------------------------------------------- #
# in-kernel multi-head attention (operates on one batch element)
# --------------------------------------------------------------------------- #
def _mha_block(x_q, x_kv, bias, wq, wk, wv, wo, ctx_scratch, *,
               num_heads, dq, dk, dv, mxu_dtype):
    """x_q [Tq,E], x_kv [Tk,E], bias [Tq,Tk] additive mask.  Returns [Tq,E] f32."""
    xq = x_q.astype(mxu_dtype)
    xkv = x_kv.astype(mxu_dtype)

    # One full-K projection matmul each (K = embSize, N = H*d) -- much better MXU
    # utilization than H tiny K=d matmuls.  1/sqrt(dk) is pre-folded into wq.
    q_all = jnp.dot(xq, wq, preferred_element_type=jnp.float32)   # [Tq, H*dq]
    k_all = jnp.dot(xkv, wk, preferred_element_type=jnp.float32)  # [Tk, H*dk]
    v_all = jnp.dot(xkv, wv, preferred_element_type=jnp.float32)  # [Tk, H*dv]

    # Head-batched score / softmax / context: ONE einsum per step instead of an
    # 8-way unrolled loop of tiny matmuls and repeated mask broadcasts.
    qh = jnp.stack([q_all[:, h * dq:(h + 1) * dq] for h in range(num_heads)], 0)
    kh = jnp.stack([k_all[:, h * dk:(h + 1) * dk] for h in range(num_heads)], 0)
    vh = jnp.stack([v_all[:, h * dv:(h + 1) * dv] for h in range(num_heads)], 0)

    s = jnp.einsum("hqd,hkd->hqk", qh.astype(mxu_dtype), kh.astype(mxu_dtype),
                   preferred_element_type=jnp.float32)            # [H, Tq, Tk]
    s = s + bias[None, :, :]          # compact additive mask, broadcast once
    s = s - jnp.max(s, axis=-1, keepdims=True)
    p = jnp.exp(s)
    # softmax denominator via the EUP approximate reciprocal (free slot).
    p = p * pl.reciprocal(jnp.sum(p, axis=-1, keepdims=True), approx=True)

    ctx = jnp.einsum("hqk,hkd->hqd", p.astype(mxu_dtype), vh.astype(mxu_dtype),
                     preferred_element_type=jnp.float32)          # [H, Tq, dv]

    # Re-assemble [Tq, H*dv] in VMEM scratch so the output projection is a single
    # K = H*dv matmul (no sublane-misaligned row slices of wo).
    for h in range(num_heads):
        ctx_scratch[:, h * dv:(h + 1) * dv] = ctx[h]
    return jnp.dot(ctx_scratch[...].astype(mxu_dtype), wo,
                   preferred_element_type=jnp.float32)            # [Tq, E]


# --------------------------------------------------------------------------- #
# kernels
# --------------------------------------------------------------------------- #
def _encoder_layer_kernel(x_ref, bias_ref, wq_ref, wk_ref, wv_ref, wo_ref,
                          w1_ref, w2_ref, o_ref, ctx_scratch, *,
                          num_heads, dq, dk, dv, block_b, mxu_dtype):
    wq, wk, wv, wo = wq_ref[...], wk_ref[...], wv_ref[...], wo_ref[...]
    w1, w2 = w1_ref[...], w2_ref[...]
    for bb in range(block_b):          # batch elements folded into one grid step
        x = x_ref[bb]                  # [S, E] f32
        attn = _mha_block(x, x, bias_ref[bb], wq, wk, wv, wo, ctx_scratch,
                          num_heads=num_heads, dq=dq, dk=dk, dv=dv,
                          mxu_dtype=mxu_dtype)
        mid = _layer_norm(x + attn)
        hidden = jnp.maximum(
            jnp.dot(mid.astype(mxu_dtype), w1, preferred_element_type=jnp.float32),
            0.0)
        ff = jnp.dot(hidden.astype(mxu_dtype), w2,
                     preferred_element_type=jnp.float32)
        o_ref[bb] = _layer_norm(mid + ff)


def _decoder_layer_kernel(x_ref, enc_ref, sbias_ref, cbias_ref,
                          sa_wq_ref, sa_wk_ref, sa_wv_ref, sa_wo_ref,
                          ca_wq_ref, ca_wk_ref, ca_wv_ref, ca_wo_ref,
                          w1_ref, w2_ref, o_ref, ctx_scratch, *,
                          num_heads, dq, dk, dv, block_b, mxu_dtype):
    sa_w = (sa_wq_ref[...], sa_wk_ref[...], sa_wv_ref[...], sa_wo_ref[...])
    ca_w = (ca_wq_ref[...], ca_wk_ref[...], ca_wv_ref[...], ca_wo_ref[...])
    w1, w2 = w1_ref[...], w2_ref[...]
    for bb in range(block_b):
        x = x_ref[bb]                  # [T, E]
        enc = enc_ref[bb]              # [S, E]
        a1 = _mha_block(x, x, sbias_ref[bb], *sa_w, ctx_scratch,
                        num_heads=num_heads, dq=dq, dk=dk, dv=dv,
                        mxu_dtype=mxu_dtype)
        mid1 = _layer_norm(x + a1)
        a2 = _mha_block(mid1, enc, cbias_ref[bb], *ca_w, ctx_scratch,
                        num_heads=num_heads, dq=dq, dk=dk, dv=dv,
                        mxu_dtype=mxu_dtype)
        mid2 = _layer_norm(mid1 + a2)
        hidden = jnp.maximum(
            jnp.dot(mid2.astype(mxu_dtype), w1, preferred_element_type=jnp.float32),
            0.0)
        ff = jnp.dot(hidden.astype(mxu_dtype), w2,
                     preferred_element_type=jnp.float32)
        o_ref[bb] = _layer_norm(mid2 + ff)


def _linear_kernel(x_ref, w_ref, o_ref, *, mxu_dtype):
    o_ref[...] = jnp.dot(x_ref[...].astype(mxu_dtype), w_ref[...],
                         preferred_element_type=jnp.float32)


# --------------------------------------------------------------------------- #
# pallas_call wrappers
# --------------------------------------------------------------------------- #
def encoder_layer(x, bias, p, *, num_heads, mxu_dtype=jnp.float32):
    B, S, E = x.shape
    dq = p["wq"].shape[1] // num_heads
    dk = p["wk"].shape[1] // num_heads
    dv = p["wv"].shape[1] // num_heads
    block_b = _pick_block_b(B)
    grid = (B // block_b,)
    scale = 1.0 / math.sqrt(dk)
    md = mxu_dtype
    ops = (x, bias,
           (p["wq"] * scale).astype(md), p["wk"].astype(md),
           p["wv"].astype(md), p["wo"].astype(md),
           p["w1"].astype(md), p["w2"].astype(md))
    in_specs = [
        pl.BlockSpec((block_b, S, E), lambda b: (b, 0, 0)),
        pl.BlockSpec((block_b, S, S), lambda b: (b, 0, 0)),
    ] + [_full_spec(w.shape) for w in ops[2:]]
    kernel = functools.partial(_encoder_layer_kernel, num_heads=num_heads,
                               dq=dq, dk=dk, dv=dv, block_b=block_b,
                               mxu_dtype=md)
    return pl.pallas_call(
        kernel,
        out_shape=jax.ShapeDtypeStruct((B, S, E), jnp.float32),
        grid_spec=pltpu.PrefetchScalarGridSpec(
            num_scalar_prefetch=0,
            grid=grid,
            in_specs=in_specs,
            out_specs=pl.BlockSpec((block_b, S, E), lambda b: (b, 0, 0)),
            scratch_shapes=[pltpu.VMEM((S, num_heads * dv), jnp.float32)],
        ),
        compiler_params=pltpu.CompilerParams(
            dimension_semantics=("parallel",),
            vmem_limit_bytes=VMEM_LIMIT_BYTES),
    )(*ops)


def decoder_layer(x, enc_out, self_bias, cross_bias, p, *, num_heads,
                  mxu_dtype=jnp.float32):
    B, T, E = x.shape
    S = enc_out.shape[1]
    dq = p["sa_wq"].shape[1] // num_heads
    dk = p["sa_wk"].shape[1] // num_heads
    dv = p["sa_wv"].shape[1] // num_heads
    block_b = _pick_block_b(B)
    grid = (B // block_b,)
    scale = 1.0 / math.sqrt(dk)
    md = mxu_dtype
    ops = (x, enc_out, self_bias, cross_bias,
           (p["sa_wq"] * scale).astype(md), p["sa_wk"].astype(md),
           p["sa_wv"].astype(md), p["sa_wo"].astype(md),
           (p["ca_wq"] * scale).astype(md), p["ca_wk"].astype(md),
           p["ca_wv"].astype(md), p["ca_wo"].astype(md),
           p["w1"].astype(md), p["w2"].astype(md))
    in_specs = [
        pl.BlockSpec((block_b, T, E), lambda b: (b, 0, 0)),
        pl.BlockSpec((block_b, S, E), lambda b: (b, 0, 0)),
        pl.BlockSpec((block_b, T, T), lambda b: (b, 0, 0)),
        pl.BlockSpec((block_b, T, S), lambda b: (b, 0, 0)),
    ] + [_full_spec(w.shape) for w in ops[4:]]
    kernel = functools.partial(_decoder_layer_kernel, num_heads=num_heads,
                               dq=dq, dk=dk, dv=dv, block_b=block_b,
                               mxu_dtype=md)
    return pl.pallas_call(
        kernel,
        out_shape=jax.ShapeDtypeStruct((B, T, E), jnp.float32),
        grid_spec=pltpu.PrefetchScalarGridSpec(
            num_scalar_prefetch=0,
            grid=grid,
            in_specs=in_specs,
            out_specs=pl.BlockSpec((block_b, T, E), lambda b: (b, 0, 0)),
            scratch_shapes=[pltpu.VMEM((T, num_heads * dv), jnp.float32)],
        ),
        compiler_params=pltpu.CompilerParams(
            dimension_semantics=("parallel",),
            vmem_limit_bytes=VMEM_LIMIT_BYTES),
    )(*ops)


def final_linear(x, w, *, mxu_dtype=jnp.float32, row_tile=256):
    """Vocab projection on flattened (B*T, E) rows (row-tiled, lane-dense output)."""
    B, T, E = x.shape
    V = w.shape[1]
    rows = B * T
    rt = min(row_tile, rows)
    if rows % rt != 0:
        rt = rows
    grid = (rows // rt,)
    out = pl.pallas_call(
        functools.partial(_linear_kernel, mxu_dtype=mxu_dtype),
        out_shape=jax.ShapeDtypeStruct((rows, V), jnp.float32),
        grid_spec=pltpu.PrefetchScalarGridSpec(
            num_scalar_prefetch=0,
            grid=grid,
            in_specs=[pl.BlockSpec((rt, E), lambda i: (i, 0)),
                      _full_spec(w.shape)],
            out_specs=pl.BlockSpec((rt, V), lambda i: (i, 0)),
        ),
        compiler_params=pltpu.CompilerParams(
            dimension_semantics=("parallel",),
            vmem_limit_bytes=VMEM_LIMIT_BYTES),
    )(x.reshape(rows, E), w.astype(mxu_dtype))
    return out.reshape(B, T, V)


# --------------------------------------------------------------------------- #
# masks, positional encoding, parameters
# --------------------------------------------------------------------------- #
def _padding_bias(q_tokens, k_tokens):
    """Compact additive padding mask [B, len_q, len_k] (key token == 0 -> -1e9)."""
    B, Tq = q_tokens.shape
    Tk = k_tokens.shape[1]
    masked = jnp.broadcast_to((k_tokens == 0)[:, None, :], (B, Tq, Tk))
    return jnp.where(masked, NEG_INF, 0.0).astype(jnp.float32)


def _decoder_self_bias(de_tokens):
    """Padding + causal (subsequent) additive mask [B, T, T]."""
    B, T = de_tokens.shape
    pad = (de_tokens == 0)[:, None, :]
    causal = jnp.triu(jnp.ones((T, T), dtype=bool), k=1)[None]
    masked = jnp.broadcast_to(pad | causal, (B, T, T))
    return jnp.where(masked, NEG_INF, 0.0).astype(jnp.float32)


def _sinusoidal_pe(max_len, emb):
    pos = jnp.arange(max_len, dtype=jnp.float32)[:, None]
    idx = jnp.arange(emb, dtype=jnp.float32)[None, :]
    angle = pos / jnp.power(10000.0, 2.0 * jnp.floor(idx / 2.0) / emb)
    even = (jnp.arange(emb)[None, :] % 2) == 0
    return jnp.where(even, jnp.sin(angle), jnp.cos(angle)).astype(jnp.float32)


def init_params(key, en_vocab, de_vocab, emb, dq, dk, dv, hidden, *,
                num_heads, num_layers, max_len):
    keys = iter(jax.random.split(key, 4 + num_layers * 16))

    def lin(fan_in, fan_out, scale=0.05):
        return (scale * jax.random.normal(next(keys), (fan_in, fan_out))
                ).astype(jnp.float32)

    params = {
        "en_emb": (0.1 * jax.random.normal(next(keys), (en_vocab, emb))
                   ).astype(jnp.float32),
        "de_emb": (0.1 * jax.random.normal(next(keys), (de_vocab, emb))
                   ).astype(jnp.float32),
        "pos_table": _sinusoidal_pe(max_len, emb),
        "enc_layers": [],
        "dec_layers": [],
    }
    for _ in range(num_layers):
        params["enc_layers"].append({
            "wq": lin(emb, num_heads * dq), "wk": lin(emb, num_heads * dk),
            "wv": lin(emb, num_heads * dv), "wo": lin(num_heads * dv, emb),
            "w1": lin(emb, hidden), "w2": lin(hidden, emb),
        })
    for _ in range(num_layers):
        params["dec_layers"].append({
            "sa_wq": lin(emb, num_heads * dq), "sa_wk": lin(emb, num_heads * dk),
            "sa_wv": lin(emb, num_heads * dv), "sa_wo": lin(num_heads * dv, emb),
            "ca_wq": lin(emb, num_heads * dq), "ca_wk": lin(emb, num_heads * dk),
            "ca_wv": lin(emb, num_heads * dv), "ca_wo": lin(num_heads * dv, emb),
            "w1": lin(emb, hidden), "w2": lin(hidden, emb),
        })
    params["out_w"] = lin(emb, de_vocab)
    return params


# --------------------------------------------------------------------------- #
# full Transformer forward (kernel path and pure-JAX reference)
# --------------------------------------------------------------------------- #
@functools.partial(jax.jit, static_argnames=("num_heads", "mxu_dtype"))
def transformer_forward(params, en_tokens, de_tokens, *, num_heads, mxu_dtype):
    S = en_tokens.shape[1]
    T = de_tokens.shape[1]
    pe = params["pos_table"]
    # Embedding gather + positional encoding stay in plain JAX (no cheap Pallas
    # equivalent at this scale); dropout is an eval-mode no-op.
    # TODO(synk): `Position` source was not provided; standard sinusoidal PE used.
    en_x = params["en_emb"][en_tokens] + pe[:S][None]
    de_x = params["de_emb"][de_tokens] + pe[:T][None]

    enc_bias = _padding_bias(en_tokens, en_tokens)      # [B, S, S]
    self_bias = _decoder_self_bias(de_tokens)           # [B, T, T]
    cross_bias = _padding_bias(de_tokens, en_tokens)    # [B, T, S]

    # NOTE: the reference Encoder/Decoder do NOT chain their layers (every layer
    # consumes the embedded inputs; only the last layer's output is returned).
    # We replicate that behaviour exactly.
    en_out = en_x
    for lp in params["enc_layers"]:
        en_out = encoder_layer(en_x, enc_bias, lp,
                               num_heads=num_heads, mxu_dtype=mxu_dtype)
    de_out = de_x
    for lp in params["dec_layers"]:
        de_out = decoder_layer(de_x, en_out, self_bias, cross_bias, lp,
                               num_heads=num_heads, mxu_dtype=mxu_dtype)
    return final_linear(de_out, params["out_w"], mxu_dtype=mxu_dtype)


def _mha_ref(x_q, x_kv, bias, wq, wk, wv, wo, num_heads):
    B, Tq, _ = x_q.shape
    dq = wq.shape[1] // num_heads
    dk = wk.shape[1] // num_heads
    dv = wv.shape[1] // num_heads

    def split(y, d):
        return y.reshape(B, -1, num_heads, d).transpose(0, 2, 1, 3)

    q = split(x_q @ wq, dq)
    k = split(x_kv @ wk, dk)
    v = split(x_kv @ wv, dv)
    s = jnp.einsum("bhqd,bhkd->bhqk", q, k) / math.sqrt(dk) + bias[:, None, :, :]
    p = jax.nn.softmax(s, axis=-1)
    ctx = jnp.einsum("bhqk,bhkd->bhqd", p, v)
    ctx = ctx.transpose(0, 2, 1, 3).reshape(B, Tq, num_heads * dv)
    return ctx @ wo


def _encoder_layer_ref(x, bias, p, num_heads):
    attn = _mha_ref(x, x, bias, p["wq"], p["wk"], p["wv"], p["wo"], num_heads)
    mid = _layer_norm(x + attn)
    ff = jnp.maximum(mid @ p["w1"], 0.0) @ p["w2"]
    return _layer_norm(mid + ff)


def _decoder_layer_ref(x, enc_out, self_bias, cross_bias, p, num_heads):
    a1 = _mha_ref(x, x, self_bias,
                  p["sa_wq"], p["sa_wk"], p["sa_wv"], p["sa_wo"], num_heads)
    mid1 = _layer_norm(x + a1)
    a2 = _mha_ref(mid1, enc_out, cross_bias,
                  p["ca_wq"], p["ca_wk"], p["ca_wv"], p["ca_wo"], num_heads)
    mid2 = _layer_norm(mid1 + a2)
    ff = jnp.maximum(mid2 @ p["w1"], 0.0) @ p["w2"]
    return _layer_norm(mid2 + ff)


def transformer_forward_ref(params, en_tokens, de_tokens, *, num_heads):
    S = en_tokens.shape[1]
    T = de_tokens.shape[1]
    pe = params["pos_table"]
    en_x = params["en_emb"][en_tokens] + pe[:S][None]
    de_x = params["de_emb"][de_tokens] + pe[:T][None]
    enc_bias = _padding_bias(en_tokens, en_tokens)
    self_bias = _decoder_self_bias(de_tokens)
    cross_bias = _padding_bias(de_tokens, en_tokens)
    en_out = en_x
    for lp in params["enc_layers"]:
        en_out = _encoder_layer_ref(en_x, enc_bias, lp, num_heads)
    de_out = de_x
    for lp in params["dec_layers"]:
        de_out = _decoder_layer_ref(de_x, en_out, self_bias, cross_bias, lp,
                                    num_heads)
    return de_out @ params["out_w"]


# --------------------------------------------------------------------------- #
# demo
# --------------------------------------------------------------------------- #
if __name__ == "__main__":
    B, SEQ_LEN, TGT_LEN = 2, 8, 8
    EMB, QS, KS, VS, HID = 128, 16, 16, 16, 256   # q/k/vSize are per-head dims
    H = NUM_HEADS
    EN_VOCAB, DE_VOCAB = 128, 128
    NUM_LAYERS = 2

    root = jax.random.PRNGKey(0)
    k_par, k_en, k_de = jax.random.split(root, 3)
    params = init_params(k_par, EN_VOCAB, DE_VOCAB, EMB, QS, KS, VS, HID,
                         num_heads=H, num_layers=NUM_LAYERS,
                         max_len=max(SEQ_LEN, TGT_LEN))

    en_tokens = jax.random.randint(k_en, (B, SEQ_LEN), 1, EN_VOCAB,
                                   dtype=jnp.int32)
    de_tokens = jax.random.randint(k_de, (B, TGT_LEN), 1, DE_VOCAB,
                                   dtype=jnp.int32)
    # zero-pad some tail tokens so the padding / causal masks are exercised
    en_tokens = en_tokens.at[1, SEQ_LEN - 2:].set(0)
    de_tokens = de_tokens.at[1, TGT_LEN - 1:].set(0)

    # f32 MXU-operand path (exact w.r.t. the PyTorch f32 module semantics)
    out = transformer_forward(params, en_tokens, de_tokens,
                              num_heads=H, mxu_dtype=jnp.float32)
    out = jax.block_until_ready(out)
    assert out.shape == (B, TGT_LEN, DE_VOCAB)
    assert bool(jnp.all(jnp.isfinite(out)))

    ref = transformer_forward_ref(params, en_tokens, de_tokens, num_heads=H)
    max_diff = float(jnp.max(jnp.abs(out - ref)))
    assert jnp.allclose(out, ref, atol=2e-2, rtol=2e-2), (
        f"f32 kernel mismatch vs reference, max abs diff = {max_diff}")

    # bf16 MXU-operand path (v6e/v7x-oriented perf feedback); looser tolerance.
    out_bf16 = jax.block_until_ready(
        transformer_forward(params, en_tokens, de_tokens,
                            num_heads=H, mxu_dtype=jnp.bfloat16))
    assert out_bf16.shape == (B, TGT_LEN, DE_VOCAB)
    assert float(jnp.max(jnp.abs(out_bf16 - ref))) < 0.25

    print("KERNEL_OK")
</pallas_src>

<mosaic_0001>
module attributes {stable_mosaic.version = 11 : i64} {
  func.func @_linear_kernel(%arg0: i32, %arg1: memref<16x128xf32, #tpu.memory_space<vmem>>, %arg2: memref<128x128xf32, #tpu.memory_space<vmem>>, %arg3: memref<16x128xf32, #tpu.memory_space<vmem>>) attributes {dimension_semantics = [#tpu.dimension_semantics<parallel>], iteration_bounds = array<i64: 1>, scalar_prefetch = 0 : i64, scratch_operands = 0 : i64, tpu.core_type = #tpu.core_type<tc>, window_params = [{transform_indices = @transform_0, window_bounds = array<i64: 16, 128>}, {pipeline_mode = #tpu.pipeline_mode<synchronous>, transform_indices = @transform_1, window_bounds = array<i64: 128, 128>}, {transform_indices = @transform_2, window_bounds = array<i64: 16, 128>}]} {
    %c0 = arith.constant 0 : index
    %c0_0 = arith.constant 0 : index
    %0 = vector.load %arg1[%c0, %c0_0] : memref<16x128xf32, #tpu.memory_space<vmem>>, vector<16x128xf32>
    %c0_1 = arith.constant 0 : index
    %c0_2 = arith.constant 0 : index
    %1 = vector.load %arg2[%c0_1, %c0_2] : memref<128x128xf32, #tpu.memory_space<vmem>>, vector<128x128xf32>
    %cst = arith.constant dense<0.000000e+00> : vector<16x128xf32>
    %2 = tpu.matmul %0, %1, %cst {dimension_numbers = #tpu.dot_dimension_numbers<[1], [0], [0], [1], [0, 0, 1, 1], [], []>} : vector<16x128xf32>, vector<128x128xf32>, vector<16x128xf32> -> vector<16x128xf32>
    %c0_3 = arith.constant 0 : index
    %c0_4 = arith.constant 0 : index
    %3 = vector.load %arg3[%c0_3, %c0_4] : memref<16x128xf32, #tpu.memory_space<vmem>>, vector<16x128xf32>
    tpu.vector_store %arg3[%c0_3, %c0_4], %2 {strides = array<i32>} : memref<16x128xf32, #tpu.memory_space<vmem>>, vector<16x128xf32>,
    return
  }
  func.func @transform_0(%arg0: i32) -> (i32, i32) {
    %c0_i32 = arith.constant 0 : i32
    %c0_i32_0 = arith.constant 0 : i32
    return %arg0, %c0_i32 : i32, i32
  }
  func.func @transform_1(%arg0: i32) -> (i32, i32) {
    %c0_i32 = arith.constant 0 : i32
    %c0_i32_0 = arith.constant 0 : i32
    %c0_i32_1 = arith.constant 0 : i32
    return %c0_i32, %c0_i32_0 : i32, i32
  }
  func.func @transform_2(%arg0: i32) -> (i32, i32) {
    %c0_i32 = arith.constant 0 : i32
    %c0_i32_0 = arith.constant 0 : i32
    return %arg0, %c0_i32 : i32, i32
  }
}

module attributes {stable_mosaic.version = 11 : i64} {
  func.func @_encoder_layer_kernel(%arg0: i32, %arg1: memref<1x8x128xf32, #tpu.memory_space<vmem>>, %arg2: memref<1x8x8xf32, #tpu.memory_space<vmem>>, %arg3: memref<128x128xf32, #tpu.memory_space<vmem>>, %arg4: memref<128x128xf32, #tpu.memory_space<vmem>>, %arg5: memref<128x128xf32, #tpu.memory_space<vmem>>, %arg6: memref<128x128xf32, #tpu.memory_space<vmem>>, %arg7: memref<128x256xf32, #tpu.memory_space<vmem>>, %arg8: memref<256x128xf32, #tpu.memory_space<vmem>>, %arg9: memref<1x8x128xf32, #tpu.memory_space<vmem>>, %arg10: memref<8x128xf32, #tpu.memory_space<vmem>>) attributes {dimension_semantics = [#tpu.dimension_semantics<parallel>], iteration_bounds = array<i64: 2>, scalar_prefetch = 0 : i64, scratch_operands = 1 : i64, tpu.core_type = #tpu.core_type<tc>, window_params = [{transform_indices = @transform_0, window_bounds = array<i64: 1, 8, 128>}, {transform_indices = @transform_1, window_bounds = array<i64: 1, 8, 8>}, {pipeline_mode = #tpu.pipeline_mode<synchronous>, transform_indices = @transform_2, window_bounds = array<i64: 128, 128>}, {pipeline_mode = #tpu.pipeline_mode<synchronous>, transform_indices = @transform_3, window_bounds = array<i64: 128, 128>}, {pipeline_mode = #tpu.pipeline_mode<synchronous>, transform_indices = @transform_4, window_bounds = array<i64: 128, 128>}, {pipeline_mode = #tpu.pipeline_mode<synchronous>, transform_indices = @transform_5, window_bounds = array<i64: 128, 128>}, {pipeline_mode = #tpu.pipeline_mode<synchronous>, transform_indices = @transform_6, window_bounds = array<i64: 128, 256>}, {pipeline_mode = #tpu.pipeline_mode<synchronous>, transform_indices = @transform_7, window_bounds = array<i64: 256, 128>}, {transform_indices = @transform_8, window_bounds = array<i64: 1, 8, 128>}]} {
    %c0 = arith.constant 0 : index
    %c0_0 = arith.constant 0 : index
    %0 = vector.load %arg3[%c0, %c0_0] : memref<128x128xf32, #tpu.memory_space<vmem>>, vector<128x128xf32>
    %c0_1 = arith.constant 0 : index
    %c0_2 = arith.constant 0 : index
    %1 = vector.load %arg4[%c0_1, %c0_2] : memref<128x128xf32, #tpu.memory_space<vmem>>, vector<128x128xf32>
    %c0_3 = arith.constant 0 : index
    %c0_4 = arith.constant 0 : index
    %2 = vector.load %arg5[%c0_3, %c0_4] : memref<128x128xf32, #tpu.memory_space<vmem>>, vector<128x128xf32>
    %c0_5 = arith.constant 0 : index
    %c0_6 = arith.constant 0 : index
    %3 = vector.load %arg6[%c0_5, %c0_6] : memref<128x128xf32, #tpu.memory_space<vmem>>, vector<128x128xf32>
    %c0_7 = arith.constant 0 : index
    %c0_8 = arith.constant 0 : index
    %4 = vector.load %arg7[%c0_7, %c0_8] : memref<128x256xf32, #tpu.memory_space<vmem>>, vector<128x256xf32>
    %c0_9 = arith.constant 0 : index
    %c0_10 = arith.constant 0 : index
    %5 = vector.load %arg8[%c0_9, %c0_10] : memref<256x128xf32, #tpu.memory_space<vmem>>, vector<256x128xf32>
    %c0_11 = arith.constant 0 : index
    %c0_12 = arith.constant 0 : index
    %c0_13 = arith.constant 0 : index
    %6 = vector.load %arg1[%c0_11, %c0_12, %c0_13] : memref<1x8x128xf32, #tpu.memory_space<vmem>>, vector<1x8x128xf32>
    %7 = vector.shape_cast %6 : vector<1x8x128xf32> to vector<8x128xf32>
    %c0_14 = arith.constant 0 : index
    %c0_15 = arith.constant 0 : index
    %c0_16 = arith.constant 0 : index
    %8 = vector.load %arg2[%c0_14, %c0_15, %c0_16] : memref<1x8x8xf32, #tpu.memory_space<vmem>>, vector<1x8x8xf32>
    %9 = vector.shape_cast %8 : vector<1x8x8xf32> to vector<8x8xf32>
    %cst = arith.constant dense<0.000000e+00> : vector<8x128xf32>
    %10 = tpu.matmul %7, %0, %cst {dimension_numbers = #tpu.dot_dimension_numbers<[1], [0], [0], [1], [0, 0, 1, 1], [], []>} : vector<8x128xf32>, vector<128x128xf32>, vector<8x128xf32> -> vector<8x128xf32>
    %cst_17 = arith.constant dense<0.000000e+00> : vector<8x128xf32>
    %11 = tpu.matmul %7, %1, %cst_17 {dimension_numbers = #tpu.dot_dimension_numbers<[1], [0], [0], [1], [0, 0, 1, 1], [], []>} : vector<8x128xf32>, vector<128x128xf32>, vector<8x128xf32> -> vector<8x128xf32>
    %cst_18 = arith.constant dense<0.000000e+00> : vector<8x128xf32>
    %12 = tpu.matmul %7, %2, %cst_18 {dimension_numbers = #tpu.dot_dimension_numbers<[1], [0], [0], [1], [0, 0, 1, 1], [], []>} : vector<8x128xf32>, vector<128x128xf32>, vector<8x128xf32> -> vector<8x128xf32>
    %13 = vector.extract_strided_slice %10 {offsets = [0, 0], sizes = [8, 16], strides = [1, 1]} : vector<8x128xf32> to vector<8x16xf32>
    %14 = vector.extract_strided_slice %10 {offsets = [0, 16], sizes = [8, 16], strides = [1, 1]} : vector<8x128xf32> to vector<8x16xf32>
    %15 = vector.extract_strided_slice %10 {offsets = [0, 32], sizes = [8, 16], strides = [1, 1]} : vector<8x128xf32> to vector<8x16xf32>
    %16 = vector.extract_strided_slice %10 {offsets = [0, 48], sizes = [8, 16], strides = [1, 1]} : vector<8x128xf32> to vector<8x16xf32>
    %17 = vector.extract_strided_slice %10 {offsets = [0, 64], sizes = [8, 16], strides = [1, 1]} : vector<8x128xf32> to vector<8x16xf32>
    %18 = vector.extract_strided_slice %10 {offsets = [0, 80], sizes = [8, 16], strides = [1, 1]} : vector<8x128xf32> to vector<8x16xf32>
    %19 = vector.extract_strided_slice %10 {offsets = [0, 96], sizes = [8, 16], strides = [1, 1]} : vector<8x128xf32> to vector<8x16xf32>
    %20 = vector.extract_strided_slice %10 {offsets = [0, 112], sizes = [8, 16], strides = [1, 1]} : vector<8x128xf32> to vector<8x16xf32>
    %21 = vector.shape_cast %13 : vector<8x16xf32> to vector<1x8x16xf32>
    %22 = vector.shape_cast %14 : vector<8x16xf32> to vector<1x8x16xf32>
    %23 = vector.shape_cast %15 : vector<8x16xf32> to vector<1x8x16xf32>
    %24 = vector.shape_cast %16 : vector<8x16xf32> to vector<1x8x16xf32>
    %25 = vector.shape_cast %17 : vector<8x16xf32> to vector<1x8x16xf32>
    %26 = vector.shape_cast %18 : vector<8x16xf32> to vector<1x8x16xf32>
    %27 = vector.shape_cast %19 : vector<8x16xf32> to vector<1x8x16xf32>
    %28 = vector.shape_cast %20 : vector<8x16xf32> to vector<1x8x16xf32>
    %29 = tpu.concatenate %21, %22, %23, %24, %25, %26, %27, %28 in 0 : vector<1x8x16xf32>, vector<1x8x16xf32>, vector<1x8x16xf32>, vector<1x8x16xf32>, vector<1x8x16xf32>, vector<1x8x16xf32>, vector<1x8x16xf32>, vector<1x8x16xf32> -> vector<8x8x16xf32>
    %30 = vector.extract_strided_slice %11 {offsets = [0, 0], sizes = [8, 16], strides = [1, 1]} : vector<8x128xf32> to vector<8x16xf32>
    %31 = vector.extract_strided_slice %11 {offsets = [0, 16], sizes = [8, 16], strides = [1, 1]} : vector<8x128xf32> to vector<8x16xf32>
    %32 = vector.extract_strided_slice %11 {offsets = [0, 32], sizes = [8, 16], strides = [1, 1]} : vector<8x128xf32> to vector<8x16xf32>
    %33 = vector.extract_strided_slice %11 {offsets = [0, 48], sizes = [8, 16], strides = [1, 1]} : vector<8x128xf32> to vector<8x16xf32>
    %34 = vector.extract_strided_slice %11 {offsets = [0, 64], sizes = [8, 16], strides = [1, 1]} : vector<8x128xf32> to vector<8x16xf32>
    %35 = vector.extract_strided_slice %11 {offsets = [0, 80], sizes = [8, 16], strides = [1, 1]} : vector<8x128xf32> to vector<8x16xf32>
    %36 = vector.extract_strided_slice %11 {offsets = [0, 96], sizes = [8, 16], strides = [1, 1]} : vector<8x128xf32> to vector<8x16xf32>
    %37 = vector.extract_strided_slice %11 {offsets = [0, 112], sizes = [8, 16], strides = [1, 1]} : vector<8x128xf32> to vector<8x16xf32>
    %38 = vector.shape_cast %30 : vector<8x16xf32> to vector<1x8x16xf32>
    %39 = vector.shape_cast %31 : vector<8x16xf32> to vector<1x8x16xf32>
    %40 = vector.shape_cast %32 : vector<8x16xf32> to vector<1x8x16xf32>
    %41 = vector.shape_cast %33 : vector<8x16xf32> to vector<1x8x16xf32>
    %42 = vector.shape_cast %34 : vector<8x16xf32> to vector<1x8x16xf32>
    %43 = vector.shape_cast %35 : vector<8x16xf32> to vector<1x8x16xf32>
    %44 = vector.shape_cast %36 : vector<8x16xf32> to vector<1x8x16xf32>
    %45 = vector.shape_cast %37 : vector<8x16xf32> to vector<1x8x16xf32>
    %46 = tpu.concatenate %38, %39, %40, %41, %42, %43, %44, %45 in 0 : vector<1x8x16xf32>, vector<1x8x16xf32>, vector<1x8x16xf32>, vector<1x8x16xf32>, vector<1x8x16xf32>, vector<1x8x16xf32>, vector<1x8x16xf32>, vector<1x8x16xf32> -> vector<8x8x16xf32>
    %47 = vector.extract_strided_slice %12 {offsets = [0, 0], sizes = [8, 16], strides = [1, 1]} : vector<8x128xf32> to vector<8x16xf32>
    %48 = vector.extract_strided_slice %12 {offsets = [0, 16], sizes = [8, 16], strides = [1, 1]} : vector<8x128xf32> to vector<8x16xf32>
    %49 = vector.extract_strided_slice %12 {offsets = [0, 32], sizes = [8, 16], strides = [1, 1]} : vector<8x128xf32> to vector<8x16xf32>
    %50 = vector.extract_strided_slice %12 {offsets = [0, 48], sizes = [8, 16], strides = [1, 1]} : vector<8x128xf32> to vector<8x16xf32>
    %51 = vector.extract_strided_slice %12 {offsets = [0, 64], sizes = [8, 16], strides = [1, 1]} : vector<8x128xf32> to vector<8x16xf32>
    %52 = vector.extract_strided_slice %12 {offsets = [0, 80], sizes = [8, 16], strides = [1, 1]} : vector<8x128xf32> to vector<8x16xf32>
    %53 = vector.extract_strided_slice %12 {offsets = [0, 96], sizes = [8, 16], strides = [1, 1]} : vector<8x128xf32> to vector<8x16xf32>
    %54 = vector.extract_strided_slice %12 {offsets = [0, 112], sizes = [8, 16], strides = [1, 1]} : vector<8x128xf32> to vector<8x16xf32>
    %55 = vector.shape_cast %47 : vector<8x16xf32> to vector<1x8x16xf32>
    %56 = vector.shape_cast %48 : vector<8x16xf32> to vector<1x8x16xf32>
    %57 = vector.shape_cast %49 : vector<8x16xf32> to vector<1x8x16xf32>
    %58 = vector.shape_cast %50 : vector<8x16xf32> to vector<1x8x16xf32>
    %59 = vector.shape_cast %51 : vector<8x16xf32> to vector<1x8x16xf32>
    %60 = vector.shape_cast %52 : vector<8x16xf32> to vector<1x8x16xf32>
    %61 = vector.shape_cast %53 : vector<8x16xf32> to vector<1x8x16xf32>
    %62 = vector.shape_cast %54 : vector<8x16xf32> to vector<1x8x16xf32>
    %63 = tpu.concatenate %55, %56, %57, %58, %59, %60, %61, %62 in 0 : vector<1x8x16xf32>, vector<1x8x16xf32>, vector<1x8x16xf32>, vector<1x8x16xf32>, vector<1x8x16xf32>, vector<1x8x16xf32>, vector<1x8x16xf32>, vector<1x8x16xf32> -> vector<8x8x16xf32>
    "tpu.trace_start"() <{level = 10 : i32, message = "hqd,hkd->hqk"}> : () -> ()
    %cst_19 = arith.constant dense<0.000000e+00> : vector<8x8x8xf32>
    %64 = tpu.matmul %29, %46, %cst_19 {dimension_numbers = #tpu.dot_dimension_numbers<[2], [2], [1], [1], [0, 0, 0, 1, 1, 1], [0], [0]>} : vector<8x8x16xf32>, vector<8x8x16xf32>, vector<8x8x8xf32> -> vector<8x8x8xf32>
    "tpu.trace_stop"() : () -> ()
    %65 = vector.shape_cast %9 : vector<8x8xf32> to vector<1x8x8xf32>
    %66 = vector.broadcast %65 : vector<1x8x8xf32> to vector<8x8x8xf32>
    %67 = arith.addf %64, %66 : vector<8x8x8xf32>
    %cst_20 = arith.constant dense<0xFF800000> : vector<8x8xf32>
    %68 = vector.multi_reduction <maximumf>, %67, %cst_20 [2] : vector<8x8x8xf32> to vector<8x8xf32>
    %69 = vector.shape_cast %68 : vector<8x8xf32> to vector<8x8x1xf32>
    %70 = vector.broadcast %69 : vector<8x8x1xf32> to vector<8x8x8xf32>
    %71 = arith.subf %67, %70 : vector<8x8x8xf32>
    %72 = math.exp %71 : vector<8x8x8xf32>
    %cst_21 = arith.constant dense<0.000000e+00> : vector<8x8xf32>
    %73 = vector.multi_reduction <add>, %72, %cst_21 [2] : vector<8x8x8xf32> to vector<8x8xf32>
    %74 = vector.shape_cast %73 : vector<8x8xf32> to vector<8x8x1xf32>
    %75 = tpu.reciprocal %74 {approx = true} : vector<8x8x1xf32> -> vector<8x8x1xf32>
    %76 = vector.broadcast %75 : vector<8x8x1xf32> to vector<8x8x8xf32>
    %77 = arith.mulf %72, %76 : vector<8x8x8xf32>
    "tpu.trace_start"() <{level = 10 : i32, message = "hqk,hkd->hqd"}> : () -> ()
    %cst_22 = arith.constant dense<0.000000e+00> : vector<8x8x16xf32>
    %78 = tpu.matmul %77, %63, %cst_22 {dimension_numbers = #tpu.dot_dimension_numbers<[2], [1], [1], [2], [0, 0, 0, 1, 1, 2], [0], [0]>} : vector<8x8x8xf32>, vector<8x8x16xf32>, vector<8x8x16xf32> -> vector<8x8x16xf32>
    "tpu.trace_stop"() : () -> ()
    %79 = vector.extract_strided_slice %78 {offsets = [0, 0, 0], sizes = [1, 8, 16], strides = [1, 1, 1]} : vector<8x8x16xf32> to vector<1x8x16xf32>
    %80 = vector.shape_cast %79 : vector<1x8x16xf32> to vector<8x16xf32>
    %c0_23 = arith.constant 0 : index
    %c0_24 = arith.constant 0 : index
    %81 = vector.load %arg10[%c0_23, %c0_24] : memref<8x128xf32, #tpu.memory_space<vmem>>, vector<8x16xf32>
    tpu.vector_store %arg10[%c0_23, %c0_24], %80 {strides = array<i32>} : memref<8x128xf32, #tpu.memory_space<vmem>>, vector<8x16xf32>,
    %82 = vector.extract_strided_slice %78 {offsets = [1, 0, 0], sizes = [1, 8, 16], strides = [1, 1, 1]} : vector<8x8x16xf32> to vector<1x8x16xf32>
    %83 = vector.shape_cast %82 : vector<1x8x16xf32> to vector<8x16xf32>
    %c0_25 = arith.constant 0 : index
    %c16 = arith.constant 16 : index
    %84 = vector.load %arg10[%c0_25, %c16] : memref<8x128xf32, #tpu.memory_space<vmem>>, vector<8x16xf32>
    tpu.vector_store %arg10[%c0_25, %c16], %83 {strides = array<i32>} : memref<8x128xf32, #tpu.memory_space<vmem>>, vector<8x16xf32>,
    %85 = vector.extract_strided_slice %78 {offsets = [2, 0, 0], sizes = [1, 8, 16], strides = [1, 1, 1]} : vector<8x8x16xf32> to vector<1x8x16xf32>
    %86 = vector.shape_cast %85 : vector<1x8x16xf32> to vector<8x16xf32>
    %c0_26 = arith.constant 0 : index
    %c32 = arith.constant 32 : index
    %87 = vector.load %arg10[%c0_26, %c32] : memref<8x128xf32, #tpu.memory_space<vmem>>, vector<8x16xf32>
    tpu.vector_store %arg10[%c0_26, %c32], %86 {strides = array<i32>} : memref<8x128xf32, #tpu.memory_space<vmem>>, vector<8x16xf32>,
    %88 = vector.extract_strided_slice %78 {offsets = [3, 0, 0], sizes = [1, 8, 16], strides = [1, 1, 1]} : vector<8x8x16xf32> to vector<1x8x16xf32>
    %89 = vector.shape_cast %88 : vector<1x8x16xf32> to vector<8x16xf32>
    %c0_27 = arith.constant 0 : index
    %c48 = arith.constant 48 : index
    %90 = vector.load %arg10[%c0_27, %c48] : memref<8x128xf32, #tpu.memory_space<vmem>>, vector<8x16xf32>
    tpu.vector_store %arg10[%c0_27, %c48], %89 {strides = array<i32>} : memref<8x128xf32, #tpu.memory_space<vmem>>, vector<8x16xf32>,
    %91 = vector.extract_strided_slice %78 {offsets = [4, 0, 0], sizes = [1, 8, 16], strides = [1, 1, 1]} : vector<8x8x16xf32> to vector<1x8x16xf32>
    %92 = vector.shape_cast %91 : vector<1x8x16xf32> to vector<8x16xf32>
    %c0_28 = arith.constant 0 : index
    %c64 = arith.constant 64 : index
    %93 = vector.load %arg10[%c0_28, %c64] : memref<8x128xf32, #tpu.memory_space<vmem>>, vector<8x16xf32>
    tpu.vector_store %arg10[%c0_28, %c64], %92 {strides = array<i32>} : memref<8x128xf32, #tpu.memory_space<vmem>>, vector<8x16xf32>,
    %94 = vector.extract_strided_slice %78 {offsets = [5, 0, 0], sizes = [1, 8, 16], strides = [1, 1, 1]} : vector<8x8x16xf32> to vector<1x8x16xf32>
    %95 = vector.shape_cast %94 : vector<1x8x16xf32> to vector<8x16xf32>
    %c0_29 = arith.constant 0 : index
    %c80 = arith.constant 80 : index
    %96 = vector.load %arg10[%c0_29, %c80] : memref<8x128xf32, #tpu.memory_space<vmem>>, vector<8x16xf32>
    tpu.vector_store %arg10[%c0_29, %c80], %95 {strides = array<i32>} : memref<8x128xf32, #tpu.memory_space<vmem>>, vector<8x16xf32>,
    %97 = vector.extract_strided_slice %78 {offsets = [6, 0, 0], sizes = [1, 8, 16], strides = [1, 1, 1]} : vector<8x8x16xf32> to vector<1x8x16xf32>
    %98 = vector.shape_cast %97 : vector<1x8x16xf32> to vector<8x16xf32>
    %c0_30 = arith.constant 0 : index
    %c96 = arith.constant 96 : index
    %99 = vector.load %arg10[%c0_30, %c96] : memref<8x128xf32, #tpu.memory_space<vmem>>, vector<8x16xf32>
    tpu.vector_store %arg10[%c0_30, %c96], %98 {strides = array<i32>} : memref<8x128xf32, #tpu.memory_space<vmem>>, vector<8x16xf32>,
    %100 = vector.extract_strided_slice %78 {offsets = [7, 0, 0], sizes = [1, 8, 16], strides = [1, 1, 1]} : vector<8x8x16xf32> to vector<1x8x16xf32>
    %101 = vector.shape_cast %100 : vector<1x8x16xf32> to vector<8x16xf32>
    %c0_31 = arith.constant 0 : index
    %c112 = arith.constant 112 : index
    %102 = vector.load %arg10[%c0_31, %c112] : memref<8x128xf32, #tpu.memory_space<vmem>>, vector<8x16xf32>
    tpu.vector_store %arg10[%c0_31, %c112], %101 {strides = array<i32>} : memref<8x128xf32, #tpu.memory_space<vmem>>, vector<8x16xf32>,
    %c0_32 = arith.constant 0 : index
    %c0_33 = arith.constant 0 : index
    %103 = vector.load %arg10[%c0_32, %c0_33] : memref<8x128xf32, #tpu.memory_space<vmem>>, vector<8x128xf32>
    %cst_34 = arith.constant dense<0.000000e+00> : vector<8x128xf32>
    %104 = tpu.matmul %103, %3, %cst_34 {dimension_numbers = #tpu.dot_dimension_numbers<[1], [0], [0], [1], [0, 0, 1, 1], [], []>} : vector<8x128xf32>, vector<128x128xf32>, vector<8x128xf32> -> vector<8x128xf32>
    %105 = arith.addf %7, %104 : vector<8x128xf32>
    %cst_35 = arith.constant dense<0.000000e+00> : vector<8xf32>
    %106 = vector.multi_reduction <add>, %105, %cst_35 [1] : vector<8x128xf32> to vector<8xf32>
    %107 = vector.shape_cast %106 : vector<8xf32> to vector<8x1xf32>
    %cst_36 = arith.constant 1.280000e+02 : f32
    %108 = vector.broadcast %cst_36 : f32 to vector<8x1xf32>
    %109 = arith.divf %107, %108 : vector<8x1xf32>
    %110 = vector.broadcast %109 : vector<8x1xf32> to vector<8x128xf32>
    %111 = arith.subf %105, %110 : vector<8x128xf32>
    %112 = arith.mulf %111, %111 : vector<8x128xf32>
    %cst_37 = arith.constant dense<0.000000e+00> : vector<8xf32>
    %113 = vector.multi_reduction <add>, %112, %cst_37 [1] : vector<8x128xf32> to vector<8xf32>
    %114 = vector.shape_cast %113 : vector<8xf32> to vector<8x1xf32>
    %cst_38 = arith.constant 1.280000e+02 : f32
    %115 = vector.broadcast %cst_38 : f32 to vector<8x1xf32>
    %116 = arith.divf %114, %115 : vector<8x1xf32>
    %cst_39 = arith.constant 9.99999974E-6 : f32
    %117 = vector.broadcast %cst_39 : f32 to vector<8x1xf32>
    %118 = arith.addf %116, %117 : vector<8x1xf32>
    %119 = math.rsqrt %118 : vector<8x1xf32>
    %120 = vector.broadcast %119 : vector<8x1xf32> to vector<8x128xf32>
    %121 = arith.mulf %111, %120 : vector<8x128xf32>
    %cst_40 = arith.constant dense<0.000000e+00> : vector<8x256xf32>
    %122 = tpu.matmul %121, %4, %cst_40 {dimension_numbers = #tpu.dot_dimension_numbers<[1], [0], [0], [1], [0, 0, 1, 1], [], []>} : vector<8x128xf32>, vector<128x256xf32>, vector<8x256xf32> -> vector<8x256xf32>
    %cst_41 = arith.constant 0.000000e+00 : f32
    %123 = vector.broadcast %cst_41 : f32 to vector<8x256xf32>
    %124 = arith.maximumf %122, %123 : vector<8x256xf32>
    %cst_42 = arith.constant dense<0.000000e+00> : vector<8x128xf32>
    %125 = tpu.matmul %124, %5, %cst_42 {dimension_numbers = #tpu.dot_dimension_numbers<[1], [0], [0], [1], [0, 0, 1, 1], [], []>} : vector<8x256xf32>, vector<256x128xf32>, vector<8x128xf32> -> vector<8x128xf32>
    %126 = arith.addf %121, %125 : vector<8x128xf32>
    %cst_43 = arith.constant dense<0.000000e+00> : vector<8xf32>
    %127 = vector.multi_reduction <add>, %126, %cst_43 [1] : vector<8x128xf32> to vector<8xf32>
    %128 = vector.shape_cast %127 : vector<8xf32> to vector<8x1xf32>
    %cst_44 = arith.constant 1.280000e+02 : f32
    %129 = vector.broadcast %cst_44 : f32 to vector<8x1xf32>
    %130 = arith.divf %128, %129 : vector<8x1xf32>
    %131 = vector.broadcast %130 : vector<8x1xf32> to vector<8x128xf32>
    %132 = arith.subf %126, %131 : vector<8x128xf32>
    %133 = arith.mulf %132, %132 : vector<8x128xf32>
    %cst_45 = arith.constant dense<0.000000e+00> : vector<8xf32>
    %134 = vector.multi_reduction <add>, %133, %cst_45 [1] : vector<8x128xf32> to vector<8xf32>
    %135 = vector.shape_cast %134 : vector<8xf32> to vector<8x1xf32>
    %cst_46 = arith.constant 1.280000e+02 : f32
    %136 = vector.broadcast %cst_46 : f32 to vector<8x1xf32>
    %137 = arith.divf %135, %136 : vector<8x1xf32>
    %cst_47 = arith.constant 9.99999974E-6 : f32
    %138 = vector.broadcast %cst_47 : f32 to vector<8x1xf32>
    %139 = arith.addf %137, %138 : vector<8x1xf32>
    %140 = math.rsqrt %139 : vector<8x1xf32>
    %141 = vector.broadcast %140 : vector<8x1xf32> to vector<8x128xf32>
    %142 = arith.mulf %132, %141 : vector<8x128xf32>
    %c0_48 = arith.constant 0 : index
    %c0_49 = arith.constant 0 : index
    %c0_50 = arith.constant 0 : index
    %143 = vector.load %arg9[%c0_48, %c0_49, %c0_50] : memref<1x8x128xf32, #tpu.memory_space<vmem>>, vector<1x8x128xf32>
    %144 = vector.shape_cast %143 : vector<1x8x128xf32> to vector<8x128xf32>
    %145 = vector.shape_cast %142 : vector<8x128xf32> to vector<1x8x128xf32>
    tpu.vector_store %arg9[%c0_48, %c0_49, %c0_50], %145 {strides = array<i32>} : memref<1x8x128xf32, #tpu.memory_space<vmem>>, vector<1x8x128xf32>,
    return
  }
  func.func @transform_0(%arg0: i32) -> (i32, i32, i32) {
    %c0_i32 = arith.constant 0 : i32
    %c0_i32_0 = arith.constant 0 : i32
    %c0_i32_1 = arith.constant 0 : i32
    return %arg0, %c0_i32, %c0_i32_0 : i32, i32, i32
  }
  func.func @transform_1(%arg0: i32) -> (i32, i32, i32) {
    %c0_i32 = arith.constant 0 : i32
    %c0_i32_0 = arith.constant 0 : i32
    %c0_i32_1 = arith.constant 0 : i32
    return %arg0, %c0_i32, %c0_i32_0 : i32, i32, i32
  }
  func.func @transform_2(%arg0: i32) -> (i32, i32) {
    %c0_i32 = arith.constant 0 : i32
    %c0_i32_0 = arith.constant 0 : i32
    %c0_i32_1 = arith.constant 0 : i32
    return %c0_i32, %c0_i32_0 : i32, i32
  }
  func.func @transform_3(%arg0: i32) -> (i32, i32) {
    %c0_i32 = arith.constant 0 : i32
    %c0_i32_0 = arith.constant 0 : i32
    %c0_i32_1 = arith.constant 0 : i32
    return %c0_i32, %c0_i32_0 : i32, i32
  }
  func.func @transform_4(%arg0: i32) -> (i32, i32) {
    %c0_i32 = arith.constant 0 : i32
    %c0_i32_0 = arith.constant 0 : i32
    %c0_i32_1 = arith.constant 0 : i32
    return %c0_i32, %c0_i32_0 : i32, i32
  }
  func.func @transform_5(%arg0: i32) -> (i32, i32) {
    %c0_i32 = arith.constant 0 : i32
    %c0_i32_0 = arith.constant 0 : i32
    %c0_i32_1 = arith.constant 0 : i32
    return %c0_i32, %c0_i32_0 : i32, i32
  }
  func.func @transform_6(%arg0: i32) -> (i32, i32) {
    %c0_i32 = arith.constant 0 : i32
    %c0_i32_0 = arith.constant 0 : i32
    %c0_i32_1 = arith.constant 0 : i32
    return %c0_i32, %c0_i32_0 : i32, i32
  }
  func.func @transform_7(%arg0: i32) -> (i32, i32) {
    %c0_i32 = arith.constant 0 : i32
    %c0_i32_0 = arith.constant 0 : i32
    %c0_i32_1 = arith.constant 0 : i32
    return %c0_i32, %c0_i32_0 : i32, i32
  }
  func.func @transform_8(%arg0: i32) -> (i32, i32, i32) {
    %c0_i32 = arith.constant 0 : i32
    %c0_i32_0 = arith.constant 0 : i32
    %c0_i32_1 = arith.constant 0 : i32
    return %arg0, %c0_i32, %c0_i32_0 : i32, i32, i32
  }
}

module attributes {stable_mosaic.version = 11 : i64} {
  func.func @_decoder_layer_kernel(%arg0: i32, %arg1: memref<1x8x128xf32, #tpu.memory_space<vmem>>, %arg2: memref<1x8x128xf32, #tpu.memory_space<vmem>>, %arg3: memref<1x8x8xf32, #tpu.memory_space<vmem>>, %arg4: memref<1x8x8xf32, #tpu.memory_space<vmem>>, %arg5: memref<128x128xf32, #tpu.memory_space<vmem>>, %arg6: memref<128x128xf32, #tpu.memory_space<vmem>>, %arg7: memref<128x128xf32, #tpu.memory_space<vmem>>, %arg8: memref<128x128xf32, #tpu.memory_space<vmem>>, %arg9: memref<128x128xf32, #tpu.memory_space<vmem>>, %arg10: memref<128x128xf32, #tpu.memory_space<vmem>>, %arg11: memref<128x128xf32, #tpu.memory_space<vmem>>, %arg12: memref<128x128xf32, #tpu.memory_space<vmem>>, %arg13: memref<128x256xf32, #tpu.memory_space<vmem>>, %arg14: memref<256x128xf32, #tpu.memory_space<vmem>>, %arg15: memref<1x8x128xf32, #tpu.memory_space<vmem>>, %arg16: memref<8x128xf32, #tpu.memory_space<vmem>>) attributes {dimension_semantics = [#tpu.dimension_semantics<parallel>], iteration_bounds = array<i64: 2>, scalar_prefetch = 0 : i64, scratch_operands = 1 : i64, tpu.core_type = #tpu.core_type<tc>, window_params = [{transform_indices = @transform_0, window_bounds = array<i64: 1, 8, 128>}, {transform_indices = @transform_1, window_bounds = array<i64: 1, 8, 128>}, {transform_indices = @transform_2, window_bounds = array<i64: 1, 8, 8>}, {transform_indices = @transform_3, window_bounds = array<i64: 1, 8, 8>}, {pipeline_mode = #tpu.pipeline_mode<synchronous>, transform_indices = @transform_4, window_bounds = array<i64: 128, 128>}, {pipeline_mode = #tpu.pipeline_mode<synchronous>, transform_indices = @transform_5, window_bounds = array<i64: 128, 128>}, {pipeline_mode = #tpu.pipeline_mode<synchronous>, transform_indices = @transform_6, window_bounds = array<i64: 128, 128>}, {pipeline_mode = #tpu.pipeline_mode<synchronous>, transform_indices = @transform_7, window_bounds = array<i64: 128, 128>}, {pipeline_mode = #tpu.pipeline_mode<synchronous>, transform_indices = @transform_8, window_bounds = array<i64: 128, 128>}, {pipeline_mode = #tpu.pipeline_mode<synchronous>, transform_indices = @transform_9, window_bounds = array<i64: 128, 128>}, {pipeline_mode = #tpu.pipeline_mode<synchronous>, transform_indices = @transform_10, window_bounds = array<i64: 128, 128>}, {pipeline_mode = #tpu.pipeline_mode<synchronous>, transform_indices = @transform_11, window_bounds = array<i64: 128, 128>}, {pipeline_mode = #tpu.pipeline_mode<synchronous>, transform_indices = @transform_12, window_bounds = array<i64: 128, 256>}, {pipeline_mode = #tpu.pipeline_mode<synchronous>, transform_indices = @transform_13, window_bounds = array<i64: 256, 128>}, {transform_indices = @transform_14, window_bounds = array<i64: 1, 8, 128>}]} {
    %c0 = arith.constant 0 : index
    %c0_0 = arith.constant 0 : index
    %0 = vector.load %arg5[%c0, %c0_0] : memref<128x128xf32, #tpu.memory_space<vmem>>, vector<128x128xf32>
    %c0_1 = arith.constant 0 : index
    %c0_2 = arith.constant 0 : index
    %1 = vector.load %arg6[%c0_1, %c0_2] : memref<128x128xf32, #tpu.memory_space<vmem>>, vector<128x128xf32>
    %c0_3 = arith.constant 0 : index
    %c0_4 = arith.constant 0 : index
    %2 = vector.load %arg7[%c0_3, %c0_4] : memref<128x128xf32, #tpu.memory_space<vmem>>, vector<128x128xf32>
    %c0_5 = arith.constant 0 : index
    %c0_6 = arith.constant 0 : index
    %3 = vector.load %arg8[%c0_5, %c0_6] : memref<128x128xf32, #tpu.memory_space<vmem>>, vector<128x128xf32>
    %c0_7 = arith.constant 0 : index
    %c0_8 = arith.constant 0 : index
    %4 = vector.load %arg9[%c0_7, %c0_8] : memref<128x128xf32, #tpu.memory_space<vmem>>, vector<128x128xf32>
    %c0_9 = arith.constant 0 : index
    %c0_10 = arith.constant 0 : index
    %5 = vector.load %arg10[%c0_9, %c0_10] : memref<128x128xf32, #tpu.memory_space<vmem>>, vector<128x128xf32>
    %c0_11 = arith.constant 0 : index
    %c0_12 = arith.constant 0 : index
    %6 = vector.load %arg11[%c0_11, %c0_12] : memref<128x128xf32, #tpu.memory_space<vmem>>, vector<128x128xf32>
    %c0_13 = arith.constant 0 : index
    %c0_14 = arith.constant 0 : index
    %7 = vector.load %arg12[%c0_13, %c0_14] : memref<128x128xf32, #tpu.memory_space<vmem>>, vector<128x128xf32>
    %c0_15 = arith.constant 0 : index
    %c0_16 = arith.constant 0 : index
    %8 = vector.load %arg13[%c0_15, %c0_16] : memref<128x256xf32, #tpu.memory_space<vmem>>, vector<128x256xf32>
    %c0_17 = arith.constant 0 : index
    %c0_18 = arith.constant 0 : index
    %9 = vector.load %arg14[%c0_17, %c0_18] : memref<256x128xf32, #tpu.memory_space<vmem>>, vector<256x128xf32>
    %c0_19 = arith.constant 0 : index
    %c0_20 = arith.constant 0 : index
    %c0_21 = arith.constant 0 : index
    %10 = vector.load %arg1[%c0_19, %c0_20, %c0_21] : memref<1x8x128xf32, #tpu.memory_space<vmem>>, vector<1x8x128xf32>
    %11 = vector.shape_cast %10 : vector<1x8x128xf32> to vector<8x128xf32>
    %c0_22 = arith.constant 0 : index
    %c0_23 = arith.constant 0 : index
    %c0_24 = arith.constant 0 : index
    %12 = vector.load %arg2[%c0_22, %c0_23, %c0_24] : memref<1x8x128xf32, #tpu.memory_space<vmem>>, vector<1x8x128xf32>
    %13 = vector.shape_cast %12 : vector<1x8x128xf32> to vector<8x128xf32>
    %c0_25 = arith.constant 0 : index
    %c0_26 = arith.constant 0 : index
    %c0_27 = arith.constant 0 : index
    %14 = vector.load %arg3[%c0_25, %c0_26, %c0_27] : memref<1x8x8xf32, #tpu.memory_space<vmem>>, vector<1x8x8xf32>
    %15 = vector.shape_cast %14 : vector<1x8x8xf32> to vector<8x8xf32>
    %cst = arith.constant dense<0.000000e+00> : vector<8x128xf32>
    %16 = tpu.matmul %11, %0, %cst {dimension_numbers = #tpu.dot_dimension_numbers<[1], [0], [0], [1], [0, 0, 1, 1], [], []>} : vector<8x128xf32>, vector<128x128xf32>, vector<8x128xf32> -> vector<8x128xf32>
    %cst_28 = arith.constant dense<0.000000e+00> : vector<8x128xf32>
    %17 = tpu.matmul %11, %1, %cst_28 {dimension_numbers = #tpu.dot_dimension_numbers<[1], [0], [0], [1], [0, 0, 1, 1], [], []>} : vector<8x128xf32>, vector<128x128xf32>, vector<8x128xf32> -> vector<8x128xf32>
    %cst_29 = arith.constant dense<0.000000e+00> : vector<8x128xf32>
    %18 = tpu.matmul %11, %2, %cst_29 {dimension_numbers = #tpu.dot_dimension_numbers<[1], [0], [0], [1], [0, 0, 1, 1], [], []>} : vector<8x128xf32>, vector<128x128xf32>, vector<8x128xf32> -> vector<8x128xf32>
    %19 = vector.extract_strided_slice %16 {offsets = [0, 0], sizes = [8, 16], strides = [1, 1]} : vector<8x128xf32> to vector<8x16xf32>
    %20 = vector.extract_strided_slice %16 {offsets = [0, 16], sizes = [8, 16], strides = [1, 1]} : vector<8x128xf32> to vector<8x16xf32>
    %21 = vector.extract_strided_slice %16 {offsets = [0, 32], sizes = [8, 16], strides = [1, 1]} : vector<8x128xf32> to vector<8x16xf32>
    %22 = vector.extract_strided_slice %16 {offsets = [0, 48], sizes = [8, 16], strides = [1, 1]} : vector<8x128xf32> to vector<8x16xf32>
    %23 = vector.extract_strided_slice %16 {offsets = [0, 64], sizes = [8, 16], strides = [1, 1]} : vector<8x128xf32> to vector<8x16xf32>
    %24 = vector.extract_strided_slice %16 {offsets = [0, 80], sizes = [8, 16], strides = [1, 1]} : vector<8x128xf32> to vector<8x16xf32>
    %25 = vector.extract_strided_slice %16 {offsets = [0, 96], sizes = [8, 16], strides = [1, 1]} : vector<8x128xf32> to vector<8x16xf32>
    %26 = vector.extract_strided_slice %16 {offsets = [0, 112], sizes = [8, 16], strides = [1, 1]} : vector<8x128xf32> to vector<8x16xf32>
    %27 = vector.shape_cast %19 : vector<8x16xf32> to vector<1x8x16xf32>
    %28 = vector.shape_cast %20 : vector<8x16xf32> to vector<1x8x16xf32>
    %29 = vector.shape_cast %21 : vector<8x16xf32> to vector<1x8x16xf32>
    %30 = vector.shape_cast %22 : vector<8x16xf32> to vector<1x8x16xf32>
    %31 = vector.shape_cast %23 : vector<8x16xf32> to vector<1x8x16xf32>
    %32 = vector.shape_cast %24 : vector<8x16xf32> to vector<1x8x16xf32>
    %33 = vector.shape_cast %25 : vector<8x16xf32> to vector<1x8x16xf32>
    %34 = vector.shape_cast %26 : vector<8x16xf32> to vector<1x8x16xf32>
    %35 = tpu.concatenate %27, %28, %29, %30, %31, %32, %33, %34 in 0 : vector<1x8x16xf32>, vector<1x8x16xf32>, vector<1x8x16xf32>, vector<1x8x16xf32>, vector<1x8x16xf32>, vector<1x8x16xf32>, vector<1x8x16xf32>, vector<1x8x16xf32> -> vector<8x8x16xf32>
    %36 = vector.extract_strided_slice %17 {offsets = [0, 0], sizes = [8, 16], strides = [1, 1]} : vector<8x128xf32> to vector<8x16xf32>
    %37 = vector.extract_strided_slice %17 {offsets = [0, 16], sizes = [8, 16], strides = [1, 1]} : vector<8x128xf32> to vector<8x16xf32>
    %38 = vector.extract_strided_slice %17 {offsets = [0, 32], sizes = [8, 16], strides = [1, 1]} : vector<8x128xf32> to vector<8x16xf32>
    %39 = vector.extract_strided_slice %17 {offsets = [0, 48], sizes = [8, 16], strides = [1, 1]} : vector<8x128xf32> to vector<8x16xf32>
    %40 = vector.extract_strided_slice %17 {offsets = [0, 64], sizes = [8, 16], strides = [1, 1]} : vector<8x128xf32> to vector<8x16xf32>
    %41 = vector.extract_strided_slice %17 {offsets = [0, 80], sizes = [8, 16], strides = [1, 1]} : vector<8x128xf32> to vector<8x16xf32>
    %42 = vector.extract_strided_slice %17 {offsets = [0, 96], sizes = [8, 16], strides = [1, 1]} : vector<8x128xf32> to vector<8x16xf32>
    %43 = vector.extract_strided_slice %17 {offsets = [0, 112], sizes = [8, 16], strides = [1, 1]} : vector<8x128xf32> to vector<8x16xf32>
    %44 = vector.shape_cast %36 : vector<8x16xf32> to vector<1x8x16xf32>
    %45 = vector.shape_cast %37 : vector<8x16xf32> to vector<1x8x16xf32>
    %46 = vector.shape_cast %38 : vector<8x16xf32> to vector<1x8x16xf32>
    %47 = vector.shape_cast %39 : vector<8x16xf32> to vector<1x8x16xf32>
    %48 = vector.shape_cast %40 : vector<8x16xf32> to vector<1x8x16xf32>
    %49 = vector.shape_cast %41 : vector<8x16xf32> to vector<1x8x16xf32>
    %50 = vector.shape_cast %42 : vector<8x16xf32> to vector<1x8x16xf32>
    %51 = vector.shape_cast %43 : vector<8x16xf32> to vector<1x8x16xf32>
    %52 = tpu.concatenate %44, %45, %46, %47, %48, %49, %50, %51 in 0 : vector<1x8x16xf32>, vector<1x8x16xf32>, vector<1x8x16xf32>, vector<1x8x16xf32>, vector<1x8x16xf32>, vector<1x8x16xf32>, vector<1x8x16xf32>, vector<1x8x16xf32> -> vector<8x8x16xf32>
    %53 = vector.extract_strided_slice %18 {offsets = [0, 0], sizes = [8, 16], strides = [1, 1]} : vector<8x128xf32> to vector<8x16xf32>
    %54 = vector.extract_strided_slice %18 {offsets = [0, 16], sizes = [8, 16], strides = [1, 1]} : vector<8x128xf32> to vector<8x16xf32>
    %55 = vector.extract_strided_slice %18 {offsets = [0, 32], sizes = [8, 16], strides = [1, 1]} : vector<8x128xf32> to vector<8x16xf32>
    %56 = vector.extract_strided_slice %18 {offsets = [0, 48], sizes = [8, 16], strides = [1, 1]} : vector<8x128xf32> to vector<8x16xf32>
    %57 = vector.extract_strided_slice %18 {offsets = [0, 64], sizes = [8, 16], strides = [1, 1]} : vector<8x128xf32> to vector<8x16xf32>
    %58 = vector.extract_strided_slice %18 {offsets = [0, 80], sizes = [8, 16], strides = [1, 1]} : vector<8x128xf32> to vector<8x16xf32>
    %59 = vector.extract_strided_slice %18 {offsets = [0, 96], sizes = [8, 16], strides = [1, 1]} : vector<8x128xf32> to vector<8x16xf32>
    %60 = vector.extract_strided_slice %18 {offsets = [0, 112], sizes = [8, 16], strides = [1, 1]} : vector<8x128xf32> to vector<8x16xf32>
    %61 = vector.shape_cast %53 : vector<8x16xf32> to vector<1x8x16xf32>
    %62 = vector.shape_cast %54 : vector<8x16xf32> to vector<1x8x16xf32>
    %63 = vector.shape_cast %55 : vector<8x16xf32> to vector<1x8x16xf32>
    %64 = vector.shape_cast %56 : vector<8x16xf32> to vector<1x8x16xf32>
    %65 = vector.shape_cast %57 : vector<8x16xf32> to vector<1x8x16xf32>
    %66 = vector.shape_cast %58 : vector<8x16xf32> to vector<1x8x16xf32>
    %67 = vector.shape_cast %59 : vector<8x16xf32> to vector<1x8x16xf32>
    %68 = vector.shape_cast %60 : vector<8x16xf32> to vector<1x8x16xf32>
    %69 = tpu.concatenate %61, %62, %63, %64, %65, %66, %67, %68 in 0 : vector<1x8x16xf32>, vector<1x8x16xf32>, vector<1x8x16xf32>, vector<1x8x16xf32>, vector<1x8x16xf32>, vector<1x8x16xf32>, vector<1x8x16xf32>, vector<1x8x16xf32> -> vector<8x8x16xf32>
    "tpu.trace_start"() <{level = 10 : i32, message = "hqd,hkd->hqk"}> : () -> ()
    %cst_30 = arith.constant dense<0.000000e+00> : vector<8x8x8xf32>
    %70 = tpu.matmul %35, %52, %cst_30 {dimension_numbers = #tpu.dot_dimension_numbers<[2], [2], [1], [1], [0, 0, 0, 1, 1, 1], [0], [0]>} : vector<8x8x16xf32>, vector<8x8x16xf32>, vector<8x8x8xf32> -> vector<8x8x8xf32>
    "tpu.trace_stop"() : () -> ()
    %71 = vector.shape_cast %15 : vector<8x8xf32> to vector<1x8x8xf32>
    %72 = vector.broadcast %71 : vector<1x8x8xf32> to vector<8x8x8xf32>
    %73 = arith.addf %70, %72 : vector<8x8x8xf32>
    %cst_31 = arith.constant dense<0xFF800000> : vector<8x8xf32>
    %74 = vector.multi_reduction <maximumf>, %73, %cst_31 [2] : vector<8x8x8xf32> to vector<8x8xf32>
    %75 = vector.shape_cast %74 : vector<8x8xf32> to vector<8x8x1xf32>
    %76 = vector.broadcast %75 : vector<8x8x1xf32> to vector<8x8x8xf32>
    %77 = arith.subf %73, %76 : vector<8x8x8xf32>
    %78 = math.exp %77 : vector<8x8x8xf32>
    %cst_32 = arith.constant dense<0.000000e+00> : vector<8x8xf32>
    %79 = vector.multi_reduction <add>, %78, %cst_32 [2] : vector<8x8x8xf32> to vector<8x8xf32>
    %80 = vector.shape_cast %79 : vector<8x8xf32> to vector<8x8x1xf32>
    %81 = tpu.reciprocal %80 {approx = true} : vector<8x8x1xf32> -> vector<8x8x1xf32>
    %82 = vector.broadcast %81 : vector<8x8x1xf32> to vector<8x8x8xf32>
    %83 = arith.mulf %78, %82 : vector<8x8x8xf32>
    "tpu.trace_start"() <{level = 10 : i32, message = "hqk,hkd->hqd"}> : () -> ()
    %cst_33 = arith.constant dense<0.000000e+00> : vector<8x8x16xf32>
    %84 = tpu.matmul %83, %69, %cst_33 {dimension_numbers = #tpu.dot_dimension_numbers<[2], [1], [1], [2], [0, 0, 0, 1, 1, 2], [0], [0]>} : vector<8x8x8xf32>, vector<8x8x16xf32>, vector<8x8x16xf32> -> vector<8x8x16xf32>
    "tpu.trace_stop"() : () -> ()
    %85 = vector.extract_strided_slice %84 {offsets = [0, 0, 0], sizes = [1, 8, 16], strides = [1, 1, 1]} : vector<8x8x16xf32> to vector<1x8x16xf32>
    %86 = vector.shape_cast %85 : vector<1x8x16xf32> to vector<8x16xf32>
    %c0_34 = arith.constant 0 : index
    %c0_35 = arith.constant 0 : index
    %87 = vector.load %arg16[%c0_34, %c0_35] : memref<8x128xf32, #tpu.memory_space<vmem>>, vector<8x16xf32>
    tpu.vector_store %arg16[%c0_34, %c0_35], %86 {strides = array<i32>} : memref<8x128xf32, #tpu.memory_space<vmem>>, vector<8x16xf32>,
    %88 = vector.extract_strided_slice %84 {offsets = [1, 0, 0], sizes = [1, 8, 16], strides = [1, 1, 1]} : vector<8x8x16xf32> to vector<1x8x16xf32>
    %89 = vector.shape_cast %88 : vector<1x8x16xf32> to vector<8x16xf32>
    %c0_36 = arith.constant 0 : index
    %c16 = arith.constant 16 : index
    %90 = vector.load %arg16[%c0_36, %c16] : memref<8x128xf32, #tpu.memory_space<vmem>>, vector<8x16xf32>
    tpu.vector_store %arg16[%c0_36, %c16], %89 {strides = array<i32>} : memref<8x128xf32, #tpu.memory_space<vmem>>, vector<8x16xf32>,
    %91 = vector.extract_strided_slice %84 {offsets = [2, 0, 0], sizes = [1, 8, 16], strides = [1, 1, 1]} : vector<8x8x16xf32> to vector<1x8x16xf32>
    %92 = vector.shape_cast %91 : vector<1x8x16xf32> to vector<8x16xf32>
    %c0_37 = arith.constant 0 : index
    %c32 = arith.constant 32 : index
    %93 = vector.load %arg16[%c0_37, %c32] : memref<8x128xf32, #tpu.memory_space<vmem>>, vector<8x16xf32>
    tpu.vector_store %arg16[%c0_37, %c32], %92 {strides = array<i32>} : memref<8x128xf32, #tpu.memory_space<vmem>>, vector<8x16xf32>,
    %94 = vector.extract_strided_slice %84 {offsets = [3, 0, 0], sizes = [1, 8, 16], strides = [1, 1, 1]} : vector<8x8x16xf32> to vector<1x8x16xf32>
    %95 = vector.shape_cast %94 : vector<1x8x16xf32> to vector<8x16xf32>
    %c0_38 = arith.constant 0 : index
    %c48 = arith.constant 48 : index
    %96 = vector.load %arg16[%c0_38, %c48] : memref<8x128xf32, #tpu.memory_space<vmem>>, vector<8x16xf32>
    tpu.vector_store %arg16[%c0_38, %c48], %95 {strides = array<i32>} : memref<8x128xf32, #tpu.memory_space<vmem>>, vector<8x16xf32>,
    %97 = vector.extract_strided_slice %84 {offsets = [4, 0, 0], sizes = [1, 8, 16], strides = [1, 1, 1]} : vector<8x8x16xf32> to vector<1x8x16xf32>
    %98 = vector.shape_cast %97 : vector<1x8x16xf32> to vector<8x16xf32>
    %c0_39 = arith.constant 0 : index
    %c64 = arith.constant 64 : index
    %99 = vector.load %arg16[%c0_39, %c64] : memref<8x128xf32, #tpu.memory_space<vmem>>, vector<8x16xf32>
    tpu.vector_store %arg16[%c0_39, %c64], %98 {strides = array<i32>} : memref<8x128xf32, #tpu.memory_space<vmem>>, vector<8x16xf32>,
    %100 = vector.extract_strided_slice %84 {offsets = [5, 0, 0], sizes = [1, 8, 16], strides = [1, 1, 1]} : vector<8x8x16xf32> to vector<1x8x16xf32>
    %101 = vector.shape_cast %100 : vector<1x8x16xf32> to vector<8x16xf32>
    %c0_40 = arith.constant 0 : index
    %c80 = arith.constant 80 : index
    %102 = vector.load %arg16[%c0_40, %c80] : memref<8x128xf32, #tpu.memory_space<vmem>>, vector<8x16xf32>
    tpu.vector_store %arg16[%c0_40, %c80], %101 {strides = array<i32>} : memref<8x128xf32, #tpu.memory_space<vmem>>, vector<8x16xf32>,
    %103 = vector.extract_strided_slice %84 {offsets = [6, 0, 0], sizes = [1, 8, 16], strides = [1, 1, 1]} : vector<8x8x16xf32> to vector<1x8x16xf32>
    %104 = vector.shape_cast %103 : vector<1x8x16xf32> to vector<8x16xf32>
    %c0_41 = arith.constant 0 : index
    %c96 = arith.constant 96 : index
    %105 = vector.load %arg16[%c0_41, %c96] : memref<8x128xf32, #tpu.memory_space<vmem>>, vector<8x16xf32>
    tpu.vector_store %arg16[%c0_41, %c96], %104 {strides = array<i32>} : memref<8x128xf32, #tpu.memory_space<vmem>>, vector<8x16xf32>,
    %106 = vector.extract_strided_slice %84 {offsets = [7, 0, 0], sizes = [1, 8, 16], strides = [1, 1, 1]} : vector<8x8x16xf32> to vector<1x8x16xf32>
    %107 = vector.shape_cast %106 : vector<1x8x16xf32> to vector<8x16xf32>
    %c0_42 = arith.constant 0 : index
    %c112 = arith.constant 112 : index
    %108 = vector.load %arg16[%c0_42, %c112] : memref<8x128xf32, #tpu.memory_space<vmem>>, vector<8x16xf32>
    tpu.vector_store %arg16[%c0_42, %c112], %107 {strides = array<i32>} : memref<8x128xf32, #tpu.memory_space<vmem>>, vector<8x16xf32>,
    %c0_43 = arith.constant 0 : index
    %c0_44 = arith.constant 0 : index
    %109 = vector.load %arg16[%c0_43, %c0_44] : memref<8x128xf32, #tpu.memory_space<vmem>>, vector<8x128xf32>
    %cst_45 = arith.constant dense<0.000000e+00> : vector<8x128xf32>
    %110 = tpu.matmul %109, %3, %cst_45 {dimension_numbers = #tpu.dot_dimension_numbers<[1], [0], [0], [1], [0, 0, 1, 1], [], []>} : vector<8x128xf32>, vector<128x128xf32>, vector<8x128xf32> -> vector<8x128xf32>
    %111 = arith.addf %11, %110 : vector<8x128xf32>
    %cst_46 = arith.constant dense<0.000000e+00> : vector<8xf32>
    %112 = vector.multi_reduction <add>, %111, %cst_46 [1] : vector<8x128xf32> to vector<8xf32>
    %113 = vector.shape_cast %112 : vector<8xf32> to vector<8x1xf32>
    %cst_47 = arith.constant 1.280000e+02 : f32
    %114 = vector.broadcast %cst_47 : f32 to vector<8x1xf32>
    %115 = arith.divf %113, %114 : vector<8x1xf32>
    %116 = vector.broadcast %115 : vector<8x1xf32> to vector<8x128xf32>
    %117 = arith.subf %111, %116 : vector<8x128xf32>
    %118 = arith.mulf %117, %117 : vector<8x128xf32>
    %cst_48 = arith.constant dense<0.000000e+00> : vector<8xf32>
    %119 = vector.multi_reduction <add>, %118, %cst_48 [1] : vector<8x128xf32> to vector<8xf32>
    %120 = vector.shape_cast %119 : vector<8xf32> to vector<8x1xf32>
    %cst_49 = arith.constant 1.280000e+02 : f32
    %121 = vector.broadcast %cst_49 : f32 to vector<8x1xf32>
    %122 = arith.divf %120, %121 : vector<8x1xf32>
    %cst_50 = arith.constant 9.99999974E-6 : f32
    %123 = vector.broadcast %cst_50 : f32 to vector<8x1xf32>
    %124 = arith.addf %122, %123 : vector<8x1xf32>
    %125 = math.rsqrt %124 : vector<8x1xf32>
    %126 = vector.broadcast %125 : vector<8x1xf32> to vector<8x128xf32>
    %127 = arith.mulf %117, %126 : vector<8x128xf32>
    %c0_51 = arith.constant 0 : index
    %c0_52 = arith.constant 0 : index
    %c0_53 = arith.constant 0 : index
    %128 = vector.load %arg4[%c0_51, %c0_52, %c0_53] : memref<1x8x8xf32, #tpu.memory_space<vmem>>, vector<1x8x8xf32>
    %129 = vector.shape_cast %128 : vector<1x8x8xf32> to vector<8x8xf32>
    %cst_54 = arith.constant dense<0.000000e+00> : vector<8x128xf32>
    %130 = tpu.matmul %127, %4, %cst_54 {dimension_numbers = #tpu.dot_dimension_numbers<[1], [0], [0], [1], [0, 0, 1, 1], [], []>} : vector<8x128xf32>, vector<128x128xf32>, vector<8x128xf32> -> vector<8x128xf32>
    %cst_55 = arith.constant dense<0.000000e+00> : vector<8x128xf32>
    %131 = tpu.matmul %13, %5, %cst_55 {dimension_numbers = #tpu.dot_dimension_numbers<[1], [0], [0], [1], [0, 0, 1, 1], [], []>} : vector<8x128xf32>, vector<128x128xf32>, vector<8x128xf32> -> vector<8x128xf32>
    %cst_56 = arith.constant dense<0.000000e+00> : vector<8x128xf32>
    %132 = tpu.matmul %13, %6, %cst_56 {dimension_numbers = #tpu.dot_dimension_numbers<[1], [0], [0], [1], [0, 0, 1, 1], [], []>} : vector<8x128xf32>, vector<128x128xf32>, vector<8x128xf32> -> vector<8x128xf32>
    %133 = vector.extract_strided_slice %130 {offsets = [0, 0], sizes = [8, 16], strides = [1, 1]} : vector<8x128xf32> to vector<8x16xf32>
    %134 = vector.extract_strided_slice %130 {offsets = [0, 16], sizes = [8, 16], strides = [1, 1]} : vector<8x128xf32> to vector<8x16xf32>
    %135 = vector.extract_strided_slice %130 {offsets = [0, 32], sizes = [8, 16], strides = [1, 1]} : vector<8x128xf32> to vector<8x16xf32>
    %136 = vector.extract_strided_slice %130 {offsets = [0, 48], sizes = [8, 16], strides = [1, 1]} : vector<8x128xf32> to vector<8x16xf32>
    %137 = vector.extract_strided_slice %130 {offsets = [0, 64], sizes = [8, 16], strides = [1, 1]} : vector<8x128xf32> to vector<8x16xf32>
    %138 = vector.extract_strided_slice %130 {offsets = [0, 80], sizes = [8, 16], strides = [1, 1]} : vector<8x128xf32> to vector<8x16xf32>
    %139 = vector.extract_strided_slice %130 {offsets = [0, 96], sizes = [8, 16], strides = [1, 1]} : vector<8x128xf32> to vector<8x16xf32>
    %140 = vector.extract_strided_slice %130 {offsets = [0, 112], sizes = [8, 16], strides = [1, 1]} : vector<8x128xf32> to vector<8x16xf32>
    %141 = vector.shape_cast %133 : vector<8x16xf32> to vector<1x8x16xf32>
    %142 = vector.shape_cast %134 : vector<8x16xf32> to vector<1x8x16xf32>
    %143 = vector.shape_cast %135 : vector<8x16xf32> to vector<1x8x16xf32>
    %144 = vector.shape_cast %136 : vector<8x16xf32> to vector<1x8x16xf32>
    %145 = vector.shape_cast %137 : vector<8x16xf32> to vector<1x8x16xf32>
    %146 = vector.shape_cast %138 : vector<8x16xf32> to vector<1x8x16xf32>
    %147 = vector.shape_cast %139 : vector<8x16xf32> to vector<1x8x16xf32>
    %148 = vector.shape_cast %140 : vector<8x16xf32> to vector<1x8x16xf32>
    %149 = tpu.concatenate %141, %142, %143, %144, %145, %146, %147, %148 in 0 : vector<1x8x16xf32>, vector<1x8x16xf32>, vector<1x8x16xf32>, vector<1x8x16xf32>, vector<1x8x16xf32>, vector<1x8x16xf32>, vector<1x8x16xf32>, vector<1x8x16xf32> -> vector<8x8x16xf32>
    %150 = vector.extract_strided_slice %131 {offsets = [0, 0], sizes = [8, 16], strides = [1, 1]} : vector<8x128xf32> to vector<8x16xf32>
    %151 = vector.extract_strided_slice %131 {offsets = [0, 16], sizes = [8, 16], strides = [1, 1]} : vector<8x128xf32> to vector<8x16xf32>
    %152 = vector.extract_strided_slice %131 {offsets = [0, 32], sizes = [8, 16], strides = [1, 1]} : vector<8x128xf32> to vector<8x16xf32>
    %153 = vector.extract_strided_slice %131 {offsets = [0, 48], sizes = [8, 16], strides = [1, 1]} : vector<8x128xf32> to vector<8x16xf32>
    %154 = vector.extract_strided_slice %131 {offsets = [0, 64], sizes = [8, 16], strides = [1, 1]} : vector<8x128xf32> to vector<8x16xf32>
    %155 = vector.extract_strided_slice %131 {offsets = [0, 80], sizes = [8, 16], strides = [1, 1]} : vector<8x128xf32> to vector<8x16xf32>
    %156 = vector.extract_strided_slice %131 {offsets = [0, 96], sizes = [8, 16], strides = [1, 1]} : vector<8x128xf32> to vector<8x16xf32>
    %157 = vector.extract_strided_slice %131 {offsets = [0, 112], sizes = [8, 16], strides = [1, 1]} : vector<8x128xf32> to vector<8x16xf32>
    %158 = vector.shape_cast %150 : vector<8x16xf32> to vector<1x8x16xf32>
    %159 = vector.shape_cast %151 : vector<8x16xf32> to vector<1x8x16xf32>
    %160 = vector.shape_cast %152 : vector<8x16xf32> to vector<1x8x16xf32>
    %161 = vector.shape_cast %153 : vector<8x16xf32> to vector<1x8x16xf32>
    %162 = vector.shape_cast %154 : vector<8x16xf32> to vector<1x8x16xf32>
    %163 = vector.shape_cast %155 : vector<8x16xf32> to vector<1x8x16xf32>
    %164 = vector.shape_cast %156 : vector<8x16xf32> to vector<1x8x16xf32>
    %165 = vector.shape_cast %157 : vector<8x16xf32> to vector<1x8x16xf32>
    %166 = tpu.concatenate %158, %159, %160, %161, %162, %163, %164, %165 in 0 : vector<1x8x16xf32>, vector<1x8x16xf32>, vector<1x8x16xf32>, vector<1x8x16xf32>, vector<1x8x16xf32>, vector<1x8x16xf32>, vector<1x8x16xf32>, vector<1x8x16xf32> -> vector<8x8x16xf32>
    %167 = vector.extract_strided_slice %132 {offsets = [0, 0], sizes = [8, 16], strides = [1, 1]} : vector<8x128xf32> to vector<8x16xf32>
    %168 = vector.extract_strided_slice %132 {offsets = [0, 16], sizes = [8, 16], strides = [1, 1]} : vector<8x128xf32> to vector<8x16xf32>
    %169 = vector.extract_strided_slice %132 {offsets = [0, 32], sizes = [8, 16], strides = [1, 1]} : vector<8x128xf32> to vector<8x16xf32>
    %170 = vector.extract_strided_slice %132 {offsets = [0, 48], sizes = [8, 16], strides = [1, 1]} : vector<8x128xf32> to vector<8x16xf32>
    %171 = vector.extract_strided_slice %132 {offsets = [0, 64], sizes = [8, 16], strides = [1, 1]} : vector<8x128xf32> to vector<8x16xf32>
    %172 = vector.extract_strided_slice %132 {offsets = [0, 80], sizes = [8, 16], strides = [1, 1]} : vector<8x128xf32> to vector<8x16xf32>
    %173 = vector.extract_strided_slice %132 {offsets = [0, 96], sizes = [8, 16], strides = [1, 1]} : vector<8x128xf32> to vector<8x16xf32>
    %174 = vector.extract_strided_slice %132 {offsets = [0, 112], sizes = [8, 16], strides = [1, 1]} : vector<8x128xf32> to vector<8x16xf32>
    %175 = vector.shape_cast %167 : vector<8x16xf32> to vector<1x8x16xf32>
    %176 = vector.shape_cast %168 : vector<8x16xf32> to vector<1x8x16xf32>
    %177 = vector.shape_cast %169 : vector<8x16xf32> to vector<1x8x16xf32>
    %178 = vector.shape_cast %170 : vector<8x16xf32> to vector<1x8x16xf32>
    %179 = vector.shape_cast %171 : vector<8x16xf32> to vector<1x8x16xf32>
    %180 = vector.shape_cast %172 : vector<8x16xf32> to vector<1x8x16xf32>
    %181 = vector.shape_cast %173 : vector<8x16xf32> to vector<1x8x16xf32>
    %182 = vector.shape_cast %174 : vector<8x16xf32> to vector<1x8x16xf32>
    %183 = tpu.concatenate %175, %176, %177, %178, %179, %180, %181, %182 in 0 : vector<1x8x16xf32>, vector<1x8x16xf32>, vector<1x8x16xf32>, vector<1x8x16xf32>, vector<1x8x16xf32>, vector<1x8x16xf32>, vector<1x8x16xf32>, vector<1x8x16xf32> -> vector<8x8x16xf32>
    "tpu.trace_start"() <{level = 10 : i32, message = "hqd,hkd->hqk"}> : () -> ()
    %cst_57 = arith.constant dense<0.000000e+00> : vector<8x8x8xf32>
    %184 = tpu.matmul %149, %166, %cst_57 {dimension_numbers = #tpu.dot_dimension_numbers<[2], [2], [1], [1], [0, 0, 0, 1, 1, 1], [0], [0]>} : vector<8x8x16xf32>, vector<8x8x16xf32>, vector<8x8x8xf32> -> vector<8x8x8xf32>
    "tpu.trace_stop"() : () -> ()
    %185 = vector.shape_cast %129 : vector<8x8xf32> to vector<1x8x8xf32>
    %186 = vector.broadcast %185 : vector<1x8x8xf32> to vector<8x8x8xf32>
    %187 = arith.addf %184, %186 : vector<8x8x8xf32>
    %cst_58 = arith.constant dense<0xFF800000> : vector<8x8xf32>
    %188 = vector.multi_reduction <maximumf>, %187, %cst_58 [2] : vector<8x8x8xf32> to vector<8x8xf32>
    %189 = vector.shape_cast %188 : vector<8x8xf32> to vector<8x8x1xf32>
    %190 = vector.broadcast %189 : vector<8x8x1xf32> to vector<8x8x8xf32>
    %191 = arith.subf %187, %190 : vector<8x8x8xf32>
    %192 = math.exp %191 : vector<8x8x8xf32>
    %cst_59 = arith.constant dense<0.000000e+00> : vector<8x8xf32>
    %193 = vector.multi_reduction <add>, %192, %cst_59 [2] : vector<8x8x8xf32> to vector<8x8xf32>
    %194 = vector.shape_cast %193 : vector<8x8xf32> to vector<8x8x1xf32>
    %195 = tpu.reciprocal %194 {approx = true} : vector<8x8x1xf32> -> vector<8x8x1xf32>
    %196 = vector.broadcast %195 : vector<8x8x1xf32> to vector<8x8x8xf32>
    %197 = arith.mulf %192, %196 : vector<8x8x8xf32>
    "tpu.trace_start"() <{level = 10 : i32, message = "hqk,hkd->hqd"}> : () -> ()
    %cst_60 = arith.constant dense<0.000000e+00> : vector<8x8x16xf32>
    %198 = tpu.matmul %197, %183, %cst_60 {dimension_numbers = #tpu.dot_dimension_numbers<[2], [1], [1], [2], [0, 0, 0, 1, 1, 2], [0], [0]>} : vector<8x8x8xf32>, vector<8x8x16xf32>, vector<8x8x16xf32> -> vector<8x8x16xf32>
    "tpu.trace_stop"() : () -> ()
    %199 = vector.extract_strided_slice %198 {offsets = [0, 0, 0], sizes = [1, 8, 16], strides = [1, 1, 1]} : vector<8x8x16xf32> to vector<1x8x16xf32>
    %200 = vector.shape_cast %199 : vector<1x8x16xf32> to vector<8x16xf32>
    %c0_61 = arith.constant 0 : index
    %c0_62 = arith.constant 0 : index
    %201 = vector.load %arg16[%c0_61, %c0_62] : memref<8x128xf32, #tpu.memory_space<vmem>>, vector<8x16xf32>
    tpu.vector_store %arg16[%c0_61, %c0_62], %200 {strides = array<i32>} : memref<8x128xf32, #tpu.memory_space<vmem>>, vector<8x16xf32>,
    %202 = vector.extract_strided_slice %198 {offsets = [1, 0, 0], sizes = [1, 8, 16], strides = [1, 1, 1]} : vector<8x8x16xf32> to vector<1x8x16xf32>
    %203 = vector.shape_cast %202 : vector<1x8x16xf32> to vector<8x16xf32>
    %c0_63 = arith.constant 0 : index
    %c16_64 = arith.constant 16 : index
    %204 = vector.load %arg16[%c0_63, %c16_64] : memref<8x128xf32, #tpu.memory_space<vmem>>, vector<8x16xf32>
    tpu.vector_store %arg16[%c0_63, %c16_64], %203 {strides = array<i32>} : memref<8x128xf32, #tpu.memory_space<vmem>>, vector<8x16xf32>,
    %205 = vector.extract_strided_slice %198 {offsets = [2, 0, 0], sizes = [1, 8, 16], strides = [1, 1, 1]} : vector<8x8x16xf32> to vector<1x8x16xf32>
    %206 = vector.shape_cast %205 : vector<1x8x16xf32> to vector<8x16xf32>
    %c0_65 = arith.constant 0 : index
    %c32_66 = arith.constant 32 : index
    %207 = vector.load %arg16[%c0_65, %c32_66] : memref<8x128xf32, #tpu.memory_space<vmem>>, vector<8x16xf32>
    tpu.vector_store %arg16[%c0_65, %c32_66], %206 {strides = array<i32>} : memref<8x128xf32, #tpu.memory_space<vmem>>, vector<8x16xf32>,
    %208 = vector.extract_strided_slice %198 {offsets = [3, 0, 0], sizes = [1, 8, 16], strides = [1, 1, 1]} : vector<8x8x16xf32> to vector<1x8x16xf32>
    %209 = vector.shape_cast %208 : vector<1x8x16xf32> to vector<8x16xf32>
    %c0_67 = arith.constant 0 : index
    %c48_68 = arith.constant 48 : index
    %210 = vector.load %arg16[%c0_67, %c48_68] : memref<8x128xf32, #tpu.memory_space<vmem>>, vector<8x16xf32>
    tpu.vector_store %arg16[%c0_67, %c48_68], %209 {strides = array<i32>} : memref<8x128xf32, #tpu.memory_space<vmem>>, vector<8x16xf32>,
    %211 = vector.extract_strided_slice %198 {offsets = [4, 0, 0], sizes = [1, 8, 16], strides = [1, 1, 1]} : vector<8x8x16xf32> to vector<1x8x16xf32>
    %212 = vector.shape_cast %211 : vector<1x8x16xf32> to vector<8x16xf32>
    %c0_69 = arith.constant 0 : index
    %c64_70 = arith.constant 64 : index
    %213 = vector.load %arg16[%c0_69, %c64_70] : memref<8x128xf32, #tpu.memory_space<vmem>>, vector<8x16xf32>
    tpu.vector_store %arg16[%c0_69, %c64_70], %212 {strides = array<i32>} : memref<8x128xf32, #tpu.memory_space<vmem>>, vector<8x16xf32>,
    %214 = vector.extract_strided_slice %198 {offsets = [5, 0, 0], sizes = [1, 8, 16], strides = [1, 1, 1]} : vector<8x8x16xf32> to vector<1x8x16xf32>
    %215 = vector.shape_cast %214 : vector<1x8x16xf32> to vector<8x16xf32>
    %c0_71 = arith.constant 0 : index
    %c80_72 = arith.constant 80 : index
    %216 = vector.load %arg16[%c0_71, %c80_72] : memref<8x128xf32, #tpu.memory_space<vmem>>, vector<8x16xf32>
    tpu.vector_store %arg16[%c0_71, %c80_72], %215 {strides = array<i32>} : memref<8x128xf32, #tpu.memory_space<vmem>>, vector<8x16xf32>,
    %217 = vector.extract_strided_slice %198 {offsets = [6, 0, 0], sizes = [1, 8, 16], strides = [1, 1, 1]} : vector<8x8x16xf32> to vector<1x8x16xf32>
    %218 = vector.shape_cast %217 : vector<1x8x16xf32> to vector<8x16xf32>
    %c0_73 = arith.constant 0 : index
    %c96_74 = arith.constant 96 : index
    %219 = vector.load %arg16[%c0_73, %c96_74] : memref<8x128xf32, #tpu.memory_space<vmem>>, vector<8x16xf32>
    tpu.vector_store %arg16[%c0_73, %c96_74], %218 {strides = array<i32>} : memref<8x128xf32, #tpu.memory_space<vmem>>, vector<8x16xf32>,
    %220 = vector.extract_strided_slice %198 {offsets = [7, 0, 0], sizes = [1, 8, 16], strides = [1, 1, 1]} : vector<8x8x16xf32> to vector<1x8x16xf32>
    %221 = vector.shape_cast %220 : vector<1x8x16xf32> to vector<8x16xf32>
    %c0_75 = arith.constant 0 : index
    %c112_76 = arith.constant 112 : index
    %222 = vector.load %arg16[%c0_75, %c112_76] : memref<8x128xf32, #tpu.memory_space<vmem>>, vector<8x16xf32>
    tpu.vector_store %arg16[%c0_75, %c112_76], %221 {strides = array<i32>} : memref<8x128xf32, #tpu.memory_space<vmem>>, vector<8x16xf32>,
    %c0_77 = arith.constant 0 : index
    %c0_78 = arith.constant 0 : index
    %223 = vector.load %arg16[%c0_77, %c0_78] : memref<8x128xf32, #tpu.memory_space<vmem>>, vector<8x128xf32>
    %cst_79 = arith.constant dense<0.000000e+00> : vector<8x128xf32>
    %224 = tpu.matmul %223, %7, %cst_79 {dimension_numbers = #tpu.dot_dimension_numbers<[1], [0], [0], [1], [0, 0, 1, 1], [], []>} : vector<8x128xf32>, vector<128x128xf32>, vector<8x128xf32> -> vector<8x128xf32>
    %225 = arith.addf %127, %224 : vector<8x128xf32>
    %cst_80 = arith.constant dense<0.000000e+00> : vector<8xf32>
    %226 = vector.multi_reduction <add>, %225, %cst_80 [1] : vector<8x128xf32> to vector<8xf32>
    %227 = vector.shape_cast %226 : vector<8xf32> to vector<8x1xf32>
    %cst_81 = arith.constant 1.280000e+02 : f32
    %228 = vector.broadcast %cst_81 : f32 to vector<8x1xf32>
    %229 = arith.divf %227, %228 : vector<8x1xf32>
    %230 = vector.broadcast %229 : vector<8x1xf32> to vector<8x128xf32>
    %231 = arith.subf %225, %230 : vector<8x128xf32>
    %232 = arith.mulf %231, %231 : vector<8x128xf32>
    %cst_82 = arith.constant dense<0.000000e+00> : vector<8xf32>
    %233 = vector.multi_reduction <add>, %232, %cst_82 [1] : vector<8x128xf32> to vector<8xf32>
    %234 = vector.shape_cast %233 : vector<8xf32> to vector<8x1xf32>
    %cst_83 = arith.constant 1.280000e+02 : f32
    %235 = vector.broadcast %cst_83 : f32 to vector<8x1xf32>
    %236 = arith.divf %234, %235 : vector<8x1xf32>
    %cst_84 = arith.constant 9.99999974E-6 : f32
    %237 = vector.broadcast %cst_84 : f32 to vector<8x1xf32>
    %238 = arith.addf %236, %237 : vector<8x1xf32>
    %239 = math.rsqrt %238 : vector<8x1xf32>
    %240 = vector.broadcast %239 : vector<8x1xf32> to vector<8x128xf32>
    %241 = arith.mulf %231, %240 : vector<8x128xf32>
    %cst_85 = arith.constant dense<0.000000e+00> : vector<8x256xf32>
    %242 = tpu.matmul %241, %8, %cst_85 {dimension_numbers = #tpu.dot_dimension_numbers<[1], [0], [0], [1], [0, 0, 1, 1], [], []>} : vector<8x128xf32>, vector<128x256xf32>, vector<8x256xf32> -> vector<8x256xf32>
    %cst_86 = arith.constant 0.000000e+00 : f32
    %243 = vector.broadcast %cst_86 : f32 to vector<8x256xf32>
    %244 = arith.maximumf %242, %243 : vector<8x256xf32>
    %cst_87 = arith.constant dense<0.000000e+00> : vector<8x128xf32>
    %245 = tpu.matmul %244, %9, %cst_87 {dimension_numbers = #tpu.dot_dimension_numbers<[1], [0], [0], [1], [0, 0, 1, 1], [], []>} : vector<8x256xf32>, vector<256x128xf32>, vector<8x128xf32> -> vector<8x128xf32>
    %246 = arith.addf %241, %245 : vector<8x128xf32>
    %cst_88 = arith.constant dense<0.000000e+00> : vector<8xf32>
    %247 = vector.multi_reduction <add>, %246, %cst_88 [1] : vector<8x128xf32> to vector<8xf32>
    %248 = vector.shape_cast %247 : vector<8xf32> to vector<8x1xf32>
    %cst_89 = arith.constant 1.280000e+02 : f32
    %249 = vector.broadcast %cst_89 : f32 to vector<8x1xf32>
    %250 = arith.divf %248, %249 : vector<8x1xf32>
    %251 = vector.broadcast %250 : vector<8x1xf32> to vector<8x128xf32>
    %252 = arith.subf %246, %251 : vector<8x128xf32>
    %253 = arith.mulf %252, %252 : vector<8x128xf32>
    %cst_90 = arith.constant dense<0.000000e+00> : vector<8xf32>
    %254 = vector.multi_reduction <add>, %253, %cst_90 [1] : vector<8x128xf32> to vector<8xf32>
    %255 = vector.shape_cast %254 : vector<8xf32> to vector<8x1xf32>
    %cst_91 = arith.constant 1.280000e+02 : f32
    %256 = vector.broadcast %cst_91 : f32 to vector<8x1xf32>
    %257 = arith.divf %255, %256 : vector<8x1xf32>
    %cst_92 = arith.constant 9.99999974E-6 : f32
    %258 = vector.broadcast %cst_92 : f32 to vector<8x1xf32>
    %259 = arith.addf %257, %258 : vector<8x1xf32>
    %260 = math.rsqrt %259 : vector<8x1xf32>
    %261 = vector.broadcast %260 : vector<8x1xf32> to vector<8x128xf32>
    %262 = arith.mulf %252, %261 : vector<8x128xf32>
    %c0_93 = arith.constant 0 : index
    %c0_94 = arith.constant 0 : index
    %c0_95 = arith.constant 0 : index
    %263 = vector.load %arg15[%c0_93, %c0_94, %c0_95] : memref<1x8x128xf32, #tpu.memory_space<vmem>>, vector<1x8x128xf32>
    %264 = vector.shape_cast %263 : vector<1x8x128xf32> to vector<8x128xf32>
    %265 = vector.shape_cast %262 : vector<8x128xf32> to vector<1x8x128xf32>
    tpu.vector_store %arg15[%c0_93, %c0_94, %c0_95], %265 {strides = array<i32>} : memref<1x8x128xf32, #tpu.memory_space<vmem>>, vector<1x8x128xf32>,
    return
  }
  func.func @transform_0(%arg0: i32) -> (i32, i32, i32) {
    %c0_i32 = arith.constant 0 : i32
    %c0_i32_0 = arith.constant 0 : i32
    %c0_i32_1 = arith.constant 0 : i32
    return %arg0, %c0_i32, %c0_i32_0 : i32, i32, i32
  }
  func.func @transform_1(%arg0: i32) -> (i32, i32, i32) {
    %c0_i32 = arith.constant 0 : i32
    %c0_i32_0 = arith.constant 0 : i32
    %c0_i32_1 = arith.constant 0 : i32
    return %arg0, %c0_i32, %c0_i32_0 : i32, i32, i32
  }
  func.func @transform_2(%arg0: i32) -> (i32, i32, i32) {
    %c0_i32 = arith.constant 0 : i32
    %c0_i32_0 = arith.constant 0 : i32
    %c0_i32_1 = arith.constant 0 : i32
    return %arg0, %c0_i32, %c0_i32_0 : i32, i32, i32
  }
  func.func @transform_3(%arg0: i32) -> (i32, i32, i32) {
    %c0_i32 = arith.constant 0 : i32
    %c0_i32_0 = arith.constant 0 : i32
    %c0_i32_1 = arith.constant 0 : i32
    return %arg0, %c0_i32, %c0_i32_0 : i32, i32, i32
  }
  func.func @transform_4(%arg0: i32) -> (i32, i32) {
    %c0_i32 = arith.constant 0 : i32
    %c0_i32_0 = arith.constant 0 : i32
    %c0_i32_1 = arith.constant 0 : i32
    return %c0_i32, %c0_i32_0 : i32, i32
  }
  func.func @transform_5(%arg0: i32) -> (i32, i32) {
    %c0_i32 = arith.constant 0 : i32
    %c0_i32_0 = arith.constant 0 : i32
    %c0_i32_1 = arith.constant 0 : i32
    return %c0_i32, %c0_i32_0 : i32, i32
  }
  func.func @transform_6(%arg0: i32) -> (i32, i32) {
    %c0_i32 = arith.constant 0 : i32
    %c0_i32_0 = arith.constant 0 : i32
    %c0_i32_1 = arith.constant 0 : i32
    return %c0_i32, %c0_i32_0 : i32, i32
  }
  func.func @transform_7(%arg0: i32) -> (i32, i32) {
    %c0_i32 = arith.constant 0 : i32
    %c0_i32_0 = arith.constant 0 : i32
    %c0_i32_1 = arith.constant 0 : i32
    return %c0_i32, %c0_i32_0 : i32, i32
  }
  func.func @transform_8(%arg0: i32) -> (i32, i32) {
    %c0_i32 = arith.constant 0 : i32
    %c0_i32_0 = arith.constant 0 : i32
    %c0_i32_1 = arith.constant 0 : i32
    return %c0_i32, %c0_i32_0 : i32, i32
  }
  func.func @transform_9(%arg0: i32) -> (i32, i32) {
    %c0_i32 = arith.constant 0 : i32
    %c0_i32_0 = arith.constant 0 : i32
    %c0_i32_1 = arith.constant 0 : i32
    return %c0_i32, %c0_i32_0 : i32, i32
  }
  func.func @transform_10(%arg0: i32) -> (i32, i32) {
    %c0_i32 = arith.constant 0 : i32
    %c0_i32_0 = arith.constant 0 : i32
    %c0_i32_1 = arith.constant 0 : i32
    return %c0_i32, %c0_i32_0 : i32, i32
  }
  func.func @transform_11(%arg0: i32) -> (i32, i32) {
    %c0_i32 = arith.constant 0 : i32
    %c0_i32_0 = arith.constant 0 : i32
    %c0_i32_1 = arith.constant 0 : i32
    return %c0_i32, %c0_i32_0 : i32, i32
  }
  func.func @transform_12(%arg0: i32) -> (i32, i32) {
    %c0_i32 = arith.constant 0 : i32
    %c0_i32_0 = arith.constant 0 : i32
    %c0_i32_1 = arith.constant 0 : i32
    return %c0_i32, %c0_i32_0 : i32, i32
  }
  func.func @transform_13(%arg0: i32) -> (i32, i32) {
    %c0_i32 = arith.constant 0 : i32
    %c0_i32_0 = arith.constant 0 : i32
    %c0_i32_1 = arith.constant 0 : i32
    return %c0_i32, %c0_i32_0 : i32, i32
  }
  func.func @transform_14(%arg0: i32) -> (i32, i32, i32) {
    %c0_i32 = arith.constant 0 : i32
    %c0_i32_0 = arith.constant 0 : i32
    %c0_i32_1 = arith.constant 0 : i32
    return %arg0, %c0_i32, %c0_i32_0 : i32, i32, i32
  }
}

</mosaic_0001>

<llo_original>
// kernel: transformer_forward.5
$region0: #{transformer_forward.5}
  #allocation0 [shape = 'u32[]', space=smem, size = 0x4, offset = 0x4, fixed_abs, tag = 'smem constant byte address 0x4 - core index']
  #allocation1 [shape = 'u32[144,128]{1,0:T(1,128)}', space=vmem, size = 0x12000, scoped, tag = 'internal scratch']
  %s0 = inlined_call_operand.vmem [shape: f32[16,128], index: 0, kind: input, shape index: {}]
  %s1 = inlined_call_operand.vmem [shape: f32[128,128], index: 1, kind: input, shape index: {}]
  %s2 = inlined_call_operand.hbm [shape: f32[16,128], index: 2, kind: output, shape index: {}]
  %s3 = sld [smem:[#allocation0]]
  $region18: #{transformer_forward.5} parent=0
    _
  %s5 = ssub.s32 1, %s3
  %s6 = scalar_select 0, %s5, %s3
  $region1: #{transformer_forward.5} parent=0
    #allocation2 [shape = 'u8[8192]{0}', space=vmem, size = 0x2000, scoped, tag = 'output window, operand 0, single buffered']
    #allocation3 [shape = 's32[1]{0}', space=sflag, size = 0x4, scoped, tag = 'scoped memory for transformer_forward.5']
    %7 = vsyncpa [#allocation3], 0
    // Predicated region
    $region2: #{transformer_forward.5} parent=1 // pred_check
      _
    $region3: #{transformer_forward.5} parent=1 // pred_check_branch
      %9 = sbr.rel (0) target = $region5
    $region4: #{transformer_forward.5} parent=1 // pred_region
      _
    $region5: #{transformer_forward.5} parent=1 // pred_fallthru
      _
    // Predicated region
    $region6: #{transformer_forward.5} parent=1 // pred_check
      _
    $region7: #{transformer_forward.5} parent=1 // pred_check_branch
      %11 = sbr.rel (0) target = $region9
    $region8: #{transformer_forward.5} parent=1 // pred_region
      _
    $region9: #{transformer_forward.5} parent=1 // pred_fallthru
      _
    %v12 = vld [vmem:[%s0] sm:$0xff]
    %v13 = vld [vmem:[%s0 + $0x8] sm:$0xff]
    %v14 = vld [vmem:[%s1] sm:$0xff]
    %v15 = vld [vmem:[%s1 + $0x8] sm:$0xff]
    %v16 = vld [vmem:[%s1 + $0x10] sm:$0xff]
    %v17 = vld [vmem:[%s1 + $0x18] sm:$0xff]
    %v18 = vld [vmem:[%s1 + $0x20] sm:$0xff]
    %v19 = vld [vmem:[%s1 + $0x28] sm:$0xff]
    %v20 = vld [vmem:[%s1 + $0x30] sm:$0xff]
    %v21 = vld [vmem:[%s1 + $0x38] sm:$0xff]
    %v22 = vld [vmem:[%s1 + $0x40] sm:$0xff]
    %v23 = vld [vmem:[%s1 + $0x48] sm:$0xff]
    %v24 = vld [vmem:[%s1 + $0x50] sm:$0xff]
    %v25 = vld [vmem:[%s1 + $0x58] sm:$0xff]
    %v26 = vld [vmem:[%s1 + $0x60] sm:$0xff]
    %v27 = vld [vmem:[%s1 + $0x68] sm:$0xff]
    %v28 = vld [vmem:[%s1 + $0x70] sm:$0xff]
    %v29 = vld [vmem:[%s1 + $0x78] sm:$0xff]
    %30 = vmatprep.subr.mxu0 0.0
    %31 = vmatpush1.msra.mxu0 %v14
    %32 = vmatprep.subr.mxu0 0.0
    %33 = vmatpush1.msra.mxu0 %v15
    %34 = vmatprep.subr.mxu0 0.0
    %35 = vmatpush1.msra.mxu0 %v16
    %36 = vmatprep.subr.mxu0 0.0
    %37 = vmatpush1.msra.mxu0 %v17
    %38 = vmatprep.subr.mxu0 0.0
    %39 = vmatpush1.msra.mxu0 %v18
    %40 = vmatprep.subr.mxu0 0.0
    %41 = vmatpush1.msra.mxu0 %v19
    %42 = vmatprep.subr.mxu0 0.0
    %43 = vmatpush1.msra.mxu0 %v20
    %44 = vmatprep.subr.mxu0 0.0
    %45 = vmatpush1.msra.mxu0 %v21
    %46 = vmatprep.subr.mxu0 0.0
    %47 = vmatpush1.msra.mxu0 %v22
    %48 = vmatprep.subr.mxu0 0.0
    %49 = vmatpush1.msra.mxu0 %v23
    %50 = vmatprep.subr.mxu0 0.0
    %51 = vmatpush1.msra.mxu0 %v24
    %52 = vmatprep.subr.mxu0 0.0
    %53 = vmatpush1.msra.mxu0 %v25
    %54 = vmatprep.subr.mxu0 0.0
    %55 = vmatpush1.msra.mxu0 %v26
    %56 = vmatprep.subr.mxu0 0.0
    %57 = vmatpush1.msra.mxu0 %v27
    %58 = vmatprep.subr.mxu0 0.0
    %59 = vmatpush1.msra.mxu0 %v28
    %60 = vmatprep.subr.mxu0 0.0
    %61 = vmatpush1.msra.mxu0 %v29
    %62 = vmatprep.subr.mxu0 0.0
    %63 = vmatpush1.msra.mxu0 0.0
    %64 = vmatprep.subr.mxu0 0.0
    %65 = vmatpush1.msra.mxu0 0.0
    %66 = vmatprep.subr.mxu0 0.0
    %67 = vmatpush1.msra.mxu0 0.0
    %68 = vmatprep.subr.mxu0 0.0
    %69 = vmatpush1.msra.mxu0 0.0
    %70 = vmatprep.subr.mxu0 0.0
    %71 = vmatpush1.msra.mxu0 0.0
    %72 = vmatprep.subr.mxu0 0.0
    %73 = vmatpush1.msra.mxu0 0.0
    %74 = vmatprep.subr.mxu0 0.0
    %75 = vmatpush1.msra.mxu0 0.0
    %76 = vmatprep.subr.mxu0 0.0
    %77 = vmatpush1.msra.mxu0 0.0
    %78 = vmatprep.subr.mxu0 0.0
    %79 = vmatpush1.msra.mxu0 0.0
    %80 = vmatprep.subr.mxu0 0.0
    %81 = vmatpush1.msra.mxu0 0.0
    %82 = vmatprep.subr.mxu0 0.0
    %83 = vmatpush1.msra.mxu0 0.0
    %84 = vmatprep.subr.mxu0 0.0
    %85 = vmatpush1.msra.mxu0 0.0
    %86 = vmatprep.subr.mxu0 0.0
    %87 = vmatpush1.msra.mxu0 0.0
    %88 = vmatprep.subr.mxu0 0.0
    %89 = vmatpush1.msra.mxu0 0.0
    %90 = vmatprep.subr.mxu0 0.0
    %91 = vmatpush1.msra.mxu0 0.0
    %92 = vmatprep.subr.mxu0 0.0
    %93 = vmatpush1.msra.mxu0 0.0
    %94 = vmatprep.mubr.f32.mxu0 0.0
    %95 = vmatmul.mubr.f32.gmra.mrb[0].mxu0 %v12
    %v96 = vpop.f32.mrb[0].mxu0
    %v97 = vadd.f32 0.0, %v96
    %v98 = vpop.f32.mrb[0].mxu0
    %99 = vmatprep.mubr.f32.mxu0 0.0
    %100 = vmatmul.mubr.f32.gmra.mrb[0].mxu0 %v13
    %v101 = vpop.f32.mrb[0].mxu0
    %v102 = vadd.f32 0.0, %v101
    %v103 = vpop.f32.mrb[0].mxu0
    %104 = vdwg.mxu0
    %105 = vst [vmem:[#allocation2] sm:$0xff] %v97
    %106 = vst [vmem:[#allocation2 + $0x8] sm:$0xff] %v102
    // Predicated region
    $region10: #{transformer_forward.5} parent=1 // pred_check
      _
    $region11: #{transformer_forward.5} parent=1 // pred_check_branch
      %108 = sbr.rel (0) target = $region13
    $region12: #{transformer_forward.5} parent=1 // pred_region
      %s110 = ssub.s32 256, 256
      %111 = vsyncadd [#allocation3], %s110
      %s112 = sshll.u32 [#allocation2], 4
      %s113 = int_to_ptr.vmem [resolvable:$true] %s112
      %118 = dma.vmem_to_hbm [thread:$0]  %s113, 256, %s2, [#allocation3], 128, 128, 8
    $region13: #{transformer_forward.5} parent=1 // pred_fallthru
      _
    // Predicated region
    $region14: #{transformer_forward.5} parent=1 // pred_check
      _
    $region15: #{transformer_forward.5} parent=1 // pred_check_branch
      %120 = sbr.rel (0) target = $region17
    $region16: #{transformer_forward.5} parent=1 // pred_region
      %121 = dma.done [#allocation3], 256
    $region17: #{transformer_forward.5} parent=1 // pred_fallthru
      _
    %122 = vsyncpa [#allocation3], 1

// kernel: transformer_forward.3
$region0: #{transformer_forward.3}
  #allocation0 [shape = 'u32[]', space=smem, size = 0x4, offset = 0x4, fixed_abs, tag = 'smem constant byte address 0x4 - core index']
  #allocation1 [shape = 'u32[144,128]{1,0:T(1,128)}', space=vmem, size = 0x12000, scoped, tag = 'internal scratch']
  #allocation2 [shape = 'f32[8,128]{1,0:T(8,128)}', space=vmem, size = 0x1000, scoped, tag = 'scratch operand']
  %s0 = inlined_call_operand.vmem [shape: f32[2,8,128], index: 0, kind: input, shape index: {}]
  %s1 = inlined_call_operand.vmem [shape: f32[2,8,8], index: 1, kind: input, shape index: {}]
  %s2 = inlined_call_operand.vmem [shape: f32[128,128], index: 2, kind: input, shape index: {}]
  %s3 = inlined_call_operand.vmem [shape: f32[128,128], index: 3, kind: input, shape index: {}]
  %s4 = inlined_call_operand.hbm [shape: f32[128,128], index: 4, kind: input, shape index: {}]
  %s5 = inlined_call_operand.hbm [shape: f32[128,128], index: 5, kind: input, shape index: {}]
  %s6 = inlined_call_operand.vmem [shape: f32[128,256], index: 6, kind: input, shape index: {}]
  %s7 = inlined_call_operand.vmem [shape: f32[256,128], index: 7, kind: input, shape index: {}]
  %s8 = inlined_call_operand.vmem [shape: f32[2,8,128], index: 8, kind: output, shape index: {}]
  %s9 = sld [smem:[#allocation0]]
  $region73: #{transformer_forward.3} parent=0
    _
  %s11 = ssub.s32 1, %s9
  %s12 = scalar_select 0, %s11, %s9
  $region1: #{transformer_forward.3} parent=0
    #allocation3 [shape = 'u8[65536]{0}', space=vmem, size = 0x10000, scoped, tag = 'input window, operand 4, single buffered']
    #allocation4 [shape = 's32[2]{0}', space=sflag, size = 0x8, scoped, tag = 'scoped memory for transformer_forward.3']
    #allocation5 [shape = 'u8[65536]{0}', space=vmem, size = 0x10000, scoped, tag = 'input window, operand 5, single buffered']
    #allocation6 [shape = 's32[1]{0}', space=sflag, size = 0x4, scoped, tag = 'scoped memory for transformer_forward.3']
    %13 = vsyncpa [#allocation4], 0
    %14 = vsyncpa [#allocation6], 0
    loop: start=0, step=1, limit=4
    $region2: #{transformer_forward.3} parent=1 // loop_pre_header
      _
    $region3: #{transformer_forward.3} parent=1 // loop_header
      %s16 = sphi 0, %s20
      %p17 = scmp.ge.s32.totalorder %s16, 4
      %s26 = sphi 0, %s28
      %s29 = sphi 0, %s26
      %s30 = sphi 0, %s29
      %s46 = sphi 0, %s30
      %s52 = sphi 0, %s54
      %s55 = sphi 0, %s52
      %s56 = sphi 0, %s55
      %s72 = sphi 0, %s56
      %s76 = sphi 0, %s76
      %s78 = sphi 0, %s76
      %s79 = sphi 0, %s78
      %s93 = sphi 0, %s79
      %s97 = sphi 0, %s97
      %s99 = sphi 0, %s97
      %s100 = sphi 0, %s99
      %s114 = sphi 0, %s100
      %s118 = sphi 0, %s118
      %s120 = sphi 0, %s118
      %s121 = sphi 0, %s120
      %s135 = sphi 0, %s121
      %s139 = sphi 0, %s139
      %s141 = sphi 0, %s139
      %s142 = sphi 0, %s141
      %s156 = sphi 0, %s142
      %s160 = sphi 0, %s160
      %s162 = sphi 0, %s160
      %s163 = sphi 0, %s162
      %s177 = sphi 0, %s163
      %s181 = sphi 0, %s181
      %s183 = sphi 0, %s181
      %s184 = sphi 0, %s183
      %s198 = sphi 0, %s184
      %s204 = sphi 0, %s206
      %s207 = sphi 0, %s204
      %s208 = sphi 0, %s207
      %s224 = sphi 0, %s208
    $region4: #{transformer_forward.3} parent=1 // loop_header_branch
      %19 = sbr.rel (%p17) target = $region8
    $region5: #{transformer_forward.3} parent=1 // loop_body
      %s21 = ssub.s32 %s16, 1
      %s22 = ssub.s32 %s16, 2
      %s23 = sadd.s32 %s16, 1
      %s24 = ssub.s32 %s16, %s23
      %p25 = scmp.eq.s32.totalorder %s24, 0
      %s27 = sadd.s32 %s26, 1
      %s28 = scalar_select %p25, %s26, %s27
      %p31 = pneg %p25
      %p32 = scmp.eq.s32.totalorder %s16, 1
      %p33 = por %p31, %p32
      %p34 = scmp.ne.s32.totalorder %s26, %s29
      %p35 = scmp.eq.s32.totalorder %s16, 0
      %p36 = por %p34, %p35
      %p37 = scmp.ne.s32.totalorder %s26, %s29
      %p38 = scmp.eq.s32.totalorder %s21, 1
      %p39 = por %p37, %p38
      %p40 = scmp.ne.s32.totalorder %s29, %s30
      %p41 = scmp.eq.s32.totalorder %s21, 0
      %p42 = por %p40, %p41
      %p43 = scmp.ne.s32.totalorder %s29, %s30
      %p44 = scmp.eq.s32.totalorder %s22, 1
      %p45 = por %p43, %p44
      %p47 = scmp.ne.s32.totalorder %s30, %s46
      %p48 = scmp.eq.s32.totalorder %s22, 0
      %p49 = por %p47, %p48
      %s50 = ssub.s32 %s16, %s23
      %p51 = scmp.eq.s32.totalorder %s50, 0
      %s53 = sadd.s32 %s52, 1
      %s54 = scalar_select %p51, %s52, %s53
      %p57 = pneg %p51
      %p58 = scmp.eq.s32.totalorder %s16, 1
      %p59 = por %p57, %p58
      %p60 = scmp.ne.s32.totalorder %s52, %s55
      %p61 = scmp.eq.s32.totalorder %s16, 0
      %p62 = por %p60, %p61
      %p63 = scmp.ne.s32.totalorder %s52, %s55
      %p64 = scmp.eq.s32.totalorder %s21, 1
      %p65 = por %p63, %p64
      %p66 = scmp.ne.s32.totalorder %s55, %s56
      %p67 = scmp.eq.s32.totalorder %s21, 0
      %p68 = por %p66, %p67
      %p69 = scmp.ne.s32.totalorder %s55, %s56
      %p70 = scmp.eq.s32.totalorder %s22, 1
      %p71 = por %p69, %p70
      %p73 = scmp.ne.s32.totalorder %s56, %s72
      %p74 = scmp.eq.s32.totalorder %s22, 0
      %p75 = por %p73, %p74
      %s77 = sadd.s32 %s76, 1
      %p80 = scmp.eq.s32.totalorder %s16, 1
      %p81 = scmp.ne.s32.totalorder %s76, %s78
      %p82 = scmp.eq.s32.totalorder %s16, 0
      %p83 = por %p81, %p82
      %p84 = scmp.ne.s32.totalorder %s76, %s78
      %p85 = scmp.eq.s32.totalorder %s21, 1
      %p86 = por %p84, %p85
      %p87 = scmp.ne.s32.totalorder %s78, %s79
      %p88 = scmp.eq.s32.totalorder %s21, 0
      %p89 = por %p87, %p88
      %p90 = scmp.ne.s32.totalorder %s78, %s79
      %p91 = scmp.eq.s32.totalorder %s22, 1
      %p92 = por %p90, %p91
      %p94 = scmp.ne.s32.totalorder %s79, %s93
      %p95 = scmp.eq.s32.totalorder %s22, 0
      %p96 = por %p94, %p95
      %s98 = sadd.s32 %s97, 1
      %p101 = scmp.eq.s32.totalorder %s16, 1
      %p102 = scmp.ne.s32.totalorder %s97, %s99
      %p103 = scmp.eq.s32.totalorder %s16, 0
      %p104 = por %p102, %p103
      %p105 = scmp.ne.s32.totalorder %s97, %s99
      %p106 = scmp.eq.s32.totalorder %s21, 1
      %p107 = por %p105, %p106
      %p108 = scmp.ne.s32.totalorder %s99, %s100
      %p109 = scmp.eq.s32.totalorder %s21, 0
      %p110 = por %p108, %p109
      %p111 = scmp.ne.s32.totalorder %s99, %s100
      %p112 = scmp.eq.s32.totalorder %s22, 1
      %p113 = por %p111, %p112
      %p115 = scmp.ne.s32.totalorder %s100, %s114
      %p116 = scmp.eq.s32.totalorder %s22, 0
      %p117 = por %p115, %p116
      %s119 = sadd.s32 %s118, 1
      %p122 = scmp.eq.s32.totalorder %s16, 1
      %p123 = scmp.ne.s32.totalorder %s118, %s120
      %p124 = scmp.eq.s32.totalorder %s16, 0
      %p125 = por %p123, %p124
      %p126 = scmp.ne.s32.totalorder %s118, %s120
      %p127 = scmp.eq.s32.totalorder %s21, 1
      %p128 = por %p126, %p127
      %p129 = scmp.ne.s32.totalorder %s120, %s121
      %p130 = scmp.eq.s32.totalorder %s21, 0
      %p131 = por %p129, %p130
      %p132 = scmp.ne.s32.totalorder %s120, %s121
      %p133 = scmp.eq.s32.totalorder %s22, 1
      %p134 = por %p132, %p133
      %p136 = scmp.ne.s32.totalorder %s121, %s135
      %p137 = scmp.eq.s32.totalorder %s22, 0
      %p138 = por %p136, %p137
      %s140 = sadd.s32 %s139, 1
      %p143 = scmp.eq.s32.totalorder %s16, 1
      %p144 = scmp.ne.s32.totalorder %s139, %s141
      %p145 = scmp.eq.s32.totalorder %s16, 0
      %p146 = por %p144, %p145
      %p147 = scmp.ne.s32.totalorder %s139, %s141
      %p148 = scmp.eq.s32.totalorder %s21, 1
      %p149 = por %p147, %p148
      %p150 = scmp.ne.s32.totalorder %s141, %s142
      %p151 = scmp.eq.s32.totalorder %s21, 0
      %p152 = por %p150, %p151
      %p153 = scmp.ne.s32.totalorder %s141, %s142
      %p154 = scmp.eq.s32.totalorder %s22, 1
      %p155 = por %p153, %p154
      %p157 = scmp.ne.s32.totalorder %s142, %s156
      %p158 = scmp.eq.s32.totalorder %s22, 0
      %p159 = por %p157, %p158
      %s161 = sadd.s32 %s160, 1
      %p164 = scmp.eq.s32.totalorder %s16, 1
      %p165 = scmp.ne.s32.totalorder %s160, %s162
      %p166 = scmp.eq.s32.totalorder %s16, 0
      %p167 = por %p165, %p166
      %p168 = scmp.ne.s32.totalorder %s160, %s162
      %p169 = scmp.eq.s32.totalorder %s21, 1
      %p170 = por %p168, %p169
      %p171 = scmp.ne.s32.totalorder %s162, %s163
      %p172 = scmp.eq.s32.totalorder %s21, 0
      %p173 = por %p171, %p172
      %p174 = scmp.ne.s32.totalorder %s162, %s163
      %p175 = scmp.eq.s32.totalorder %s22, 1
      %p176 = por %p174, %p175
      %p178 = scmp.ne.s32.totalorder %s163, %s177
      %p179 = scmp.eq.s32.totalorder %s22, 0
      %p180 = por %p178, %p179
      %s182 = sadd.s32 %s181, 1
      %p185 = scmp.eq.s32.totalorder %s16, 1
      %p186 = scmp.ne.s32.totalorder %s181, %s183
      %p187 = scmp.eq.s32.totalorder %s16, 0
      %p188 = por %p186, %p187
      %p189 = scmp.ne.s32.totalorder %s181, %s183
      %p190 = scmp.eq.s32.totalorder %s21, 1
      %p191 = por %p189, %p190
      %p192 = scmp.ne.s32.totalorder %s183, %s184
      %p193 = scmp.eq.s32.totalorder %s21, 0
      %p194 = por %p192, %p193
      %p195 = scmp.ne.s32.totalorder %s183, %s184
      %p196 = scmp.eq.s32.totalorder %s22, 1
      %p197 = por %p195, %p196
      %p199 = scmp.ne.s32.totalorder %s184, %s198
      %p200 = scmp.eq.s32.totalorder %s22, 0
      %p201 = por %p199, %p200
      %s202 = ssub.s32 %s16, %s23
      %p203 = scmp.eq.s32.totalorder %s202, 0
      %s205 = sadd.s32 %s204, 1
      %s206 = scalar_select %p203, %s204, %s205
      %p209 = pneg %p203
      %p210 = scmp.eq.s32.totalorder %s16, 1
      %p211 = por %p209, %p210
      %p212 = scmp.ne.s32.totalorder %s204, %s207
      %p213 = scmp.eq.s32.totalorder %s16, 0
      %p214 = por %p212, %p213
      %p215 = scmp.ne.s32.totalorder %s204, %s207
      %p216 = scmp.eq.s32.totalorder %s21, 1
      %p217 = por %p215, %p216
      %p218 = scmp.ne.s32.totalorder %s207, %s208
      %p219 = scmp.eq.s32.totalorder %s21, 0
      %p220 = por %p218, %p219
      %p221 = scmp.ne.s32.totalorder %s207, %s208
      %p222 = scmp.eq.s32.totalorder %s22, 1
      %p223 = por %p221, %p222
      %p225 = scmp.ne.s32.totalorder %s208, %s224
      %p226 = scmp.eq.s32.totalorder %s22, 0
      %p227 = por %p225, %p226
      %p228 = scmp.le.s32.totalorder 1, %s16
      %p229 = scmp.lt.s32.totalorder %s16, 3
      %p230 = pnand %p228, %p229
      %p231 = pneg %p230
      // Predicated region
      $region9: #{transformer_forward.3} parent=5 // pred_check
        _
      $region10: #{transformer_forward.3} parent=5 // pred_check_branch
        %233 = sbr.rel (%p230) target = $region12
      $region11: #{transformer_forward.3} parent=5 // pred_region
        %s234 = ssub.s32 %s16, 1
        // Predicated region
        $region13: #{transformer_forward.3} parent=11 // pred_check
          %p235 = pneg %p89
        $region14: #{transformer_forward.3} parent=11 // pred_check_branch
          %237 = sbr.rel (%p235) target = $region16
        $region15: #{transformer_forward.3} parent=11 // pred_region
          _
        $region16: #{transformer_forward.3} parent=11 // pred_fallthru
          _
        // Predicated region
        $region17: #{transformer_forward.3} parent=11 // pred_check
          %p238 = pneg %p110
        $region18: #{transformer_forward.3} parent=11 // pred_check_branch
          %240 = sbr.rel (%p238) target = $region20
        $region19: #{transformer_forward.3} parent=11 // pred_region
          _
        $region20: #{transformer_forward.3} parent=11 // pred_fallthru
          _
        // Predicated region
        $region21: #{transformer_forward.3} parent=11 // pred_check
          %p241 = pneg %p131
        $region22: #{transformer_forward.3} parent=11 // pred_check_branch
          %243 = sbr.rel (%p241) target = $region24
        $region23: #{transformer_forward.3} parent=11 // pred_region
          %s245 = ssub.s32 2048, 2048
          %246 = vsyncadd [#allocation4], %s245
          %s247 = sshll.u32 [#allocation3], 4
          %s248 = int_to_ptr.vmem [resolvable:$true] %s247
          %253 = dma.hbm_to_vmem [thread:$0]  %s4, 2048, %s248, [#allocation4], 128, 128, 8
        $region24: #{transformer_forward.3} parent=11 // pred_fallthru
          _
        // Predicated region
        $region25: #{transformer_forward.3} parent=11 // pred_check
          %p254 = pneg %p152
        $region26: #{transformer_forward.3} parent=11 // pred_check_branch
          %256 = sbr.rel (%p254) target = $region28
        $region27: #{transformer_forward.3} parent=11 // pred_region
          %s258 = ssub.s32 2048, 2048
          %259 = vsyncadd [#allocation6], %s258
          %s260 = sshll.u32 [#allocation5], 4
          %s261 = int_to_ptr.vmem [resolvable:$true] %s260
          %266 = dma.hbm_to_vmem [thread:$0]  %s5, 2048, %s261, [#allocation6], 128, 128, 8
        $region28: #{transformer_forward.3} parent=11 // pred_fallthru
          _
        // Predicated region
        $region29: #{transformer_forward.3} parent=11 // pred_check
          %p267 = pneg %p173
        $region30: #{transformer_forward.3} parent=11 // pred_check_branch
          %269 = sbr.rel (%p267) target = $region32
        $region31: #{transformer_forward.3} parent=11 // pred_region
          _
        $region32: #{transformer_forward.3} parent=11 // pred_fallthru
          _
        // Predicated region
        $region33: #{transformer_forward.3} parent=11 // pred_check
          %p270 = pneg %p194
        $region34: #{transformer_forward.3} parent=11 // pred_check_branch
          %272 = sbr.rel (%p270) target = $region36
        $region35: #{transformer_forward.3} parent=11 // pred_region
          _
        $region36: #{transformer_forward.3} parent=11 // pred_fallthru
          _
      $region12: #{transformer_forward.3} parent=5 // pred_fallthru
        _
      %p273 = scmp.lt.s32.totalorder %s16, 2
      // Predicated region
      $region37: #{transformer_forward.3} parent=5 // pred_check
        %p274 = pneg %p273
      $region38: #{transformer_forward.3} parent=5 // pred_check_branch
        %276 = sbr.rel (%p274) target = $region40
      $region39: #{transformer_forward.3} parent=5 // pred_region
        // Predicated region
        $region41: #{transformer_forward.3} parent=39 // pred_check
          %p277 = pneg %p36
        $region42: #{transformer_forward.3} parent=39 // pred_check_branch
          %279 = sbr.rel (%p277) target = $region44
        $region43: #{transformer_forward.3} parent=39 // pred_region
          %p280 = scmp.lt.s32.totalorder %s16, 1
          %s281 = scalar_select %p280, %s16, 1
          %s282 = smul.addr %s281, 8
          %s283 = scalar_lea.vmem %s0, %s282
        $region44: #{transformer_forward.3} parent=39 // pred_fallthru
          _
        // Predicated region
        $region45: #{transformer_forward.3} parent=39 // pred_check
          %p284 = pneg %p62
        $region46: #{transformer_forward.3} parent=39 // pred_check_branch
          %286 = sbr.rel (%p284) target = $region48
        $region47: #{transformer_forward.3} parent=39 // pred_region
          %p287 = scmp.lt.s32.totalorder %s16, 1
          %s288 = scalar_select %p287, %s16, 1
          %s289 = smul.addr %s288, 8
          %s290 = scalar_lea.vmem %s1, %s289
        $region48: #{transformer_forward.3} parent=39 // pred_fallthru
          _
      $region40: #{transformer_forward.3} parent=5 // pred_fallthru
        _
      %p291 = scmp.le.s32.totalorder 1, %s16
      %p292 = scmp.lt.s32.totalorder %s16, 3
      %p293 = pnand %p291, %p292
      %p294 = pneg %p293
      // Predicated region
      $region49: #{transformer_forward.3} parent=5 // pred_check
        _
      $region50: #{transformer_forward.3} parent=5 // pred_check_branch
        %296 = sbr.rel (%p293) target = $region52
      $region51: #{transformer_forward.3} parent=5 // pred_region
        %s297 = ssub.s32 %s16, 1
        // Predicated region
        $region53: #{transformer_forward.3} parent=51 // pred_check
          %p298 = pneg %p131
        $region54: #{transformer_forward.3} parent=51 // pred_check_branch
          %300 = sbr.rel (%p298) target = $region56
        $region55: #{transformer_forward.3} parent=51 // pred_region
          %301 = dma.done [#allocation4], 2048
        $region56: #{transformer_forward.3} parent=51 // pred_fallthru
          _
        // Predicated region
        $region57: #{transformer_forward.3} parent=51 // pred_check
          %p302 = pneg %p152
        $region58: #{transformer_forward.3} parent=51 // pred_check_branch
          %304 = sbr.rel (%p302) target = $region60
        $region59: #{transformer_forward.3} parent=51 // pred_region
          %305 = dma.done [#allocation6], 2048
        $region60: #{transformer_forward.3} parent=51 // pred_fallthru
          _
        %p306 = scmp.lt.s32.totalorder %s21, 1
        %s307 = scalar_select %p306, %s21, 1
        %s308 = smul.addr %s307, 8
        %s309 = scalar_lea.vmem %s0, %s308
        %p310 = pneg %p42
        %p311 = pneg %p39
        %p312 = scmp.lt.s32.totalorder %s21, 1
        %s313 = scalar_select %p312, %s21, 1
        %s314 = smul.addr %s313, 8
        %s315 = scalar_lea.vmem %s1, %s314
        %p316 = pneg %p68
        %p317 = pneg %p65
        %p318 = pneg %p89
        %p319 = pneg %p86
        %p320 = pneg %p110
        %p321 = pneg %p107
        %p322 = pneg %p131
        %p323 = pneg %p128
        %p324 = pneg %p152
        %p325 = pneg %p149
        %p326 = pneg %p173
        %p327 = pneg %p170
        %p328 = pneg %p194
        %p329 = pneg %p191
        %p330 = pneg %p220
        %p331 = pneg %p217
        %p332 = scmp.lt.s32.totalorder %s21, 1
        %s333 = scalar_select %p332, %s21, 1
        %s334 = smul.addr %s333, 8
        %s335 = scalar_lea.vmem %s8, %s334
        %p336 = scmp.lt.s32.totalorder %s21, 1
        %s337 = scalar_select %p336, %s21, 1
        %s338 = smul.addr %s337, 8
        %s339 = scalar_lea.vmem %s0, %s338
        %p340 = scmp.lt.s32.totalorder %s21, 1
        %s341 = scalar_select %p340, %s21, 1
        %s342 = smul.addr %s341, 8
        %s343 = scalar_lea.vmem %s1, %s342
        %p344 = scmp.lt.s32.totalorder %s21, 1
        %s345 = scalar_select %p344, %s21, 1
        %s346 = smul.addr %s345, 8
        %s347 = scalar_lea.vmem %s8, %s346
        %v348 = vld [vmem:[%s2] sm:$0xff]
        %v349 = vld [vmem:[%s2 + $0x8] sm:$0xff]
        %v350 = vld [vmem:[%s2 + $0x10] sm:$0xff]
        %v351 = vld [vmem:[%s2 + $0x18] sm:$0xff]
        %v352 = vld [vmem:[%s2 + $0x20] sm:$0xff]
        %v353 = vld [vmem:[%s2 + $0x28] sm:$0xff]
        %v354 = vld [vmem:[%s2 + $0x30] sm:$0xff]
        %v355 = vld [vmem:[%s2 + $0x38] sm:$0xff]
        %v356 = vld [vmem:[%s2 + $0x40] sm:$0xff]
        %v357 = vld [vmem:[%s2 + $0x48] sm:$0xff]
        %v358 = vld [vmem:[%s2 + $0x50] sm:$0xff]
        %v359 = vld [vmem:[%s2 + $0x58] sm:$0xff]
        %v360 = vld [vmem:[%s2 + $0x60] sm:$0xff]
        %v361 = vld [vmem:[%s2 + $0x68] sm:$0xff]
        %v362 = vld [vmem:[%s2 + $0x70] sm:$0xff]
        %v363 = vld [vmem:[%s2 + $0x78] sm:$0xff]
        %v364 = vld [vmem:[%s3] sm:$0xff]
        %v365 = vld [vmem:[%s3 + $0x8] sm:$0xff]
        %v366 = vld [vmem:[%s3 + $0x10] sm:$0xff]
        %v367 = vld [vmem:[%s3 + $0x18] sm:$0xff]
        %v368 = vld [vmem:[%s3 + $0x20] sm:$0xff]
        %v369 = vld [vmem:[%s3 + $0x28] sm:$0xff]
        %v370 = vld [vmem:[%s3 + $0x30] sm:$0xff]
        %v371 = vld [vmem:[%s3 + $0x38] sm:$0xff]
        %v372 = vld [vmem:[%s3 + $0x40] sm:$0xff]
        %v373 = vld [vmem:[%s3 + $0x48] sm:$0xff]
        %v374 = vld [vmem:[%s3 + $0x50] sm:$0xff]
        %v375 = vld [vmem:[%s3 + $0x58] sm:$0xff]
        %v376 = vld [vmem:[%s3 + $0x60] sm:$0xff]
        %v377 = vld [vmem:[%s3 + $0x68] sm:$0xff]
        %v378 = vld [vmem:[%s3 + $0x70] sm:$0xff]
        %v379 = vld [vmem:[%s3 + $0x78] sm:$0xff]
        %v380 = vld [vmem:[#allocation3] sm:$0xff]
        %v381 = vld [vmem:[#allocation3 + $0x8] sm:$0xff]
        %v382 = vld [vmem:[#allocation3 + $0x10] sm:$0xff]
        %v383 = vld [vmem:[#allocation3 + $0x18] sm:$0xff]
        %v384 = vld [vmem:[#allocation3 + $0x20] sm:$0xff]
        %v385 = vld [vmem:[#allocation3 + $0x28] sm:$0xff]
        %v386 = vld [vmem:[#allocation3 + $0x30] sm:$0xff]
        %v387 = vld [vmem:[#allocation3 + $0x38] sm:$0xff]
        %v388 = vld [vmem:[#allocation3 + $0x40] sm:$0xff]
        %v389 = vld [vmem:[#allocation3 + $0x48] sm:$0xff]
        %v390 = vld [vmem:[#allocation3 + $0x50] sm:$0xff]
        %v391 = vld [vmem:[#allocation3 + $0x58] sm:$0xff]
        %v392 = vld [vmem:[#allocation3 + $0x60] sm:$0xff]
        %v393 = vld [vmem:[#allocation3 + $0x68] sm:$0xff]
        %v394 = vld [vmem:[#allocation3 + $0x70] sm:$0xff]
        %v395 = vld [vmem:[#allocation3 + $0x78] sm:$0xff]
        %v396 = vld [vmem:[#allocation5] sm:$0xff]
        %v397 = vld [vmem:[#allocation5 + $0x8] sm:$0xff]
        %v398 = vld [vmem:[#allocation5 + $0x10] sm:$0xff]
        %v399 = vld [vmem:[#allocation5 + $0x18] sm:$0xff]
        %v400 = vld [vmem:[#allocation5 + $0x20] sm:$0xff]
        %v401 = vld [vmem:[#allocation5 + $0x28] sm:$0xff]
        %v402 = vld [vmem:[#allocation5 + $0x30] sm:$0xff]
        %v403 = vld [vmem:[#allocation5 + $0x38] sm:$0xff]
        %v404 = vld [vmem:[#allocation5 + $0x40] sm:$0xff]
        %v405 = vld [vmem:[#allocation5 + $0x48] sm:$0xff]
        %v406 = vld [vmem:[#allocation5 + $0x50] sm:$0xff]
        %v407 = vld [vmem:[#allocation5 + $0x58] sm:$0xff]
        %v408 = vld [vmem:[#allocation5 + $0x60] sm:$0xff]
        %v409 = vld [vmem:[#allocation5 + $0x68] sm:$0xff]
        %v410 = vld [vmem:[#allocation5 + $0x70] sm:$0xff]
        %v411 = vld [vmem:[#allocation5 + $0x78] sm:$0xff]
        %v412 = vld [vmem:[%s6] sm:$0xff]
        %v413 = vld [vmem:[%s6 + $0x8] sm:$0xff]
        %v414 = vld [vmem:[%s6 + $0x10] sm:$0xff]
        %v415 = vld [vmem:[%s6 + $0x18] sm:$0xff]
        %v416 = vld [vmem:[%s6 + $0x20] sm:$0xff]
        %v417 = vld [vmem:[%s6 + $0x28] sm:$0xff]
        %v418 = vld [vmem:[%s6 + $0x30] sm:$0xff]
        %v419 = vld [vmem:[%s6 + $0x38] sm:$0xff]
        %v420 = vld [vmem:[%s6 + $0x40] sm:$0xff]
        %v421 = vld [vmem:[%s6 + $0x48] sm:$0xff]
        %v422 = vld [vmem:[%s6 + $0x50] sm:$0xff]
        %v423 = vld [vmem:[%s6 + $0x58] sm:$0xff]
        %v424 = vld [vmem:[%s6 + $0x60] sm:$0xff]
        %v425 = vld [vmem:[%s6 + $0x68] sm:$0xff]
        %v426 = vld [vmem:[%s6 + $0x70] sm:$0xff]
        %v427 = vld [vmem:[%s6 + $0x78] sm:$0xff]
        %v428 = vld [vmem:[%s6 + $0x80] sm:$0xff]
        %v429 = vld [vmem:[%s6 + $0x88] sm:$0xff]
        %v430 = vld [vmem:[%s6 + $0x90] sm:$0xff]
        %v431 = vld [vmem:[%s6 + $0x98] sm:$0xff]
        %v432 = vld [vmem:[%s6 + $0xa0] sm:$0xff]
        %v433 = vld [vmem:[%s6 + $0xa8] sm:$0xff]
        %v434 = vld [vmem:[%s6 + $0xb0] sm:$0xff]
        %v435 = vld [vmem:[%s6 + $0xb8] sm:$0xff]
        %v436 = vld [vmem:[%s6 + $0xc0] sm:$0xff]
        %v437 = vld [vmem:[%s6 + $0xc8] sm:$0xff]
        %v438 = vld [vmem:[%s6 + $0xd0] sm:$0xff]
        %v439 = vld [vmem:[%s6 + $0xd8] sm:$0xff]
        %v440 = vld [vmem:[%s6 + $0xe0] sm:$0xff]
        %v441 = vld [vmem:[%s6 + $0xe8] sm:$0xff]
        %v442 = vld [vmem:[%s6 + $0xf0] sm:$0xff]
        %v443 = vld [vmem:[%s6 + $0xf8] sm:$0xff]
        %v444 = vld [vmem:[%s7] sm:$0xff]
        %v445 = vld [vmem:[%s7 + $0x8] sm:$0xff]
        %v446 = vld [vmem:[%s7 + $0x10] sm:$0xff]
        %v447 = vld [vmem:[%s7 + $0x18] sm:$0xff]
        %v448 = vld [vmem:[%s7 + $0x20] sm:$0xff]
        %v449 = vld [vmem:[%s7 + $0x28] sm:$0xff]
        %v450 = vld [vmem:[%s7 + $0x30] sm:$0xff]
        %v451 = vld [vmem:[%s7 + $0x38] sm:$0xff]
        %v452 = vld [vmem:[%s7 + $0x40] sm:$0xff]
        %v453 = vld [vmem:[%s7 + $0x48] sm:$0xff]
        %v454 = vld [vmem:[%s7 + $0x50] sm:$0xff]
        %v455 = vld [vmem:[%s7 + $0x58] sm:$0xff]
        %v456 = vld [vmem:[%s7 + $0x60] sm:$0xff]
        %v457 = vld [vmem:[%s7 + $0x68] sm:$0xff]
        %v458 = vld [vmem:[%s7 + $0x70] sm:$0xff]
        %v459 = vld [vmem:[%s7 + $0x78] sm:$0xff]
        %v460 = vld [vmem:[%s7 + $0x80] sm:$0xff]
        %v461 = vld [vmem:[%s7 + $0x88] sm:$0xff]
        %v462 = vld [vmem:[%s7 + $0x90] sm:$0xff]
        %v463 = vld [vmem:[%s7 + $0x98] sm:$0xff]
        %v464 = vld [vmem:[%s7 + $0xa0] sm:$0xff]
        %v465 = vld [vmem:[%s7 + $0xa8] sm:$0xff]
        %v466 = vld [vmem:[%s7 + $0xb0] sm:$0xff]
        %v467 = vld [vmem:[%s7 + $0xb8] sm:$0xff]
        %v468 = vld [vmem:[%s7 + $0xc0] sm:$0xff]
        %v469 = vld [vmem:[%s7 + $0xc8] sm:$0xff]
        %v470 = vld [vmem:[%s7 + $0xd0] sm:$0xff]
        %v471 = vld [vmem:[%s7 + $0xd8] sm:$0xff]
        %v472 = vld [vmem:[%s7 + $0xe0] sm:$0xff]
        %v473 = vld [vmem:[%s7 + $0xe8] sm:$0xff]
        %v474 = vld [vmem:[%s7 + $0xf0] sm:$0xff]
        %v475 = vld [vmem:[%s7 + $0xf8] sm:$0xff]
        %v476 = vld [vmem:[%s339] sm:$0xff]
        %v477 = vld [vmem:[%s343] sm:$0xff]
        %478 = vmatprep.subr.mxu0 0.0
        %479 = vmatpush1.msra.mxu0 %v348
        %480 = vmatprep.subr.mxu0 0.0
        %481 = vmatpush1.msra.mxu0 %v349
        %482 = vmatprep.subr.mxu0 0.0
        %483 = vmatpush1.msra.mxu0 %v350
        %484 = vmatprep.subr.mxu0 0.0
        %485 = vmatpush1.msra.mxu0 %v351
        %486 = vmatprep.subr.mxu0 0.0
        %487 = vmatpush1.msra.mxu0 %v352
        %488 = vmatprep.subr.mxu0 0.0
        %489 = vmatpush1.msra.mxu0 %v353
        %490 = vmatprep.subr.mxu0 0.0
        %491 = vmatpush1.msra.mxu0 %v354
        %492 = vmatprep.subr.mxu0 0.0
        %493 = vmatpush1.msra.mxu0 %v355
        %494 = vmatprep.subr.mxu0 0.0
        %495 = vmatpush1.msra.mxu0 %v356
        %496 = vmatprep.subr.mxu0 0.0
        %497 = vmatpush1.msra.mxu0 %v357
        %498 = vmatprep.subr.mxu0 0.0
        %499 = vmatpush1.msra.mxu0 %v358
        %500 = vmatprep.subr.mxu0 0.0
        %501 = vmatpush1.msra.mxu0 %v359
        %502 = vmatprep.subr.mxu0 0.0
        %503 = vmatpush1.msra.mxu0 %v360
        %504 = vmatprep.subr.mxu0 0.0
        %505 = vmatpush1.msra.mxu0 %v361
        %506 = vmatprep.subr.mxu0 0.0
        %507 = vmatpush1.msra.mxu0 %v362
        %508 = vmatprep.subr.mxu0 0.0
        %509 = vmatpush1.msra.mxu0 %v363
        %510 = vmatprep.subr.mxu0 0.0
        %511 = vmatpush1.msra.mxu0 0.0
        %512 = vmatprep.subr.mxu0 0.0
        %513 = vmatpush1.msra.mxu0 0.0
        %514 = vmatprep.subr.mxu0 0.0
        %515 = vmatpush1.msra.mxu0 0.0
        %516 = vmatprep.subr.mxu0 0.0
        %517 = vmatpush1.msra.mxu0 0.0
        %518 = vmatprep.subr.mxu0 0.0
        %519 = vmatpush1.msra.mxu0 0.0
        %520 = vmatprep.subr.mxu0 0.0
        %521 = vmatpush1.msra.mxu0 0.0
        %522 = vmatprep.subr.mxu0 0.0
        %523 = vmatpush1.msra.mxu0 0.0
        %524 = vmatprep.subr.mxu0 0.0
        %525 = vmatpush1.msra.mxu0 0.0
        %526 = vmatprep.subr.mxu0 0.0
        %527 = vmatpush1.msra.mxu0 0.0
        %528 = vmatprep.subr.mxu0 0.0
        %529 = vmatpush1.msra.mxu0 0.0
        %530 = vmatprep.subr.mxu0 0.0
        %531 = vmatpush1.msra.mxu0 0.0
        %532 = vmatprep.subr.mxu0 0.0
        %533 = vmatpush1.msra.mxu0 0.0
        %534 = vmatprep.subr.mxu0 0.0
        %535 = vmatpush1.msra.mxu0 0.0
        %536 = vmatprep.subr.mxu0 0.0
        %537 = vmatpush1.msra.mxu0 0.0
        %538 = vmatprep.subr.mxu0 0.0
        %539 = vmatpush1.msra.mxu0 0.0
        %540 = vmatprep.subr.mxu0 0.0
        %541 = vmatpush1.msra.mxu0 0.0
        %542 = vmatprep.mubr.f32.mxu0 0.0
        %543 = vmatmul.mubr.f32.gmra.mrb[0].mxu0 %v476
        %v544 = vpop.f32.mrb[0].mxu0
        %v545 = vadd.f32 0.0, %v544
        %v546 = vpop.f32.mrb[0].mxu0
        %547 = vdwg.mxu0
        %548 = vmatprep.subr.mxu0 0.0
        %549 = vmatpush1.msra.mxu0 %v364
        %550 = vmatprep.subr.mxu0 0.0
        %551 = vmatpush1.msra.mxu0 %v365
        %552 = vmatprep.subr.mxu0 0.0
        %553 = vmatpush1.msra.mxu0 %v366
        %554 = vmatprep.subr.mxu0 0.0
        %555 = vmatpush1.msra.mxu0 %v367
        %556 = vmatprep.subr.mxu0 0.0
        %557 = vmatpush1.msra.mxu0 %v368
        %558 = vmatprep.subr.mxu0 0.0
        %559 = vmatpush1.msra.mxu0 %v369
        %560 = vmatprep.subr.mxu0 0.0
        %561 = vmatpush1.msra.mxu0 %v370
        %562 = vmatprep.subr.mxu0 0.0
        %563 = vmatpush1.msra.mxu0 %v371
        %564 = vmatprep.subr.mxu0 0.0
        %565 = vmatpush1.msra.mxu0 %v372
        %566 = vmatprep.subr.mxu0 0.0
        %567 = vmatpush1.msra.mxu0 %v373
        %568 = vmatprep.subr.mxu0 0.0
        %569 = vmatpush1.msra.mxu0 %v374
        %570 = vmatprep.subr.mxu0 0.0
        %571 = vmatpush1.msra.mxu0 %v375
        %572 = vmatprep.subr.mxu0 0.0
        %573 = vmatpush1.msra.mxu0 %v376
        %574 = vmatprep.subr.mxu0 0.0
        %575 = vmatpush1.msra.mxu0 %v377
        %576 = vmatprep.subr.mxu0 0.0
        %577 = vmatpush1.msra.mxu0 %v378
        %578 = vmatprep.subr.mxu0 0.0
        %579 = vmatpush1.msra.mxu0 %v379
        %580 = vmatprep.subr.mxu0 0.0
        %581 = vmatpush1.msra.mxu0 0.0
        %582 = vmatprep.subr.mxu0 0.0
        %583 = vmatpush1.msra.mxu0 0.0
        %584 = vmatprep.subr.mxu0 0.0
        %585 = vmatpush1.msra.mxu0 0.0
        %586 = vmatprep.subr.mxu0 0.0
        %587 = vmatpush1.msra.mxu0 0.0
        %588 = vmatprep.subr.mxu0 0.0
        %589 = vmatpush1.msra.mxu0 0.0
        %590 = vmatprep.subr.mxu0 0.0
        %591 = vmatpush1.msra.mxu0 0.0
        %592 = vmatprep.subr.mxu0 0.0
        %593 = vmatpush1.msra.mxu0 0.0
        %594 = vmatprep.subr.mxu0 0.0
        %595 = vmatpush1.msra.mxu0 0.0
        %596 = vmatprep.subr.mxu0 0.0
        %597 = vmatpush1.msra.mxu0 0.0
        %598 = vmatprep.subr.mxu0 0.0
        %599 = vmatpush1.msra.mxu0 0.0
        %600 = vmatprep.subr.mxu0 0.0
        %601 = vmatpush1.msra.mxu0 0.0
        %602 = vmatprep.subr.mxu0 0.0
        %603 = vmatpush1.msra.mxu0 0.0
        %604 = vmatprep.subr.mxu0 0.0
        %605 = vmatpush1.msra.mxu0 0.0
        %606 = vmatprep.subr.mxu0 0.0
        %607 = vmatpush1.msra.mxu0 0.0
        %608 = vmatprep.subr.mxu0 0.0
        %609 = vmatpush1.msra.mxu0 0.0
        %610 = vmatprep.subr.mxu0 0.0
        %611 = vmatpush1.msra.mxu0 0.0
        %612 = vmatprep.mubr.f32.mxu0 0.0
        %613 = vmatmul.mubr.f32.gmra.mrb[0].mxu0 %v476
        %v614 = vpop.f32.mrb[0].mxu0
        %v615 = vadd.f32 0.0, %v614
        %v616 = vpop.f32.mrb[0].mxu0
        %617 = vdwg.mxu0
        %618 = vmatprep.subr.mxu0 0.0
        %619 = vmatpush1.msra.mxu0 %v380
        %620 = vmatprep.subr.mxu0 0.0
        %621 = vmatpush1.msra.mxu0 %v381
        %622 = vmatprep.subr.mxu0 0.0
        %623 = vmatpush1.msra.mxu0 %v382
        %624 = vmatprep.subr.mxu0 0.0
        %625 = vmatpush1.msra.mxu0 %v383
        %626 = vmatprep.subr.mxu0 0.0
        %627 = vmatpush1.msra.mxu0 %v384
        %628 = vmatprep.subr.mxu0 0.0
        %629 = vmatpush1.msra.mxu0 %v385
        %630 = vmatprep.subr.mxu0 0.0
        %631 = vmatpush1.msra.mxu0 %v386
        %632 = vmatprep.subr.mxu0 0.0
        %633 = vmatpush1.msra.mxu0 %v387
        %634 = vmatprep.subr.mxu0 0.0
        %635 = vmatpush1.msra.mxu0 %v388
        %636 = vmatprep.subr.mxu0 0.0
        %637 = vmatpush1.msra.mxu0 %v389
        %638 = vmatprep.subr.mxu0 0.0
        %639 = vmatpush1.msra.mxu0 %v390
        %640 = vmatprep.subr.mxu0 0.0
        %641 = vmatpush1.msra.mxu0 %v391
        %642 = vmatprep.subr.mxu0 0.0
        %643 = vmatpush1.msra.mxu0 %v392
        %644 = vmatprep.subr.mxu0 0.0
        %645 = vmatpush1.msra.mxu0 %v393
        %646 = vmatprep.subr.mxu0 0.0
        %647 = vmatpush1.msra.mxu0 %v394
        %648 = vmatprep.subr.mxu0 0.0
        %649 = vmatpush1.msra.mxu0 %v395
        %650 = vmatprep.subr.mxu0 0.0
        %651 = vmatpush1.msra.mxu0 0.0
        %652 = vmatprep.subr.mxu0 0.0
        %653 = vmatpush1.msra.mxu0 0.0
        %654 = vmatprep.subr.mxu0 0.0
        %655 = vmatpush1.msra.mxu0 0.0
        %656 = vmatprep.subr.mxu0 0.0
        %657 = vmatpush1.msra.mxu0 0.0
        %658 = vmatprep.subr.mxu0 0.0
        %659 = vmatpush1.msra.mxu0 0.0
        %660 = vmatprep.subr.mxu0 0.0
        %661 = vmatpush1.msra.mxu0 0.0
        %662 = vmatprep.subr.mxu0 0.0
        %663 = vmatpush1.msra.mxu0 0.0
        %664 = vmatprep.subr.mxu0 0.0
        %665 = vmatpush1.msra.mxu0 0.0
        %666 = vmatprep.subr.mxu0 0.0
        %667 = vmatpush1.msra.mxu0 0.0
        %668 = vmatprep.subr.mxu0 0.0
        %669 = vmatpush1.msra.mxu0 0.0
        %670 = vmatprep.subr.mxu0 0.0
        %671 = vmatpush1.msra.mxu0 0.0
        %672 = vmatprep.subr.mxu0 0.0
        %673 = vmatpush1.msra.mxu0 0.0
        %674 = vmatprep.subr.mxu0 0.0
        %675 = vmatpush1.msra.mxu0 0.0
        %676 = vmatprep.subr.mxu0 0.0
        %677 = vmatpush1.msra.mxu0 0.0
        %678 = vmatprep.subr.mxu0 0.0
        %679 = vmatpush1.msra.mxu0 0.0
        %680 = vmatprep.subr.mxu0 0.0
        %681 = vmatpush1.msra.mxu0 0.0
        %682 = vmatprep.mubr.f32.mxu0 0.0
        %683 = vmatmul.mubr.f32.gmra.mrb[0].mxu0 %v476
        %v684 = vpop.f32.mrb[0].mxu0
        %v685 = vadd.f32 0.0, %v684
        %v686 = vpop.f32.mrb[0].mxu0
        %687 = vdwg.mxu0
        %689 = vrot.lane.b32.xlu0 %v545, 112
        %v690 = vpop.permute.xlu0 %689
        %691 = vrot.lane.b32.xlu0 %v545, 96
        %v692 = vpop.permute.xlu0 %691
        %693 = vrot.lane.b32.xlu0 %v545, 80
        %v694 = vpop.permute.xlu0 %693
        %695 = vrot.lane.b32.xlu0 %v545, 64
        %v696 = vpop.permute.xlu0 %695
        %697 = vrot.lane.b32.xlu0 %v545, 48
        %v698 = vpop.permute.xlu0 %697
        %699 = vrot.lane.b32.xlu0 %v545, 32
        %v700 = vpop.permute.xlu0 %699
        %701 = vrot.lane.b32.xlu0 %v545, 16
        %v702 = vpop.permute.xlu0 %701
        %704 = vrot.lane.b32.xlu0 %v615, 112
        %v705 = vpop.permute.xlu0 %704
        %706 = vrot.lane.b32.xlu0 %v615, 96
        %v707 = vpop.permute.xlu0 %706
        %708 = vrot.lane.b32.xlu0 %v615, 80
        %v709 = vpop.permute.xlu0 %708
        %710 = vrot.lane.b32.xlu0 %v615, 64
        %v711 = vpop.permute.xlu0 %710
        %712 = vrot.lane.b32.xlu0 %v615, 48
        %v713 = vpop.permute.xlu0 %712
        %714 = vrot.lane.b32.xlu0 %v615, 32
        %v715 = vpop.permute.xlu0 %714
        %716 = vrot.lane.b32.xlu0 %v615, 16
        %v717 = vpop.permute.xlu0 %716
        %719 = vrot.lane.b32.xlu0 %v685, 112
        %v720 = vpop.permute.xlu0 %719
        %722 = vrot.lane.b32.xlu0 %v685, 96
        %v723 = vpop.permute.xlu0 %722
        %725 = vrot.lane.b32.xlu0 %v685, 80
        %v726 = vpop.permute.xlu0 %725
        %728 = vrot.lane.b32.xlu0 %v685, 64
        %v729 = vpop.permute.xlu0 %728
        %731 = vrot.lane.b32.xlu0 %v685, 48
        %v732 = vpop.permute.xlu0 %731
        %734 = vrot.lane.b32.xlu0 %v685, 32
        %v735 = vpop.permute.xlu0 %734
        %737 = vrot.lane.b32.xlu0 %v685, 16
        %v738 = vpop.permute.xlu0 %737
        %vm740 = vcmask 130048
        %v741 = vsel %vm740, %v545, 0
        %v743 = vsel %vm740, %v615, 0
        %745 = vmatprep.subr.mxu0 0.0
        %746 = vmatpush1.xpose.msra.mxu0 %v743
        %747 = vmatprep.subr.mxu0 0.0
        %748 = vmatpush1.xpose.msra.mxu0 0.0
        %749 = vmatprep.subr.mxu0 0.0
        %750 = vmatpush1.xpose.msra.mxu0 0.0
        %751 = vmatprep.subr.mxu0 0.0
        %752 = vmatpush1.xpose.msra.mxu0 0.0
        %753 = vmatprep.subr.mxu0 0.0
        %754 = vmatpush1.xpose.msra.mxu0 0.0
        %755 = vmatprep.subr.mxu0 0.0
        %756 = vmatpush1.xpose.msra.mxu0 0.0
        %757 = vmatprep.subr.mxu0 0.0
        %758 = vmatpush1.xpose.msra.mxu0 0.0
        %759 = vmatprep.subr.mxu0 0.0
        %760 = vmatpush1.xpose.msra.mxu0 0.0
        %761 = vmatprep.subr.mxu0 0.0
        %762 = vmatpush1.xpose.msra.mxu0 0.0
        %763 = vmatprep.subr.mxu0 0.0
        %764 = vmatpush1.xpose.msra.mxu0 0.0
        %765 = vmatprep.subr.mxu0 0.0
        %766 = vmatpush1.xpose.msra.mxu0 0.0
        %767 = vmatprep.subr.mxu0 0.0
        %768 = vmatpush1.xpose.msra.mxu0 0.0
        %769 = vmatprep.subr.mxu0 0.0
        %770 = vmatpush1.xpose.msra.mxu0 0.0
        %771 = vmatprep.subr.mxu0 0.0
        %772 = vmatpush1.xpose.msra.mxu0 0.0
        %773 = vmatprep.subr.mxu0 0.0
        %774 = vmatpush1.xpose.msra.mxu0 0.0
        %775 = vmatprep.subr.mxu0 0.0
        %776 = vmatpush1.xpose.msra.mxu0 0.0
        %777 = vmatprep.subr.mxu0 0.0
        %778 = vmatpush1.xpose.msra.mxu0 0.0
        %779 = vmatprep.subr.mxu0 0.0
        %780 = vmatpush1.xpose.msra.mxu0 0.0
        %781 = vmatprep.subr.mxu0 0.0
        %782 = vmatpush1.xpose.msra.mxu0 0.0
        %783 = vmatprep.subr.mxu0 0.0
        %784 = vmatpush1.xpose.msra.mxu0 0.0
        %785 = vmatprep.subr.mxu0 0.0
        %786 = vmatpush1.xpose.msra.mxu0 0.0
        %787 = vmatprep.subr.mxu0 0.0
        %788 = vmatpush1.xpose.msra.mxu0 0.0
        %789 = vmatprep.subr.mxu0 0.0
        %790 = vmatpush1.xpose.msra.mxu0 0.0
        %791 = vmatprep.subr.mxu0 0.0
        %792 = vmatpush1.xpose.msra.mxu0 0.0
        %793 = vmatprep.subr.mxu0 0.0
        %794 = vmatpush1.xpose.msra.mxu0 0.0
        %795 = vmatprep.subr.mxu0 0.0
        %796 = vmatpush1.xpose.msra.mxu0 0.0
        %797 = vmatprep.subr.mxu0 0.0
        %798 = vmatpush1.xpose.msra.mxu0 0.0
        %799 = vmatprep.subr.mxu0 0.0
        %800 = vmatpush1.xpose.msra.mxu0 0.0
        %801 = vmatprep.subr.mxu0 0.0
        %802 = vmatpush1.xpose.msra.mxu0 0.0
        %803 = vmatprep.subr.mxu0 0.0
        %804 = vmatpush1.xpose.msra.mxu0 0.0
        %805 = vmatprep.subr.mxu0 0.0
        %806 = vmatpush1.xpose.msra.mxu0 0.0
        %807 = vmatprep.subr.mxu0 0.0
        %808 = vmatpush1.xpose.msra.mxu0 0.0
        %809 = vmatprep.mubr.f32.mxu0 0.0
        %810 = vmatmul.mubr.f32.gmra.mrb[0].mxu0 %v741
        %v811 = vpop.f32.mrb[0].mxu0
        %v812 = vadd.f32 %v477, %v811
        %v813 = vpop.f32.mrb[0].mxu0
        %814 = vdwg.mxu0
        %v815 = vsel %vm740, %v690, 0
        %v817 = vsel %vm740, %v705, 0
        %819 = vmatprep.subr.mxu0 0.0
        %820 = vmatpush1.xpose.msra.mxu0 %v817
        %821 = vmatprep.subr.mxu0 0.0
        %822 = vmatpush1.xpose.msra.mxu0 0.0
        %823 = vmatprep.subr.mxu0 0.0
        %824 = vmatpush1.xpose.msra.mxu0 0.0
        %825 = vmatprep.subr.mxu0 0.0
        %826 = vmatpush1.xpose.msra.mxu0 0.0
        %827 = vmatprep.subr.mxu0 0.0
        %828 = vmatpush1.xpose.msra.mxu0 0.0
        %829 = vmatprep.subr.mxu0 0.0
        %830 = vmatpush1.xpose.msra.mxu0 0.0
        %831 = vmatprep.subr.mxu0 0.0
        %832 = vmatpush1.xpose.msra.mxu0 0.0
        %833 = vmatprep.subr.mxu0 0.0
        %834 = vmatpush1.xpose.msra.mxu0 0.0
        %835 = vmatprep.subr.mxu0 0.0
        %836 = vmatpush1.xpose.msra.mxu0 0.0
        %837 = vmatprep.subr.mxu0 0.0
        %838 = vmatpush1.xpose.msra.mxu0 0.0
        %839 = vmatprep.subr.mxu0 0.0
        %840 = vmatpush1.xpose.msra.mxu0 0.0
        %841 = vmatprep.subr.mxu0 0.0
        %842 = vmatpush1.xpose.msra.mxu0 0.0
        %843 = vmatprep.subr.mxu0 0.0
        %844 = vmatpush1.xpose.msra.mxu0 0.0
        %845 = vmatprep.subr.mxu0 0.0
        %846 = vmatpush1.xpose.msra.mxu0 0.0
        %847 = vmatprep.subr.mxu0 0.0
        %848 = vmatpush1.xpose.msra.mxu0 0.0
        %849 = vmatprep.subr.mxu0 0.0
        %850 = vmatpush1.xpose.msra.mxu0 0.0
        %851 = vmatprep.subr.mxu0 0.0
        %852 = vmatpush1.xpose.msra.mxu0 0.0
        %853 = vmatprep.subr.mxu0 0.0
        %854 = vmatpush1.xpose.msra.mxu0 0.0
        %855 = vmatprep.subr.mxu0 0.0
        %856 = vmatpush1.xpose.msra.mxu0 0.0
        %857 = vmatprep.subr.mxu0 0.0
        %858 = vmatpush1.xpose.msra.mxu0 0.0
        %859 = vmatprep.subr.mxu0 0.0
        %860 = vmatpush1.xpose.msra.mxu0 0.0
        %861 = vmatprep.subr.mxu0 0.0
        %862 = vmatpush1.xpose.msra.mxu0 0.0
        %863 = vmatprep.subr.mxu0 0.0
        %864 = vmatpush1.xpose.msra.mxu0 0.0
        %865 = vmatprep.subr.mxu0 0.0
        %866 = vmatpush1.xpose.msra.mxu0 0.0
        %867 = vmatprep.subr.mxu0 0.0
        %868 = vmatpush1.xpose.msra.mxu0 0.0
        %869 = vmatprep.subr.mxu0 0.0
        %870 = vmatpush1.xpose.msra.mxu0 0.0
        %871 = vmatprep.subr.mxu0 0.0
        %872 = vmatpush1.xpose.msra.mxu0 0.0
        %873 = vmatprep.subr.mxu0 0.0
        %874 = vmatpush1.xpose.msra.mxu0 0.0
        %875 = vmatprep.subr.mxu0 0.0
        %876 = vmatpush1.xpose.msra.mxu0 0.0
        %877 = vmatprep.subr.mxu0 0.0
        %878 = vmatpush1.xpose.msra.mxu0 0.0
        %879 = vmatprep.subr.mxu0 0.0
        %880 = vmatpush1.xpose.msra.mxu0 0.0
        %881 = vmatprep.subr.mxu0 0.0
        %882 = vmatpush1.xpose.msra.mxu0 0.0
        %883 = vmatprep.mubr.f32.mxu0 0.0
        %884 = vmatmul.mubr.f32.gmra.mrb[0].mxu0 %v815
        %v885 = vpop.f32.mrb[0].mxu0
        %v886 = vadd.f32 %v477, %v885
        %v887 = vpop.f32.mrb[0].mxu0
        %888 = vdwg.mxu0
        %v889 = vsel %vm740, %v692, 0
        %v891 = vsel %vm740, %v707, 0
        %893 = vmatprep.subr.mxu0 0.0
        %894 = vmatpush1.xpose.msra.mxu0 %v891
        %895 = vmatprep.subr.mxu0 0.0
        %896 = vmatpush1.xpose.msra.mxu0 0.0
        %897 = vmatprep.subr.mxu0 0.0
        %898 = vmatpush1.xpose.msra.mxu0 0.0
        %899 = vmatprep.subr.mxu0 0.0
        %900 = vmatpush1.xpose.msra.mxu0 0.0
        %901 = vmatprep.subr.mxu0 0.0
        %902 = vmatpush1.xpose.msra.mxu0 0.0
        %903 = vmatprep.subr.mxu0 0.0
        %904 = vmatpush1.xpose.msra.mxu0 0.0
        %905 = vmatprep.subr.mxu0 0.0
        %906 = vmatpush1.xpose.msra.mxu0 0.0
        %907 = vmatprep.subr.mxu0 0.0
        %908 = vmatpush1.xpose.msra.mxu0 0.0
        %909 = vmatprep.subr.mxu0 0.0
        %910 = vmatpush1.xpose.msra.mxu0 0.0
        %911 = vmatprep.subr.mxu0 0.0
        %912 = vmatpush1.xpose.msra.mxu0 0.0
        %913 = vmatprep.subr.mxu0 0.0
        %914 = vmatpush1.xpose.msra.mxu0 0.0
        %915 = vmatprep.subr.mxu0 0.0
        %916 = vmatpush1.xpose.msra.mxu0 0.0
        %917 = vmatprep.subr.mxu0 0.0
        %918 = vmatpush1.xpose.msra.mxu0 0.0
        %919 = vmatprep.subr.mxu0 0.0
        %920 = vmatpush1.xpose.msra.mxu0 0.0
        %921 = vmatprep.subr.mxu0 0.0
        %922 = vmatpush1.xpose.msra.mxu0 0.0
        %923 = vmatprep.subr.mxu0 0.0
        %924 = vmatpush1.xpose.msra.mxu0 0.0
        %925 = vmatprep.subr.mxu0 0.0
        %926 = vmatpush1.xpose.msra.mxu0 0.0
        %927 = vmatprep.subr.mxu0 0.0
        %928 = vmatpush1.xpose.msra.mxu0 0.0
        %929 = vmatprep.subr.mxu0 0.0
        %930 = vmatpush1.xpose.msra.mxu0 0.0
        %931 = vmatprep.subr.mxu0 0.0
        %932 = vmatpush1.xpose.msra.mxu0 0.0
        %933 = vmatprep.subr.mxu0 0.0
        %934 = vmatpush1.xpose.msra.mxu0 0.0
        %935 = vmatprep.subr.mxu0 0.0
        %936 = vmatpush1.xpose.msra.mxu0 0.0
        %937 = vmatprep.subr.mxu0 0.0
        %938 = vmatpush1.xpose.msra.mxu0 0.0
        %939 = vmatprep.subr.mxu0 0.0
        %940 = vmatpush1.xpose.msra.mxu0 0.0
        %941 = vmatprep.subr.mxu0 0.0
        %942 = vmatpush1.xpose.msra.mxu0 0.0
        %943 = vmatprep.subr.mxu0 0.0
        %944 = vmatpush1.xpose.msra.mxu0 0.0
        %945 = vmatprep.subr.mxu0 0.0
        %946 = vmatpush1.xpose.msra.mxu0 0.0
        %947 = vmatprep.subr.mxu0 0.0
        %948 = vmatpush1.xpose.msra.mxu0 0.0
        %949 = vmatprep.subr.mxu0 0.0
        %950 = vmatpush1.xpose.msra.mxu0 0.0
        %951 = vmatprep.subr.mxu0 0.0
        %952 = vmatpush1.xpose.msra.mxu0 0.0
        %953 = vmatprep.subr.mxu0 0.0
        %954 = vmatpush1.xpose.msra.mxu0 0.0
        %955 = vmatprep.subr.mxu0 0.0
        %956 = vmatpush1.xpose.msra.mxu0 0.0
        %957 = vmatprep.mubr.f32.mxu0 0.0
        %958 = vmatmul.mubr.f32.gmra.mrb[0].mxu0 %v889
        %v959 = vpop.f32.mrb[0].mxu0
        %v960 = vadd.f32 %v477, %v959
        %v961 = vpop.f32.mrb[0].mxu0
        %962 = vdwg.mxu0
        %v963 = vsel %vm740, %v694, 0
        %v965 = vsel %vm740, %v709, 0
        %967 = vmatprep.subr.mxu0 0.0
        %968 = vmatpush1.xpose.msra.mxu0 %v965
        %969 = vmatprep.subr.mxu0 0.0
        %970 = vmatpush1.xpose.msra.mxu0 0.0
        %971 = vmatprep.subr.mxu0 0.0
        %972 = vmatpush1.xpose.msra.mxu0 0.0
        %973 = vmatprep.subr.mxu0 0.0
        %974 = vmatpush1.xpose.msra.mxu0 0.0
        %975 = vmatprep.subr.mxu0 0.0
        %976 = vmatpush1.xpose.msra.mxu0 0.0
        %977 = vmatprep.subr.mxu0 0.0
        %978 = vmatpush1.xpose.msra.mxu0 0.0
        %979 = vmatprep.subr.mxu0 0.0
        %980 = vmatpush1.xpose.msra.mxu0 0.0
        %981 = vmatprep.subr.mxu0 0.0
        %982 = vmatpush1.xpose.msra.mxu0 0.0
        %983 = vmatprep.subr.mxu0 0.0
        %984 = vmatpush1.xpose.msra.mxu0 0.0
        %985 = vmatprep.subr.mxu0 0.0
        %986 = vmatpush1.xpose.msra.mxu0 0.0
        %987 = vmatprep.subr.mxu0 0.0
        %988 = vmatpush1.xpose.msra.mxu0 0.0
        %989 = vmatprep.subr.mxu0 0.0
        %990 = vmatpush1.xpose.msra.mxu0 0.0
        %991 = vmatprep.subr.mxu0 0.0
        %992 = vmatpush1.xpose.msra.mxu0 0.0
        %993 = vmatprep.subr.mxu0 0.0
        %994 = vmatpush1.xpose.msra.mxu0 0.0
        %995 = vmatprep.subr.mxu0 0.0
        %996 = vmatpush1.xpose.msra.mxu0 0.0
        %997 = vmatprep.subr.mxu0 0.0
        %998 = vmatpush1.xpose.msra.mxu0 0.0
        %999 = vmatprep.subr.mxu0 0.0
        %1000 = vmatpush1.xpose.msra.mxu0 0.0
        %1001 = vmatprep.subr.mxu0 0.0
        %1002 = vmatpush1.xpose.msra.mxu0 0.0
        %1003 = vmatprep.subr.mxu0 0.0
        %1004 = vmatpush1.xpose.msra.mxu0 0.0
        %1005 = vmatprep.subr.mxu0 0.0
        %1006 = vmatpush1.xpose.msra.mxu0 0.0
        %1007 = vmatprep.subr.mxu0 0.0
        %1008 = vmatpush1.xpose.msra.mxu0 0.0
        %1009 = vmatprep.subr.mxu0 0.0
        %1010 = vmatpush1.xpose.msra.mxu0 0.0
        %1011 = vmatprep.subr.mxu0 0.0
        %1012 = vmatpush1.xpose.msra.mxu0 0.0
        %1013 = vmatprep.subr.mxu0 0.0
        %1014 = vmatpush1.xpose.msra.mxu0 0.0
        %1015 = vmatprep.subr.mxu0 0.0
        %1016 = vmatpush1.xpose.msra.mxu0 0.0
        %1017 = vmatprep.subr.mxu0 0.0
        %1018 = vmatpush1.xpose.msra.mxu0 0.0
        %1019 = vmatprep.subr.mxu0 0.0
        %1020 = vmatpush1.xpose.msra.mxu0 0.0
        %1021 = vmatprep.subr.mxu0 0.0
        %1022 = vmatpush1.xpose.msra.mxu0 0.0
        %1023 = vmatprep.subr.mxu0 0.0
        %1024 = vmatpush1.xpose.msra.mxu0 0.0
        %1025 = vmatprep.subr.mxu0 0.0
        %1026 = vmatpush1.xpose.msra.mxu0 0.0
        %1027 = vmatprep.subr.mxu0 0.0
        %1028 = vmatpush1.xpose.msra.mxu0 0.0
        %1029 = vmatprep.subr.mxu0 0.0
        %1030 = vmatpush1.xpose.msra.mxu0 0.0
        %1031 = vmatprep.mubr.f32.mxu0 0.0
        %1032 = vmatmul.mubr.f32.gmra.mrb[0].mxu0 %v963
        %v1033 = vpop.f32.mrb[0].mxu0
        %v1034 = vadd.f32 %v477, %v1033
        %v1035 = vpop.f32.mrb[0].mxu0
        %1036 = vdwg.mxu0
        %v1037 = vsel %vm740, %v696, 0
        %v1039 = vsel %vm740, %v711, 0
        %1041 = vmatprep.subr.mxu0 0.0
        %1042 = vmatpush1.xpose.msra.mxu0 %v1039
        %1043 = vmatprep.subr.mxu0 0.0
        %1044 = vmatpush1.xpose.msra.mxu0 0.0
        %1045 = vmatprep.subr.mxu0 0.0
        %1046 = vmatpush1.xpose.msra.mxu0 0.0
        %1047 = vmatprep.subr.mxu0 0.0
        %1048 = vmatpush1.xpose.msra.mxu0 0.0
        %1049 = vmatprep.subr.mxu0 0.0
        %1050 = vmatpush1.xpose.msra.mxu0 0.0
        %1051 = vmatprep.subr.mxu0 0.0
        %1052 = vmatpush1.xpose.msra.mxu0 0.0
        %1053 = vmatprep.subr.mxu0 0.0
        %1054 = vmatpush1.xpose.msra.mxu0 0.0
        %1055 = vmatprep.subr.mxu0 0.0
        %1056 = vmatpush1.xpose.msra.mxu0 0.0
        %1057 = vmatprep.subr.mxu0 0.0
        %1058 = vmatpush1.xpose.msra.mxu0 0.0
        %1059 = vmatprep.subr.mxu0 0.0
        %1060 = vmatpush1.xpose.msra.mxu0 0.0
        %1061 = vmatprep.subr.mxu0 0.0
        %1062 = vmatpush1.xpose.msra.mxu0 0.0
        %1063 = vmatprep.subr.mxu0 0.0
        %1064 = vmatpush1.xpose.msra.mxu0 0.0
        %1065 = vmatprep.subr.mxu0 0.0
        %1066 = vmatpush1.xpose.msra.mxu0 0.0
        %1067 = vmatprep.subr.mxu0 0.0
        %1068 = vmatpush1.xpose.msra.mxu0 0.0
        %1069 = vmatprep.subr.mxu0 0.0
        %1070 = vmatpush1.xpose.msra.mxu0 0.0
        %1071 = vmatprep.subr.mxu0 0.0
        %1072 = vmatpush1.xpose.msra.mxu0 0.0
        %1073 = vmatprep.subr.mxu0 0.0
        %1074 = vmatpush1.xpose.msra.mxu0 0.0
        %1075 = vmatprep.subr.mxu0 0.0
        %1076 = vmatpush1.xpose.msra.mxu0 0.0
        %1077 = vmatprep.subr.mxu0 0.0
        %1078 = vmatpush1.xpose.msra.mxu0 0.0
        %1079 = vmatprep.subr.mxu0 0.0
        %1080 = vmatpush1.xpose.msra.mxu0 0.0
        %1081 = vmatprep.subr.mxu0 0.0
        %1082 = vmatpush1.xpose.msra.mxu0 0.0
        %1083 = vmatprep.subr.mxu0 0.0
        %1084 = vmatpush1.xpose.msra.mxu0 0.0
        %1085 = vmatprep.subr.mxu0 0.0
        %1086 = vmatpush1.xpose.msra.mxu0 0.0
        %1087 = vmatprep.subr.mxu0 0.0
        %1088 = vmatpush1.xpose.msra.mxu0 0.0
        %1089 = vmatprep.subr.mxu0 0.0
        %1090 = vmatpush1.xpose.msra.mxu0 0.0
        %1091 = vmatprep.subr.mxu0 0.0
        %1092 = vmatpush1.xpose.msra.mxu0 0.0
        %1093 = vmatprep.subr.mxu0 0.0
        %1094 = vmatpush1.xpose.msra.mxu0 0.0
        %1095 = vmatprep.subr.mxu0 0.0
        %1096 = vmatpush1.xpose.msra.mxu0 0.0
        %1097 = vmatprep.subr.mxu0 0.0
        %1098 = vmatpush1.xpose.msra.mxu0 0.0
        %1099 = vmatprep.subr.mxu0 0.0
        %1100 = vmatpush1.xpose.msra.mxu0 0.0
        %1101 = vmatprep.subr.mxu0 0.0
        %1102 = vmatpush1.xpose.msra.mxu0 0.0
        %1103 = vmatprep.subr.mxu0 0.0
        %1104 = vmatpush1.xpose.msra.mxu0 0.0
        %1105 = vmatprep.mubr.f32.mxu0 0.0
        %1106 = vmatmul.mubr.f32.gmra.mrb[0].mxu0 %v1037
        %v1107 = vpop.f32.mrb[0].mxu0
        %v1108 = vadd.f32 %v477, %v1107
        %v1109 = vpop.f32.mrb[0].mxu0
        %1110 = vdwg.mxu0
        %v1111 = vsel %vm740, %v698, 0
        %v1113 = vsel %vm740, %v713, 0
        %1115 = vmatprep.subr.mxu0 0.0
        %1116 = vmatpush1.xpose.msra.mxu0 %v1113
        %1117 = vmatprep.subr.mxu0 0.0
        %1118 = vmatpush1.xpose.msra.mxu0 0.0
        %1119 = vmatprep.subr.mxu0 0.0
        %1120 = vmatpush1.xpose.msra.mxu0 0.0
        %1121 = vmatprep.subr.mxu0 0.0
        %1122 = vmatpush1.xpose.msra.mxu0 0.0
        %1123 = vmatprep.subr.mxu0 0.0
        %1124 = vmatpush1.xpose.msra.mxu0 0.0
        %1125 = vmatprep.subr.mxu0 0.0
        %1126 = vmatpush1.xpose.msra.mxu0 0.0
        %1127 = vmatprep.subr.mxu0 0.0
        %1128 = vmatpush1.xpose.msra.mxu0 0.0
        %1129 = vmatprep.subr.mxu0 0.0
        %1130 = vmatpush1.xpose.msra.mxu0 0.0
        %1131 = vmatprep.subr.mxu0 0.0
        %1132 = vmatpush1.xpose.msra.mxu0 0.0
        %1133 = vmatprep.subr.mxu0 0.0
        %1134 = vmatpush1.xpose.msra.mxu0 0.0
        %1135 = vmatprep.subr.mxu0 0.0
        %1136 = vmatpush1.xpose.msra.mxu0 0.0
        %1137 = vmatprep.subr.mxu0 0.0
        %1138 = vmatpush1.xpose.msra.mxu0 0.0
        %1139 = vmatprep.subr.mxu0 0.0
        %1140 = vmatpush1.xpose.msra.mxu0 0.0
        %1141 = vmatprep.subr.mxu0 0.0
        %1142 = vmatpush1.xpose.msra.mxu0 0.0
        %1143 = vmatprep.subr.mxu0 0.0
        %1144 = vmatpush1.xpose.msra.mxu0 0.0
        %1145 = vmatprep.subr.mxu0 0.0
        %1146 = vmatpush1.xpose.msra.mxu0 0.0
        %1147 = vmatprep.subr.mxu0 0.0
        %1148 = vmatpush1.xpose.msra.mxu0 0.0
        %1149 = vmatprep.subr.mxu0 0.0
        %1150 = vmatpush1.xpose.msra.mxu0 0.0
        %1151 = vmatprep.subr.mxu0 0.0
        %1152 = vmatpush1.xpose.msra.mxu0 0.0
        %1153 = vmatprep.subr.mxu0 0.0
        %1154 = vmatpush1.xpose.msra.mxu0 0.0
        %1155 = vmatprep.subr.mxu0 0.0
        %1156 = vmatpush1.xpose.msra.mxu0 0.0
        %1157 = vmatprep.subr.mxu0 0.0
        %1158 = vmatpush1.xpose.msra.mxu0 0.0
        %1159 = vmatprep.subr.mxu0 0.0
        %1160 = vmatpush1.xpose.msra.mxu0 0.0
        %1161 = vmatprep.subr.mxu0 0.0
        %1162 = vmatpush1.xpose.msra.mxu0 0.0
        %1163 = vmatprep.subr.mxu0 0.0
        %1164 = vmatpush1.xpose.msra.mxu0 0.0
        %1165 = vmatprep.subr.mxu0 0.0
        %1166 = vmatpush1.xpose.msra.mxu0 0.0
        %1167 = vmatprep.subr.mxu0 0.0
        %1168 = vmatpush1.xpose.msra.mxu0 0.0
        %1169 = vmatprep.subr.mxu0 0.0
        %1170 = vmatpush1.xpose.msra.mxu0 0.0
        %1171 = vmatprep.subr.mxu0 0.0
        %1172 = vmatpush1.xpose.msra.mxu0 0.0
        %1173 = vmatprep.subr.mxu0 0.0
        %1174 = vmatpush1.xpose.msra.mxu0 0.0
        %1175 = vmatprep.subr.mxu0 0.0
        %1176 = vmatpush1.xpose.msra.mxu0 0.0
        %1177 = vmatprep.subr.mxu0 0.0
        %1178 = vmatpush1.xpose.msra.mxu0 0.0
        %1179 = vmatprep.mubr.f32.mxu0 0.0
        %1180 = vmatmul.mubr.f32.gmra.mrb[0].mxu0 %v1111
        %v1181 = vpop.f32.mrb[0].mxu0
        %v1182 = vadd.f32 %v477, %v1181
        %v1183 = vpop.f32.mrb[0].mxu0
        %1184 = vdwg.mxu0
        %v1185 = vsel %vm740, %v700, 0
        %v1187 = vsel %vm740, %v715, 0
        %1189 = vmatprep.subr.mxu0 0.0
        %1190 = vmatpush1.xpose.msra.mxu0 %v1187
        %1191 = vmatprep.subr.mxu0 0.0
        %1192 = vmatpush1.xpose.msra.mxu0 0.0
        %1193 = vmatprep.subr.mxu0 0.0
        %1194 = vmatpush1.xpose.msra.mxu0 0.0
        %1195 = vmatprep.subr.mxu0 0.0
        %1196 = vmatpush1.xpose.msra.mxu0 0.0
        %1197 = vmatprep.subr.mxu0 0.0
        %1198 = vmatpush1.xpose.msra.mxu0 0.0
        %1199 = vmatprep.subr.mxu0 0.0
        %1200 = vmatpush1.xpose.msra.mxu0 0.0
        %1201 = vmatprep.subr.mxu0 0.0
        %1202 = vmatpush1.xpose.msra.mxu0 0.0
        %1203 = vmatprep.subr.mxu0 0.0
        %1204 = vmatpush1.xpose.msra.mxu0 0.0
        %1205 = vmatprep.subr.mxu0 0.0
        %1206 = vmatpush1.xpose.msra.mxu0 0.0
        %1207 = vmatprep.subr.mxu0 0.0
        %1208 = vmatpush1.xpose.msra.mxu0 0.0
        %1209 = vmatprep.subr.mxu0 0.0
        %1210 = vmatpush1.xpose.msra.mxu0 0.0
        %1211 = vmatprep.subr.mxu0 0.0
        %1212 = vmatpush1.xpose.msra.mxu0 0.0
        %1213 = vmatprep.subr.mxu0 0.0
        %1214 = vmatpush1.xpose.msra.mxu0 0.0
        %1215 = vmatprep.subr.mxu0 0.0
        %1216 = vmatpush1.xpose.msra.mxu0 0.0
        %1217 = vmatprep.subr.mxu0 0.0
        %1218 = vmatpush1.xpose.msra.mxu0 0.0
        %1219 = vmatprep.subr.mxu0 0.0
        %1220 = vmatpush1.xpose.msra.mxu0 0.0
        %1221 = vmatprep.subr.mxu0 0.0
        %1222 = vmatpush1.xpose.msra.mxu0 0.0
        %1223 = vmatprep.subr.mxu0 0.0
        %1224 = vmatpush1.xpose.msra.mxu0 0.0
        %1225 = vmatprep.subr.mxu0 0.0
        %1226 = vmatpush1.xpose.msra.mxu0 0.0
        %1227 = vmatprep.subr.mxu0 0.0
        %1228 = vmatpush1.xpose.msra.mxu0 0.0
        %1229 = vmatprep.subr.mxu0 0.0
        %1230 = vmatpush1.xpose.msra.mxu0 0.0
        %1231 = vmatprep.subr.mxu0 0.0
        %1232 = vmatpush1.xpose.msra.mxu0 0.0
        %1233 = vmatprep.subr.mxu0 0.0
        %1234 = vmatpush1.xpose.msra.mxu0 0.0
        %1235 = vmatprep.subr.mxu0 0.0
        %1236 = vmatpush1.xpose.msra.mxu0 0.0
        %1237 = vmatprep.subr.mxu0 0.0
        %1238 = vmatpush1.xpose.msra.mxu0 0.0
        %1239 = vmatprep.subr.mxu0 0.0
        %1240 = vmatpush1.xpose.msra.mxu0 0.0
        %1241 = vmatprep.subr.mxu0 0.0
        %1242 = vmatpush1.xpose.msra.mxu0 0.0
        %1243 = vmatprep.subr.mxu0 0.0
        %1244 = vmatpush1.xpose.msra.mxu0 0.0
        %1245 = vmatprep.subr.mxu0 0.0
        %1246 = vmatpush1.xpose.msra.mxu0 0.0
        %1247 = vmatprep.subr.mxu0 0.0
        %1248 = vmatpush1.xpose.msra.mxu0 0.0
        %1249 = vmatprep.subr.mxu0 0.0
        %1250 = vmatpush1.xpose.msra.mxu0 0.0
        %1251 = vmatprep.subr.mxu0 0.0
        %1252 = vmatpush1.xpose.msra.mxu0 0.0
        %1253 = vmatprep.mubr.f32.mxu0 0.0
        %1254 = vmatmul.mubr.f32.gmra.mrb[0].mxu0 %v1185
        %v1255 = vpop.f32.mrb[0].mxu0
        %v1256 = vadd.f32 %v477, %v1255
        %v1257 = vpop.f32.mrb[0].mxu0
        %1258 = vdwg.mxu0
        %v1259 = vsel %vm740, %v702, 0
        %v1261 = vsel %vm740, %v717, 0
        %1263 = vmatprep.subr.mxu0 0.0
        %1264 = vmatpush1.xpose.msra.mxu0 %v1261
        %1265 = vmatprep.subr.mxu0 0.0
        %1266 = vmatpush1.xpose.msra.mxu0 0.0
        %1267 = vmatprep.subr.mxu0 0.0
        %1268 = vmatpush1.xpose.msra.mxu0 0.0
        %1269 = vmatprep.subr.mxu0 0.0
        %1270 = vmatpush1.xpose.msra.mxu0 0.0
        %1271 = vmatprep.subr.mxu0 0.0
        %1272 = vmatpush1.xpose.msra.mxu0 0.0
        %1273 = vmatprep.subr.mxu0 0.0
        %1274 = vmatpush1.xpose.msra.mxu0 0.0
        %1275 = vmatprep.subr.mxu0 0.0
        %1276 = vmatpush1.xpose.msra.mxu0 0.0
        %1277 = vmatprep.subr.mxu0 0.0
        %1278 = vmatpush1.xpose.msra.mxu0 0.0
        %1279 = vmatprep.subr.mxu0 0.0
        %1280 = vmatpush1.xpose.msra.mxu0 0.0
        %1281 = vmatprep.subr.mxu0 0.0
        %1282 = vmatpush1.xpose.msra.mxu0 0.0
        %1283 = vmatprep.subr.mxu0 0.0
        %1284 = vmatpush1.xpose.msra.mxu0 0.0
        %1285 = vmatprep.subr.mxu0 0.0
        %1286 = vmatpush1.xpose.msra.mxu0 0.0
        %1287 = vmatprep.subr.mxu0 0.0
        %1288 = vmatpush1.xpose.msra.mxu0 0.0
        %1289 = vmatprep.subr.mxu0 0.0
        %1290 = vmatpush1.xpose.msra.mxu0 0.0
        %1291 = vmatprep.subr.mxu0 0.0
        %1292 = vmatpush1.xpose.msra.mxu0 0.0
        %1293 = vmatprep.subr.mxu0 0.0
        %1294 = vmatpush1.xpose.msra.mxu0 0.0
        %1295 = vmatprep.subr.mxu0 0.0
        %1296 = vmatpush1.xpose.msra.mxu0 0.0
        %1297 = vmatprep.subr.mxu0 0.0
        %1298 = vmatpush1.xpose.msra.mxu0 0.0
        %1299 = vmatprep.subr.mxu0 0.0
        %1300 = vmatpush1.xpose.msra.mxu0 0.0
        %1301 = vmatprep.subr.mxu0 0.0
        %1302 = vmatpush1.xpose.msra.mxu0 0.0
        %1303 = vmatprep.subr.mxu0 0.0
        %1304 = vmatpush1.xpose.msra.mxu0 0.0
        %1305 = vmatprep.subr.mxu0 0.0
        %1306 = vmatpush1.xpose.msra.mxu0 0.0
        %1307 = vmatprep.subr.mxu0 0.0
        %1308 = vmatpush1.xpose.msra.mxu0 0.0
        %1309 = vmatprep.subr.mxu0 0.0
        %1310 = vmatpush1.xpose.msra.mxu0 0.0
        %1311 = vmatprep.subr.mxu0 0.0
        %1312 = vmatpush1.xpose.msra.mxu0 0.0
        %1313 = vmatprep.subr.mxu0 0.0
        %1314 = vmatpush1.xpose.msra.mxu0 0.0
        %1315 = vmatprep.subr.mxu0 0.0
        %1316 = vmatpush1.xpose.msra.mxu0 0.0
        %1317 = vmatprep.subr.mxu0 0.0
        %1318 = vmatpush1.xpose.msra.mxu0 0.0
        %1319 = vmatprep.subr.mxu0 0.0
        %1320 = vmatpush1.xpose.msra.mxu0 0.0
        %1321 = vmatprep.subr.mxu0 0.0
        %1322 = vmatpush1.xpose.msra.mxu0 0.0
        %1323 = vmatprep.subr.mxu0 0.0
        %1324 = vmatpush1.xpose.msra.mxu0 0.0
        %1325 = vmatprep.subr.mxu0 0.0
        %1326 = vmatpush1.xpose.msra.mxu0 0.0
        %1327 = vmatprep.mubr.f32.mxu0 0.0
        %1328 = vmatmul.mubr.f32.gmra.mrb[0].mxu0 %v1259
        %v1329 = vpop.f32.mrb[0].mxu0
        %v1330 = vadd.f32 %v477, %v1329
        %v1331 = vpop.f32.mrb[0].mxu0
        %1332 = vdwg.mxu0
        %vm1333 = vcmask 64512
        %v1334 = vsel %vm1333, %v812, -inf
        %1335 = vmax.xlane.f32.xlu0 %v1334
        %v1336 = vpop.xlane.xlu0 %1335
        %v1337 = vsel %vm1333, %v886, -inf
        %1338 = vmax.xlane.f32.xlu0 %v1337
        %v1339 = vpop.xlane.xlu0 %1338
        %v1340 = vsel %vm1333, %v960, -inf
        %1341 = vmax.xlane.f32.xlu0 %v1340
        %v1342 = vpop.xlane.xlu0 %1341
        %v1343 = vsel %vm1333, %v1034, -inf
        %1344 = vmax.xlane.f32.xlu0 %v1343
        %v1345 = vpop.xlane.xlu0 %1344
        %v1346 = vsel %vm1333, %v1108, -inf
        %1347 = vmax.xlane.f32.xlu0 %v1346
        %v1348 = vpop.xlane.xlu0 %1347
        %v1349 = vsel %vm1333, %v1182, -inf
        %1350 = vmax.xlane.f32.xlu0 %v1349
        %v1351 = vpop.xlane.xlu0 %1350
        %v1352 = vsel %vm1333, %v1256, -inf
        %1353 = vmax.xlane.f32.xlu0 %v1352
        %v1354 = vpop.xlane.xlu0 %1353
        %v1355 = vsel %vm1333, %v1330, -inf
        %1356 = vmax.xlane.f32.xlu0 %v1355
        %v1357 = vpop.xlane.xlu0 %1356
        %v1358 = vsub.f32 %v812, %v1336
        %v1359 = vsub.f32 %v886, %v1339
        %v1360 = vsub.f32 %v960, %v1342
        %v1361 = vsub.f32 %v1034, %v1345
        %v1362 = vsub.f32 %v1108, %v1348
        %v1363 = vsub.f32 %v1182, %v1351
        %v1364 = vsub.f32 %v1256, %v1354
        %v1365 = vsub.f32 %v1330, %v1357
        %v1366 = vmul.f32 %v1358, 1.442695
        %v1367 = vpow.pop %v1366
        %v1368 = vmul.f32 %v1359, 1.442695
        %v1369 = vpow.pop %v1368
        %v1370 = vmul.f32 %v1360, 1.442695
        %v1371 = vpow.pop %v1370
        %v1372 = vmul.f32 %v1361, 1.442695
        %v1373 = vpow.pop %v1372
        %v1374 = vmul.f32 %v1362, 1.442695
        %v1375 = vpow.pop %v1374
        %v1376 = vmul.f32 %v1363, 1.442695
        %v1377 = vpow.pop %v1376
        %v1378 = vmul.f32 %v1364, 1.442695
        %v1379 = vpow.pop %v1378
        %v1380 = vmul.f32 %v1365, 1.442695
        %v1381 = vpow.pop %v1380
        %v1382 = vsel %vm1333, %v1367, 0.0
        %1383 = vadd.xlane.f32.xlu0 %v1382
        %v1384 = vpop.xlane.xlu0 %1383
        %v1385 = vsel %vm1333, %v1369, 0.0
        %1386 = vadd.xlane.f32.xlu0 %v1385
        %v1387 = vpop.xlane.xlu0 %1386
        %v1388 = vsel %vm1333, %v1371, 0.0
        %1389 = vadd.xlane.f32.xlu0 %v1388
        %v1390 = vpop.xlane.xlu0 %1389
        %v1391 = vsel %vm1333, %v1373, 0.0
        %1392 = vadd.xlane.f32.xlu0 %v1391
        %v1393 = vpop.xlane.xlu0 %1392
        %v1394 = vsel %vm1333, %v1375, 0.0
        %1395 = vadd.xlane.f32.xlu0 %v1394
        %v1396 = vpop.xlane.xlu0 %1395
        %v1397 = vsel %vm1333, %v1377, 0.0
        %1398 = vadd.xlane.f32.xlu0 %v1397
        %v1399 = vpop.xlane.xlu0 %1398
        %v1400 = vsel %vm1333, %v1379, 0.0
        %1401 = vadd.xlane.f32.xlu0 %v1400
        %v1402 = vpop.xlane.xlu0 %1401
        %v1403 = vsel %vm1333, %v1381, 0.0
        %1404 = vadd.xlane.f32.xlu0 %v1403
        %v1405 = vpop.xlane.xlu0 %1404
        %v1406 = vrcp.pop %v1384
        %v1407 = vrcp.pop %v1387
        %v1408 = vrcp.pop %v1390
        %v1409 = vrcp.pop %v1393
        %v1410 = vrcp.pop %v1396
        %v1411 = vrcp.pop %v1399
        %v1412 = vrcp.pop %v1402
        %v1413 = vrcp.pop %v1405
        %v1414 = vmul.f32 %v1367, %v1406
        %v1415 = vmul.f32 %v1369, %v1407
        %v1416 = vmul.f32 %v1371, %v1408
        %v1417 = vmul.f32 %v1373, %v1409
        %v1418 = vmul.f32 %v1375, %v1410
        %v1419 = vmul.f32 %v1377, %v1411
        %v1420 = vmul.f32 %v1379, %v1412
        %v1421 = vmul.f32 %v1381, %v1413
        %v1423 = vsel %vm1333, %v1414, 0
        %1425 = vmatprep.subr.mxu0 0.0
        %1426 = vmatpush1.msra.mxu0 %v685
        %1427 = vmatprep.subr.mxu0 0.0
        %1428 = vmatpush1.msra.mxu0 0.0
        %1429 = vmatprep.subr.mxu0 0.0
        %1430 = vmatpush1.msra.mxu0 0.0
        %1431 = vmatprep.subr.mxu0 0.0
        %1432 = vmatpush1.msra.mxu0 0.0
        %1433 = vmatprep.subr.mxu0 0.0
        %1434 = vmatpush1.msra.mxu0 0.0
        %1435 = vmatprep.subr.mxu0 0.0
        %1436 = vmatpush1.msra.mxu0 0.0
        %1437 = vmatprep.subr.mxu0 0.0
        %1438 = vmatpush1.msra.mxu0 0.0
        %1439 = vmatprep.subr.mxu0 0.0
        %1440 = vmatpush1.msra.mxu0 0.0
        %1441 = vmatprep.subr.mxu0 0.0
        %1442 = vmatpush1.msra.mxu0 0.0
        %1443 = vmatprep.subr.mxu0 0.0
        %1444 = vmatpush1.msra.mxu0 0.0
        %1445 = vmatprep.subr.mxu0 0.0
        %1446 = vmatpush1.msra.mxu0 0.0
        %1447 = vmatprep.subr.mxu0 0.0
        %1448 = vmatpush1.msra.mxu0 0.0
        %1449 = vmatprep.subr.mxu0 0.0
        %1450 = vmatpush1.msra.mxu0 0.0
        %1451 = vmatprep.subr.mxu0 0.0
        %1452 = vmatpush1.msra.mxu0 0.0
        %1453 = vmatprep.subr.mxu0 0.0
        %1454 = vmatpush1.msra.mxu0 0.0
        %1455 = vmatprep.subr.mxu0 0.0
        %1456 = vmatpush1.msra.mxu0 0.0
        %1457 = vmatprep.subr.mxu0 0.0
        %1458 = vmatpush1.msra.mxu0 0.0
        %1459 = vmatprep.subr.mxu0 0.0
        %1460 = vmatpush1.msra.mxu0 0.0
        %1461 = vmatprep.subr.mxu0 0.0
        %1462 = vmatpush1.msra.mxu0 0.0
        %1463 = vmatprep.subr.mxu0 0.0
        %1464 = vmatpush1.msra.mxu0 0.0
        %1465 = vmatprep.subr.mxu0 0.0
        %1466 = vmatpush1.msra.mxu0 0.0
        %1467 = vmatprep.subr.mxu0 0.0
        %1468 = vmatpush1.msra.mxu0 0.0
        %1469 = vmatprep.subr.mxu0 0.0
        %1470 = vmatpush1.msra.mxu0 0.0
        %1471 = vmatprep.subr.mxu0 0.0
        %1472 = vmatpush1.msra.mxu0 0.0
        %1473 = vmatprep.subr.mxu0 0.0
        %1474 = vmatpush1.msra.mxu0 0.0
        %1475 = vmatprep.subr.mxu0 0.0
        %1476 = vmatpush1.msra.mxu0 0.0
        %1477 = vmatprep.subr.mxu0 0.0
        %1478 = vmatpush1.msra.mxu0 0.0
        %1479 = vmatprep.subr.mxu0 0.0
        %1480 = vmatpush1.msra.mxu0 0.0
        %1481 = vmatprep.subr.mxu0 0.0
        %1482 = vmatpush1.msra.mxu0 0.0
        %1483 = vmatprep.subr.mxu0 0.0
        %1484 = vmatpush1.msra.mxu0 0.0
        %1485 = vmatprep.subr.mxu0 0.0
        %1486 = vmatpush1.msra.mxu0 0.0
        %1487 = vmatprep.subr.mxu0 0.0
        %1488 = vmatpush1.msra.mxu0 0.0
        %1489 = vmatprep.mubr.f32.mxu0 0.0
        %1490 = vmatmul.mubr.f32.gmra.mrb[0].mxu0 %v1423
        %v1491 = vpop.f32.mrb[0].mxu0
        %v1492 = vadd.f32 0.0, %v1491
        %v1493 = vpop.f32.mrb[0].mxu0
        %1494 = vdwg.mxu0
        %v1496 = vsel %vm1333, %v1415, 0
        %1498 = vmatprep.subr.mxu0 0.0
        %1499 = vmatpush1.msra.mxu0 %v720
        %1500 = vmatprep.subr.mxu0 0.0
        %1501 = vmatpush1.msra.mxu0 0.0
        %1502 = vmatprep.subr.mxu0 0.0
        %1503 = vmatpush1.msra.mxu0 0.0
        %1504 = vmatprep.subr.mxu0 0.0
        %1505 = vmatpush1.msra.mxu0 0.0
        %1506 = vmatprep.subr.mxu0 0.0
        %1507 = vmatpush1.msra.mxu0 0.0
        %1508 = vmatprep.subr.mxu0 0.0
        %1509 = vmatpush1.msra.mxu0 0.0
        %1510 = vmatprep.subr.mxu0 0.0
        %1511 = vmatpush1.msra.mxu0 0.0
        %1512 = vmatprep.subr.mxu0 0.0
        %1513 = vmatpush1.msra.mxu0 0.0
        %1514 = vmatprep.subr.mxu0 0.0
        %1515 = vmatpush1.msra.mxu0 0.0
        %1516 = vmatprep.subr.mxu0 0.0
        %1517 = vmatpush1.msra.mxu0 0.0
        %1518 = vmatprep.subr.mxu0 0.0
        %1519 = vmatpush1.msra.mxu0 0.0
        %1520 = vmatprep.subr.mxu0 0.0
        %1521 = vmatpush1.msra.mxu0 0.0
        %1522 = vmatprep.subr.mxu0 0.0
        %1523 = vmatpush1.msra.mxu0 0.0
        %1524 = vmatprep.subr.mxu0 0.0
        %1525 = vmatpush1.msra.mxu0 0.0
        %1526 = vmatprep.subr.mxu0 0.0
        %1527 = vmatpush1.msra.mxu0 0.0
        %1528 = vmatprep.subr.mxu0 0.0
        %1529 = vmatpush1.msra.mxu0 0.0
        %1530 = vmatprep.subr.mxu0 0.0
        %1531 = vmatpush1.msra.mxu0 0.0
        %1532 = vmatprep.subr.mxu0 0.0
        %1533 = vmatpush1.msra.mxu0 0.0
        %1534 = vmatprep.subr.mxu0 0.0
        %1535 = vmatpush1.msra.mxu0 0.0
        %1536 = vmatprep.subr.mxu0 0.0
        %1537 = vmatpush1.msra.mxu0 0.0
        %1538 = vmatprep.subr.mxu0 0.0
        %1539 = vmatpush1.msra.mxu0 0.0
        %1540 = vmatprep.subr.mxu0 0.0
        %1541 = vmatpush1.msra.mxu0 0.0
        %1542 = vmatprep.subr.mxu0 0.0
        %1543 = vmatpush1.msra.mxu0 0.0
        %1544 = vmatprep.subr.mxu0 0.0
        %1545 = vmatpush1.msra.mxu0 0.0
        %1546 = vmatprep.subr.mxu0 0.0
        %1547 = vmatpush1.msra.mxu0 0.0
        %1548 = vmatprep.subr.mxu0 0.0
        %1549 = vmatpush1.msra.mxu0 0.0
        %1550 = vmatprep.subr.mxu0 0.0
        %1551 = vmatpush1.msra.mxu0 0.0
        %1552 = vmatprep.subr.mxu0 0.0
        %1553 = vmatpush1.msra.mxu0 0.0
        %1554 = vmatprep.subr.mxu0 0.0
        %1555 = vmatpush1.msra.mxu0 0.0
        %1556 = vmatprep.subr.mxu0 0.0
        %1557 = vmatpush1.msra.mxu0 0.0
        %1558 = vmatprep.subr.mxu0 0.0
        %1559 = vmatpush1.msra.mxu0 0.0
        %1560 = vmatprep.subr.mxu0 0.0
        %1561 = vmatpush1.msra.mxu0 0.0
        %1562 = vmatprep.mubr.f32.mxu0 0.0
        %1563 = vmatmul.mubr.f32.gmra.mrb[0].mxu0 %v1496
        %v1564 = vpop.f32.mrb[0].mxu0
        %v1565 = vadd.f32 0.0, %v1564
        %v1566 = vpop.f32.mrb[0].mxu0
        %1567 = vdwg.mxu0
        %v1569 = vsel %vm1333, %v1416, 0
        %1571 = vmatprep.subr.mxu0 0.0
        %1572 = vmatpush1.msra.mxu0 %v723
        %1573 = vmatprep.subr.mxu0 0.0
        %1574 = vmatpush1.msra.mxu0 0.0
        %1575 = vmatprep.subr.mxu0 0.0
        %1576 = vmatpush1.msra.mxu0 0.0
        %1577 = vmatprep.subr.mxu0 0.0
        %1578 = vmatpush1.msra.mxu0 0.0
        %1579 = vmatprep.subr.mxu0 0.0
        %1580 = vmatpush1.msra.mxu0 0.0
        %1581 = vmatprep.subr.mxu0 0.0
        %1582 = vmatpush1.msra.mxu0 0.0
        %1583 = vmatprep.subr.mxu0 0.0
        %1584 = vmatpush1.msra.mxu0 0.0
        %1585 = vmatprep.subr.mxu0 0.0
        %1586 = vmatpush1.msra.mxu0 0.0
        %1587 = vmatprep.subr.mxu0 0.0
        %1588 = vmatpush1.msra.mxu0 0.0
        %1589 = vmatprep.subr.mxu0 0.0
        %1590 = vmatpush1.msra.mxu0 0.0
        %1591 = vmatprep.subr.mxu0 0.0
        %1592 = vmatpush1.msra.mxu0 0.0
        %1593 = vmatprep.subr.mxu0 0.0
        %1594 = vmatpush1.msra.mxu0 0.0
        %1595 = vmatprep.subr.mxu0 0.0
        %1596 = vmatpush1.msra.mxu0 0.0
        %1597 = vmatprep.subr.mxu0 0.0
        %1598 = vmatpush1.msra.mxu0 0.0
        %1599 = vmatprep.subr.mxu0 0.0
        %1600 = vmatpush1.msra.mxu0 0.0
        %1601 = vmatprep.subr.mxu0 0.0
        %1602 = vmatpush1.msra.mxu0 0.0
        %1603 = vmatprep.subr.mxu0 0.0
        %1604 = vmatpush1.msra.mxu0 0.0
        %1605 = vmatprep.subr.mxu0 0.0
        %1606 = vmatpush1.msra.mxu0 0.0
        %1607 = vmatprep.subr.mxu0 0.0
        %1608 = vmatpush1.msra.mxu0 0.0
        %1609 = vmatprep.subr.mxu0 0.0
        %1610 = vmatpush1.msra.mxu0 0.0
        %1611 = vmatprep.subr.mxu0 0.0
        %1612 = vmatpush1.msra.mxu0 0.0
        %1613 = vmatprep.subr.mxu0 0.0
        %1614 = vmatpush1.msra.mxu0 0.0
        %1615 = vmatprep.subr.mxu0 0.0
        %1616 = vmatpush1.msra.mxu0 0.0
        %1617 = vmatprep.subr.mxu0 0.0
        %1618 = vmatpush1.msra.mxu0 0.0
        %1619 = vmatprep.subr.mxu0 0.0
        %1620 = vmatpush1.msra.mxu0 0.0
        %1621 = vmatprep.subr.mxu0 0.0
        %1622 = vmatpush1.msra.mxu0 0.0
        %1623 = vmatprep.subr.mxu0 0.0
        %1624 = vmatpush1.msra.mxu0 0.0
        %1625 = vmatprep.subr.mxu0 0.0
        %1626 = vmatpush1.msra.mxu0 0.0
        %1627 = vmatprep.subr.mxu0 0.0
        %1628 = vmatpush1.msra.mxu0 0.0
        %1629 = vmatprep.subr.mxu0 0.0
        %1630 = vmatpush1.msra.mxu0 0.0
        %1631 = vmatprep.subr.mxu0 0.0
        %1632 = vmatpush1.msra.mxu0 0.0
        %1633 = vmatprep.subr.mxu0 0.0
        %1634 = vmatpush1.msra.mxu0 0.0
        %1635 = vmatprep.mubr.f32.mxu0 0.0
        %1636 = vmatmul.mubr.f32.gmra.mrb[0].mxu0 %v1569
        %v1637 = vpop.f32.mrb[0].mxu0
        %v1638 = vadd.f32 0.0, %v1637
        %v1639 = vpop.f32.mrb[0].mxu0
        %1640 = vdwg.mxu0
        %v1642 = vsel %vm1333, %v1417, 0
        %1644 = vmatprep.subr.mxu0 0.0
        %1645 = vmatpush1.msra.mxu0 %v726
        %1646 = vmatprep.subr.mxu0 0.0
        %1647 = vmatpush1.msra.mxu0 0.0
        %1648 = vmatprep.subr.mxu0 0.0
        %1649 = vmatpush1.msra.mxu0 0.0
        %1650 = vmatprep.subr.mxu0 0.0
        %1651 = vmatpush1.msra.mxu0 0.0
        %1652 = vmatprep.subr.mxu0 0.0
        %1653 = vmatpush1.msra.mxu0 0.0
        %1654 = vmatprep.subr.mxu0 0.0
        %1655 = vmatpush1.msra.mxu0 0.0
        %1656 = vmatprep.subr.mxu0 0.0
        %1657 = vmatpush1.msra.mxu0 0.0
        %1658 = vmatprep.subr.mxu0 0.0
        %1659 = vmatpush1.msra.mxu0 0.0
        %1660 = vmatprep.subr.mxu0 0.0
        %1661 = vmatpush1.msra.mxu0 0.0
        %1662 = vmatprep.subr.mxu0 0.0
        %1663 = vmatpush1.msra.mxu0 0.0
        %1664 = vmatprep.subr.mxu0 0.0
        %1665 = vmatpush1.msra.mxu0 0.0
        %1666 = vmatprep.subr.mxu0 0.0
        %1667 = vmatpush1.msra.mxu0 0.0
        %1668 = vmatprep.subr.mxu0 0.0
        %1669 = vmatpush1.msra.mxu0 0.0
        %1670 = vmatprep.subr.mxu0 0.0
        %1671 = vmatpush1.msra.mxu0 0.0
        %1672 = vmatprep.subr.mxu0 0.0
        %1673 = vmatpush1.msra.mxu0 0.0
        %1674 = vmatprep.subr.mxu0 0.0
        %1675 = vmatpush1.msra.mxu0 0.0
        %1676 = vmatprep.subr.mxu0 0.0
        %1677 = vmatpush1.msra.mxu0 0.0
        %1678 = vmatprep.subr.mxu0 0.0
        %1679 = vmatpush1.msra.mxu0 0.0
        %1680 = vmatprep.subr.mxu0 0.0
        %1681 = vmatpush1.msra.mxu0 0.0
        %1682 = vmatprep.subr.mxu0 0.0
        %1683 = vmatpush1.msra.mxu0 0.0
        %1684 = vmatprep.subr.mxu0 0.0
        %1685 = vmatpush1.msra.mxu0 0.0
        %1686 = vmatprep.subr.mxu0 0.0
        %1687 = vmatpush1.msra.mxu0 0.0
        %1688 = vmatprep.subr.mxu0 0.0
        %1689 = vmatpush1.msra.mxu0 0.0
        %1690 = vmatprep.subr.mxu0 0.0
        %1691 = vmatpush1.msra.mxu0 0.0
        %1692 = vmatprep.subr.mxu0 0.0
        %1693 = vmatpush1.msra.mxu0 0.0
        %1694 = vmatprep.subr.mxu0 0.0
        %1695 = vmatpush1.msra.mxu0 0.0
        %1696 = vmatprep.subr.mxu0 0.0
        %1697 = vmatpush1.msra.mxu0 0.0
        %1698 = vmatprep.subr.mxu0 0.0
        %1699 = vmatpush1.msra.mxu0 0.0
        %1700 = vmatprep.subr.mxu0 0.0
        %1701 = vmatpush1.msra.mxu0 0.0
        %1702 = vmatprep.subr.mxu0 0.0
        %1703 = vmatpush1.msra.mxu0 0.0
        %1704 = vmatprep.subr.mxu0 0.0
        %1705 = vmatpush1.msra.mxu0 0.0
        %1706 = vmatprep.subr.mxu0 0.0
        %1707 = vmatpush1.msra.mxu0 0.0
        %1708 = vmatprep.mubr.f32.mxu0 0.0
        %1709 = vmatmul.mubr.f32.gmra.mrb[0].mxu0 %v1642
        %v1710 = vpop.f32.mrb[0].mxu0
        %v1711 = vadd.f32 0.0, %v1710
        %v1712 = vpop.f32.mrb[0].mxu0
        %1713 = vdwg.mxu0
        %v1715 = vsel %vm1333, %v1418, 0
        %1717 = vmatprep.subr.mxu0 0.0
        %1718 = vmatpush1.msra.mxu0 %v729
        %1719 = vmatprep.subr.mxu0 0.0
        %1720 = vmatpush1.msra.mxu0 0.0
        %1721 = vmatprep.subr.mxu0 0.0
        %1722 = vmatpush1.msra.mxu0 0.0
        %1723 = vmatprep.subr.mxu0 0.0
        %1724 = vmatpush1.msra.mxu0 0.0
        %1725 = vmatprep.subr.mxu0 0.0
        %1726 = vmatpush1.msra.mxu0 0.0
        %1727 = vmatprep.subr.mxu0 0.0
        %1728 = vmatpush1.msra.mxu0 0.0
        %1729 = vmatprep.subr.mxu0 0.0
        %1730 = vmatpush1.msra.mxu0 0.0
        %1731 = vmatprep.subr.mxu0 0.0
        %1732 = vmatpush1.msra.mxu0 0.0
        %1733 = vmatprep.subr.mxu0 0.0
        %1734 = vmatpush1.msra.mxu0 0.0
        %1735 = vmatprep.subr.mxu0 0.0
        %1736 = vmatpush1.msra.mxu0 0.0
        %1737 = vmatprep.subr.mxu0 0.0
        %1738 = vmatpush1.msra.mxu0 0.0
        %1739 = vmatprep.subr.mxu0 0.0
        %1740 = vmatpush1.msra.mxu0 0.0
        %1741 = vmatprep.subr.mxu0 0.0
        %1742 = vmatpush1.msra.mxu0 0.0
        %1743 = vmatprep.subr.mxu0 0.0
        %1744 = vmatpush1.msra.mxu0 0.0
        %1745 = vmatprep.subr.mxu0 0.0
        %1746 = vmatpush1.msra.mxu0 0.0
        %1747 = vmatprep.subr.mxu0 0.0
        %1748 = vmatpush1.msra.mxu0 0.0
        %1749 = vmatprep.subr.mxu0 0.0
        %1750 = vmatpush1.msra.mxu0 0.0
        %1751 = vmatprep.subr.mxu0 0.0
        %1752 = vmatpush1.msra.mxu0 0.0
        %1753 = vmatprep.subr.mxu0 0.0
        %1754 = vmatpush1.msra.mxu0 0.0
        %1755 = vmatprep.subr.mxu0 0.0
        %1756 = vmatpush1.msra.mxu0 0.0
        %1757 = vmatprep.subr.mxu0 0.0
        %1758 = vmatpush1.msra.mxu0 0.0
        %1759 = vmatprep.subr.mxu0 0.0
        %1760 = vmatpush1.msra.mxu0 0.0
        %1761 = vmatprep.subr.mxu0 0.0
        %1762 = vmatpush1.msra.mxu0 0.0
        %1763 = vmatprep.subr.mxu0 0.0
        %1764 = vmatpush1.msra.mxu0 0.0
        %1765 = vmatprep.subr.mxu0 0.0
        %1766 = vmatpush1.msra.mxu0 0.0
        %1767 = vmatprep.subr.mxu0 0.0
        %1768 = vmatpush1.msra.mxu0 0.0
        %1769 = vmatprep.subr.mxu0 0.0
        %1770 = vmatpush1.msra.mxu0 0.0
        %1771 = vmatprep.subr.mxu0 0.0
        %1772 = vmatpush1.msra.mxu0 0.0
        %1773 = vmatprep.subr.mxu0 0.0
        %1774 = vmatpush1.msra.mxu0 0.0
        %1775 = vmatprep.subr.mxu0 0.0
        %1776 = vmatpush1.msra.mxu0 0.0
        %1777 = vmatprep.subr.mxu0 0.0
        %1778 = vmatpush1.msra.mxu0 0.0
        %1779 = vmatprep.subr.mxu0 0.0
        %1780 = vmatpush1.msra.mxu0 0.0
        %1781 = vmatprep.mubr.f32.mxu0 0.0
        %1782 = vmatmul.mubr.f32.gmra.mrb[0].mxu0 %v1715
        %v1783 = vpop.f32.mrb[0].mxu0
        %v1784 = vadd.f32 0.0, %v1783
        %v1785 = vpop.f32.mrb[0].mxu0
        %1786 = vdwg.mxu0
        %v1788 = vsel %vm1333, %v1419, 0
        %1790 = vmatprep.subr.mxu0 0.0
        %1791 = vmatpush1.msra.mxu0 %v732
        %1792 = vmatprep.subr.mxu0 0.0
        %1793 = vmatpush1.msra.mxu0 0.0
        %1794 = vmatprep.subr.mxu0 0.0
        %1795 = vmatpush1.msra.mxu0 0.0
        %1796 = vmatprep.subr.mxu0 0.0
        %1797 = vmatpush1.msra.mxu0 0.0
        %1798 = vmatprep.subr.mxu0 0.0
        %1799 = vmatpush1.msra.mxu0 0.0
        %1800 = vmatprep.subr.mxu0 0.0
        %1801 = vmatpush1.msra.mxu0 0.0
        %1802 = vmatprep.subr.mxu0 0.0
        %1803 = vmatpush1.msra.mxu0 0.0
        %1804 = vmatprep.subr.mxu0 0.0
        %1805 = vmatpush1.msra.mxu0 0.0
        %1806 = vmatprep.subr.mxu0 0.0
        %1807 = vmatpush1.msra.mxu0 0.0
        %1808 = vmatprep.subr.mxu0 0.0
        %1809 = vmatpush1.msra.mxu0 0.0
        %1810 = vmatprep.subr.mxu0 0.0
        %1811 = vmatpush1.msra.mxu0 0.0
        %1812 = vmatprep.subr.mxu0 0.0
        %1813 = vmatpush1.msra.mxu0 0.0
        %1814 = vmatprep.subr.mxu0 0.0
        %1815 = vmatpush1.msra.mxu0 0.0
        %1816 = vmatprep.subr.mxu0 0.0
        %1817 = vmatpush1.msra.mxu0 0.0
        %1818 = vmatprep.subr.mxu0 0.0
        %1819 = vmatpush1.msra.mxu0 0.0
        %1820 = vmatprep.subr.mxu0 0.0
        %1821 = vmatpush1.msra.mxu0 0.0
        %1822 = vmatprep.subr.mxu0 0.0
        %1823 = vmatpush1.msra.mxu0 0.0
        %1824 = vmatprep.subr.mxu0 0.0
        %1825 = vmatpush1.msra.mxu0 0.0
        %1826 = vmatprep.subr.mxu0 0.0
        %1827 = vmatpush1.msra.mxu0 0.0
        %1828 = vmatprep.subr.mxu0 0.0
        %1829 = vmatpush1.msra.mxu0 0.0
        %1830 = vmatprep.subr.mxu0 0.0
        %1831 = vmatpush1.msra.mxu0 0.0
        %1832 = vmatprep.subr.mxu0 0.0
        %1833 = vmatpush1.msra.mxu0 0.0
        %1834 = vmatprep.subr.mxu0 0.0
        %1835 = vmatpush1.msra.mxu0 0.0
        %1836 = vmatprep.subr.mxu0 0.0
        %1837 = vmatpush1.msra.mxu0 0.0
        %1838 = vmatprep.subr.mxu0 0.0
        %1839 = vmatpush1.msra.mxu0 0.0
        %1840 = vmatprep.subr.mxu0 0.0
        %1841 = vmatpush1.msra.mxu0 0.0
        %1842 = vmatprep.subr.mxu0 0.0
        %1843 = vmatpush1.msra.mxu0 0.0
        %1844 = vmatprep.subr.mxu0 0.0
        %1845 = vmatpush1.msra.mxu0 0.0
        %1846 = vmatprep.subr.mxu0 0.0
        %1847 = vmatpush1.msra.mxu0 0.0
        %1848 = vmatprep.subr.mxu0 0.0
        %1849 = vmatpush1.msra.mxu0 0.0
        %1850 = vmatprep.subr.mxu0 0.0
        %1851 = vmatpush1.msra.mxu0 0.0
        %1852 = vmatprep.subr.mxu0 0.0
        %1853 = vmatpush1.msra.mxu0 0.0
        %1854 = vmatprep.mubr.f32.mxu0 0.0
        %1855 = vmatmul.mubr.f32.gmra.mrb[0].mxu0 %v1788
        %v1856 = vpop.f32.mrb[0].mxu0
        %v1857 = vadd.f32 0.0, %v1856
        %v1858 = vpop.f32.mrb[0].mxu0
        %1859 = vdwg.mxu0
        %v1861 = vsel %vm1333, %v1420, 0
        %1863 = vmatprep.subr.mxu0 0.0
        %1864 = vmatpush1.msra.mxu0 %v735
        %1865 = vmatprep.subr.mxu0 0.0
        %1866 = vmatpush1.msra.mxu0 0.0
        %1867 = vmatprep.subr.mxu0 0.0
        %1868 = vmatpush1.msra.mxu0 0.0
        %1869 = vmatprep.subr.mxu0 0.0
        %1870 = vmatpush1.msra.mxu0 0.0
        %1871 = vmatprep.subr.mxu0 0.0
        %1872 = vmatpush1.msra.mxu0 0.0
        %1873 = vmatprep.subr.mxu0 0.0
        %1874 = vmatpush1.msra.mxu0 0.0
        %1875 = vmatprep.subr.mxu0 0.0
        %1876 = vmatpush1.msra.mxu0 0.0
        %1877 = vmatprep.subr.mxu0 0.0
        %1878 = vmatpush1.msra.mxu0 0.0
        %1879 = vmatprep.subr.mxu0 0.0
        %1880 = vmatpush1.msra.mxu0 0.0
        %1881 = vmatprep.subr.mxu0 0.0
        %1882 = vmatpush1.msra.mxu0 0.0
        %1883 = vmatprep.subr.mxu0 0.0
        %1884 = vmatpush1.msra.mxu0 0.0
        %1885 = vmatprep.subr.mxu0 0.0
        %1886 = vmatpush1.msra.mxu0 0.0
        %1887 = vmatprep.subr.mxu0 0.0
        %1888 = vmatpush1.msra.mxu0 0.0
        %1889 = vmatprep.subr.mxu0 0.0
        %1890 = vmatpush1.msra.mxu0 0.0
        %1891 = vmatprep.subr.mxu0 0.0
        %1892 = vmatpush1.msra.mxu0 0.0
        %1893 = vmatprep.subr.mxu0 0.0
        %1894 = vmatpush1.msra.mxu0 0.0
        %1895 = vmatprep.subr.mxu0 0.0
        %1896 = vmatpush1.msra.mxu0 0.0
        %1897 = vmatprep.subr.mxu0 0.0
        %1898 = vmatpush1.msra.mxu0 0.0
        %1899 = vmatprep.subr.mxu0 0.0
        %1900 = vmatpush1.msra.mxu0 0.0
        %1901 = vmatprep.subr.mxu0 0.0
        %1902 = vmatpush1.msra.mxu0 0.0
        %1903 = vmatprep.subr.mxu0 0.0
        %1904 = vmatpush1.msra.mxu0 0.0
        %1905 = vmatprep.subr.mxu0 0.0
        %1906 = vmatpush1.msra.mxu0 0.0
        %1907 = vmatprep.subr.mxu0 0.0
        %1908 = vmatpush1.msra.mxu0 0.0
        %1909 = vmatprep.subr.mxu0 0.0
        %1910 = vmatpush1.msra.mxu0 0.0
        %1911 = vmatprep.subr.mxu0 0.0
        %1912 = vmatpush1.msra.mxu0 0.0
        %1913 = vmatprep.subr.mxu0 0.0
        %1914 = vmatpush1.msra.mxu0 0.0
        %1915 = vmatprep.subr.mxu0 0.0
        %1916 = vmatpush1.msra.mxu0 0.0
        %1917 = vmatprep.subr.mxu0 0.0
        %1918 = vmatpush1.msra.mxu0 0.0
        %1919 = vmatprep.subr.mxu0 0.0
        %1920 = vmatpush1.msra.mxu0 0.0
        %1921 = vmatprep.subr.mxu0 0.0
        %1922 = vmatpush1.msra.mxu0 0.0
        %1923 = vmatprep.subr.mxu0 0.0
        %1924 = vmatpush1.msra.mxu0 0.0
        %1925 = vmatprep.subr.mxu0 0.0
        %1926 = vmatpush1.msra.mxu0 0.0
        %1927 = vmatprep.mubr.f32.mxu0 0.0
        %1928 = vmatmul.mubr.f32.gmra.mrb[0].mxu0 %v1861
        %v1929 = vpop.f32.mrb[0].mxu0
        %v1930 = vadd.f32 0.0, %v1929
        %v1931 = vpop.f32.mrb[0].mxu0
        %1932 = vdwg.mxu0
        %v1934 = vsel %vm1333, %v1421, 0
        %1936 = vmatprep.subr.mxu0 0.0
        %1937 = vmatpush1.msra.mxu0 %v738
        %1938 = vmatprep.subr.mxu0 0.0
        %1939 = vmatpush1.msra.mxu0 0.0
        %1940 = vmatprep.subr.mxu0 0.0
        %1941 = vmatpush1.msra.mxu0 0.0
        %1942 = vmatprep.subr.mxu0 0.0
        %1943 = vmatpush1.msra.mxu0 0.0
        %1944 = vmatprep.subr.mxu0 0.0
        %1945 = vmatpush1.msra.mxu0 0.0
        %1946 = vmatprep.subr.mxu0 0.0
        %1947 = vmatpush1.msra.mxu0 0.0
        %1948 = vmatprep.subr.mxu0 0.0
        %1949 = vmatpush1.msra.mxu0 0.0
        %1950 = vmatprep.subr.mxu0 0.0
        %1951 = vmatpush1.msra.mxu0 0.0
        %1952 = vmatprep.subr.mxu0 0.0
        %1953 = vmatpush1.msra.mxu0 0.0
        %1954 = vmatprep.subr.mxu0 0.0
        %1955 = vmatpush1.msra.mxu0 0.0
        %1956 = vmatprep.subr.mxu0 0.0
        %1957 = vmatpush1.msra.mxu0 0.0
        %1958 = vmatprep.subr.mxu0 0.0
        %1959 = vmatpush1.msra.mxu0 0.0
        %1960 = vmatprep.subr.mxu0 0.0
        %1961 = vmatpush1.msra.mxu0 0.0
        %1962 = vmatprep.subr.mxu0 0.0
        %1963 = vmatpush1.msra.mxu0 0.0
        %1964 = vmatprep.subr.mxu0 0.0
        %1965 = vmatpush1.msra.mxu0 0.0
        %1966 = vmatprep.subr.mxu0 0.0
        %1967 = vmatpush1.msra.mxu0 0.0
        %1968 = vmatprep.subr.mxu0 0.0
        %1969 = vmatpush1.msra.mxu0 0.0
        %1970 = vmatprep.subr.mxu0 0.0
        %1971 = vmatpush1.msra.mxu0 0.0
        %1972 = vmatprep.subr.mxu0 0.0
        %1973 = vmatpush1.msra.mxu0 0.0
        %1974 = vmatprep.subr.mxu0 0.0
        %1975 = vmatpush1.msra.mxu0 0.0
        %1976 = vmatprep.subr.mxu0 0.0
        %1977 = vmatpush1.msra.mxu0 0.0
        %1978 = vmatprep.subr.mxu0 0.0
        %1979 = vmatpush1.msra.mxu0 0.0
        %1980 = vmatprep.subr.mxu0 0.0
        %1981 = vmatpush1.msra.mxu0 0.0
        %1982 = vmatprep.subr.mxu0 0.0
        %1983 = vmatpush1.msra.mxu0 0.0
        %1984 = vmatprep.subr.mxu0 0.0
        %1985 = vmatpush1.msra.mxu0 0.0
        %1986 = vmatprep.subr.mxu0 0.0
        %1987 = vmatpush1.msra.mxu0 0.0
        %1988 = vmatprep.subr.mxu0 0.0
        %1989 = vmatpush1.msra.mxu0 0.0
        %1990 = vmatprep.subr.mxu0 0.0
        %1991 = vmatpush1.msra.mxu0 0.0
        %1992 = vmatprep.subr.mxu0 0.0
        %1993 = vmatpush1.msra.mxu0 0.0
        %1994 = vmatprep.subr.mxu0 0.0
        %1995 = vmatpush1.msra.mxu0 0.0
        %1996 = vmatprep.subr.mxu0 0.0
        %1997 = vmatpush1.msra.mxu0 0.0
        %1998 = vmatprep.subr.mxu0 0.0
        %1999 = vmatpush1.msra.mxu0 0.0
        %2000 = vmatprep.mubr.f32.mxu0 0.0
        %2001 = vmatmul.mubr.f32.gmra.mrb[0].mxu0 %v1934
        %v2002 = vpop.f32.mrb[0].mxu0
        %v2003 = vadd.f32 0.0, %v2002
        %v2004 = vpop.f32.mrb[0].mxu0
        %2005 = vdwg.mxu0
        %2006 = vst.msk [vmem:[#allocation2] sm:$0xff] %vm740, %v1492
        %2008 = vrot.lane.b32.xlu0 %v1565, 16
        %v2009 = vpop.permute.xlu0 %2008
        %vm2011 = vcmask 261248
        %2012 = vst.msk [vmem:[#allocation2] sm:$0xff] %vm2011, %v2009
        %2014 = vrot.lane.b32.xlu0 %v1638, 32
        %v2015 = vpop.permute.xlu0 %2014
        %vm2017 = vcmask 392448
        %2018 = vst.msk [vmem:[#allocation2] sm:$0xff] %vm2017, %v2015
        %2020 = vrot.lane.b32.xlu0 %v1711, 48
        %v2021 = vpop.permute.xlu0 %2020
        %vm2023 = vcmask 523648
        %2024 = vst.msk [vmem:[#allocation2] sm:$0xff] %vm2023, %v2021
        %2026 = vrot.lane.b32.xlu0 %v1784, 64
        %v2027 = vpop.permute.xlu0 %2026
        %vm2029 = vcmask 654848
        %2030 = vst.msk [vmem:[#allocation2] sm:$0xff] %vm2029, %v2027
        %2032 = vrot.lane.b32.xlu0 %v1857, 80
        %v2033 = vpop.permute.xlu0 %2032
        %vm2035 = vcmask 786048
        %2036 = vst.msk [vmem:[#allocation2] sm:$0xff] %vm2035, %v2033
        %2038 = vrot.lane.b32.xlu0 %v1930, 96
        %v2039 = vpop.permute.xlu0 %2038
        %vm2041 = vcmask 917248
        %2042 = vst.msk [vmem:[#allocation2] sm:$0xff] %vm2041, %v2039
        %2044 = vrot.lane.b32.xlu0 %v2003, 112
        %v2045 = vpop.permute.xlu0 %2044
        %vm2047 = vcmask 1048448
        %2048 = vst.msk [vmem:[#allocation2] sm:$0xff] %vm2047, %v2045
        %v2049 = vld [vmem:[#allocation2] sm:$0xff]
        %2050 = vmatprep.subr.mxu0 0.0
        %2051 = vmatpush1.msra.mxu0 %v396
        %2052 = vmatprep.subr.mxu0 0.0
        %2053 = vmatpush1.msra.mxu0 %v397
        %2054 = vmatprep.subr.mxu0 0.0
        %2055 = vmatpush1.msra.mxu0 %v398
        %2056 = vmatprep.subr.mxu0 0.0
        %2057 = vmatpush1.msra.mxu0 %v399
        %2058 = vmatprep.subr.mxu0 0.0
        %2059 = vmatpush1.msra.mxu0 %v400
        %2060 = vmatprep.subr.mxu0 0.0
        %2061 = vmatpush1.msra.mxu0 %v401
        %2062 = vmatprep.subr.mxu0 0.0
        %2063 = vmatpush1.msra.mxu0 %v402
        %2064 = vmatprep.subr.mxu0 0.0
        %2065 = vmatpush1.msra.mxu0 %v403
        %2066 = vmatprep.subr.mxu0 0.0
        %2067 = vmatpush1.msra.mxu0 %v404
        %2068 = vmatprep.subr.mxu0 0.0
        %2069 = vmatpush1.msra.mxu0 %v405
        %2070 = vmatprep.subr.mxu0 0.0
        %2071 = vmatpush1.msra.mxu0 %v406
        %2072 = vmatprep.subr.mxu0 0.0
        %2073 = vmatpush1.msra.mxu0 %v407
        %2074 = vmatprep.subr.mxu0 0.0
        %2075 = vmatpush1.msra.mxu0 %v408
        %2076 = vmatprep.subr.mxu0 0.0
        %2077 = vmatpush1.msra.mxu0 %v409
        %2078 = vmatprep.subr.mxu0 0.0
        %2079 = vmatpush1.msra.mxu0 %v410
        %2080 = vmatprep.subr.mxu0 0.0
        %2081 = vmatpush1.msra.mxu0 %v411
        %2082 = vmatprep.subr.mxu0 0.0
        %2083 = vmatpush1.msra.mxu0 0.0
        %2084 = vmatprep.subr.mxu0 0.0
        %2085 = vmatpush1.msra.mxu0 0.0
        %2086 = vmatprep.subr.mxu0 0.0
        %2087 = vmatpush1.msra.mxu0 0.0
        %2088 = vmatprep.subr.mxu0 0.0
        %2089 = vmatpush1.msra.mxu0 0.0
        %2090 = vmatprep.subr.mxu0 0.0
        %2091 = vmatpush1.msra.mxu0 0.0
        %2092 = vmatprep.subr.mxu0 0.0
        %2093 = vmatpush1.msra.mxu0 0.0
        %2094 = vmatprep.subr.mxu0 0.0
        %2095 = vmatpush1.msra.mxu0 0.0
        %2096 = vmatprep.subr.mxu0 0.0
        %2097 = vmatpush1.msra.mxu0 0.0
        %2098 = vmatprep.subr.mxu0 0.0
        %2099 = vmatpush1.msra.mxu0 0.0
        %2100 = vmatprep.subr.mxu0 0.0
        %2101 = vmatpush1.msra.mxu0 0.0
        %2102 = vmatprep.subr.mxu0 0.0
        %2103 = vmatpush1.msra.mxu0 0.0
        %2104 = vmatprep.subr.mxu0 0.0
        %2105 = vmatpush1.msra.mxu0 0.0
        %2106 = vmatprep.subr.mxu0 0.0
        %2107 = vmatpush1.msra.mxu0 0.0
        %2108 = vmatprep.subr.mxu0 0.0
        %2109 = vmatpush1.msra.mxu0 0.0
        %2110 = vmatprep.subr.mxu0 0.0
        %2111 = vmatpush1.msra.mxu0 0.0
        %2112 = vmatprep.subr.mxu0 0.0
        %2113 = vmatpush1.msra.mxu0 0.0
        %2114 = vmatprep.mubr.f32.mxu0 0.0
        %2115 = vmatmul.mubr.f32.gmra.mrb[0].mxu0 %v2049
        %v2116 = vpop.f32.mrb[0].mxu0
        %v2117 = vadd.f32 0.0, %v2116
        %v2118 = vpop.f32.mrb[0].mxu0
        %2119 = vdwg.mxu0
        %v2120 = vadd.f32 %v476, %v2117
        %2121 = vadd.xlane.f32.xlu0 %v2120
        %v2122 = vpop.xlane.xlu0 %2121
        %v2123 = vrcp.pop 128.0
        %v2124 = vmul.f32 %v2122, %v2123
        %v2125 = vsub.f32 %v2120, %v2124
        %v2126 = vmul.f32 %v2125, %v2125
        %2127 = vadd.xlane.f32.xlu0 %v2126
        %v2128 = vpop.xlane.xlu0 %2127
        %v2129 = vmul.f32 %v2128, %v2123
        %v2130 = vadd.f32 %v2129, 1e-05
        %v2131 = vrsqrt.pop %v2130
        %v2132 = vmul.f32 %v2125, %v2131
        %2133 = vmatprep.subr.mxu0 %v413
        %2134 = vmatpush1.msra.mxu0 %v412
        %2135 = vmatprep.subr.mxu0 %v415
        %2136 = vmatpush1.msra.mxu0 %v414
        %2137 = vmatprep.subr.mxu0 %v417
        %2138 = vmatpush1.msra.mxu0 %v416
        %2139 = vmatprep.subr.mxu0 %v419
        %2140 = vmatpush1.msra.mxu0 %v418
        %2141 = vmatprep.subr.mxu0 %v421
        %2142 = vmatpush1.msra.mxu0 %v420
        %2143 = vmatprep.subr.mxu0 %v423
        %2144 = vmatpush1.msra.mxu0 %v422
        %2145 = vmatprep.subr.mxu0 %v425
        %2146 = vmatpush1.msra.mxu0 %v424
        %2147 = vmatprep.subr.mxu0 %v427
        %2148 = vmatpush1.msra.mxu0 %v426
        %2149 = vmatprep.subr.mxu0 %v429
        %2150 = vmatpush1.msra.mxu0 %v428
        %2151 = vmatprep.subr.mxu0 %v431
        %2152 = vmatpush1.msra.mxu0 %v430
        %2153 = vmatprep.subr.mxu0 %v433
        %2154 = vmatpush1.msra.mxu0 %v432
        %2155 = vmatprep.subr.mxu0 %v435
        %2156 = vmatpush1.msra.mxu0 %v434
        %2157 = vmatprep.subr.mxu0 %v437
        %2158 = vmatpush1.msra.mxu0 %v436
        %2159 = vmatprep.subr.mxu0 %v439
        %2160 = vmatpush1.msra.mxu0 %v438
        %2161 = vmatprep.subr.mxu0 %v441
        %2162 = vmatpush1.msra.mxu0 %v440
        %2163 = vmatprep.subr.mxu0 %v443
        %2164 = vmatpush1.msra.mxu0 %v442
        %2165 = vmatprep.subr.mxu0 0.0
        %2166 = vmatpush1.msra.mxu0 0.0
        %2167 = vmatprep.subr.mxu0 0.0
        %2168 = vmatpush1.msra.mxu0 0.0
        %2169 = vmatprep.subr.mxu0 0.0
        %2170 = vmatpush1.msra.mxu0 0.0
        %2171 = vmatprep.subr.mxu0 0.0
        %2172 = vmatpush1.msra.mxu0 0.0
        %2173 = vmatprep.subr.mxu0 0.0
        %2174 = vmatpush1.msra.mxu0 0.0
        %2175 = vmatprep.subr.mxu0 0.0
        %2176 = vmatpush1.msra.mxu0 0.0
        %2177 = vmatprep.subr.mxu0 0.0
        %2178 = vmatpush1.msra.mxu0 0.0
        %2179 = vmatprep.subr.mxu0 0.0
        %2180 = vmatpush1.msra.mxu0 0.0
        %2181 = vmatprep.subr.mxu0 0.0
        %2182 = vmatpush1.msra.mxu0 0.0
        %2183 = vmatprep.subr.mxu0 0.0
        %2184 = vmatpush1.msra.mxu0 0.0
        %2185 = vmatprep.subr.mxu0 0.0
        %2186 = vmatpush1.msra.mxu0 0.0
        %2187 = vmatprep.subr.mxu0 0.0
        %2188 = vmatpush1.msra.mxu0 0.0
        %2189 = vmatprep.subr.mxu0 0.0
        %2190 = vmatpush1.msra.mxu0 0.0
        %2191 = vmatprep.subr.mxu0 0.0
        %2192 = vmatpush1.msra.mxu0 0.0
        %2193 = vmatprep.subr.mxu0 0.0
        %2194 = vmatpush1.msra.mxu0 0.0
        %2195 = vmatprep.subr.mxu0 0.0
        %2196 = vmatpush1.msra.mxu0 0.0
        %2197 = vmatprep.mubr.f32.mxu0 0.0
        %2198 = vmatmul.mubr.f32.gmra.mrb[0].mxu0 %v2132
        %v2199 = vpop.f32.mrb[0].mxu0
        %v2200 = vadd.f32 0.0, %v2199
        %v2201 = vpop.f32.mrb[0].mxu0
        %v2202 = vadd.f32 0.0, %v2201
        %2203 = vdwg.mxu0
        %v2204 = vmax.f32 %v2200, 0.0
        %v2205 = vmax.f32 %v2202, 0.0
        %2206 = vmatprep.subr.mxu0 0.0
        %2207 = vmatpush1.msra.mxu0 %v444
        %2208 = vmatprep.subr.mxu0 0.0
        %2209 = vmatpush1.msra.mxu0 %v445
        %2210 = vmatprep.subr.mxu0 0.0
        %2211 = vmatpush1.msra.mxu0 %v446
        %2212 = vmatprep.subr.mxu0 0.0
        %2213 = vmatpush1.msra.mxu0 %v447
        %2214 = vmatprep.subr.mxu0 0.0
        %2215 = vmatpush1.msra.mxu0 %v448
        %2216 = vmatprep.subr.mxu0 0.0
        %2217 = vmatpush1.msra.mxu0 %v449
        %2218 = vmatprep.subr.mxu0 0.0
        %2219 = vmatpush1.msra.mxu0 %v450
        %2220 = vmatprep.subr.mxu0 0.0
        %2221 = vmatpush1.msra.mxu0 %v451
        %2222 = vmatprep.subr.mxu0 0.0
        %2223 = vmatpush1.msra.mxu0 %v452
        %2224 = vmatprep.subr.mxu0 0.0
        %2225 = vmatpush1.msra.mxu0 %v453
        %2226 = vmatprep.subr.mxu0 0.0
        %2227 = vmatpush1.msra.mxu0 %v454
        %2228 = vmatprep.subr.mxu0 0.0
        %2229 = vmatpush1.msra.mxu0 %v455
        %2230 = vmatprep.subr.mxu0 0.0
        %2231 = vmatpush1.msra.mxu0 %v456
        %2232 = vmatprep.subr.mxu0 0.0
        %2233 = vmatpush1.msra.mxu0 %v457
        %2234 = vmatprep.subr.mxu0 0.0
        %2235 = vmatpush1.msra.mxu0 %v458
        %2236 = vmatprep.subr.mxu0 0.0
        %2237 = vmatpush1.msra.mxu0 %v459
        %2238 = vmatprep.subr.mxu0 0.0
        %2239 = vmatpush1.msra.mxu0 %v460
        %2240 = vmatprep.subr.mxu0 0.0
        %2241 = vmatpush1.msra.mxu0 %v461
        %2242 = vmatprep.subr.mxu0 0.0
        %2243 = vmatpush1.msra.mxu0 %v462
        %2244 = vmatprep.subr.mxu0 0.0
        %2245 = vmatpush1.msra.mxu0 %v463
        %2246 = vmatprep.subr.mxu0 0.0
        %2247 = vmatpush1.msra.mxu0 %v464
        %2248 = vmatprep.subr.mxu0 0.0
        %2249 = vmatpush1.msra.mxu0 %v465
        %2250 = vmatprep.subr.mxu0 0.0
        %2251 = vmatpush1.msra.mxu0 %v466
        %2252 = vmatprep.subr.mxu0 0.0
        %2253 = vmatpush1.msra.mxu0 %v467
        %2254 = vmatprep.subr.mxu0 0.0
        %2255 = vmatpush1.msra.mxu0 %v468
        %2256 = vmatprep.subr.mxu0 0.0
        %2257 = vmatpush1.msra.mxu0 %v469
        %2258 = vmatprep.subr.mxu0 0.0
        %2259 = vmatpush1.msra.mxu0 %v470
        %2260 = vmatprep.subr.mxu0 0.0
        %2261 = vmatpush1.msra.mxu0 %v471
        %2262 = vmatprep.subr.mxu0 0.0
        %2263 = vmatpush1.msra.mxu0 %v472
        %2264 = vmatprep.subr.mxu0 0.0
        %2265 = vmatpush1.msra.mxu0 %v473
        %2266 = vmatprep.subr.mxu0 0.0
        %2267 = vmatpush1.msra.mxu0 %v474
        %2268 = vmatprep.subr.mxu0 0.0
        %2269 = vmatpush1.msra.mxu0 %v475
        %2270 = vmatprep.mubr.f32.mxu0 %v2205
        %2271 = vmatmul.mubr.f32.gmra.mrb[0].mxu0 %v2204
        %v2272 = vpop.f32.mrb[0].mxu0
        %v2273 = vadd.f32 0.0, %v2272
        %v2274 = vpop.f32.mrb[0].mxu0
        %2275 = vdwg.mxu0
        %v2276 = vadd.f32 %v2132, %v2273
        %2277 = vadd.xlane.f32.xlu0 %v2276
        %v2278 = vpop.xlane.xlu0 %2277
        %v2279 = vmul.f32 %v2278, %v2123
        %v2280 = vsub.f32 %v2276, %v2279
        %v2281 = vmul.f32 %v2280, %v2280
        %2282 = vadd.xlane.f32.xlu0 %v2281
        %v2283 = vpop.xlane.xlu0 %2282
        %v2284 = vmul.f32 %v2283, %v2123
        %v2285 = vadd.f32 %v2284, 1e-05
        %v2286 = vrsqrt.pop %v2285
        %v2287 = vmul.f32 %v2280, %v2286
        %2288 = vst [vmem:[%s347] sm:$0xff] %v2287
        %p2289 = scmp.lt.s32.totalorder %s21, 1
        %s2290 = scalar_select %p2289, %s21, 1
        %s2291 = smul.addr %s2290, 8
        %s2292 = scalar_lea.vmem %s8, %s2291
        // Predicated region
        $region61: #{transformer_forward.3} parent=51 // pred_check
          %p2293 = pneg %p217
        $region62: #{transformer_forward.3} parent=51 // pred_check_branch
          %2295 = sbr.rel (%p2293) target = $region64
        $region63: #{transformer_forward.3} parent=51 // pred_region
          _
        $region64: #{transformer_forward.3} parent=51 // pred_fallthru
          _
      $region52: #{transformer_forward.3} parent=5 // pred_fallthru
        _
      %p2296 = scmp.le.s32.totalorder 2, %s16
      // Predicated region
      $region65: #{transformer_forward.3} parent=5 // pred_check
        %p2297 = pneg %p2296
      $region66: #{transformer_forward.3} parent=5 // pred_check_branch
        %2299 = sbr.rel (%p2297) target = $region68
      $region67: #{transformer_forward.3} parent=5 // pred_region
        %s2300 = ssub.s32 %s16, 2
        // Predicated region
        $region69: #{transformer_forward.3} parent=67 // pred_check
          %p2301 = pneg %p223
        $region70: #{transformer_forward.3} parent=67 // pred_check_branch
          %2303 = sbr.rel (%p2301) target = $region72
        $region71: #{transformer_forward.3} parent=67 // pred_region
          %p2304 = scmp.lt.s32.totalorder %s22, 1
          %s2305 = scalar_select %p2304, %s22, 1
          %s2306 = smul.addr %s2305, 8
          %s2307 = scalar_lea.vmem %s8, %s2306
        $region72: #{transformer_forward.3} parent=67 // pred_fallthru
          _
      $region68: #{transformer_forward.3} parent=5 // pred_fallthru
        _
    $region6: #{transformer_forward.3} parent=1 // loop_footer
      %s20 = sadd.s32 1, %s16
    $region7: #{transformer_forward.3} parent=1 // loop_footer_branch
      %15 = sbr.rel target = $region3
    $region8: #{transformer_forward.3} parent=1 // loop_exit
      _
    %2308 = vsyncpa [#allocation4], 1
    %s2309 = scalar_lea.sflag [#allocation4], 1
    %2310 = vsyncpa %s2309, 1
    %2311 = vsyncpa [#allocation6], 1

// kernel: transformer_forward.4
$region0: #{transformer_forward.4}
  #allocation0 [shape = 'u32[]', space=smem, size = 0x4, offset = 0x4, fixed_abs, tag = 'smem constant byte address 0x4 - core index']
  #allocation1 [shape = 'u32[144,128]{1,0:T(1,128)}', space=vmem, size = 0x12000, scoped, tag = 'internal scratch']
  #allocation2 [shape = 'f32[8,128]{1,0:T(8,128)}', space=vmem, size = 0x1000, scoped, tag = 'scratch operand']
  %s0 = inlined_call_operand.vmem [shape: f32[2,8,128], index: 0, kind: input, shape index: {}]
  %s1 = inlined_call_operand.vmem [shape: f32[2,8,128], index: 1, kind: input, shape index: {}]
  %s2 = inlined_call_operand.vmem [shape: f32[2,8,8], index: 2, kind: input, shape index: {}]
  %s3 = inlined_call_operand.vmem [shape: f32[2,8,8], index: 3, kind: input, shape index: {}]
  %s4 = inlined_call_operand.vmem [shape: f32[128,128], index: 4, kind: input, shape index: {}]
  %s5 = inlined_call_operand.vmem [shape: f32[128,128], index: 5, kind: input, shape index: {}]
  %s6 = inlined_call_operand.vmem [shape: f32[128,128], index: 6, kind: input, shape index: {}]
  %s7 = inlined_call_operand.vmem [shape: f32[128,128], index: 7, kind: input, shape index: {}]
  %s8 = inlined_call_operand.vmem [shape: f32[128,128], index: 8, kind: input, shape index: {}]
  %s9 = inlined_call_operand.vmem [shape: f32[128,128], index: 9, kind: input, shape index: {}]
  %s10 = inlined_call_operand.vmem [shape: f32[128,128], index: 10, kind: input, shape index: {}]
  %s11 = inlined_call_operand.vmem [shape: f32[128,128], index: 11, kind: input, shape index: {}]
  %s12 = inlined_call_operand.vmem [shape: f32[128,256], index: 12, kind: input, shape index: {}]
  %s13 = inlined_call_operand.vmem [shape: f32[256,128], index: 13, kind: input, shape index: {}]
  %s14 = inlined_call_operand.vmem [shape: f32[2,8,128], index: 14, kind: output, shape index: {}]
  %s15 = sld [smem:[#allocation0]]
  $region89: #{transformer_forward.4} parent=0
    _
  %s17 = ssub.s32 1, %s15
  %s18 = scalar_select 0, %s17, %s15
  loop: start=0, step=1, limit=4
  $region2: #{transformer_forward.4} parent=0 // loop_pre_header
    _
  $region3: #{transformer_forward.4} parent=0 // loop_header
    %s20 = sphi 0, %s24
    %p21 = scmp.ge.s32.totalorder %s20, 4
    %s30 = sphi 0, %s32
    %s33 = sphi 0, %s30
    %s34 = sphi 0, %s33
    %s50 = sphi 0, %s34
    %s56 = sphi 0, %s58
    %s59 = sphi 0, %s56
    %s60 = sphi 0, %s59
    %s76 = sphi 0, %s60
    %s82 = sphi 0, %s84
    %s85 = sphi 0, %s82
    %s86 = sphi 0, %s85
    %s102 = sphi 0, %s86
    %s108 = sphi 0, %s110
    %s111 = sphi 0, %s108
    %s112 = sphi 0, %s111
    %s128 = sphi 0, %s112
    %s132 = sphi 0, %s132
    %s134 = sphi 0, %s132
    %s135 = sphi 0, %s134
    %s149 = sphi 0, %s135
    %s153 = sphi 0, %s153
    %s155 = sphi 0, %s153
    %s156 = sphi 0, %s155
    %s170 = sphi 0, %s156
    %s174 = sphi 0, %s174
    %s176 = sphi 0, %s174
    %s177 = sphi 0, %s176
    %s191 = sphi 0, %s177
    %s195 = sphi 0, %s195
    %s197 = sphi 0, %s195
    %s198 = sphi 0, %s197
    %s212 = sphi 0, %s198
    %s216 = sphi 0, %s216
    %s218 = sphi 0, %s216
    %s219 = sphi 0, %s218
    %s233 = sphi 0, %s219
    %s237 = sphi 0, %s237
    %s239 = sphi 0, %s237
    %s240 = sphi 0, %s239
    %s254 = sphi 0, %s240
    %s258 = sphi 0, %s258
    %s260 = sphi 0, %s258
    %s261 = sphi 0, %s260
    %s275 = sphi 0, %s261
    %s279 = sphi 0, %s279
    %s281 = sphi 0, %s279
    %s282 = sphi 0, %s281
    %s296 = sphi 0, %s282
    %s300 = sphi 0, %s300
    %s302 = sphi 0, %s300
    %s303 = sphi 0, %s302
    %s317 = sphi 0, %s303
    %s321 = sphi 0, %s321
    %s323 = sphi 0, %s321
    %s324 = sphi 0, %s323
    %s338 = sphi 0, %s324
    %s344 = sphi 0, %s346
    %s347 = sphi 0, %s344
    %s348 = sphi 0, %s347
    %s364 = sphi 0, %s348
  $region4: #{transformer_forward.4} parent=0 // loop_header_branch
    %23 = sbr.rel (%p21) target = $region8
  $region5: #{transformer_forward.4} parent=0 // loop_body
    %s25 = ssub.s32 %s20, 1
    %s26 = ssub.s32 %s20, 2
    %s27 = sadd.s32 %s20, 1
    %s28 = ssub.s32 %s20, %s27
    %p29 = scmp.eq.s32.totalorder %s28, 0
    %s31 = sadd.s32 %s30, 1
    %s32 = scalar_select %p29, %s30, %s31
    %p35 = pneg %p29
    %p36 = scmp.eq.s32.totalorder %s20, 1
    %p37 = por %p35, %p36
    %p38 = scmp.ne.s32.totalorder %s30, %s33
    %p39 = scmp.eq.s32.totalorder %s20, 0
    %p40 = por %p38, %p39
    %p41 = scmp.ne.s32.totalorder %s30, %s33
    %p42 = scmp.eq.s32.totalorder %s25, 1
    %p43 = por %p41, %p42
    %p44 = scmp.ne.s32.totalorder %s33, %s34
    %p45 = scmp.eq.s32.totalorder %s25, 0
    %p46 = por %p44, %p45
    %p47 = scmp.ne.s32.totalorder %s33, %s34
    %p48 = scmp.eq.s32.totalorder %s26, 1
    %p49 = por %p47, %p48
    %p51 = scmp.ne.s32.totalorder %s34, %s50
    %p52 = scmp.eq.s32.totalorder %s26, 0
    %p53 = por %p51, %p52
    %s54 = ssub.s32 %s20, %s27
    %p55 = scmp.eq.s32.totalorder %s54, 0
    %s57 = sadd.s32 %s56, 1
    %s58 = scalar_select %p55, %s56, %s57
    %p61 = pneg %p55
    %p62 = scmp.eq.s32.totalorder %s20, 1
    %p63 = por %p61, %p62
    %p64 = scmp.ne.s32.totalorder %s56, %s59
    %p65 = scmp.eq.s32.totalorder %s20, 0
    %p66 = por %p64, %p65
    %p67 = scmp.ne.s32.totalorder %s56, %s59
    %p68 = scmp.eq.s32.totalorder %s25, 1
    %p69 = por %p67, %p68
    %p70 = scmp.ne.s32.totalorder %s59, %s60
    %p71 = scmp.eq.s32.totalorder %s25, 0
    %p72 = por %p70, %p71
    %p73 = scmp.ne.s32.totalorder %s59, %s60
    %p74 = scmp.eq.s32.totalorder %s26, 1
    %p75 = por %p73, %p74
    %p77 = scmp.ne.s32.totalorder %s60, %s76
    %p78 = scmp.eq.s32.totalorder %s26, 0
    %p79 = por %p77, %p78
    %s80 = ssub.s32 %s20, %s27
    %p81 = scmp.eq.s32.totalorder %s80, 0
    %s83 = sadd.s32 %s82, 1
    %s84 = scalar_select %p81, %s82, %s83
    %p87 = pneg %p81
    %p88 = scmp.eq.s32.totalorder %s20, 1
    %p89 = por %p87, %p88
    %p90 = scmp.ne.s32.totalorder %s82, %s85
    %p91 = scmp.eq.s32.totalorder %s20, 0
    %p92 = por %p90, %p91
    %p93 = scmp.ne.s32.totalorder %s82, %s85
    %p94 = scmp.eq.s32.totalorder %s25, 1
    %p95 = por %p93, %p94
    %p96 = scmp.ne.s32.totalorder %s85, %s86
    %p97 = scmp.eq.s32.totalorder %s25, 0
    %p98 = por %p96, %p97
    %p99 = scmp.ne.s32.totalorder %s85, %s86
    %p100 = scmp.eq.s32.totalorder %s26, 1
    %p101 = por %p99, %p100
    %p103 = scmp.ne.s32.totalorder %s86, %s102
    %p104 = scmp.eq.s32.totalorder %s26, 0
    %p105 = por %p103, %p104
    %s106 = ssub.s32 %s20, %s27
    %p107 = scmp.eq.s32.totalorder %s106, 0
    %s109 = sadd.s32 %s108, 1
    %s110 = scalar_select %p107, %s108, %s109
    %p113 = pneg %p107
    %p114 = scmp.eq.s32.totalorder %s20, 1
    %p115 = por %p113, %p114
    %p116 = scmp.ne.s32.totalorder %s108, %s111
    %p117 = scmp.eq.s32.totalorder %s20, 0
    %p118 = por %p116, %p117
    %p119 = scmp.ne.s32.totalorder %s108, %s111
    %p120 = scmp.eq.s32.totalorder %s25, 1
    %p121 = por %p119, %p120
    %p122 = scmp.ne.s32.totalorder %s111, %s112
    %p123 = scmp.eq.s32.totalorder %s25, 0
    %p124 = por %p122, %p123
    %p125 = scmp.ne.s32.totalorder %s111, %s112
    %p126 = scmp.eq.s32.totalorder %s26, 1
    %p127 = por %p125, %p126
    %p129 = scmp.ne.s32.totalorder %s112, %s128
    %p130 = scmp.eq.s32.totalorder %s26, 0
    %p131 = por %p129, %p130
    %s133 = sadd.s32 %s132, 1
    %p136 = scmp.eq.s32.totalorder %s20, 1
    %p137 = scmp.ne.s32.totalorder %s132, %s134
    %p138 = scmp.eq.s32.totalorder %s20, 0
    %p139 = por %p137, %p138
    %p140 = scmp.ne.s32.totalorder %s132, %s134
    %p141 = scmp.eq.s32.totalorder %s25, 1
    %p142 = por %p140, %p141
    %p143 = scmp.ne.s32.totalorder %s134, %s135
    %p144 = scmp.eq.s32.totalorder %s25, 0
    %p145 = por %p143, %p144
    %p146 = scmp.ne.s32.totalorder %s134, %s135
    %p147 = scmp.eq.s32.totalorder %s26, 1
    %p148 = por %p146, %p147
    %p150 = scmp.ne.s32.totalorder %s135, %s149
    %p151 = scmp.eq.s32.totalorder %s26, 0
    %p152 = por %p150, %p151
    %s154 = sadd.s32 %s153, 1
    %p157 = scmp.eq.s32.totalorder %s20, 1
    %p158 = scmp.ne.s32.totalorder %s153, %s155
    %p159 = scmp.eq.s32.totalorder %s20, 0
    %p160 = por %p158, %p159
    %p161 = scmp.ne.s32.totalorder %s153, %s155
    %p162 = scmp.eq.s32.totalorder %s25, 1
    %p163 = por %p161, %p162
    %p164 = scmp.ne.s32.totalorder %s155, %s156
    %p165 = scmp.eq.s32.totalorder %s25, 0
    %p166 = por %p164, %p165
    %p167 = scmp.ne.s32.totalorder %s155, %s156
    %p168 = scmp.eq.s32.totalorder %s26, 1
    %p169 = por %p167, %p168
    %p171 = scmp.ne.s32.totalorder %s156, %s170
    %p172 = scmp.eq.s32.totalorder %s26, 0
    %p173 = por %p171, %p172
    %s175 = sadd.s32 %s174, 1
    %p178 = scmp.eq.s32.totalorder %s20, 1
    %p179 = scmp.ne.s32.totalorder %s174, %s176
    %p180 = scmp.eq.s32.totalorder %s20, 0
    %p181 = por %p179, %p180
    %p182 = scmp.ne.s32.totalorder %s174, %s176
    %p183 = scmp.eq.s32.totalorder %s25, 1
    %p184 = por %p182, %p183
    %p185 = scmp.ne.s32.totalorder %s176, %s177
    %p186 = scmp.eq.s32.totalorder %s25, 0
    %p187 = por %p185, %p186
    %p188 = scmp.ne.s32.totalorder %s176, %s177
    %p189 = scmp.eq.s32.totalorder %s26, 1
    %p190 = por %p188, %p189
    %p192 = scmp.ne.s32.totalorder %s177, %s191
    %p193 = scmp.eq.s32.totalorder %s26, 0
    %p194 = por %p192, %p193
    %s196 = sadd.s32 %s195, 1
    %p199 = scmp.eq.s32.totalorder %s20, 1
    %p200 = scmp.ne.s32.totalorder %s195, %s197
    %p201 = scmp.eq.s32.totalorder %s20, 0
    %p202 = por %p200, %p201
    %p203 = scmp.ne.s32.totalorder %s195, %s197
    %p204 = scmp.eq.s32.totalorder %s25, 1
    %p205 = por %p203, %p204
    %p206 = scmp.ne.s32.totalorder %s197, %s198
    %p207 = scmp.eq.s32.totalorder %s25, 0
    %p208 = por %p206, %p207
    %p209 = scmp.ne.s32.totalorder %s197, %s198
    %p210 = scmp.eq.s32.totalorder %s26, 1
    %p211 = por %p209, %p210
    %p213 = scmp.ne.s32.totalorder %s198, %s212
    %p214 = scmp.eq.s32.totalorder %s26, 0
    %p215 = por %p213, %p214
    %s217 = sadd.s32 %s216, 1
    %p220 = scmp.eq.s32.totalorder %s20, 1
    %p221 = scmp.ne.s32.totalorder %s216, %s218
    %p222 = scmp.eq.s32.totalorder %s20, 0
    %p223 = por %p221, %p222
    %p224 = scmp.ne.s32.totalorder %s216, %s218
    %p225 = scmp.eq.s32.totalorder %s25, 1
    %p226 = por %p224, %p225
    %p227 = scmp.ne.s32.totalorder %s218, %s219
    %p228 = scmp.eq.s32.totalorder %s25, 0
    %p229 = por %p227, %p228
    %p230 = scmp.ne.s32.totalorder %s218, %s219
    %p231 = scmp.eq.s32.totalorder %s26, 1
    %p232 = por %p230, %p231
    %p234 = scmp.ne.s32.totalorder %s219, %s233
    %p235 = scmp.eq.s32.totalorder %s26, 0
    %p236 = por %p234, %p235
    %s238 = sadd.s32 %s237, 1
    %p241 = scmp.eq.s32.totalorder %s20, 1
    %p242 = scmp.ne.s32.totalorder %s237, %s239
    %p243 = scmp.eq.s32.totalorder %s20, 0
    %p244 = por %p242, %p243
    %p245 = scmp.ne.s32.totalorder %s237, %s239
    %p246 = scmp.eq.s32.totalorder %s25, 1
    %p247 = por %p245, %p246
    %p248 = scmp.ne.s32.totalorder %s239, %s240
    %p249 = scmp.eq.s32.totalorder %s25, 0
    %p250 = por %p248, %p249
    %p251 = scmp.ne.s32.totalorder %s239, %s240
    %p252 = scmp.eq.s32.totalorder %s26, 1
    %p253 = por %p251, %p252
    %p255 = scmp.ne.s32.totalorder %s240, %s254
    %p256 = scmp.eq.s32.totalorder %s26, 0
    %p257 = por %p255, %p256
    %s259 = sadd.s32 %s258, 1
    %p262 = scmp.eq.s32.totalorder %s20, 1
    %p263 = scmp.ne.s32.totalorder %s258, %s260
    %p264 = scmp.eq.s32.totalorder %s20, 0
    %p265 = por %p263, %p264
    %p266 = scmp.ne.s32.totalorder %s258, %s260
    %p267 = scmp.eq.s32.totalorder %s25, 1
    %p268 = por %p266, %p267
    %p269 = scmp.ne.s32.totalorder %s260, %s261
    %p270 = scmp.eq.s32.totalorder %s25, 0
    %p271 = por %p269, %p270
    %p272 = scmp.ne.s32.totalorder %s260, %s261
    %p273 = scmp.eq.s32.totalorder %s26, 1
    %p274 = por %p272, %p273
    %p276 = scmp.ne.s32.totalorder %s261, %s275
    %p277 = scmp.eq.s32.totalorder %s26, 0
    %p278 = por %p276, %p277
    %s280 = sadd.s32 %s279, 1
    %p283 = scmp.eq.s32.totalorder %s20, 1
    %p284 = scmp.ne.s32.totalorder %s279, %s281
    %p285 = scmp.eq.s32.totalorder %s20, 0
    %p286 = por %p284, %p285
    %p287 = scmp.ne.s32.totalorder %s279, %s281
    %p288 = scmp.eq.s32.totalorder %s25, 1
    %p289 = por %p287, %p288
    %p290 = scmp.ne.s32.totalorder %s281, %s282
    %p291 = scmp.eq.s32.totalorder %s25, 0
    %p292 = por %p290, %p291
    %p293 = scmp.ne.s32.totalorder %s281, %s282
    %p294 = scmp.eq.s32.totalorder %s26, 1
    %p295 = por %p293, %p294
    %p297 = scmp.ne.s32.totalorder %s282, %s296
    %p298 = scmp.eq.s32.totalorder %s26, 0
    %p299 = por %p297, %p298
    %s301 = sadd.s32 %s300, 1
    %p304 = scmp.eq.s32.totalorder %s20, 1
    %p305 = scmp.ne.s32.totalorder %s300, %s302
    %p306 = scmp.eq.s32.totalorder %s20, 0
    %p307 = por %p305, %p306
    %p308 = scmp.ne.s32.totalorder %s300, %s302
    %p309 = scmp.eq.s32.totalorder %s25, 1
    %p310 = por %p308, %p309
    %p311 = scmp.ne.s32.totalorder %s302, %s303
    %p312 = scmp.eq.s32.totalorder %s25, 0
    %p313 = por %p311, %p312
    %p314 = scmp.ne.s32.totalorder %s302, %s303
    %p315 = scmp.eq.s32.totalorder %s26, 1
    %p316 = por %p314, %p315
    %p318 = scmp.ne.s32.totalorder %s303, %s317
    %p319 = scmp.eq.s32.totalorder %s26, 0
    %p320 = por %p318, %p319
    %s322 = sadd.s32 %s321, 1
    %p325 = scmp.eq.s32.totalorder %s20, 1
    %p326 = scmp.ne.s32.totalorder %s321, %s323
    %p327 = scmp.eq.s32.totalorder %s20, 0
    %p328 = por %p326, %p327
    %p329 = scmp.ne.s32.totalorder %s321, %s323
    %p330 = scmp.eq.s32.totalorder %s25, 1
    %p331 = por %p329, %p330
    %p332 = scmp.ne.s32.totalorder %s323, %s324
    %p333 = scmp.eq.s32.totalorder %s25, 0
    %p334 = por %p332, %p333
    %p335 = scmp.ne.s32.totalorder %s323, %s324
    %p336 = scmp.eq.s32.totalorder %s26, 1
    %p337 = por %p335, %p336
    %p339 = scmp.ne.s32.totalorder %s324, %s338
    %p340 = scmp.eq.s32.totalorder %s26, 0
    %p341 = por %p339, %p340
    %s342 = ssub.s32 %s20, %s27
    %p343 = scmp.eq.s32.totalorder %s342, 0
    %s345 = sadd.s32 %s344, 1
    %s346 = scalar_select %p343, %s344, %s345
    %p349 = pneg %p343
    %p350 = scmp.eq.s32.totalorder %s20, 1
    %p351 = por %p349, %p350
    %p352 = scmp.ne.s32.totalorder %s344, %s347
    %p353 = scmp.eq.s32.totalorder %s20, 0
    %p354 = por %p352, %p353
    %p355 = scmp.ne.s32.totalorder %s344, %s347
    %p356 = scmp.eq.s32.totalorder %s25, 1
    %p357 = por %p355, %p356
    %p358 = scmp.ne.s32.totalorder %s347, %s348
    %p359 = scmp.eq.s32.totalorder %s25, 0
    %p360 = por %p358, %p359
    %p361 = scmp.ne.s32.totalorder %s347, %s348
    %p362 = scmp.eq.s32.totalorder %s26, 1
    %p363 = por %p361, %p362
    %p365 = scmp.ne.s32.totalorder %s348, %s364
    %p366 = scmp.eq.s32.totalorder %s26, 0
    %p367 = por %p365, %p366
    %p368 = scmp.le.s32.totalorder 1, %s20
    %p369 = scmp.lt.s32.totalorder %s20, 3
    %p370 = pnand %p368, %p369
    %p371 = pneg %p370
    // Predicated region
    $region9: #{transformer_forward.4} parent=5 // pred_check
      _
    $region10: #{transformer_forward.4} parent=5 // pred_check_branch
      %373 = sbr.rel (%p370) target = $region12
    $region11: #{transformer_forward.4} parent=5 // pred_region
      %s374 = ssub.s32 %s20, 1
      // Predicated region
      $region13: #{transformer_forward.4} parent=11 // pred_check
        %p375 = pneg %p145
      $region14: #{transformer_forward.4} parent=11 // pred_check_branch
        %377 = sbr.rel (%p375) target = $region16
      $region15: #{transformer_forward.4} parent=11 // pred_region
        _
      $region16: #{transformer_forward.4} parent=11 // pred_fallthru
        _
      // Predicated region
      $region17: #{transformer_forward.4} parent=11 // pred_check
        %p378 = pneg %p166
      $region18: #{transformer_forward.4} parent=11 // pred_check_branch
        %380 = sbr.rel (%p378) target = $region20
      $region19: #{transformer_forward.4} parent=11 // pred_region
        _
      $region20: #{transformer_forward.4} parent=11 // pred_fallthru
        _
      // Predicated region
      $region21: #{transformer_forward.4} parent=11 // pred_check
        %p381 = pneg %p187
      $region22: #{transformer_forward.4} parent=11 // pred_check_branch
        %383 = sbr.rel (%p381) target = $region24
      $region23: #{transformer_forward.4} parent=11 // pred_region
        _
      $region24: #{transformer_forward.4} parent=11 // pred_fallthru
        _
      // Predicated region
      $region25: #{transformer_forward.4} parent=11 // pred_check
        %p384 = pneg %p208
      $region26: #{transformer_forward.4} parent=11 // pred_check_branch
        %386 = sbr.rel (%p384) target = $region28
      $region27: #{transformer_forward.4} parent=11 // pred_region
        _
      $region28: #{transformer_forward.4} parent=11 // pred_fallthru
        _
      // Predicated region
      $region29: #{transformer_forward.4} parent=11 // pred_check
        %p387 = pneg %p229
      $region30: #{transformer_forward.4} parent=11 // pred_check_branch
        %389 = sbr.rel (%p387) target = $region32
      $region31: #{transformer_forward.4} parent=11 // pred_region
        _
      $region32: #{transformer_forward.4} parent=11 // pred_fallthru
        _
      // Predicated region
      $region33: #{transformer_forward.4} parent=11 // pred_check
        %p390 = pneg %p250
      $region34: #{transformer_forward.4} parent=11 // pred_check_branch
        %392 = sbr.rel (%p390) target = $region36
      $region35: #{transformer_forward.4} parent=11 // pred_region
        _
      $region36: #{transformer_forward.4} parent=11 // pred_fallthru
        _
      // Predicated region
      $region37: #{transformer_forward.4} parent=11 // pred_check
        %p393 = pneg %p271
      $region38: #{transformer_forward.4} parent=11 // pred_check_branch
        %395 = sbr.rel (%p393) target = $region40
      $region39: #{transformer_forward.4} parent=11 // pred_region
        _
      $region40: #{transformer_forward.4} parent=11 // pred_fallthru
        _
      // Predicated region
      $region41: #{transformer_forward.4} parent=11 // pred_check
        %p396 = pneg %p292
      $region42: #{transformer_forward.4} parent=11 // pred_check_branch
        %398 = sbr.rel (%p396) target = $region44
      $region43: #{transformer_forward.4} parent=11 // pred_region
        _
      $region44: #{transformer_forward.4} parent=11 // pred_fallthru
        _
      // Predicated region
      $region45: #{transformer_forward.4} parent=11 // pred_check
        %p399 = pneg %p313
      $region46: #{transformer_forward.4} parent=11 // pred_check_branch
        %401 = sbr.rel (%p399) target = $region48
      $region47: #{transformer_forward.4} parent=11 // pred_region
        _
      $region48: #{transformer_forward.4} parent=11 // pred_fallthru
        _
      // Predicated region
      $region49: #{transformer_forward.4} parent=11 // pred_check
        %p402 = pneg %p334
      $region50: #{transformer_forward.4} parent=11 // pred_check_branch
        %404 = sbr.rel (%p402) target = $region52
      $region51: #{transformer_forward.4} parent=11 // pred_region
        _
      $region52: #{transformer_forward.4} parent=11 // pred_fallthru
        _
    $region12: #{transformer_forward.4} parent=5 // pred_fallthru
      _
    %p405 = scmp.lt.s32.totalorder %s20, 2
    // Predicated region
    $region53: #{transformer_forward.4} parent=5 // pred_check
      %p406 = pneg %p405
    $region54: #{transformer_forward.4} parent=5 // pred_check_branch
      %408 = sbr.rel (%p406) target = $region56
    $region55: #{transformer_forward.4} parent=5 // pred_region
      // Predicated region
      $region57: #{transformer_forward.4} parent=55 // pred_check
        %p409 = pneg %p40
      $region58: #{transformer_forward.4} parent=55 // pred_check_branch
        %411 = sbr.rel (%p409) target = $region60
      $region59: #{transformer_forward.4} parent=55 // pred_region
        %p412 = scmp.lt.s32.totalorder %s20, 1
        %s413 = scalar_select %p412, %s20, 1
        %s414 = smul.addr %s413, 8
        %s415 = scalar_lea.vmem %s0, %s414
      $region60: #{transformer_forward.4} parent=55 // pred_fallthru
        _
      // Predicated region
      $region61: #{transformer_forward.4} parent=55 // pred_check
        %p416 = pneg %p66
      $region62: #{transformer_forward.4} parent=55 // pred_check_branch
        %418 = sbr.rel (%p416) target = $region64
      $region63: #{transformer_forward.4} parent=55 // pred_region
        %p419 = scmp.lt.s32.totalorder %s20, 1
        %s420 = scalar_select %p419, %s20, 1
        %s421 = smul.addr %s420, 8
        %s422 = scalar_lea.vmem %s1, %s421
      $region64: #{transformer_forward.4} parent=55 // pred_fallthru
        _
      // Predicated region
      $region65: #{transformer_forward.4} parent=55 // pred_check
        %p423 = pneg %p92
      $region66: #{transformer_forward.4} parent=55 // pred_check_branch
        %425 = sbr.rel (%p423) target = $region68
      $region67: #{transformer_forward.4} parent=55 // pred_region
        %p426 = scmp.lt.s32.totalorder %s20, 1
        %s427 = scalar_select %p426, %s20, 1
        %s428 = smul.addr %s427, 8
        %s429 = scalar_lea.vmem %s2, %s428
      $region68: #{transformer_forward.4} parent=55 // pred_fallthru
        _
      // Predicated region
      $region69: #{transformer_forward.4} parent=55 // pred_check
        %p430 = pneg %p118
      $region70: #{transformer_forward.4} parent=55 // pred_check_branch
        %432 = sbr.rel (%p430) target = $region72
      $region71: #{transformer_forward.4} parent=55 // pred_region
        %p433 = scmp.lt.s32.totalorder %s20, 1
        %s434 = scalar_select %p433, %s20, 1
        %s435 = smul.addr %s434, 8
        %s436 = scalar_lea.vmem %s3, %s435
      $region72: #{transformer_forward.4} parent=55 // pred_fallthru
        _
    $region56: #{transformer_forward.4} parent=5 // pred_fallthru
      _
    %p437 = scmp.le.s32.totalorder 1, %s20
    %p438 = scmp.lt.s32.totalorder %s20, 3
    %p439 = pnand %p437, %p438
    %p440 = pneg %p439
    // Predicated region
    $region73: #{transformer_forward.4} parent=5 // pred_check
      _
    $region74: #{transformer_forward.4} parent=5 // pred_check_branch
      %442 = sbr.rel (%p439) target = $region76
    $region75: #{transformer_forward.4} parent=5 // pred_region
      %s443 = ssub.s32 %s20, 1
      %p444 = scmp.lt.s32.totalorder %s25, 1
      %s445 = scalar_select %p444, %s25, 1
      %s446 = smul.addr %s445, 8
      %s447 = scalar_lea.vmem %s0, %s446
      %p448 = pneg %p46
      %p449 = pneg %p43
      %p450 = scmp.lt.s32.totalorder %s25, 1
      %s451 = scalar_select %p450, %s25, 1
      %s452 = smul.addr %s451, 8
      %s453 = scalar_lea.vmem %s1, %s452
      %p454 = pneg %p72
      %p455 = pneg %p69
      %p456 = scmp.lt.s32.totalorder %s25, 1
      %s457 = scalar_select %p456, %s25, 1
      %s458 = smul.addr %s457, 8
      %s459 = scalar_lea.vmem %s2, %s458
      %p460 = pneg %p98
      %p461 = pneg %p95
      %p462 = scmp.lt.s32.totalorder %s25, 1
      %s463 = scalar_select %p462, %s25, 1
      %s464 = smul.addr %s463, 8
      %s465 = scalar_lea.vmem %s3, %s464
      %p466 = pneg %p124
      %p467 = pneg %p121
      %p468 = pneg %p145
      %p469 = pneg %p142
      %p470 = pneg %p166
      %p471 = pneg %p163
      %p472 = pneg %p187
      %p473 = pneg %p184
      %p474 = pneg %p208
      %p475 = pneg %p205
      %p476 = pneg %p229
      %p477 = pneg %p226
      %p478 = pneg %p250
      %p479 = pneg %p247
      %p480 = pneg %p271
      %p481 = pneg %p268
      %p482 = pneg %p292
      %p483 = pneg %p289
      %p484 = pneg %p313
      %p485 = pneg %p310
      %p486 = pneg %p334
      %p487 = pneg %p331
      %p488 = pneg %p360
      %p489 = pneg %p357
      %p490 = scmp.lt.s32.totalorder %s25, 1
      %s491 = scalar_select %p490, %s25, 1
      %s492 = smul.addr %s491, 8
      %s493 = scalar_lea.vmem %s14, %s492
      %p494 = scmp.lt.s32.totalorder %s25, 1
      %s495 = scalar_select %p494, %s25, 1
      %s496 = smul.addr %s495, 8
      %s497 = scalar_lea.vmem %s0, %s496
      %p498 = scmp.lt.s32.totalorder %s25, 1
      %s499 = scalar_select %p498, %s25, 1
      %s500 = smul.addr %s499, 8
      %s501 = scalar_lea.vmem %s1, %s500
      %p502 = scmp.lt.s32.totalorder %s25, 1
      %s503 = scalar_select %p502, %s25, 1
      %s504 = smul.addr %s503, 8
      %s505 = scalar_lea.vmem %s2, %s504
      %p506 = scmp.lt.s32.totalorder %s25, 1
      %s507 = scalar_select %p506, %s25, 1
      %s508 = smul.addr %s507, 8
      %s509 = scalar_lea.vmem %s3, %s508
      %p510 = scmp.lt.s32.totalorder %s25, 1
      %s511 = scalar_select %p510, %s25, 1
      %s512 = smul.addr %s511, 8
      %s513 = scalar_lea.vmem %s14, %s512
      %v514 = vld [vmem:[%s4] sm:$0xff]
      %v515 = vld [vmem:[%s4 + $0x8] sm:$0xff]
      %v516 = vld [vmem:[%s4 + $0x10] sm:$0xff]
      %v517 = vld [vmem:[%s4 + $0x18] sm:$0xff]
      %v518 = vld [vmem:[%s4 + $0x20] sm:$0xff]
      %v519 = vld [vmem:[%s4 + $0x28] sm:$0xff]
      %v520 = vld [vmem:[%s4 + $0x30] sm:$0xff]
      %v521 = vld [vmem:[%s4 + $0x38] sm:$0xff]
      %v522 = vld [vmem:[%s4 + $0x40] sm:$0xff]
      %v523 = vld [vmem:[%s4 + $0x48] sm:$0xff]
      %v524 = vld [vmem:[%s4 + $0x50] sm:$0xff]
      %v525 = vld [vmem:[%s4 + $0x58] sm:$0xff]
      %v526 = vld [vmem:[%s4 + $0x60] sm:$0xff]
      %v527 = vld [vmem:[%s4 + $0x68] sm:$0xff]
      %v528 = vld [vmem:[%s4 + $0x70] sm:$0xff]
      %v529 = vld [vmem:[%s4 + $0x78] sm:$0xff]
      %v530 = vld [vmem:[%s5] sm:$0xff]
      %v531 = vld [vmem:[%s5 + $0x8] sm:$0xff]
      %v532 = vld [vmem:[%s5 + $0x10] sm:$0xff]
      %v533 = vld [vmem:[%s5 + $0x18] sm:$0xff]
      %v534 = vld [vmem:[%s5 + $0x20] sm:$0xff]
      %v535 = vld [vmem:[%s5 + $0x28] sm:$0xff]
      %v536 = vld [vmem:[%s5 + $0x30] sm:$0xff]
      %v537 = vld [vmem:[%s5 + $0x38] sm:$0xff]
      %v538 = vld [vmem:[%s5 + $0x40] sm:$0xff]
      %v539 = vld [vmem:[%s5 + $0x48] sm:$0xff]
      %v540 = vld [vmem:[%s5 + $0x50] sm:$0xff]
      %v541 = vld [vmem:[%s5 + $0x58] sm:$0xff]
      %v542 = vld [vmem:[%s5 + $0x60] sm:$0xff]
      %v543 = vld [vmem:[%s5 + $0x68] sm:$0xff]
      %v544 = vld [vmem:[%s5 + $0x70] sm:$0xff]
      %v545 = vld [vmem:[%s5 + $0x78] sm:$0xff]
      %v546 = vld [vmem:[%s6] sm:$0xff]
      %v547 = vld [vmem:[%s6 + $0x8] sm:$0xff]
      %v548 = vld [vmem:[%s6 + $0x10] sm:$0xff]
      %v549 = vld [vmem:[%s6 + $0x18] sm:$0xff]
      %v550 = vld [vmem:[%s6 + $0x20] sm:$0xff]
      %v551 = vld [vmem:[%s6 + $0x28] sm:$0xff]
      %v552 = vld [vmem:[%s6 + $0x30] sm:$0xff]
      %v553 = vld [vmem:[%s6 + $0x38] sm:$0xff]
      %v554 = vld [vmem:[%s6 + $0x40] sm:$0xff]
      %v555 = vld [vmem:[%s6 + $0x48] sm:$0xff]
      %v556 = vld [vmem:[%s6 + $0x50] sm:$0xff]
      %v557 = vld [vmem:[%s6 + $0x58] sm:$0xff]
      %v558 = vld [vmem:[%s6 + $0x60] sm:$0xff]
      %v559 = vld [vmem:[%s6 + $0x68] sm:$0xff]
      %v560 = vld [vmem:[%s6 + $0x70] sm:$0xff]
      %v561 = vld [vmem:[%s6 + $0x78] sm:$0xff]
      %v562 = vld [vmem:[%s7] sm:$0xff]
      %v563 = vld [vmem:[%s7 + $0x8] sm:$0xff]
      %v564 = vld [vmem:[%s7 + $0x10] sm:$0xff]
      %v565 = vld [vmem:[%s7 + $0x18] sm:$0xff]
      %v566 = vld [vmem:[%s7 + $0x20] sm:$0xff]
      %v567 = vld [vmem:[%s7 + $0x28] sm:$0xff]
      %v568 = vld [vmem:[%s7 + $0x30] sm:$0xff]
      %v569 = vld [vmem:[%s7 + $0x38] sm:$0xff]
      %v570 = vld [vmem:[%s7 + $0x40] sm:$0xff]
      %v571 = vld [vmem:[%s7 + $0x48] sm:$0xff]
      %v572 = vld [vmem:[%s7 + $0x50] sm:$0xff]
      %v573 = vld [vmem:[%s7 + $0x58] sm:$0xff]
      %v574 = vld [vmem:[%s7 + $0x60] sm:$0xff]
      %v575 = vld [vmem:[%s7 + $0x68] sm:$0xff]
      %v576 = vld [vmem:[%s7 + $0x70] sm:$0xff]
      %v577 = vld [vmem:[%s7 + $0x78] sm:$0xff]
      %v578 = vld [vmem:[%s8] sm:$0xff]
      %v579 = vld [vmem:[%s8 + $0x8] sm:$0xff]
      %v580 = vld [vmem:[%s8 + $0x10] sm:$0xff]
      %v581 = vld [vmem:[%s8 + $0x18] sm:$0xff]
      %v582 = vld [vmem:[%s8 + $0x20] sm:$0xff]
      %v583 = vld [vmem:[%s8 + $0x28] sm:$0xff]
      %v584 = vld [vmem:[%s8 + $0x30] sm:$0xff]
      %v585 = vld [vmem:[%s8 + $0x38] sm:$0xff]
      %v586 = vld [vmem:[%s8 + $0x40] sm:$0xff]
      %v587 = vld [vmem:[%s8 + $0x48] sm:$0xff]
      %v588 = vld [vmem:[%s8 + $0x50] sm:$0xff]
      %v589 = vld [vmem:[%s8 + $0x58] sm:$0xff]
      %v590 = vld [vmem:[%s8 + $0x60] sm:$0xff]
      %v591 = vld [vmem:[%s8 + $0x68] sm:$0xff]
      %v592 = vld [vmem:[%s8 + $0x70] sm:$0xff]
      %v593 = vld [vmem:[%s8 + $0x78] sm:$0xff]
      %v594 = vld [vmem:[%s9] sm:$0xff]
      %v595 = vld [vmem:[%s9 + $0x8] sm:$0xff]
      %v596 = vld [vmem:[%s9 + $0x10] sm:$0xff]
      %v597 = vld [vmem:[%s9 + $0x18] sm:$0xff]
      %v598 = vld [vmem:[%s9 + $0x20] sm:$0xff]
      %v599 = vld [vmem:[%s9 + $0x28] sm:$0xff]
      %v600 = vld [vmem:[%s9 + $0x30] sm:$0xff]
      %v601 = vld [vmem:[%s9 + $0x38] sm:$0xff]
      %v602 = vld [vmem:[%s9 + $0x40] sm:$0xff]
      %v603 = vld [vmem:[%s9 + $0x48] sm:$0xff]
      %v604 = vld [vmem:[%s9 + $0x50] sm:$0xff]
      %v605 = vld [vmem:[%s9 + $0x58] sm:$0xff]
      %v606 = vld [vmem:[%s9 + $0x60] sm:$0xff]
      %v607 = vld [vmem:[%s9 + $0x68] sm:$0xff]
      %v608 = vld [vmem:[%s9 + $0x70] sm:$0xff]
      %v609 = vld [vmem:[%s9 + $0x78] sm:$0xff]
      %v610 = vld [vmem:[%s10] sm:$0xff]
      %v611 = vld [vmem:[%s10 + $0x8] sm:$0xff]
      %v612 = vld [vmem:[%s10 + $0x10] sm:$0xff]
      %v613 = vld [vmem:[%s10 + $0x18] sm:$0xff]
      %v614 = vld [vmem:[%s10 + $0x20] sm:$0xff]
      %v615 = vld [vmem:[%s10 + $0x28] sm:$0xff]
      %v616 = vld [vmem:[%s10 + $0x30] sm:$0xff]
      %v617 = vld [vmem:[%s10 + $0x38] sm:$0xff]
      %v618 = vld [vmem:[%s10 + $0x40] sm:$0xff]
      %v619 = vld [vmem:[%s10 + $0x48] sm:$0xff]
      %v620 = vld [vmem:[%s10 + $0x50] sm:$0xff]
      %v621 = vld [vmem:[%s10 + $0x58] sm:$0xff]
      %v622 = vld [vmem:[%s10 + $0x60] sm:$0xff]
      %v623 = vld [vmem:[%s10 + $0x68] sm:$0xff]
      %v624 = vld [vmem:[%s10 + $0x70] sm:$0xff]
      %v625 = vld [vmem:[%s10 + $0x78] sm:$0xff]
      %v626 = vld [vmem:[%s11] sm:$0xff]
      %v627 = vld [vmem:[%s11 + $0x8] sm:$0xff]
      %v628 = vld [vmem:[%s11 + $0x10] sm:$0xff]
      %v629 = vld [vmem:[%s11 + $0x18] sm:$0xff]
      %v630 = vld [vmem:[%s11 + $0x20] sm:$0xff]
      %v631 = vld [vmem:[%s11 + $0x28] sm:$0xff]
      %v632 = vld [vmem:[%s11 + $0x30] sm:$0xff]
      %v633 = vld [vmem:[%s11 + $0x38] sm:$0xff]
      %v634 = vld [vmem:[%s11 + $0x40] sm:$0xff]
      %v635 = vld [vmem:[%s11 + $0x48] sm:$0xff]
      %v636 = vld [vmem:[%s11 + $0x50] sm:$0xff]
      %v637 = vld [vmem:[%s11 + $0x58] sm:$0xff]
      %v638 = vld [vmem:[%s11 + $0x60] sm:$0xff]
      %v639 = vld [vmem:[%s11 + $0x68] sm:$0xff]
      %v640 = vld [vmem:[%s11 + $0x70] sm:$0xff]
      %v641 = vld [vmem:[%s11 + $0x78] sm:$0xff]
      %v642 = vld [vmem:[%s12] sm:$0xff]
      %v643 = vld [vmem:[%s12 + $0x8] sm:$0xff]
      %v644 = vld [vmem:[%s12 + $0x10] sm:$0xff]
      %v645 = vld [vmem:[%s12 + $0x18] sm:$0xff]
      %v646 = vld [vmem:[%s12 + $0x20] sm:$0xff]
      %v647 = vld [vmem:[%s12 + $0x28] sm:$0xff]
      %v648 = vld [vmem:[%s12 + $0x30] sm:$0xff]
      %v649 = vld [vmem:[%s12 + $0x38] sm:$0xff]
      %v650 = vld [vmem:[%s12 + $0x40] sm:$0xff]
      %v651 = vld [vmem:[%s12 + $0x48] sm:$0xff]
      %v652 = vld [vmem:[%s12 + $0x50] sm:$0xff]
      %v653 = vld [vmem:[%s12 + $0x58] sm:$0xff]
      %v654 = vld [vmem:[%s12 + $0x60] sm:$0xff]
      %v655 = vld [vmem:[%s12 + $0x68] sm:$0xff]
      %v656 = vld [vmem:[%s12 + $0x70] sm:$0xff]
      %v657 = vld [vmem:[%s12 + $0x78] sm:$0xff]
      %v658 = vld [vmem:[%s12 + $0x80] sm:$0xff]
      %v659 = vld [vmem:[%s12 + $0x88] sm:$0xff]
      %v660 = vld [vmem:[%s12 + $0x90] sm:$0xff]
      %v661 = vld [vmem:[%s12 + $0x98] sm:$0xff]
      %v662 = vld [vmem:[%s12 + $0xa0] sm:$0xff]
      %v663 = vld [vmem:[%s12 + $0xa8] sm:$0xff]
      %v664 = vld [vmem:[%s12 + $0xb0] sm:$0xff]
      %v665 = vld [vmem:[%s12 + $0xb8] sm:$0xff]
      %v666 = vld [vmem:[%s12 + $0xc0] sm:$0xff]
      %v667 = vld [vmem:[%s12 + $0xc8] sm:$0xff]
      %v668 = vld [vmem:[%s12 + $0xd0] sm:$0xff]
      %v669 = vld [vmem:[%s12 + $0xd8] sm:$0xff]
      %v670 = vld [vmem:[%s12 + $0xe0] sm:$0xff]
      %v671 = vld [vmem:[%s12 + $0xe8] sm:$0xff]
      %v672 = vld [vmem:[%s12 + $0xf0] sm:$0xff]
      %v673 = vld [vmem:[%s12 + $0xf8] sm:$0xff]
      %v674 = vld [vmem:[%s13] sm:$0xff]
      %v675 = vld [vmem:[%s13 + $0x8] sm:$0xff]
      %v676 = vld [vmem:[%s13 + $0x10] sm:$0xff]
      %v677 = vld [vmem:[%s13 + $0x18] sm:$0xff]
      %v678 = vld [vmem:[%s13 + $0x20] sm:$0xff]
      %v679 = vld [vmem:[%s13 + $0x28] sm:$0xff]
      %v680 = vld [vmem:[%s13 + $0x30] sm:$0xff]
      %v681 = vld [vmem:[%s13 + $0x38] sm:$0xff]
      %v682 = vld [vmem:[%s13 + $0x40] sm:$0xff]
      %v683 = vld [vmem:[%s13 + $0x48] sm:$0xff]
      %v684 = vld [vmem:[%s13 + $0x50] sm:$0xff]
      %v685 = vld [vmem:[%s13 + $0x58] sm:$0xff]
      %v686 = vld [vmem:[%s13 + $0x60] sm:$0xff]
      %v687 = vld [vmem:[%s13 + $0x68] sm:$0xff]
      %v688 = vld [vmem:[%s13 + $0x70] sm:$0xff]
      %v689 = vld [vmem:[%s13 + $0x78] sm:$0xff]
      %v690 = vld [vmem:[%s13 + $0x80] sm:$0xff]
      %v691 = vld [vmem:[%s13 + $0x88] sm:$0xff]
      %v692 = vld [vmem:[%s13 + $0x90] sm:$0xff]
      %v693 = vld [vmem:[%s13 + $0x98] sm:$0xff]
      %v694 = vld [vmem:[%s13 + $0xa0] sm:$0xff]
      %v695 = vld [vmem:[%s13 + $0xa8] sm:$0xff]
      %v696 = vld [vmem:[%s13 + $0xb0] sm:$0xff]
      %v697 = vld [vmem:[%s13 + $0xb8] sm:$0xff]
      %v698 = vld [vmem:[%s13 + $0xc0] sm:$0xff]
      %v699 = vld [vmem:[%s13 + $0xc8] sm:$0xff]
      %v700 = vld [vmem:[%s13 + $0xd0] sm:$0xff]
      %v701 = vld [vmem:[%s13 + $0xd8] sm:$0xff]
      %v702 = vld [vmem:[%s13 + $0xe0] sm:$0xff]
      %v703 = vld [vmem:[%s13 + $0xe8] sm:$0xff]
      %v704 = vld [vmem:[%s13 + $0xf0] sm:$0xff]
      %v705 = vld [vmem:[%s13 + $0xf8] sm:$0xff]
      %v706 = vld [vmem:[%s497] sm:$0xff]
      %v707 = vld [vmem:[%s501] sm:$0xff]
      %v708 = vld [vmem:[%s505] sm:$0xff]
      %709 = vmatprep.subr.mxu0 0.0
      %710 = vmatpush1.msra.mxu0 %v514
      %711 = vmatprep.subr.mxu0 0.0
      %712 = vmatpush1.msra.mxu0 %v515
      %713 = vmatprep.subr.mxu0 0.0
      %714 = vmatpush1.msra.mxu0 %v516
      %715 = vmatprep.subr.mxu0 0.0
      %716 = vmatpush1.msra.mxu0 %v517
      %717 = vmatprep.subr.mxu0 0.0
      %718 = vmatpush1.msra.mxu0 %v518
      %719 = vmatprep.subr.mxu0 0.0
      %720 = vmatpush1.msra.mxu0 %v519
      %721 = vmatprep.subr.mxu0 0.0
      %722 = vmatpush1.msra.mxu0 %v520
      %723 = vmatprep.subr.mxu0 0.0
      %724 = vmatpush1.msra.mxu0 %v521
      %725 = vmatprep.subr.mxu0 0.0
      %726 = vmatpush1.msra.mxu0 %v522
      %727 = vmatprep.subr.mxu0 0.0
      %728 = vmatpush1.msra.mxu0 %v523
      %729 = vmatprep.subr.mxu0 0.0
      %730 = vmatpush1.msra.mxu0 %v524
      %731 = vmatprep.subr.mxu0 0.0
      %732 = vmatpush1.msra.mxu0 %v525
      %733 = vmatprep.subr.mxu0 0.0
      %734 = vmatpush1.msra.mxu0 %v526
      %735 = vmatprep.subr.mxu0 0.0
      %736 = vmatpush1.msra.mxu0 %v527
      %737 = vmatprep.subr.mxu0 0.0
      %738 = vmatpush1.msra.mxu0 %v528
      %739 = vmatprep.subr.mxu0 0.0
      %740 = vmatpush1.msra.mxu0 %v529
      %741 = vmatprep.subr.mxu0 0.0
      %742 = vmatpush1.msra.mxu0 0.0
      %743 = vmatprep.subr.mxu0 0.0
      %744 = vmatpush1.msra.mxu0 0.0
      %745 = vmatprep.subr.mxu0 0.0
      %746 = vmatpush1.msra.mxu0 0.0
      %747 = vmatprep.subr.mxu0 0.0
      %748 = vmatpush1.msra.mxu0 0.0
      %749 = vmatprep.subr.mxu0 0.0
      %750 = vmatpush1.msra.mxu0 0.0
      %751 = vmatprep.subr.mxu0 0.0
      %752 = vmatpush1.msra.mxu0 0.0
      %753 = vmatprep.subr.mxu0 0.0
      %754 = vmatpush1.msra.mxu0 0.0
      %755 = vmatprep.subr.mxu0 0.0
      %756 = vmatpush1.msra.mxu0 0.0
      %757 = vmatprep.subr.mxu0 0.0
      %758 = vmatpush1.msra.mxu0 0.0
      %759 = vmatprep.subr.mxu0 0.0
      %760 = vmatpush1.msra.mxu0 0.0
      %761 = vmatprep.subr.mxu0 0.0
      %762 = vmatpush1.msra.mxu0 0.0
      %763 = vmatprep.subr.mxu0 0.0
      %764 = vmatpush1.msra.mxu0 0.0
      %765 = vmatprep.subr.mxu0 0.0
      %766 = vmatpush1.msra.mxu0 0.0
      %767 = vmatprep.subr.mxu0 0.0
      %768 = vmatpush1.msra.mxu0 0.0
      %769 = vmatprep.subr.mxu0 0.0
      %770 = vmatpush1.msra.mxu0 0.0
      %771 = vmatprep.subr.mxu0 0.0
      %772 = vmatpush1.msra.mxu0 0.0
      %773 = vmatprep.mubr.f32.mxu0 0.0
      %774 = vmatmul.mubr.f32.gmra.mrb[0].mxu0 %v706
      %v775 = vpop.f32.mrb[0].mxu0
      %v776 = vadd.f32 0.0, %v775
      %v777 = vpop.f32.mrb[0].mxu0
      %778 = vdwg.mxu0
      %779 = vmatprep.subr.mxu0 0.0
      %780 = vmatpush1.msra.mxu0 %v530
      %781 = vmatprep.subr.mxu0 0.0
      %782 = vmatpush1.msra.mxu0 %v531
      %783 = vmatprep.subr.mxu0 0.0
      %784 = vmatpush1.msra.mxu0 %v532
      %785 = vmatprep.subr.mxu0 0.0
      %786 = vmatpush1.msra.mxu0 %v533
      %787 = vmatprep.subr.mxu0 0.0
      %788 = vmatpush1.msra.mxu0 %v534
      %789 = vmatprep.subr.mxu0 0.0
      %790 = vmatpush1.msra.mxu0 %v535
      %791 = vmatprep.subr.mxu0 0.0
      %792 = vmatpush1.msra.mxu0 %v536
      %793 = vmatprep.subr.mxu0 0.0
      %794 = vmatpush1.msra.mxu0 %v537
      %795 = vmatprep.subr.mxu0 0.0
      %796 = vmatpush1.msra.mxu0 %v538
      %797 = vmatprep.subr.mxu0 0.0
      %798 = vmatpush1.msra.mxu0 %v539
      %799 = vmatprep.subr.mxu0 0.0
      %800 = vmatpush1.msra.mxu0 %v540
      %801 = vmatprep.subr.mxu0 0.0
      %802 = vmatpush1.msra.mxu0 %v541
      %803 = vmatprep.subr.mxu0 0.0
      %804 = vmatpush1.msra.mxu0 %v542
      %805 = vmatprep.subr.mxu0 0.0
      %806 = vmatpush1.msra.mxu0 %v543
      %807 = vmatprep.subr.mxu0 0.0
      %808 = vmatpush1.msra.mxu0 %v544
      %809 = vmatprep.subr.mxu0 0.0
      %810 = vmatpush1.msra.mxu0 %v545
      %811 = vmatprep.subr.mxu0 0.0
      %812 = vmatpush1.msra.mxu0 0.0
      %813 = vmatprep.subr.mxu0 0.0
      %814 = vmatpush1.msra.mxu0 0.0
      %815 = vmatprep.subr.mxu0 0.0
      %816 = vmatpush1.msra.mxu0 0.0
      %817 = vmatprep.subr.mxu0 0.0
      %818 = vmatpush1.msra.mxu0 0.0
      %819 = vmatprep.subr.mxu0 0.0
      %820 = vmatpush1.msra.mxu0 0.0
      %821 = vmatprep.subr.mxu0 0.0
      %822 = vmatpush1.msra.mxu0 0.0
      %823 = vmatprep.subr.mxu0 0.0
      %824 = vmatpush1.msra.mxu0 0.0
      %825 = vmatprep.subr.mxu0 0.0
      %826 = vmatpush1.msra.mxu0 0.0
      %827 = vmatprep.subr.mxu0 0.0
      %828 = vmatpush1.msra.mxu0 0.0
      %829 = vmatprep.subr.mxu0 0.0
      %830 = vmatpush1.msra.mxu0 0.0
      %831 = vmatprep.subr.mxu0 0.0
      %832 = vmatpush1.msra.mxu0 0.0
      %833 = vmatprep.subr.mxu0 0.0
      %834 = vmatpush1.msra.mxu0 0.0
      %835 = vmatprep.subr.mxu0 0.0
      %836 = vmatpush1.msra.mxu0 0.0
      %837 = vmatprep.subr.mxu0 0.0
      %838 = vmatpush1.msra.mxu0 0.0
      %839 = vmatprep.subr.mxu0 0.0
      %840 = vmatpush1.msra.mxu0 0.0
      %841 = vmatprep.subr.mxu0 0.0
      %842 = vmatpush1.msra.mxu0 0.0
      %843 = vmatprep.mubr.f32.mxu0 0.0
      %844 = vmatmul.mubr.f32.gmra.mrb[0].mxu0 %v706
      %v845 = vpop.f32.mrb[0].mxu0
      %v846 = vadd.f32 0.0, %v845
      %v847 = vpop.f32.mrb[0].mxu0
      %848 = vdwg.mxu0
      %849 = vmatprep.subr.mxu0 0.0
      %850 = vmatpush1.msra.mxu0 %v546
      %851 = vmatprep.subr.mxu0 0.0
      %852 = vmatpush1.msra.mxu0 %v547
      %853 = vmatprep.subr.mxu0 0.0
      %854 = vmatpush1.msra.mxu0 %v548
      %855 = vmatprep.subr.mxu0 0.0
      %856 = vmatpush1.msra.mxu0 %v549
      %857 = vmatprep.subr.mxu0 0.0
      %858 = vmatpush1.msra.mxu0 %v550
      %859 = vmatprep.subr.mxu0 0.0
      %860 = vmatpush1.msra.mxu0 %v551
      %861 = vmatprep.subr.mxu0 0.0
      %862 = vmatpush1.msra.mxu0 %v552
      %863 = vmatprep.subr.mxu0 0.0
      %864 = vmatpush1.msra.mxu0 %v553
      %865 = vmatprep.subr.mxu0 0.0
      %866 = vmatpush1.msra.mxu0 %v554
      %867 = vmatprep.subr.mxu0 0.0
      %868 = vmatpush1.msra.mxu0 %v555
      %869 = vmatprep.subr.mxu0 0.0
      %870 = vmatpush1.msra.mxu0 %v556
      %871 = vmatprep.subr.mxu0 0.0
      %872 = vmatpush1.msra.mxu0 %v557
      %873 = vmatprep.subr.mxu0 0.0
      %874 = vmatpush1.msra.mxu0 %v558
      %875 = vmatprep.subr.mxu0 0.0
      %876 = vmatpush1.msra.mxu0 %v559
      %877 = vmatprep.subr.mxu0 0.0
      %878 = vmatpush1.msra.mxu0 %v560
      %879 = vmatprep.subr.mxu0 0.0
      %880 = vmatpush1.msra.mxu0 %v561
      %881 = vmatprep.subr.mxu0 0.0
      %882 = vmatpush1.msra.mxu0 0.0
      %883 = vmatprep.subr.mxu0 0.0
      %884 = vmatpush1.msra.mxu0 0.0
      %885 = vmatprep.subr.mxu0 0.0
      %886 = vmatpush1.msra.mxu0 0.0
      %887 = vmatprep.subr.mxu0 0.0
      %888 = vmatpush1.msra.mxu0 0.0
      %889 = vmatprep.subr.mxu0 0.0
      %890 = vmatpush1.msra.mxu0 0.0
      %891 = vmatprep.subr.mxu0 0.0
      %892 = vmatpush1.msra.mxu0 0.0
      %893 = vmatprep.subr.mxu0 0.0
      %894 = vmatpush1.msra.mxu0 0.0
      %895 = vmatprep.subr.mxu0 0.0
      %896 = vmatpush1.msra.mxu0 0.0
      %897 = vmatprep.subr.mxu0 0.0
      %898 = vmatpush1.msra.mxu0 0.0
      %899 = vmatprep.subr.mxu0 0.0
      %900 = vmatpush1.msra.mxu0 0.0
      %901 = vmatprep.subr.mxu0 0.0
      %902 = vmatpush1.msra.mxu0 0.0
      %903 = vmatprep.subr.mxu0 0.0
      %904 = vmatpush1.msra.mxu0 0.0
      %905 = vmatprep.subr.mxu0 0.0
      %906 = vmatpush1.msra.mxu0 0.0
      %907 = vmatprep.subr.mxu0 0.0
      %908 = vmatpush1.msra.mxu0 0.0
      %909 = vmatprep.subr.mxu0 0.0
      %910 = vmatpush1.msra.mxu0 0.0
      %911 = vmatprep.subr.mxu0 0.0
      %912 = vmatpush1.msra.mxu0 0.0
      %913 = vmatprep.mubr.f32.mxu0 0.0
      %914 = vmatmul.mubr.f32.gmra.mrb[0].mxu0 %v706
      %v915 = vpop.f32.mrb[0].mxu0
      %v916 = vadd.f32 0.0, %v915
      %v917 = vpop.f32.mrb[0].mxu0
      %918 = vdwg.mxu0
      %920 = vrot.lane.b32.xlu0 %v776, 112
      %v921 = vpop.permute.xlu0 %920
      %922 = vrot.lane.b32.xlu0 %v776, 96
      %v923 = vpop.permute.xlu0 %922
      %924 = vrot.lane.b32.xlu0 %v776, 80
      %v925 = vpop.permute.xlu0 %924
      %926 = vrot.lane.b32.xlu0 %v776, 64
      %v927 = vpop.permute.xlu0 %926
      %928 = vrot.lane.b32.xlu0 %v776, 48
      %v929 = vpop.permute.xlu0 %928
      %930 = vrot.lane.b32.xlu0 %v776, 32
      %v931 = vpop.permute.xlu0 %930
      %932 = vrot.lane.b32.xlu0 %v776, 16
      %v933 = vpop.permute.xlu0 %932
      %935 = vrot.lane.b32.xlu0 %v846, 112
      %v936 = vpop.permute.xlu0 %935
      %937 = vrot.lane.b32.xlu0 %v846, 96
      %v938 = vpop.permute.xlu0 %937
      %939 = vrot.lane.b32.xlu0 %v846, 80
      %v940 = vpop.permute.xlu0 %939
      %941 = vrot.lane.b32.xlu0 %v846, 64
      %v942 = vpop.permute.xlu0 %941
      %943 = vrot.lane.b32.xlu0 %v846, 48
      %v944 = vpop.permute.xlu0 %943
      %945 = vrot.lane.b32.xlu0 %v846, 32
      %v946 = vpop.permute.xlu0 %945
      %947 = vrot.lane.b32.xlu0 %v846, 16
      %v948 = vpop.permute.xlu0 %947
      %950 = vrot.lane.b32.xlu0 %v916, 112
      %v951 = vpop.permute.xlu0 %950
      %953 = vrot.lane.b32.xlu0 %v916, 96
      %v954 = vpop.permute.xlu0 %953
      %956 = vrot.lane.b32.xlu0 %v916, 80
      %v957 = vpop.permute.xlu0 %956
      %959 = vrot.lane.b32.xlu0 %v916, 64
      %v960 = vpop.permute.xlu0 %959
      %962 = vrot.lane.b32.xlu0 %v916, 48
      %v963 = vpop.permute.xlu0 %962
      %965 = vrot.lane.b32.xlu0 %v916, 32
      %v966 = vpop.permute.xlu0 %965
      %968 = vrot.lane.b32.xlu0 %v916, 16
      %v969 = vpop.permute.xlu0 %968
      %vm971 = vcmask 130048
      %v972 = vsel %vm971, %v776, 0
      %v974 = vsel %vm971, %v846, 0
      %976 = vmatprep.subr.mxu0 0.0
      %977 = vmatpush1.xpose.msra.mxu0 %v974
      %978 = vmatprep.subr.mxu0 0.0
      %979 = vmatpush1.xpose.msra.mxu0 0.0
      %980 = vmatprep.subr.mxu0 0.0
      %981 = vmatpush1.xpose.msra.mxu0 0.0
      %982 = vmatprep.subr.mxu0 0.0
      %983 = vmatpush1.xpose.msra.mxu0 0.0
      %984 = vmatprep.subr.mxu0 0.0
      %985 = vmatpush1.xpose.msra.mxu0 0.0
      %986 = vmatprep.subr.mxu0 0.0
      %987 = vmatpush1.xpose.msra.mxu0 0.0
      %988 = vmatprep.subr.mxu0 0.0
      %989 = vmatpush1.xpose.msra.mxu0 0.0
      %990 = vmatprep.subr.mxu0 0.0
      %991 = vmatpush1.xpose.msra.mxu0 0.0
      %992 = vmatprep.subr.mxu0 0.0
      %993 = vmatpush1.xpose.msra.mxu0 0.0
      %994 = vmatprep.subr.mxu0 0.0
      %995 = vmatpush1.xpose.msra.mxu0 0.0
      %996 = vmatprep.subr.mxu0 0.0
      %997 = vmatpush1.xpose.msra.mxu0 0.0
      %998 = vmatprep.subr.mxu0 0.0
      %999 = vmatpush1.xpose.msra.mxu0 0.0
      %1000 = vmatprep.subr.mxu0 0.0
      %1001 = vmatpush1.xpose.msra.mxu0 0.0
      %1002 = vmatprep.subr.mxu0 0.0
      %1003 = vmatpush1.xpose.msra.mxu0 0.0
      %1004 = vmatprep.subr.mxu0 0.0
      %1005 = vmatpush1.xpose.msra.mxu0 0.0
      %1006 = vmatprep.subr.mxu0 0.0
      %1007 = vmatpush1.xpose.msra.mxu0 0.0
      %1008 = vmatprep.subr.mxu0 0.0
      %1009 = vmatpush1.xpose.msra.mxu0 0.0
      %1010 = vmatprep.subr.mxu0 0.0
      %1011 = vmatpush1.xpose.msra.mxu0 0.0
      %1012 = vmatprep.subr.mxu0 0.0
      %1013 = vmatpush1.xpose.msra.mxu0 0.0
      %1014 = vmatprep.subr.mxu0 0.0
      %1015 = vmatpush1.xpose.msra.mxu0 0.0
      %1016 = vmatprep.subr.mxu0 0.0
      %1017 = vmatpush1.xpose.msra.mxu0 0.0
      %1018 = vmatprep.subr.mxu0 0.0
      %1019 = vmatpush1.xpose.msra.mxu0 0.0
      %1020 = vmatprep.subr.mxu0 0.0
      %1021 = vmatpush1.xpose.msra.mxu0 0.0
      %1022 = vmatprep.subr.mxu0 0.0
      %1023 = vmatpush1.xpose.msra.mxu0 0.0
      %1024 = vmatprep.subr.mxu0 0.0
      %1025 = vmatpush1.xpose.msra.mxu0 0.0
      %1026 = vmatprep.subr.mxu0 0.0
      %1027 = vmatpush1.xpose.msra.mxu0 0.0
      %1028 = vmatprep.subr.mxu0 0.0
      %1029 = vmatpush1.xpose.msra.mxu0 0.0
      %1030 = vmatprep.subr.mxu0 0.0
      %1031 = vmatpush1.xpose.msra.mxu0 0.0
      %1032 = vmatprep.subr.mxu0 0.0
      %1033 = vmatpush1.xpose.msra.mxu0 0.0
      %1034 = vmatprep.subr.mxu0 0.0
      %1035 = vmatpush1.xpose.msra.mxu0 0.0
      %1036 = vmatprep.subr.mxu0 0.0
      %1037 = vmatpush1.xpose.msra.mxu0 0.0
      %1038 = vmatprep.subr.mxu0 0.0
      %1039 = vmatpush1.xpose.msra.mxu0 0.0
      %1040 = vmatprep.mubr.f32.mxu0 0.0
      %1041 = vmatmul.mubr.f32.gmra.mrb[0].mxu0 %v972
      %v1042 = vpop.f32.mrb[0].mxu0
      %v1043 = vadd.f32 %v708, %v1042
      %v1044 = vpop.f32.mrb[0].mxu0
      %1045 = vdwg.mxu0
      %v1046 = vsel %vm971, %v921, 0
      %v1048 = vsel %vm971, %v936, 0
      %1050 = vmatprep.subr.mxu0 0.0
      %1051 = vmatpush1.xpose.msra.mxu0 %v1048
      %1052 = vmatprep.subr.mxu0 0.0
      %1053 = vmatpush1.xpose.msra.mxu0 0.0
      %1054 = vmatprep.subr.mxu0 0.0
      %1055 = vmatpush1.xpose.msra.mxu0 0.0
      %1056 = vmatprep.subr.mxu0 0.0
      %1057 = vmatpush1.xpose.msra.mxu0 0.0
      %1058 = vmatprep.subr.mxu0 0.0
      %1059 = vmatpush1.xpose.msra.mxu0 0.0
      %1060 = vmatprep.subr.mxu0 0.0
      %1061 = vmatpush1.xpose.msra.mxu0 0.0
      %1062 = vmatprep.subr.mxu0 0.0
      %1063 = vmatpush1.xpose.msra.mxu0 0.0
      %1064 = vmatprep.subr.mxu0 0.0
      %1065 = vmatpush1.xpose.msra.mxu0 0.0
      %1066 = vmatprep.subr.mxu0 0.0
      %1067 = vmatpush1.xpose.msra.mxu0 0.0
      %1068 = vmatprep.subr.mxu0 0.0
      %1069 = vmatpush1.xpose.msra.mxu0 0.0
      %1070 = vmatprep.subr.mxu0 0.0
      %1071 = vmatpush1.xpose.msra.mxu0 0.0
      %1072 = vmatprep.subr.mxu0 0.0
      %1073 = vmatpush1.xpose.msra.mxu0 0.0
      %1074 = vmatprep.subr.mxu0 0.0
      %1075 = vmatpush1.xpose.msra.mxu0 0.0
      %1076 = vmatprep.subr.mxu0 0.0
      %1077 = vmatpush1.xpose.msra.mxu0 0.0
      %1078 = vmatprep.subr.mxu0 0.0
      %1079 = vmatpush1.xpose.msra.mxu0 0.0
      %1080 = vmatprep.subr.mxu0 0.0
      %1081 = vmatpush1.xpose.msra.mxu0 0.0
      %1082 = vmatprep.subr.mxu0 0.0
      %1083 = vmatpush1.xpose.msra.mxu0 0.0
      %1084 = vmatprep.subr.mxu0 0.0
      %1085 = vmatpush1.xpose.msra.mxu0 0.0
      %1086 = vmatprep.subr.mxu0 0.0
      %1087 = vmatpush1.xpose.msra.mxu0 0.0
      %1088 = vmatprep.subr.mxu0 0.0
      %1089 = vmatpush1.xpose.msra.mxu0 0.0
      %1090 = vmatprep.subr.mxu0 0.0
      %1091 = vmatpush1.xpose.msra.mxu0 0.0
      %1092 = vmatprep.subr.mxu0 0.0
      %1093 = vmatpush1.xpose.msra.mxu0 0.0
      %1094 = vmatprep.subr.mxu0 0.0
      %1095 = vmatpush1.xpose.msra.mxu0 0.0
      %1096 = vmatprep.subr.mxu0 0.0
      %1097 = vmatpush1.xpose.msra.mxu0 0.0
      %1098 = vmatprep.subr.mxu0 0.0
      %1099 = vmatpush1.xpose.msra.mxu0 0.0
      %1100 = vmatprep.subr.mxu0 0.0
      %1101 = vmatpush1.xpose.msra.mxu0 0.0
      %1102 = vmatprep.subr.mxu0 0.0
      %1103 = vmatpush1.xpose.msra.mxu0 0.0
      %1104 = vmatprep.subr.mxu0 0.0
      %1105 = vmatpush1.xpose.msra.mxu0 0.0
      %1106 = vmatprep.subr.mxu0 0.0
      %1107 = vmatpush1.xpose.msra.mxu0 0.0
      %1108 = vmatprep.subr.mxu0 0.0
      %1109 = vmatpush1.xpose.msra.mxu0 0.0
      %1110 = vmatprep.subr.mxu0 0.0
      %1111 = vmatpush1.xpose.msra.mxu0 0.0
      %1112 = vmatprep.subr.mxu0 0.0
      %1113 = vmatpush1.xpose.msra.mxu0 0.0
      %1114 = vmatprep.mubr.f32.mxu0 0.0
      %1115 = vmatmul.mubr.f32.gmra.mrb[0].mxu0 %v1046
      %v1116 = vpop.f32.mrb[0].mxu0
      %v1117 = vadd.f32 %v708, %v1116
      %v1118 = vpop.f32.mrb[0].mxu0
      %1119 = vdwg.mxu0
      %v1120 = vsel %vm971, %v923, 0
      %v1122 = vsel %vm971, %v938, 0
      %1124 = vmatprep.subr.mxu0 0.0
      %1125 = vmatpush1.xpose.msra.mxu0 %v1122
      %1126 = vmatprep.subr.mxu0 0.0
      %1127 = vmatpush1.xpose.msra.mxu0 0.0
      %1128 = vmatprep.subr.mxu0 0.0
      %1129 = vmatpush1.xpose.msra.mxu0 0.0
      %1130 = vmatprep.subr.mxu0 0.0
      %1131 = vmatpush1.xpose.msra.mxu0 0.0
      %1132 = vmatprep.subr.mxu0 0.0
      %1133 = vmatpush1.xpose.msra.mxu0 0.0
      %1134 = vmatprep.subr.mxu0 0.0
      %1135 = vmatpush1.xpose.msra.mxu0 0.0
      %1136 = vmatprep.subr.mxu0 0.0
      %1137 = vmatpush1.xpose.msra.mxu0 0.0
      %1138 = vmatprep.subr.mxu0 0.0
      %1139 = vmatpush1.xpose.msra.mxu0 0.0
      %1140 = vmatprep.subr.mxu0 0.0
      %1141 = vmatpush1.xpose.msra.mxu0 0.0
      %1142 = vmatprep.subr.mxu0 0.0
      %1143 = vmatpush1.xpose.msra.mxu0 0.0
      %1144 = vmatprep.subr.mxu0 0.0
      %1145 = vmatpush1.xpose.msra.mxu0 0.0
      %1146 = vmatprep.subr.mxu0 0.0
      %1147 = vmatpush1.xpose.msra.mxu0 0.0
      %1148 = vmatprep.subr.mxu0 0.0
      %1149 = vmatpush1.xpose.msra.mxu0 0.0
      %1150 = vmatprep.subr.mxu0 0.0
      %1151 = vmatpush1.xpose.msra.mxu0 0.0
      %1152 = vmatprep.subr.mxu0 0.0
      %1153 = vmatpush1.xpose.msra.mxu0 0.0
      %1154 = vmatprep.subr.mxu0 0.0
      %1155 = vmatpush1.xpose.msra.mxu0 0.0
      %1156 = vmatprep.subr.mxu0 0.0
      %1157 = vmatpush1.xpose.msra.mxu0 0.0
      %1158 = vmatprep.subr.mxu0 0.0
      %1159 = vmatpush1.xpose.msra.mxu0 0.0
      %1160 = vmatprep.subr.mxu0 0.0
      %1161 = vmatpush1.xpose.msra.mxu0 0.0
      %1162 = vmatprep.subr.mxu0 0.0
      %1163 = vmatpush1.xpose.msra.mxu0 0.0
      %1164 = vmatprep.subr.mxu0 0.0
      %1165 = vmatpush1.xpose.msra.mxu0 0.0
      %1166 = vmatprep.subr.mxu0 0.0
      %1167 = vmatpush1.xpose.msra.mxu0 0.0
      %1168 = vmatprep.subr.mxu0 0.0
      %1169 = vmatpush1.xpose.msra.mxu0 0.0
      %1170 = vmatprep.subr.mxu0 0.0
      %1171 = vmatpush1.xpose.msra.mxu0 0.0
      %1172 = vmatprep.subr.mxu0 0.0
      %1173 = vmatpush1.xpose.msra.mxu0 0.0
      %1174 = vmatprep.subr.mxu0 0.0
      %1175 = vmatpush1.xpose.msra.mxu0 0.0
      %1176 = vmatprep.subr.mxu0 0.0
      %1177 = vmatpush1.xpose.msra.mxu0 0.0
      %1178 = vmatprep.subr.mxu0 0.0
      %1179 = vmatpush1.xpose.msra.mxu0 0.0
      %1180 = vmatprep.subr.mxu0 0.0
      %1181 = vmatpush1.xpose.msra.mxu0 0.0
      %1182 = vmatprep.subr.mxu0 0.0
      %1183 = vmatpush1.xpose.msra.mxu0 0.0
      %1184 = vmatprep.subr.mxu0 0.0
      %1185 = vmatpush1.xpose.msra.mxu0 0.0
      %1186 = vmatprep.subr.mxu0 0.0
      %1187 = vmatpush1.xpose.msra.mxu0 0.0
      %1188 = vmatprep.mubr.f32.mxu0 0.0
      %1189 = vmatmul.mubr.f32.gmra.mrb[0].mxu0 %v1120
      %v1190 = vpop.f32.mrb[0].mxu0
      %v1191 = vadd.f32 %v708, %v1190
      %v1192 = vpop.f32.mrb[0].mxu0
      %1193 = vdwg.mxu0
      %v1194 = vsel %vm971, %v925, 0
      %v1196 = vsel %vm971, %v940, 0
      %1198 = vmatprep.subr.mxu0 0.0
      %1199 = vmatpush1.xpose.msra.mxu0 %v1196
      %1200 = vmatprep.subr.mxu0 0.0
      %1201 = vmatpush1.xpose.msra.mxu0 0.0
      %1202 = vmatprep.subr.mxu0 0.0
      %1203 = vmatpush1.xpose.msra.mxu0 0.0
      %1204 = vmatprep.subr.mxu0 0.0
      %1205 = vmatpush1.xpose.msra.mxu0 0.0
      %1206 = vmatprep.subr.mxu0 0.0
      %1207 = vmatpush1.xpose.msra.mxu0 0.0
      %1208 = vmatprep.subr.mxu0 0.0
      %1209 = vmatpush1.xpose.msra.mxu0 0.0
      %1210 = vmatprep.subr.mxu0 0.0
      %1211 = vmatpush1.xpose.msra.mxu0 0.0
      %1212 = vmatprep.subr.mxu0 0.0
      %1213 = vmatpush1.xpose.msra.mxu0 0.0
      %1214 = vmatprep.subr.mxu0 0.0
      %1215 = vmatpush1.xpose.msra.mxu0 0.0
      %1216 = vmatprep.subr.mxu0 0.0
      %1217 = vmatpush1.xpose.msra.mxu0 0.0
      %1218 = vmatprep.subr.mxu0 0.0
      %1219 = vmatpush1.xpose.msra.mxu0 0.0
      %1220 = vmatprep.subr.mxu0 0.0
      %1221 = vmatpush1.xpose.msra.mxu0 0.0
      %1222 = vmatprep.subr.mxu0 0.0
      %1223 = vmatpush1.xpose.msra.mxu0 0.0
      %1224 = vmatprep.subr.mxu0 0.0
      %1225 = vmatpush1.xpose.msra.mxu0 0.0
      %1226 = vmatprep.subr.mxu0 0.0
      %1227 = vmatpush1.xpose.msra.mxu0 0.0
      %1228 = vmatprep.subr.mxu0 0.0
      %1229 = vmatpush1.xpose.msra.mxu0 0.0
      %1230 = vmatprep.subr.mxu0 0.0
      %1231 = vmatpush1.xpose.msra.mxu0 0.0
      %1232 = vmatprep.subr.mxu0 0.0
      %1233 = vmatpush1.xpose.msra.mxu0 0.0
      %1234 = vmatprep.subr.mxu0 0.0
      %1235 = vmatpush1.xpose.msra.mxu0 0.0
      %1236 = vmatprep.subr.mxu0 0.0
      %1237 = vmatpush1.xpose.msra.mxu0 0.0
      %1238 = vmatprep.subr.mxu0 0.0
      %1239 = vmatpush1.xpose.msra.mxu0 0.0
      %1240 = vmatprep.subr.mxu0 0.0
      %1241 = vmatpush1.xpose.msra.mxu0 0.0
      %1242 = vmatprep.subr.mxu0 0.0
      %1243 = vmatpush1.xpose.msra.mxu0 0.0
      %1244 = vmatprep.subr.mxu0 0.0
      %1245 = vmatpush1.xpose.msra.mxu0 0.0
      %1246 = vmatprep.subr.mxu0 0.0
      %1247 = vmatpush1.xpose.msra.mxu0 0.0
      %1248 = vmatprep.subr.mxu0 0.0
      %1249 = vmatpush1.xpose.msra.mxu0 0.0
      %1250 = vmatprep.subr.mxu0 0.0
      %1251 = vmatpush1.xpose.msra.mxu0 0.0
      %1252 = vmatprep.subr.mxu0 0.0
      %1253 = vmatpush1.xpose.msra.mxu0 0.0
      %1254 = vmatprep.subr.mxu0 0.0
      %1255 = vmatpush1.xpose.msra.mxu0 0.0
      %1256 = vmatprep.subr.mxu0 0.0
      %1257 = vmatpush1.xpose.msra.mxu0 0.0
      %1258 = vmatprep.subr.mxu0 0.0
      %1259 = vmatpush1.xpose.msra.mxu0 0.0
      %1260 = vmatprep.subr.mxu0 0.0
      %1261 = vmatpush1.xpose.msra.mxu0 0.0
      %1262 = vmatprep.mubr.f32.mxu0 0.0
      %1263 = vmatmul.mubr.f32.gmra.mrb[0].mxu0 %v1194
      %v1264 = vpop.f32.mrb[0].mxu0
      %v1265 = vadd.f32 %v708, %v1264
      %v1266 = vpop.f32.mrb[0].mxu0
      %1267 = vdwg.mxu0
      %v1268 = vsel %vm971, %v927, 0
      %v1270 = vsel %vm971, %v942, 0
      %1272 = vmatprep.subr.mxu0 0.0
      %1273 = vmatpush1.xpose.msra.mxu0 %v1270
      %1274 = vmatprep.subr.mxu0 0.0
      %1275 = vmatpush1.xpose.msra.mxu0 0.0
      %1276 = vmatprep.subr.mxu0 0.0
      %1277 = vmatpush1.xpose.msra.mxu0 0.0
      %1278 = vmatprep.subr.mxu0 0.0
      %1279 = vmatpush1.xpose.msra.mxu0 0.0
      %1280 = vmatprep.subr.mxu0 0.0
      %1281 = vmatpush1.xpose.msra.mxu0 0.0
      %1282 = vmatprep.subr.mxu0 0.0
      %1283 = vmatpush1.xpose.msra.mxu0 0.0
      %1284 = vmatprep.subr.mxu0 0.0
      %1285 = vmatpush1.xpose.msra.mxu0 0.0
      %1286 = vmatprep.subr.mxu0 0.0
      %1287 = vmatpush1.xpose.msra.mxu0 0.0
      %1288 = vmatprep.subr.mxu0 0.0
      %1289 = vmatpush1.xpose.msra.mxu0 0.0
      %1290 = vmatprep.subr.mxu0 0.0
      %1291 = vmatpush1.xpose.msra.mxu0 0.0
      %1292 = vmatprep.subr.mxu0 0.0
      %1293 = vmatpush1.xpose.msra.mxu0 0.0
      %1294 = vmatprep.subr.mxu0 0.0
      %1295 = vmatpush1.xpose.msra.mxu0 0.0
      %1296 = vmatprep.subr.mxu0 0.0
      %1297 = vmatpush1.xpose.msra.mxu0 0.0
      %1298 = vmatprep.subr.mxu0 0.0
      %1299 = vmatpush1.xpose.msra.mxu0 0.0
      %1300 = vmatprep.subr.mxu0 0.0
      %1301 = vmatpush1.xpose.msra.mxu0 0.0
      %1302 = vmatprep.subr.mxu0 0.0
      %1303 = vmatpush1.xpose.msra.mxu0 0.0
      %1304 = vmatprep.subr.mxu0 0.0
      %1305 = vmatpush1.xpose.msra.mxu0 0.0
      %1306 = vmatprep.subr.mxu0 0.0
      %1307 = vmatpush1.xpose.msra.mxu0 0.0
      %1308 = vmatprep.subr.mxu0 0.0
      %1309 = vmatpush1.xpose.msra.mxu0 0.0
      %1310 = vmatprep.subr.mxu0 0.0
      %1311 = vmatpush1.xpose.msra.mxu0 0.0
      %1312 = vmatprep.subr.mxu0 0.0
      %1313 = vmatpush1.xpose.msra.mxu0 0.0
      %1314 = vmatprep.subr.mxu0 0.0
      %1315 = vmatpush1.xpose.msra.mxu0 0.0
      %1316 = vmatprep.subr.mxu0 0.0
      %1317 = vmatpush1.xpose.msra.mxu0 0.0
      %1318 = vmatprep.subr.mxu0 0.0
      %1319 = vmatpush1.xpose.msra.mxu0 0.0
      %1320 = vmatprep.subr.mxu0 0.0
      %1321 = vmatpush1.xpose.msra.mxu0 0.0
      %1322 = vmatprep.subr.mxu0 0.0
      %1323 = vmatpush1.xpose.msra.mxu0 0.0
      %1324 = vmatprep.subr.mxu0 0.0
      %1325 = vmatpush1.xpose.msra.mxu0 0.0
      %1326 = vmatprep.subr.mxu0 0.0
      %1327 = vmatpush1.xpose.msra.mxu0 0.0
      %1328 = vmatprep.subr.mxu0 0.0
      %1329 = vmatpush1.xpose.msra.mxu0 0.0
      %1330 = vmatprep.subr.mxu0 0.0
      %1331 = vmatpush1.xpose.msra.mxu0 0.0
      %1332 = vmatprep.subr.mxu0 0.0
      %1333 = vmatpush1.xpose.msra.mxu0 0.0
      %1334 = vmatprep.subr.mxu0 0.0
      %1335 = vmatpush1.xpose.msra.mxu0 0.0
      %1336 = vmatprep.mubr.f32.mxu0 0.0
      %1337 = vmatmul.mubr.f32.gmra.mrb[0].mxu0 %v1268
      %v1338 = vpop.f32.mrb[0].mxu0
      %v1339 = vadd.f32 %v708, %v1338
      %v1340 = vpop.f32.mrb[0].mxu0
      %1341 = vdwg.mxu0
      %v1342 = vsel %vm971, %v929, 0
      %v1344 = vsel %vm971, %v944, 0
      %1346 = vmatprep.subr.mxu0 0.0
      %1347 = vmatpush1.xpose.msra.mxu0 %v1344
      %1348 = vmatprep.subr.mxu0 0.0
      %1349 = vmatpush1.xpose.msra.mxu0 0.0
      %1350 = vmatprep.subr.mxu0 0.0
      %1351 = vmatpush1.xpose.msra.mxu0 0.0
      %1352 = vmatprep.subr.mxu0 0.0
      %1353 = vmatpush1.xpose.msra.mxu0 0.0
      %1354 = vmatprep.subr.mxu0 0.0
      %1355 = vmatpush1.xpose.msra.mxu0 0.0
      %1356 = vmatprep.subr.mxu0 0.0
      %1357 = vmatpush1.xpose.msra.mxu0 0.0
      %1358 = vmatprep.subr.mxu0 0.0
      %1359 = vmatpush1.xpose.msra.mxu0 0.0
      %1360 = vmatprep.subr.mxu0 0.0
      %1361 = vmatpush1.xpose.msra.mxu0 0.0
      %1362 = vmatprep.subr.mxu0 0.0
      %1363 = vmatpush1.xpose.msra.mxu0 0.0
      %1364 = vmatprep.subr.mxu0 0.0
      %1365 = vmatpush1.xpose.msra.mxu0 0.0
      %1366 = vmatprep.subr.mxu0 0.0
      %1367 = vmatpush1.xpose.msra.mxu0 0.0
      %1368 = vmatprep.subr.mxu0 0.0
      %1369 = vmatpush1.xpose.msra.mxu0 0.0
      %1370 = vmatprep.subr.mxu0 0.0
      %1371 = vmatpush1.xpose.msra.mxu0 0.0
      %1372 = vmatprep.subr.mxu0 0.0
      %1373 = vmatpush1.xpose.msra.mxu0 0.0
      %1374 = vmatprep.subr.mxu0 0.0
      %1375 = vmatpush1.xpose.msra.mxu0 0.0
      %1376 = vmatprep.subr.mxu0 0.0
      %1377 = vmatpush1.xpose.msra.mxu0 0.0
      %1378 = vmatprep.subr.mxu0 0.0
      %1379 = vmatpush1.xpose.msra.mxu0 0.0
      %1380 = vmatprep.subr.mxu0 0.0
      %1381 = vmatpush1.xpose.msra.mxu0 0.0
      %1382 = vmatprep.subr.mxu0 0.0
      %1383 = vmatpush1.xpose.msra.mxu0 0.0
      %1384 = vmatprep.subr.mxu0 0.0
      %1385 = vmatpush1.xpose.msra.mxu0 0.0
      %1386 = vmatprep.subr.mxu0 0.0
      %1387 = vmatpush1.xpose.msra.mxu0 0.0
      %1388 = vmatprep.subr.mxu0 0.0
      %1389 = vmatpush1.xpose.msra.mxu0 0.0
      %1390 = vmatprep.subr.mxu0 0.0
      %1391 = vmatpush1.xpose.msra.mxu0 0.0
      %1392 = vmatprep.subr.mxu0 0.0
      %1393 = vmatpush1.xpose.msra.mxu0 0.0
      %1394 = vmatprep.subr.mxu0 0.0
      %1395 = vmatpush1.xpose.msra.mxu0 0.0
      %1396 = vmatprep.subr.mxu0 0.0
      %1397 = vmatpush1.xpose.msra.mxu0 0.0
      %1398 = vmatprep.subr.mxu0 0.0
      %1399 = vmatpush1.xpose.msra.mxu0 0.0
      %1400 = vmatprep.subr.mxu0 0.0
      %1401 = vmatpush1.xpose.msra.mxu0 0.0
      %1402 = vmatprep.subr.mxu0 0.0
      %1403 = vmatpush1.xpose.msra.mxu0 0.0
      %1404 = vmatprep.subr.mxu0 0.0
      %1405 = vmatpush1.xpose.msra.mxu0 0.0
      %1406 = vmatprep.subr.mxu0 0.0
      %1407 = vmatpush1.xpose.msra.mxu0 0.0
      %1408 = vmatprep.subr.mxu0 0.0
      %1409 = vmatpush1.xpose.msra.mxu0 0.0
      %1410 = vmatprep.mubr.f32.mxu0 0.0
      %1411 = vmatmul.mubr.f32.gmra.mrb[0].mxu0 %v1342
      %v1412 = vpop.f32.mrb[0].mxu0
      %v1413 = vadd.f32 %v708, %v1412
      %v1414 = vpop.f32.mrb[0].mxu0
      %1415 = vdwg.mxu0
      %v1416 = vsel %vm971, %v931, 0
      %v1418 = vsel %vm971, %v946, 0
      %1420 = vmatprep.subr.mxu0 0.0
      %1421 = vmatpush1.xpose.msra.mxu0 %v1418
      %1422 = vmatprep.subr.mxu0 0.0
      %1423 = vmatpush1.xpose.msra.mxu0 0.0
      %1424 = vmatprep.subr.mxu0 0.0
      %1425 = vmatpush1.xpose.msra.mxu0 0.0
      %1426 = vmatprep.subr.mxu0 0.0
      %1427 = vmatpush1.xpose.msra.mxu0 0.0
      %1428 = vmatprep.subr.mxu0 0.0
      %1429 = vmatpush1.xpose.msra.mxu0 0.0
      %1430 = vmatprep.subr.mxu0 0.0
      %1431 = vmatpush1.xpose.msra.mxu0 0.0
      %1432 = vmatprep.subr.mxu0 0.0
      %1433 = vmatpush1.xpose.msra.mxu0 0.0
      %1434 = vmatprep.subr.mxu0 0.0
      %1435 = vmatpush1.xpose.msra.mxu0 0.0
      %1436 = vmatprep.subr.mxu0 0.0
      %1437 = vmatpush1.xpose.msra.mxu0 0.0
      %1438 = vmatprep.subr.mxu0 0.0
      %1439 = vmatpush1.xpose.msra.mxu0 0.0
      %1440 = vmatprep.subr.mxu0 0.0
      %1441 = vmatpush1.xpose.msra.mxu0 0.0
      %1442 = vmatprep.subr.mxu0 0.0
      %1443 = vmatpush1.xpose.msra.mxu0 0.0
      %1444 = vmatprep.subr.mxu0 0.0
      %1445 = vmatpush1.xpose.msra.mxu0 0.0
      %1446 = vmatprep.subr.mxu0 0.0
      %1447 = vmatpush1.xpose.msra.mxu0 0.0
      %1448 = vmatprep.subr.mxu0 0.0
      %1449 = vmatpush1.xpose.msra.mxu0 0.0
      %1450 = vmatprep.subr.mxu0 0.0
      %1451 = vmatpush1.xpose.msra.mxu0 0.0
      %1452 = vmatprep.subr.mxu0 0.0
      %1453 = vmatpush1.xpose.msra.mxu0 0.0
      %1454 = vmatprep.subr.mxu0 0.0
      %1455 = vmatpush1.xpose.msra.mxu0 0.0
      %1456 = vmatprep.subr.mxu0 0.0
      %1457 = vmatpush1.xpose.msra.mxu0 0.0
      %1458 = vmatprep.subr.mxu0 0.0
      %1459 = vmatpush1.xpose.msra.mxu0 0.0
      %1460 = vmatprep.subr.mxu0 0.0
      %1461 = vmatpush1.xpose.msra.mxu0 0.0
      %1462 = vmatprep.subr.mxu0 0.0
      %1463 = vmatpush1.xpose.msra.mxu0 0.0
      %1464 = vmatprep.subr.mxu0 0.0
      %1465 = vmatpush1.xpose.msra.mxu0 0.0
      %1466 = vmatprep.subr.mxu0 0.0
      %1467 = vmatpush1.xpose.msra.mxu0 0.0
      %1468 = vmatprep.subr.mxu0 0.0
      %1469 = vmatpush1.xpose.msra.mxu0 0.0
      %1470 = vmatprep.subr.mxu0 0.0
      %1471 = vmatpush1.xpose.msra.mxu0 0.0
      %1472 = vmatprep.subr.mxu0 0.0
      %1473 = vmatpush1.xpose.msra.mxu0 0.0
      %1474 = vmatprep.subr.mxu0 0.0
      %1475 = vmatpush1.xpose.msra.mxu0 0.0
      %1476 = vmatprep.subr.mxu0 0.0
      %1477 = vmatpush1.xpose.msra.mxu0 0.0
      %1478 = vmatprep.subr.mxu0 0.0
      %1479 = vmatpush1.xpose.msra.mxu0 0.0
      %1480 = vmatprep.subr.mxu0 0.0
      %1481 = vmatpush1.xpose.msra.mxu0 0.0
      %1482 = vmatprep.subr.mxu0 0.0
      %1483 = vmatpush1.xpose.msra.mxu0 0.0
      %1484 = vmatprep.mubr.f32.mxu0 0.0
      %1485 = vmatmul.mubr.f32.gmra.mrb[0].mxu0 %v1416
      %v1486 = vpop.f32.mrb[0].mxu0
      %v1487 = vadd.f32 %v708, %v1486
      %v1488 = vpop.f32.mrb[0].mxu0
      %1489 = vdwg.mxu0
      %v1490 = vsel %vm971, %v933, 0
      %v1492 = vsel %vm971, %v948, 0
      %1494 = vmatprep.subr.mxu0 0.0
      %1495 = vmatpush1.xpose.msra.mxu0 %v1492
      %1496 = vmatprep.subr.mxu0 0.0
      %1497 = vmatpush1.xpose.msra.mxu0 0.0
      %1498 = vmatprep.subr.mxu0 0.0
      %1499 = vmatpush1.xpose.msra.mxu0 0.0
      %1500 = vmatprep.subr.mxu0 0.0
      %1501 = vmatpush1.xpose.msra.mxu0 0.0
      %1502 = vmatprep.subr.mxu0 0.0
      %1503 = vmatpush1.xpose.msra.mxu0 0.0
      %1504 = vmatprep.subr.mxu0 0.0
      %1505 = vmatpush1.xpose.msra.mxu0 0.0
      %1506 = vmatprep.subr.mxu0 0.0
      %1507 = vmatpush1.xpose.msra.mxu0 0.0
      %1508 = vmatprep.subr.mxu0 0.0
      %1509 = vmatpush1.xpose.msra.mxu0 0.0
      %1510 = vmatprep.subr.mxu0 0.0
      %1511 = vmatpush1.xpose.msra.mxu0 0.0
      %1512 = vmatprep.subr.mxu0 0.0
      %1513 = vmatpush1.xpose.msra.mxu0 0.0
      %1514 = vmatprep.subr.mxu0 0.0
      %1515 = vmatpush1.xpose.msra.mxu0 0.0
      %1516 = vmatprep.subr.mxu0 0.0
      %1517 = vmatpush1.xpose.msra.mxu0 0.0
      %1518 = vmatprep.subr.mxu0 0.0
      %1519 = vmatpush1.xpose.msra.mxu0 0.0
      %1520 = vmatprep.subr.mxu0 0.0
      %1521 = vmatpush1.xpose.msra.mxu0 0.0
      %1522 = vmatprep.subr.mxu0 0.0
      %1523 = vmatpush1.xpose.msra.mxu0 0.0
      %1524 = vmatprep.subr.mxu0 0.0
      %1525 = vmatpush1.xpose.msra.mxu0 0.0
      %1526 = vmatprep.subr.mxu0 0.0
      %1527 = vmatpush1.xpose.msra.mxu0 0.0
      %1528 = vmatprep.subr.mxu0 0.0
      %1529 = vmatpush1.xpose.msra.mxu0 0.0
      %1530 = vmatprep.subr.mxu0 0.0
      %1531 = vmatpush1.xpose.msra.mxu0 0.0
      %1532 = vmatprep.subr.mxu0 0.0
      %1533 = vmatpush1.xpose.msra.mxu0 0.0
      %1534 = vmatprep.subr.mxu0 0.0
      %1535 = vmatpush1.xpose.msra.mxu0 0.0
      %1536 = vmatprep.subr.mxu0 0.0
      %1537 = vmatpush1.xpose.msra.mxu0 0.0
      %1538 = vmatprep.subr.mxu0 0.0
      %1539 = vmatpush1.xpose.msra.mxu0 0.0
      %1540 = vmatprep.subr.mxu0 0.0
      %1541 = vmatpush1.xpose.msra.mxu0 0.0
      %1542 = vmatprep.subr.mxu0 0.0
      %1543 = vmatpush1.xpose.msra.mxu0 0.0
      %1544 = vmatprep.subr.mxu0 0.0
      %1545 = vmatpush1.xpose.msra.mxu0 0.0
      %1546 = vmatprep.subr.mxu0 0.0
      %1547 = vmatpush1.xpose.msra.mxu0 0.0
      %1548 = vmatprep.subr.mxu0 0.0
      %1549 = vmatpush1.xpose.msra.mxu0 0.0
      %1550 = vmatprep.subr.mxu0 0.0
      %1551 = vmatpush1.xpose.msra.mxu0 0.0
      %1552 = vmatprep.subr.mxu0 0.0
      %1553 = vmatpush1.xpose.msra.mxu0 0.0
      %1554 = vmatprep.subr.mxu0 0.0
      %1555 = vmatpush1.xpose.msra.mxu0 0.0
      %1556 = vmatprep.subr.mxu0 0.0
      %1557 = vmatpush1.xpose.msra.mxu0 0.0
      %1558 = vmatprep.mubr.f32.mxu0 0.0
      %1559 = vmatmul.mubr.f32.gmra.mrb[0].mxu0 %v1490
      %v1560 = vpop.f32.mrb[0].mxu0
      %v1561 = vadd.f32 %v708, %v1560
      %v1562 = vpop.f32.mrb[0].mxu0
      %1563 = vdwg.mxu0
      %vm1564 = vcmask 64512
      %v1565 = vsel %vm1564, %v1043, -inf
      %1566 = vmax.xlane.f32.xlu0 %v1565
      %v1567 = vpop.xlane.xlu0 %1566
      %v1568 = vsel %vm1564, %v1117, -inf
      %1569 = vmax.xlane.f32.xlu0 %v1568
      %v1570 = vpop.xlane.xlu0 %1569
      %v1571 = vsel %vm1564, %v1191, -inf
      %1572 = vmax.xlane.f32.xlu0 %v1571
      %v1573 = vpop.xlane.xlu0 %1572
      %v1574 = vsel %vm1564, %v1265, -inf
      %1575 = vmax.xlane.f32.xlu0 %v1574
      %v1576 = vpop.xlane.xlu0 %1575
      %v1577 = vsel %vm1564, %v1339, -inf
      %1578 = vmax.xlane.f32.xlu0 %v1577
      %v1579 = vpop.xlane.xlu0 %1578
      %v1580 = vsel %vm1564, %v1413, -inf
      %1581 = vmax.xlane.f32.xlu0 %v1580
      %v1582 = vpop.xlane.xlu0 %1581
      %v1583 = vsel %vm1564, %v1487, -inf
      %1584 = vmax.xlane.f32.xlu0 %v1583
      %v1585 = vpop.xlane.xlu0 %1584
      %v1586 = vsel %vm1564, %v1561, -inf
      %1587 = vmax.xlane.f32.xlu0 %v1586
      %v1588 = vpop.xlane.xlu0 %1587
      %v1589 = vsub.f32 %v1043, %v1567
      %v1590 = vsub.f32 %v1117, %v1570
      %v1591 = vsub.f32 %v1191, %v1573
      %v1592 = vsub.f32 %v1265, %v1576
      %v1593 = vsub.f32 %v1339, %v1579
      %v1594 = vsub.f32 %v1413, %v1582
      %v1595 = vsub.f32 %v1487, %v1585
      %v1596 = vsub.f32 %v1561, %v1588
      %v1597 = vmul.f32 %v1589, 1.442695
      %v1598 = vpow.pop %v1597
      %v1599 = vmul.f32 %v1590, 1.442695
      %v1600 = vpow.pop %v1599
      %v1601 = vmul.f32 %v1591, 1.442695
      %v1602 = vpow.pop %v1601
      %v1603 = vmul.f32 %v1592, 1.442695
      %v1604 = vpow.pop %v1603
      %v1605 = vmul.f32 %v1593, 1.442695
      %v1606 = vpow.pop %v1605
      %v1607 = vmul.f32 %v1594, 1.442695
      %v1608 = vpow.pop %v1607
      %v1609 = vmul.f32 %v1595, 1.442695
      %v1610 = vpow.pop %v1609
      %v1611 = vmul.f32 %v1596, 1.442695
      %v1612 = vpow.pop %v1611
      %v1613 = vsel %vm1564, %v1598, 0.0
      %1614 = vadd.xlane.f32.xlu0 %v1613
      %v1615 = vpop.xlane.xlu0 %1614
      %v1616 = vsel %vm1564, %v1600, 0.0
      %1617 = vadd.xlane.f32.xlu0 %v1616
      %v1618 = vpop.xlane.xlu0 %1617
      %v1619 = vsel %vm1564, %v1602, 0.0
      %1620 = vadd.xlane.f32.xlu0 %v1619
      %v1621 = vpop.xlane.xlu0 %1620
      %v1622 = vsel %vm1564, %v1604, 0.0
      %1623 = vadd.xlane.f32.xlu0 %v1622
      %v1624 = vpop.xlane.xlu0 %1623
      %v1625 = vsel %vm1564, %v1606, 0.0
      %1626 = vadd.xlane.f32.xlu0 %v1625
      %v1627 = vpop.xlane.xlu0 %1626
      %v1628 = vsel %vm1564, %v1608, 0.0
      %1629 = vadd.xlane.f32.xlu0 %v1628
      %v1630 = vpop.xlane.xlu0 %1629
      %v1631 = vsel %vm1564, %v1610, 0.0
      %1632 = vadd.xlane.f32.xlu0 %v1631
      %v1633 = vpop.xlane.xlu0 %1632
      %v1634 = vsel %vm1564, %v1612, 0.0
      %1635 = vadd.xlane.f32.xlu0 %v1634
      %v1636 = vpop.xlane.xlu0 %1635
      %v1637 = vrcp.pop %v1615
      %v1638 = vrcp.pop %v1618
      %v1639 = vrcp.pop %v1621
      %v1640 = vrcp.pop %v1624
      %v1641 = vrcp.pop %v1627
      %v1642 = vrcp.pop %v1630
      %v1643 = vrcp.pop %v1633
      %v1644 = vrcp.pop %v1636
      %v1645 = vmul.f32 %v1598, %v1637
      %v1646 = vmul.f32 %v1600, %v1638
      %v1647 = vmul.f32 %v1602, %v1639
      %v1648 = vmul.f32 %v1604, %v1640
      %v1649 = vmul.f32 %v1606, %v1641
      %v1650 = vmul.f32 %v1608, %v1642
      %v1651 = vmul.f32 %v1610, %v1643
      %v1652 = vmul.f32 %v1612, %v1644
      %v1654 = vsel %vm1564, %v1645, 0
      %1656 = vmatprep.subr.mxu0 0.0
      %1657 = vmatpush1.msra.mxu0 %v916
      %1658 = vmatprep.subr.mxu0 0.0
      %1659 = vmatpush1.msra.mxu0 0.0
      %1660 = vmatprep.subr.mxu0 0.0
      %1661 = vmatpush1.msra.mxu0 0.0
      %1662 = vmatprep.subr.mxu0 0.0
      %1663 = vmatpush1.msra.mxu0 0.0
      %1664 = vmatprep.subr.mxu0 0.0
      %1665 = vmatpush1.msra.mxu0 0.0
      %1666 = vmatprep.subr.mxu0 0.0
      %1667 = vmatpush1.msra.mxu0 0.0
      %1668 = vmatprep.subr.mxu0 0.0
      %1669 = vmatpush1.msra.mxu0 0.0
      %1670 = vmatprep.subr.mxu0 0.0
      %1671 = vmatpush1.msra.mxu0 0.0
      %1672 = vmatprep.subr.mxu0 0.0
      %1673 = vmatpush1.msra.mxu0 0.0
      %1674 = vmatprep.subr.mxu0 0.0
      %1675 = vmatpush1.msra.mxu0 0.0
      %1676 = vmatprep.subr.mxu0 0.0
      %1677 = vmatpush1.msra.mxu0 0.0
      %1678 = vmatprep.subr.mxu0 0.0
      %1679 = vmatpush1.msra.mxu0 0.0
      %1680 = vmatprep.subr.mxu0 0.0
      %1681 = vmatpush1.msra.mxu0 0.0
      %1682 = vmatprep.subr.mxu0 0.0
      %1683 = vmatpush1.msra.mxu0 0.0
      %1684 = vmatprep.subr.mxu0 0.0
      %1685 = vmatpush1.msra.mxu0 0.0
      %1686 = vmatprep.subr.mxu0 0.0
      %1687 = vmatpush1.msra.mxu0 0.0
      %1688 = vmatprep.subr.mxu0 0.0
      %1689 = vmatpush1.msra.mxu0 0.0
      %1690 = vmatprep.subr.mxu0 0.0
      %1691 = vmatpush1.msra.mxu0 0.0
      %1692 = vmatprep.subr.mxu0 0.0
      %1693 = vmatpush1.msra.mxu0 0.0
      %1694 = vmatprep.subr.mxu0 0.0
      %1695 = vmatpush1.msra.mxu0 0.0
      %1696 = vmatprep.subr.mxu0 0.0
      %1697 = vmatpush1.msra.mxu0 0.0
      %1698 = vmatprep.subr.mxu0 0.0
      %1699 = vmatpush1.msra.mxu0 0.0
      %1700 = vmatprep.subr.mxu0 0.0
      %1701 = vmatpush1.msra.mxu0 0.0
      %1702 = vmatprep.subr.mxu0 0.0
      %1703 = vmatpush1.msra.mxu0 0.0
      %1704 = vmatprep.subr.mxu0 0.0
      %1705 = vmatpush1.msra.mxu0 0.0
      %1706 = vmatprep.subr.mxu0 0.0
      %1707 = vmatpush1.msra.mxu0 0.0
      %1708 = vmatprep.subr.mxu0 0.0
      %1709 = vmatpush1.msra.mxu0 0.0
      %1710 = vmatprep.subr.mxu0 0.0
      %1711 = vmatpush1.msra.mxu0 0.0
      %1712 = vmatprep.subr.mxu0 0.0
      %1713 = vmatpush1.msra.mxu0 0.0
      %1714 = vmatprep.subr.mxu0 0.0
      %1715 = vmatpush1.msra.mxu0 0.0
      %1716 = vmatprep.subr.mxu0 0.0
      %1717 = vmatpush1.msra.mxu0 0.0
      %1718 = vmatprep.subr.mxu0 0.0
      %1719 = vmatpush1.msra.mxu0 0.0
      %1720 = vmatprep.mubr.f32.mxu0 0.0
      %1721 = vmatmul.mubr.f32.gmra.mrb[0].mxu0 %v1654
      %v1722 = vpop.f32.mrb[0].mxu0
      %v1723 = vadd.f32 0.0, %v1722
      %v1724 = vpop.f32.mrb[0].mxu0
      %1725 = vdwg.mxu0
      %v1727 = vsel %vm1564, %v1646, 0
      %1729 = vmatprep.subr.mxu0 0.0
      %1730 = vmatpush1.msra.mxu0 %v951
      %1731 = vmatprep.subr.mxu0 0.0
      %1732 = vmatpush1.msra.mxu0 0.0
      %1733 = vmatprep.subr.mxu0 0.0
      %1734 = vmatpush1.msra.mxu0 0.0
      %1735 = vmatprep.subr.mxu0 0.0
      %1736 = vmatpush1.msra.mxu0 0.0
      %1737 = vmatprep.subr.mxu0 0.0
      %1738 = vmatpush1.msra.mxu0 0.0
      %1739 = vmatprep.subr.mxu0 0.0
      %1740 = vmatpush1.msra.mxu0 0.0
      %1741 = vmatprep.subr.mxu0 0.0
      %1742 = vmatpush1.msra.mxu0 0.0
      %1743 = vmatprep.subr.mxu0 0.0
      %1744 = vmatpush1.msra.mxu0 0.0
      %1745 = vmatprep.subr.mxu0 0.0
      %1746 = vmatpush1.msra.mxu0 0.0
      %1747 = vmatprep.subr.mxu0 0.0
      %1748 = vmatpush1.msra.mxu0 0.0
      %1749 = vmatprep.subr.mxu0 0.0
      %1750 = vmatpush1.msra.mxu0 0.0
      %1751 = vmatprep.subr.mxu0 0.0
      %1752 = vmatpush1.msra.mxu0 0.0
      %1753 = vmatprep.subr.mxu0 0.0
      %1754 = vmatpush1.msra.mxu0 0.0
      %1755 = vmatprep.subr.mxu0 0.0
      %1756 = vmatpush1.msra.mxu0 0.0
      %1757 = vmatprep.subr.mxu0 0.0
      %1758 = vmatpush1.msra.mxu0 0.0
      %1759 = vmatprep.subr.mxu0 0.0
      %1760 = vmatpush1.msra.mxu0 0.0
      %1761 = vmatprep.subr.mxu0 0.0
      %1762 = vmatpush1.msra.mxu0 0.0
      %1763 = vmatprep.subr.mxu0 0.0
      %1764 = vmatpush1.msra.mxu0 0.0
      %1765 = vmatprep.subr.mxu0 0.0
      %1766 = vmatpush1.msra.mxu0 0.0
      %1767 = vmatprep.subr.mxu0 0.0
      %1768 = vmatpush1.msra.mxu0 0.0
      %1769 = vmatprep.subr.mxu0 0.0
      %1770 = vmatpush1.msra.mxu0 0.0
      %1771 = vmatprep.subr.mxu0 0.0
      %1772 = vmatpush1.msra.mxu0 0.0
      %1773 = vmatprep.subr.mxu0 0.0
      %1774 = vmatpush1.msra.mxu0 0.0
      %1775 = vmatprep.subr.mxu0 0.0
      %1776 = vmatpush1.msra.mxu0 0.0
      %1777 = vmatprep.subr.mxu0 0.0
      %1778 = vmatpush1.msra.mxu0 0.0
      %1779 = vmatprep.subr.mxu0 0.0
      %1780 = vmatpush1.msra.mxu0 0.0
      %1781 = vmatprep.subr.mxu0 0.0
      %1782 = vmatpush1.msra.mxu0 0.0
      %1783 = vmatprep.subr.mxu0 0.0
      %1784 = vmatpush1.msra.mxu0 0.0
      %1785 = vmatprep.subr.mxu0 0.0
      %1786 = vmatpush1.msra.mxu0 0.0
      %1787 = vmatprep.subr.mxu0 0.0
      %1788 = vmatpush1.msra.mxu0 0.0
      %1789 = vmatprep.subr.mxu0 0.0
      %1790 = vmatpush1.msra.mxu0 0.0
      %1791 = vmatprep.subr.mxu0 0.0
      %1792 = vmatpush1.msra.mxu0 0.0
      %1793 = vmatprep.mubr.f32.mxu0 0.0
      %1794 = vmatmul.mubr.f32.gmra.mrb[0].mxu0 %v1727
      %v1795 = vpop.f32.mrb[0].mxu0
      %v1796 = vadd.f32 0.0, %v1795
      %v1797 = vpop.f32.mrb[0].mxu0
      %1798 = vdwg.mxu0
      %v1800 = vsel %vm1564, %v1647, 0
      %1802 = vmatprep.subr.mxu0 0.0
      %1803 = vmatpush1.msra.mxu0 %v954
      %1804 = vmatprep.subr.mxu0 0.0
      %1805 = vmatpush1.msra.mxu0 0.0
      %1806 = vmatprep.subr.mxu0 0.0
      %1807 = vmatpush1.msra.mxu0 0.0
      %1808 = vmatprep.subr.mxu0 0.0
      %1809 = vmatpush1.msra.mxu0 0.0
      %1810 = vmatprep.subr.mxu0 0.0
      %1811 = vmatpush1.msra.mxu0 0.0
      %1812 = vmatprep.subr.mxu0 0.0
      %1813 = vmatpush1.msra.mxu0 0.0
      %1814 = vmatprep.subr.mxu0 0.0
      %1815 = vmatpush1.msra.mxu0 0.0
      %1816 = vmatprep.subr.mxu0 0.0
      %1817 = vmatpush1.msra.mxu0 0.0
      %1818 = vmatprep.subr.mxu0 0.0
      %1819 = vmatpush1.msra.mxu0 0.0
      %1820 = vmatprep.subr.mxu0 0.0
      %1821 = vmatpush1.msra.mxu0 0.0
      %1822 = vmatprep.subr.mxu0 0.0
      %1823 = vmatpush1.msra.mxu0 0.0
      %1824 = vmatprep.subr.mxu0 0.0
      %1825 = vmatpush1.msra.mxu0 0.0
      %1826 = vmatprep.subr.mxu0 0.0
      %1827 = vmatpush1.msra.mxu0 0.0
      %1828 = vmatprep.subr.mxu0 0.0
      %1829 = vmatpush1.msra.mxu0 0.0
      %1830 = vmatprep.subr.mxu0 0.0
      %1831 = vmatpush1.msra.mxu0 0.0
      %1832 = vmatprep.subr.mxu0 0.0
      %1833 = vmatpush1.msra.mxu0 0.0
      %1834 = vmatprep.subr.mxu0 0.0
      %1835 = vmatpush1.msra.mxu0 0.0
      %1836 = vmatprep.subr.mxu0 0.0
      %1837 = vmatpush1.msra.mxu0 0.0
      %1838 = vmatprep.subr.mxu0 0.0
      %1839 = vmatpush1.msra.mxu0 0.0
      %1840 = vmatprep.subr.mxu0 0.0
      %1841 = vmatpush1.msra.mxu0 0.0
      %1842 = vmatprep.subr.mxu0 0.0
      %1843 = vmatpush1.msra.mxu0 0.0
      %1844 = vmatprep.subr.mxu0 0.0
      %1845 = vmatpush1.msra.mxu0 0.0
      %1846 = vmatprep.subr.mxu0 0.0
      %1847 = vmatpush1.msra.mxu0 0.0
      %1848 = vmatprep.subr.mxu0 0.0
      %1849 = vmatpush1.msra.mxu0 0.0
      %1850 = vmatprep.subr.mxu0 0.0
      %1851 = vmatpush1.msra.mxu0 0.0
      %1852 = vmatprep.subr.mxu0 0.0
      %1853 = vmatpush1.msra.mxu0 0.0
      %1854 = vmatprep.subr.mxu0 0.0
      %1855 = vmatpush1.msra.mxu0 0.0
      %1856 = vmatprep.subr.mxu0 0.0
      %1857 = vmatpush1.msra.mxu0 0.0
      %1858 = vmatprep.subr.mxu0 0.0
      %1859 = vmatpush1.msra.mxu0 0.0
      %1860 = vmatprep.subr.mxu0 0.0
      %1861 = vmatpush1.msra.mxu0 0.0
      %1862 = vmatprep.subr.mxu0 0.0
      %1863 = vmatpush1.msra.mxu0 0.0
      %1864 = vmatprep.subr.mxu0 0.0
      %1865 = vmatpush1.msra.mxu0 0.0
      %1866 = vmatprep.mubr.f32.mxu0 0.0
      %1867 = vmatmul.mubr.f32.gmra.mrb[0].mxu0 %v1800
      %v1868 = vpop.f32.mrb[0].mxu0
      %v1869 = vadd.f32 0.0, %v1868
      %v1870 = vpop.f32.mrb[0].mxu0
      %1871 = vdwg.mxu0
      %v1873 = vsel %vm1564, %v1648, 0
      %1875 = vmatprep.subr.mxu0 0.0
      %1876 = vmatpush1.msra.mxu0 %v957
      %1877 = vmatprep.subr.mxu0 0.0
      %1878 = vmatpush1.msra.mxu0 0.0
      %1879 = vmatprep.subr.mxu0 0.0
      %1880 = vmatpush1.msra.mxu0 0.0
      %1881 = vmatprep.subr.mxu0 0.0
      %1882 = vmatpush1.msra.mxu0 0.0
      %1883 = vmatprep.subr.mxu0 0.0
      %1884 = vmatpush1.msra.mxu0 0.0
      %1885 = vmatprep.subr.mxu0 0.0
      %1886 = vmatpush1.msra.mxu0 0.0
      %1887 = vmatprep.subr.mxu0 0.0
      %1888 = vmatpush1.msra.mxu0 0.0
      %1889 = vmatprep.subr.mxu0 0.0
      %1890 = vmatpush1.msra.mxu0 0.0
      %1891 = vmatprep.subr.mxu0 0.0
      %1892 = vmatpush1.msra.mxu0 0.0
      %1893 = vmatprep.subr.mxu0 0.0
      %1894 = vmatpush1.msra.mxu0 0.0
      %1895 = vmatprep.subr.mxu0 0.0
      %1896 = vmatpush1.msra.mxu0 0.0
      %1897 = vmatprep.subr.mxu0 0.0
      %1898 = vmatpush1.msra.mxu0 0.0
      %1899 = vmatprep.subr.mxu0 0.0
      %1900 = vmatpush1.msra.mxu0 0.0
      %1901 = vmatprep.subr.mxu0 0.0
      %1902 = vmatpush1.msra.mxu0 0.0
      %1903 = vmatprep.subr.mxu0 0.0
      %1904 = vmatpush1.msra.mxu0 0.0
      %1905 = vmatprep.subr.mxu0 0.0
      %1906 = vmatpush1.msra.mxu0 0.0
      %1907 = vmatprep.subr.mxu0 0.0
      %1908 = vmatpush1.msra.mxu0 0.0
      %1909 = vmatprep.subr.mxu0 0.0
      %1910 = vmatpush1.msra.mxu0 0.0
      %1911 = vmatprep.subr.mxu0 0.0
      %1912 = vmatpush1.msra.mxu0 0.0
      %1913 = vmatprep.subr.mxu0 0.0
      %1914 = vmatpush1.msra.mxu0 0.0
      %1915 = vmatprep.subr.mxu0 0.0
      %1916 = vmatpush1.msra.mxu0 0.0
      %1917 = vmatprep.subr.mxu0 0.0
      %1918 = vmatpush1.msra.mxu0 0.0
      %1919 = vmatprep.subr.mxu0 0.0
      %1920 = vmatpush1.msra.mxu0 0.0
      %1921 = vmatprep.subr.mxu0 0.0
      %1922 = vmatpush1.msra.mxu0 0.0
      %1923 = vmatprep.subr.mxu0 0.0
      %1924 = vmatpush1.msra.mxu0 0.0
      %1925 = vmatprep.subr.mxu0 0.0
      %1926 = vmatpush1.msra.mxu0 0.0
      %1927 = vmatprep.subr.mxu0 0.0
      %1928 = vmatpush1.msra.mxu0 0.0
      %1929 = vmatprep.subr.mxu0 0.0
      %1930 = vmatpush1.msra.mxu0 0.0
      %1931 = vmatprep.subr.mxu0 0.0
      %1932 = vmatpush1.msra.mxu0 0.0
      %1933 = vmatprep.subr.mxu0 0.0
      %1934 = vmatpush1.msra.mxu0 0.0
      %1935 = vmatprep.subr.mxu0 0.0
      %1936 = vmatpush1.msra.mxu0 0.0
      %1937 = vmatprep.subr.mxu0 0.0
      %1938 = vmatpush1.msra.mxu0 0.0
      %1939 = vmatprep.mubr.f32.mxu0 0.0
      %1940 = vmatmul.mubr.f32.gmra.mrb[0].mxu0 %v1873
      %v1941 = vpop.f32.mrb[0].mxu0
      %v1942 = vadd.f32 0.0, %v1941
      %v1943 = vpop.f32.mrb[0].mxu0
      %1944 = vdwg.mxu0
      %v1946 = vsel %vm1564, %v1649, 0
      %1948 = vmatprep.subr.mxu0 0.0
      %1949 = vmatpush1.msra.mxu0 %v960
      %1950 = vmatprep.subr.mxu0 0.0
      %1951 = vmatpush1.msra.mxu0 0.0
      %1952 = vmatprep.subr.mxu0 0.0
      %1953 = vmatpush1.msra.mxu0 0.0
      %1954 = vmatprep.subr.mxu0 0.0
      %1955 = vmatpush1.msra.mxu0 0.0
      %1956 = vmatprep.subr.mxu0 0.0
      %1957 = vmatpush1.msra.mxu0 0.0
      %1958 = vmatprep.subr.mxu0 0.0
      %1959 = vmatpush1.msra.mxu0 0.0
      %1960 = vmatprep.subr.mxu0 0.0
      %1961 = vmatpush1.msra.mxu0 0.0
      %1962 = vmatprep.subr.mxu0 0.0
      %1963 = vmatpush1.msra.mxu0 0.0
      %1964 = vmatprep.subr.mxu0 0.0
      %1965 = vmatpush1.msra.mxu0 0.0
      %1966 = vmatprep.subr.mxu0 0.0
      %1967 = vmatpush1.msra.mxu0 0.0
      %1968 = vmatprep.subr.mxu0 0.0
      %1969 = vmatpush1.msra.mxu0 0.0
      %1970 = vmatprep.subr.mxu0 0.0
      %1971 = vmatpush1.msra.mxu0 0.0
      %1972 = vmatprep.subr.mxu0 0.0
      %1973 = vmatpush1.msra.mxu0 0.0
      %1974 = vmatprep.subr.mxu0 0.0
      %1975 = vmatpush1.msra.mxu0 0.0
      %1976 = vmatprep.subr.mxu0 0.0
      %1977 = vmatpush1.msra.mxu0 0.0
      %1978 = vmatprep.subr.mxu0 0.0
      %1979 = vmatpush1.msra.mxu0 0.0
      %1980 = vmatprep.subr.mxu0 0.0
      %1981 = vmatpush1.msra.mxu0 0.0
      %1982 = vmatprep.subr.mxu0 0.0
      %1983 = vmatpush1.msra.mxu0 0.0
      %1984 = vmatprep.subr.mxu0 0.0
      %1985 = vmatpush1.msra.mxu0 0.0
      %1986 = vmatprep.subr.mxu0 0.0
      %1987 = vmatpush1.msra.mxu0 0.0
      %1988 = vmatprep.subr.mxu0 0.0
      %1989 = vmatpush1.msra.mxu0 0.0
      %1990 = vmatprep.subr.mxu0 0.0
      %1991 = vmatpush1.msra.mxu0 0.0
      %1992 = vmatprep.subr.mxu0 0.0
      %1993 = vmatpush1.msra.mxu0 0.0
      %1994 = vmatprep.subr.mxu0 0.0
      %1995 = vmatpush1.msra.mxu0 0.0
      %1996 = vmatprep.subr.mxu0 0.0
      %1997 = vmatpush1.msra.mxu0 0.0
      %1998 = vmatprep.subr.mxu0 0.0
      %1999 = vmatpush1.msra.mxu0 0.0
      %2000 = vmatprep.subr.mxu0 0.0
      %2001 = vmatpush1.msra.mxu0 0.0
      %2002 = vmatprep.subr.mxu0 0.0
      %2003 = vmatpush1.msra.mxu0 0.0
      %2004 = vmatprep.subr.mxu0 0.0
      %2005 = vmatpush1.msra.mxu0 0.0
      %2006 = vmatprep.subr.mxu0 0.0
      %2007 = vmatpush1.msra.mxu0 0.0
      %2008 = vmatprep.subr.mxu0 0.0
      %2009 = vmatpush1.msra.mxu0 0.0
      %2010 = vmatprep.subr.mxu0 0.0
      %2011 = vmatpush1.msra.mxu0 0.0
      %2012 = vmatprep.mubr.f32.mxu0 0.0
      %2013 = vmatmul.mubr.f32.gmra.mrb[0].mxu0 %v1946
      %v2014 = vpop.f32.mrb[0].mxu0
      %v2015 = vadd.f32 0.0, %v2014
      %v2016 = vpop.f32.mrb[0].mxu0
      %2017 = vdwg.mxu0
      %v2019 = vsel %vm1564, %v1650, 0
      %2021 = vmatprep.subr.mxu0 0.0
      %2022 = vmatpush1.msra.mxu0 %v963
      %2023 = vmatprep.subr.mxu0 0.0
      %2024 = vmatpush1.msra.mxu0 0.0
      %2025 = vmatprep.subr.mxu0 0.0
      %2026 = vmatpush1.msra.mxu0 0.0
      %2027 = vmatprep.subr.mxu0 0.0
      %2028 = vmatpush1.msra.mxu0 0.0
      %2029 = vmatprep.subr.mxu0 0.0
      %2030 = vmatpush1.msra.mxu0 0.0
      %2031 = vmatprep.subr.mxu0 0.0
      %2032 = vmatpush1.msra.mxu0 0.0
      %2033 = vmatprep.subr.mxu0 0.0
      %2034 = vmatpush1.msra.mxu0 0.0
      %2035 = vmatprep.subr.mxu0 0.0
      %2036 = vmatpush1.msra.mxu0 0.0
      %2037 = vmatprep.subr.mxu0 0.0
      %2038 = vmatpush1.msra.mxu0 0.0
      %2039 = vmatprep.subr.mxu0 0.0
      %2040 = vmatpush1.msra.mxu0 0.0
      %2041 = vmatprep.subr.mxu0 0.0
      %2042 = vmatpush1.msra.mxu0 0.0
      %2043 = vmatprep.subr.mxu0 0.0
      %2044 = vmatpush1.msra.mxu0 0.0
      %2045 = vmatprep.subr.mxu0 0.0
      %2046 = vmatpush1.msra.mxu0 0.0
      %2047 = vmatprep.subr.mxu0 0.0
      %2048 = vmatpush1.msra.mxu0 0.0
      %2049 = vmatprep.subr.mxu0 0.0
      %2050 = vmatpush1.msra.mxu0 0.0
      %2051 = vmatprep.subr.mxu0 0.0
      %2052 = vmatpush1.msra.mxu0 0.0
      %2053 = vmatprep.subr.mxu0 0.0
      %2054 = vmatpush1.msra.mxu0 0.0
      %2055 = vmatprep.subr.mxu0 0.0
      %2056 = vmatpush1.msra.mxu0 0.0
      %2057 = vmatprep.subr.mxu0 0.0
      %2058 = vmatpush1.msra.mxu0 0.0
      %2059 = vmatprep.subr.mxu0 0.0
      %2060 = vmatpush1.msra.mxu0 0.0
      %2061 = vmatprep.subr.mxu0 0.0
      %2062 = vmatpush1.msra.mxu0 0.0
      %2063 = vmatprep.subr.mxu0 0.0
      %2064 = vmatpush1.msra.mxu0 0.0
      %2065 = vmatprep.subr.mxu0 0.0
      %2066 = vmatpush1.msra.mxu0 0.0
      %2067 = vmatprep.subr.mxu0 0.0
      %2068 = vmatpush1.msra.mxu0 0.0
      %2069 = vmatprep.subr.mxu0 0.0
      %2070 = vmatpush1.msra.mxu0 0.0
      %2071 = vmatprep.subr.mxu0 0.0
      %2072 = vmatpush1.msra.mxu0 0.0
      %2073 = vmatprep.subr.mxu0 0.0
      %2074 = vmatpush1.msra.mxu0 0.0
      %2075 = vmatprep.subr.mxu0 0.0
      %2076 = vmatpush1.msra.mxu0 0.0
      %2077 = vmatprep.subr.mxu0 0.0
      %2078 = vmatpush1.msra.mxu0 0.0
      %2079 = vmatprep.subr.mxu0 0.0
      %2080 = vmatpush1.msra.mxu0 0.0
      %2081 = vmatprep.subr.mxu0 0.0
      %2082 = vmatpush1.msra.mxu0 0.0
      %2083 = vmatprep.subr.mxu0 0.0
      %2084 = vmatpush1.msra.mxu0 0.0
      %2085 = vmatprep.mubr.f32.mxu0 0.0
      %2086 = vmatmul.mubr.f32.gmra.mrb[0].mxu0 %v2019
      %v2087 = vpop.f32.mrb[0].mxu0
      %v2088 = vadd.f32 0.0, %v2087
      %v2089 = vpop.f32.mrb[0].mxu0
      %2090 = vdwg.mxu0
      %v2092 = vsel %vm1564, %v1651, 0
      %2094 = vmatprep.subr.mxu0 0.0
      %2095 = vmatpush1.msra.mxu0 %v966
      %2096 = vmatprep.subr.mxu0 0.0
      %2097 = vmatpush1.msra.mxu0 0.0
      %2098 = vmatprep.subr.mxu0 0.0
      %2099 = vmatpush1.msra.mxu0 0.0
      %2100 = vmatprep.subr.mxu0 0.0
      %2101 = vmatpush1.msra.mxu0 0.0
      %2102 = vmatprep.subr.mxu0 0.0
      %2103 = vmatpush1.msra.mxu0 0.0
      %2104 = vmatprep.subr.mxu0 0.0
      %2105 = vmatpush1.msra.mxu0 0.0
      %2106 = vmatprep.subr.mxu0 0.0
      %2107 = vmatpush1.msra.mxu0 0.0
      %2108 = vmatprep.subr.mxu0 0.0
      %2109 = vmatpush1.msra.mxu0 0.0
      %2110 = vmatprep.subr.mxu0 0.0
      %2111 = vmatpush1.msra.mxu0 0.0
      %2112 = vmatprep.subr.mxu0 0.0
      %2113 = vmatpush1.msra.mxu0 0.0
      %2114 = vmatprep.subr.mxu0 0.0
      %2115 = vmatpush1.msra.mxu0 0.0
      %2116 = vmatprep.subr.mxu0 0.0
      %2117 = vmatpush1.msra.mxu0 0.0
      %2118 = vmatprep.subr.mxu0 0.0
      %2119 = vmatpush1.msra.mxu0 0.0
      %2120 = vmatprep.subr.mxu0 0.0
      %2121 = vmatpush1.msra.mxu0 0.0
      %2122 = vmatprep.subr.mxu0 0.0
      %2123 = vmatpush1.msra.mxu0 0.0
      %2124 = vmatprep.subr.mxu0 0.0
      %2125 = vmatpush1.msra.mxu0 0.0
      %2126 = vmatprep.subr.mxu0 0.0
      %2127 = vmatpush1.msra.mxu0 0.0
      %2128 = vmatprep.subr.mxu0 0.0
      %2129 = vmatpush1.msra.mxu0 0.0
      %2130 = vmatprep.subr.mxu0 0.0
      %2131 = vmatpush1.msra.mxu0 0.0
      %2132 = vmatprep.subr.mxu0 0.0
      %2133 = vmatpush1.msra.mxu0 0.0
      %2134 = vmatprep.subr.mxu0 0.0
      %2135 = vmatpush1.msra.mxu0 0.0
      %2136 = vmatprep.subr.mxu0 0.0
      %2137 = vmatpush1.msra.mxu0 0.0
      %2138 = vmatprep.subr.mxu0 0.0
      %2139 = vmatpush1.msra.mxu0 0.0
      %2140 = vmatprep.subr.mxu0 0.0
      %2141 = vmatpush1.msra.mxu0 0.0
      %2142 = vmatprep.subr.mxu0 0.0
      %2143 = vmatpush1.msra.mxu0 0.0
      %2144 = vmatprep.subr.mxu0 0.0
      %2145 = vmatpush1.msra.mxu0 0.0
      %2146 = vmatprep.subr.mxu0 0.0
      %2147 = vmatpush1.msra.mxu0 0.0
      %2148 = vmatprep.subr.mxu0 0.0
      %2149 = vmatpush1.msra.mxu0 0.0
      %2150 = vmatprep.subr.mxu0 0.0
      %2151 = vmatpush1.msra.mxu0 0.0
      %2152 = vmatprep.subr.mxu0 0.0
      %2153 = vmatpush1.msra.mxu0 0.0
      %2154 = vmatprep.subr.mxu0 0.0
      %2155 = vmatpush1.msra.mxu0 0.0
      %2156 = vmatprep.subr.mxu0 0.0
      %2157 = vmatpush1.msra.mxu0 0.0
      %2158 = vmatprep.mubr.f32.mxu0 0.0
      %2159 = vmatmul.mubr.f32.gmra.mrb[0].mxu0 %v2092
      %v2160 = vpop.f32.mrb[0].mxu0
      %v2161 = vadd.f32 0.0, %v2160
      %v2162 = vpop.f32.mrb[0].mxu0
      %2163 = vdwg.mxu0
      %v2165 = vsel %vm1564, %v1652, 0
      %2167 = vmatprep.subr.mxu0 0.0
      %2168 = vmatpush1.msra.mxu0 %v969
      %2169 = vmatprep.subr.mxu0 0.0
      %2170 = vmatpush1.msra.mxu0 0.0
      %2171 = vmatprep.subr.mxu0 0.0
      %2172 = vmatpush1.msra.mxu0 0.0
      %2173 = vmatprep.subr.mxu0 0.0
      %2174 = vmatpush1.msra.mxu0 0.0
      %2175 = vmatprep.subr.mxu0 0.0
      %2176 = vmatpush1.msra.mxu0 0.0
      %2177 = vmatprep.subr.mxu0 0.0
      %2178 = vmatpush1.msra.mxu0 0.0
      %2179 = vmatprep.subr.mxu0 0.0
      %2180 = vmatpush1.msra.mxu0 0.0
      %2181 = vmatprep.subr.mxu0 0.0
      %2182 = vmatpush1.msra.mxu0 0.0
      %2183 = vmatprep.subr.mxu0 0.0
      %2184 = vmatpush1.msra.mxu0 0.0
      %2185 = vmatprep.subr.mxu0 0.0
      %2186 = vmatpush1.msra.mxu0 0.0
      %2187 = vmatprep.subr.mxu0 0.0
      %2188 = vmatpush1.msra.mxu0 0.0
      %2189 = vmatprep.subr.mxu0 0.0
      %2190 = vmatpush1.msra.mxu0 0.0
      %2191 = vmatprep.subr.mxu0 0.0
      %2192 = vmatpush1.msra.mxu0 0.0
      %2193 = vmatprep.subr.mxu0 0.0
      %2194 = vmatpush1.msra.mxu0 0.0
      %2195 = vmatprep.subr.mxu0 0.0
      %2196 = vmatpush1.msra.mxu0 0.0
      %2197 = vmatprep.subr.mxu0 0.0
      %2198 = vmatpush1.msra.mxu0 0.0
      %2199 = vmatprep.subr.mxu0 0.0
      %2200 = vmatpush1.msra.mxu0 0.0
      %2201 = vmatprep.subr.mxu0 0.0
      %2202 = vmatpush1.msra.mxu0 0.0
      %2203 = vmatprep.subr.mxu0 0.0
      %2204 = vmatpush1.msra.mxu0 0.0
      %2205 = vmatprep.subr.mxu0 0.0
      %2206 = vmatpush1.msra.mxu0 0.0
      %2207 = vmatprep.subr.mxu0 0.0
      %2208 = vmatpush1.msra.mxu0 0.0
      %2209 = vmatprep.subr.mxu0 0.0
      %2210 = vmatpush1.msra.mxu0 0.0
      %2211 = vmatprep.subr.mxu0 0.0
      %2212 = vmatpush1.msra.mxu0 0.0
      %2213 = vmatprep.subr.mxu0 0.0
      %2214 = vmatpush1.msra.mxu0 0.0
      %2215 = vmatprep.subr.mxu0 0.0
      %2216 = vmatpush1.msra.mxu0 0.0
      %2217 = vmatprep.subr.mxu0 0.0
      %2218 = vmatpush1.msra.mxu0 0.0
      %2219 = vmatprep.subr.mxu0 0.0
      %2220 = vmatpush1.msra.mxu0 0.0
      %2221 = vmatprep.subr.mxu0 0.0
      %2222 = vmatpush1.msra.mxu0 0.0
      %2223 = vmatprep.subr.mxu0 0.0
      %2224 = vmatpush1.msra.mxu0 0.0
      %2225 = vmatprep.subr.mxu0 0.0
      %2226 = vmatpush1.msra.mxu0 0.0
      %2227 = vmatprep.subr.mxu0 0.0
      %2228 = vmatpush1.msra.mxu0 0.0
      %2229 = vmatprep.subr.mxu0 0.0
      %2230 = vmatpush1.msra.mxu0 0.0
      %2231 = vmatprep.mubr.f32.mxu0 0.0
      %2232 = vmatmul.mubr.f32.gmra.mrb[0].mxu0 %v2165
      %v2233 = vpop.f32.mrb[0].mxu0
      %v2234 = vadd.f32 0.0, %v2233
      %v2235 = vpop.f32.mrb[0].mxu0
      %2236 = vdwg.mxu0
      %2237 = vst.msk [vmem:[#allocation2] sm:$0xff] %vm971, %v1723
      %2239 = vrot.lane.b32.xlu0 %v1796, 16
      %v2240 = vpop.permute.xlu0 %2239
      %vm2242 = vcmask 261248
      %2243 = vst.msk [vmem:[#allocation2] sm:$0xff] %vm2242, %v2240
      %2245 = vrot.lane.b32.xlu0 %v1869, 32
      %v2246 = vpop.permute.xlu0 %2245
      %vm2248 = vcmask 392448
      %2249 = vst.msk [vmem:[#allocation2] sm:$0xff] %vm2248, %v2246
      %2251 = vrot.lane.b32.xlu0 %v1942, 48
      %v2252 = vpop.permute.xlu0 %2251
      %vm2254 = vcmask 523648
      %2255 = vst.msk [vmem:[#allocation2] sm:$0xff] %vm2254, %v2252
      %2257 = vrot.lane.b32.xlu0 %v2015, 64
      %v2258 = vpop.permute.xlu0 %2257
      %vm2260 = vcmask 654848
      %2261 = vst.msk [vmem:[#allocation2] sm:$0xff] %vm2260, %v2258
      %2263 = vrot.lane.b32.xlu0 %v2088, 80
      %v2264 = vpop.permute.xlu0 %2263
      %vm2266 = vcmask 786048
      %2267 = vst.msk [vmem:[#allocation2] sm:$0xff] %vm2266, %v2264
      %2269 = vrot.lane.b32.xlu0 %v2161, 96
      %v2270 = vpop.permute.xlu0 %2269
      %vm2272 = vcmask 917248
      %2273 = vst.msk [vmem:[#allocation2] sm:$0xff] %vm2272, %v2270
      %2275 = vrot.lane.b32.xlu0 %v2234, 112
      %v2276 = vpop.permute.xlu0 %2275
      %vm2278 = vcmask 1048448
      %2279 = vst.msk [vmem:[#allocation2] sm:$0xff] %vm2278, %v2276
      %v2280 = vld [vmem:[#allocation2] sm:$0xff]
      %2281 = vmatprep.subr.mxu0 0.0
      %2282 = vmatpush1.msra.mxu0 %v562
      %2283 = vmatprep.subr.mxu0 0.0
      %2284 = vmatpush1.msra.mxu0 %v563
      %2285 = vmatprep.subr.mxu0 0.0
      %2286 = vmatpush1.msra.mxu0 %v564
      %2287 = vmatprep.subr.mxu0 0.0
      %2288 = vmatpush1.msra.mxu0 %v565
      %2289 = vmatprep.subr.mxu0 0.0
      %2290 = vmatpush1.msra.mxu0 %v566
      %2291 = vmatprep.subr.mxu0 0.0
      %2292 = vmatpush1.msra.mxu0 %v567
      %2293 = vmatprep.subr.mxu0 0.0
      %2294 = vmatpush1.msra.mxu0 %v568
      %2295 = vmatprep.subr.mxu0 0.0
      %2296 = vmatpush1.msra.mxu0 %v569
      %2297 = vmatprep.subr.mxu0 0.0
      %2298 = vmatpush1.msra.mxu0 %v570
      %2299 = vmatprep.subr.mxu0 0.0
      %2300 = vmatpush1.msra.mxu0 %v571
      %2301 = vmatprep.subr.mxu0 0.0
      %2302 = vmatpush1.msra.mxu0 %v572
      %2303 = vmatprep.subr.mxu0 0.0
      %2304 = vmatpush1.msra.mxu0 %v573
      %2305 = vmatprep.subr.mxu0 0.0
      %2306 = vmatpush1.msra.mxu0 %v574
      %2307 = vmatprep.subr.mxu0 0.0
      %2308 = vmatpush1.msra.mxu0 %v575
      %2309 = vmatprep.subr.mxu0 0.0
      %2310 = vmatpush1.msra.mxu0 %v576
      %2311 = vmatprep.subr.mxu0 0.0
      %2312 = vmatpush1.msra.mxu0 %v577
      %2313 = vmatprep.subr.mxu0 0.0
      %2314 = vmatpush1.msra.mxu0 0.0
      %2315 = vmatprep.subr.mxu0 0.0
      %2316 = vmatpush1.msra.mxu0 0.0
      %2317 = vmatprep.subr.mxu0 0.0
      %2318 = vmatpush1.msra.mxu0 0.0
      %2319 = vmatprep.subr.mxu0 0.0
      %2320 = vmatpush1.msra.mxu0 0.0
      %2321 = vmatprep.subr.mxu0 0.0
      %2322 = vmatpush1.msra.mxu0 0.0
      %2323 = vmatprep.subr.mxu0 0.0
      %2324 = vmatpush1.msra.mxu0 0.0
      %2325 = vmatprep.subr.mxu0 0.0
      %2326 = vmatpush1.msra.mxu0 0.0
      %2327 = vmatprep.subr.mxu0 0.0
      %2328 = vmatpush1.msra.mxu0 0.0
      %2329 = vmatprep.subr.mxu0 0.0
      %2330 = vmatpush1.msra.mxu0 0.0
      %2331 = vmatprep.subr.mxu0 0.0
      %2332 = vmatpush1.msra.mxu0 0.0
      %2333 = vmatprep.subr.mxu0 0.0
      %2334 = vmatpush1.msra.mxu0 0.0
      %2335 = vmatprep.subr.mxu0 0.0
      %2336 = vmatpush1.msra.mxu0 0.0
      %2337 = vmatprep.subr.mxu0 0.0
      %2338 = vmatpush1.msra.mxu0 0.0
      %2339 = vmatprep.subr.mxu0 0.0
      %2340 = vmatpush1.msra.mxu0 0.0
      %2341 = vmatprep.subr.mxu0 0.0
      %2342 = vmatpush1.msra.mxu0 0.0
      %2343 = vmatprep.subr.mxu0 0.0
      %2344 = vmatpush1.msra.mxu0 0.0
      %2345 = vmatprep.mubr.f32.mxu0 0.0
      %2346 = vmatmul.mubr.f32.gmra.mrb[0].mxu0 %v2280
      %v2347 = vpop.f32.mrb[0].mxu0
      %v2348 = vadd.f32 0.0, %v2347
      %v2349 = vpop.f32.mrb[0].mxu0
      %2350 = vdwg.mxu0
      %v2351 = vadd.f32 %v706, %v2348
      %2352 = vadd.xlane.f32.xlu0 %v2351
      %v2353 = vpop.xlane.xlu0 %2352
      %v2354 = vrcp.pop 128.0
      %v2355 = vmul.f32 %v2353, %v2354
      %v2356 = vsub.f32 %v2351, %v2355
      %v2357 = vmul.f32 %v2356, %v2356
      %2358 = vadd.xlane.f32.xlu0 %v2357
      %v2359 = vpop.xlane.xlu0 %2358
      %v2360 = vmul.f32 %v2359, %v2354
      %v2361 = vadd.f32 %v2360, 1e-05
      %v2362 = vrsqrt.pop %v2361
      %v2363 = vmul.f32 %v2356, %v2362
      %v2364 = vld [vmem:[%s509] sm:$0xff]
      %2365 = vmatprep.subr.mxu0 0.0
      %2366 = vmatpush1.msra.mxu0 %v578
      %2367 = vmatprep.subr.mxu0 0.0
      %2368 = vmatpush1.msra.mxu0 %v579
      %2369 = vmatprep.subr.mxu0 0.0
      %2370 = vmatpush1.msra.mxu0 %v580
      %2371 = vmatprep.subr.mxu0 0.0
      %2372 = vmatpush1.msra.mxu0 %v581
      %2373 = vmatprep.subr.mxu0 0.0
      %2374 = vmatpush1.msra.mxu0 %v582
      %2375 = vmatprep.subr.mxu0 0.0
      %2376 = vmatpush1.msra.mxu0 %v583
      %2377 = vmatprep.subr.mxu0 0.0
      %2378 = vmatpush1.msra.mxu0 %v584
      %2379 = vmatprep.subr.mxu0 0.0
      %2380 = vmatpush1.msra.mxu0 %v585
      %2381 = vmatprep.subr.mxu0 0.0
      %2382 = vmatpush1.msra.mxu0 %v586
      %2383 = vmatprep.subr.mxu0 0.0
      %2384 = vmatpush1.msra.mxu0 %v587
      %2385 = vmatprep.subr.mxu0 0.0
      %2386 = vmatpush1.msra.mxu0 %v588
      %2387 = vmatprep.subr.mxu0 0.0
      %2388 = vmatpush1.msra.mxu0 %v589
      %2389 = vmatprep.subr.mxu0 0.0
      %2390 = vmatpush1.msra.mxu0 %v590
      %2391 = vmatprep.subr.mxu0 0.0
      %2392 = vmatpush1.msra.mxu0 %v591
      %2393 = vmatprep.subr.mxu0 0.0
      %2394 = vmatpush1.msra.mxu0 %v592
      %2395 = vmatprep.subr.mxu0 0.0
      %2396 = vmatpush1.msra.mxu0 %v593
      %2397 = vmatprep.subr.mxu0 0.0
      %2398 = vmatpush1.msra.mxu0 0.0
      %2399 = vmatprep.subr.mxu0 0.0
      %2400 = vmatpush1.msra.mxu0 0.0
      %2401 = vmatprep.subr.mxu0 0.0
      %2402 = vmatpush1.msra.mxu0 0.0
      %2403 = vmatprep.subr.mxu0 0.0
      %2404 = vmatpush1.msra.mxu0 0.0
      %2405 = vmatprep.subr.mxu0 0.0
      %2406 = vmatpush1.msra.mxu0 0.0
      %2407 = vmatprep.subr.mxu0 0.0
      %2408 = vmatpush1.msra.mxu0 0.0
      %2409 = vmatprep.subr.mxu0 0.0
      %2410 = vmatpush1.msra.mxu0 0.0
      %2411 = vmatprep.subr.mxu0 0.0
      %2412 = vmatpush1.msra.mxu0 0.0
      %2413 = vmatprep.subr.mxu0 0.0
      %2414 = vmatpush1.msra.mxu0 0.0
      %2415 = vmatprep.subr.mxu0 0.0
      %2416 = vmatpush1.msra.mxu0 0.0
      %2417 = vmatprep.subr.mxu0 0.0
      %2418 = vmatpush1.msra.mxu0 0.0
      %2419 = vmatprep.subr.mxu0 0.0
      %2420 = vmatpush1.msra.mxu0 0.0
      %2421 = vmatprep.subr.mxu0 0.0
      %2422 = vmatpush1.msra.mxu0 0.0
      %2423 = vmatprep.subr.mxu0 0.0
      %2424 = vmatpush1.msra.mxu0 0.0
      %2425 = vmatprep.subr.mxu0 0.0
      %2426 = vmatpush1.msra.mxu0 0.0
      %2427 = vmatprep.subr.mxu0 0.0
      %2428 = vmatpush1.msra.mxu0 0.0
      %2429 = vmatprep.mubr.f32.mxu0 0.0
      %2430 = vmatmul.mubr.f32.gmra.mrb[0].mxu0 %v2363
      %v2431 = vpop.f32.mrb[0].mxu0
      %v2432 = vadd.f32 0.0, %v2431
      %v2433 = vpop.f32.mrb[0].mxu0
      %2434 = vdwg.mxu0
      %2435 = vmatprep.subr.mxu0 0.0
      %2436 = vmatpush1.msra.mxu0 %v594
      %2437 = vmatprep.subr.mxu0 0.0
      %2438 = vmatpush1.msra.mxu0 %v595
      %2439 = vmatprep.subr.mxu0 0.0
      %2440 = vmatpush1.msra.mxu0 %v596
      %2441 = vmatprep.subr.mxu0 0.0
      %2442 = vmatpush1.msra.mxu0 %v597
      %2443 = vmatprep.subr.mxu0 0.0
      %2444 = vmatpush1.msra.mxu0 %v598
      %2445 = vmatprep.subr.mxu0 0.0
      %2446 = vmatpush1.msra.mxu0 %v599
      %2447 = vmatprep.subr.mxu0 0.0
      %2448 = vmatpush1.msra.mxu0 %v600
      %2449 = vmatprep.subr.mxu0 0.0
      %2450 = vmatpush1.msra.mxu0 %v601
      %2451 = vmatprep.subr.mxu0 0.0
      %2452 = vmatpush1.msra.mxu0 %v602
      %2453 = vmatprep.subr.mxu0 0.0
      %2454 = vmatpush1.msra.mxu0 %v603
      %2455 = vmatprep.subr.mxu0 0.0
      %2456 = vmatpush1.msra.mxu0 %v604
      %2457 = vmatprep.subr.mxu0 0.0
      %2458 = vmatpush1.msra.mxu0 %v605
      %2459 = vmatprep.subr.mxu0 0.0
      %2460 = vmatpush1.msra.mxu0 %v606
      %2461 = vmatprep.subr.mxu0 0.0
      %2462 = vmatpush1.msra.mxu0 %v607
      %2463 = vmatprep.subr.mxu0 0.0
      %2464 = vmatpush1.msra.mxu0 %v608
      %2465 = vmatprep.subr.mxu0 0.0
      %2466 = vmatpush1.msra.mxu0 %v609
      %2467 = vmatprep.subr.mxu0 0.0
      %2468 = vmatpush1.msra.mxu0 0.0
      %2469 = vmatprep.subr.mxu0 0.0
      %2470 = vmatpush1.msra.mxu0 0.0
      %2471 = vmatprep.subr.mxu0 0.0
      %2472 = vmatpush1.msra.mxu0 0.0
      %2473 = vmatprep.subr.mxu0 0.0
      %2474 = vmatpush1.msra.mxu0 0.0
      %2475 = vmatprep.subr.mxu0 0.0
      %2476 = vmatpush1.msra.mxu0 0.0
      %2477 = vmatprep.subr.mxu0 0.0
      %2478 = vmatpush1.msra.mxu0 0.0
      %2479 = vmatprep.subr.mxu0 0.0
      %2480 = vmatpush1.msra.mxu0 0.0
      %2481 = vmatprep.subr.mxu0 0.0
      %2482 = vmatpush1.msra.mxu0 0.0
      %2483 = vmatprep.subr.mxu0 0.0
      %2484 = vmatpush1.msra.mxu0 0.0
      %2485 = vmatprep.subr.mxu0 0.0
      %2486 = vmatpush1.msra.mxu0 0.0
      %2487 = vmatprep.subr.mxu0 0.0
      %2488 = vmatpush1.msra.mxu0 0.0
      %2489 = vmatprep.subr.mxu0 0.0
      %2490 = vmatpush1.msra.mxu0 0.0
      %2491 = vmatprep.subr.mxu0 0.0
      %2492 = vmatpush1.msra.mxu0 0.0
      %2493 = vmatprep.subr.mxu0 0.0
      %2494 = vmatpush1.msra.mxu0 0.0
      %2495 = vmatprep.subr.mxu0 0.0
      %2496 = vmatpush1.msra.mxu0 0.0
      %2497 = vmatprep.subr.mxu0 0.0
      %2498 = vmatpush1.msra.mxu0 0.0
      %2499 = vmatprep.mubr.f32.mxu0 0.0
      %2500 = vmatmul.mubr.f32.gmra.mrb[0].mxu0 %v707
      %v2501 = vpop.f32.mrb[0].mxu0
      %v2502 = vadd.f32 0.0, %v2501
      %v2503 = vpop.f32.mrb[0].mxu0
      %2504 = vdwg.mxu0
      %2505 = vmatprep.subr.mxu0 0.0
      %2506 = vmatpush1.msra.mxu0 %v610
      %2507 = vmatprep.subr.mxu0 0.0
      %2508 = vmatpush1.msra.mxu0 %v611
      %2509 = vmatprep.subr.mxu0 0.0
      %2510 = vmatpush1.msra.mxu0 %v612
      %2511 = vmatprep.subr.mxu0 0.0
      %2512 = vmatpush1.msra.mxu0 %v613
      %2513 = vmatprep.subr.mxu0 0.0
      %2514 = vmatpush1.msra.mxu0 %v614
      %2515 = vmatprep.subr.mxu0 0.0
      %2516 = vmatpush1.msra.mxu0 %v615
      %2517 = vmatprep.subr.mxu0 0.0
      %2518 = vmatpush1.msra.mxu0 %v616
      %2519 = vmatprep.subr.mxu0 0.0
      %2520 = vmatpush1.msra.mxu0 %v617
      %2521 = vmatprep.subr.mxu0 0.0
      %2522 = vmatpush1.msra.mxu0 %v618
      %2523 = vmatprep.subr.mxu0 0.0
      %2524 = vmatpush1.msra.mxu0 %v619
      %2525 = vmatprep.subr.mxu0 0.0
      %2526 = vmatpush1.msra.mxu0 %v620
      %2527 = vmatprep.subr.mxu0 0.0
      %2528 = vmatpush1.msra.mxu0 %v621
      %2529 = vmatprep.subr.mxu0 0.0
      %2530 = vmatpush1.msra.mxu0 %v622
      %2531 = vmatprep.subr.mxu0 0.0
      %2532 = vmatpush1.msra.mxu0 %v623
      %2533 = vmatprep.subr.mxu0 0.0
      %2534 = vmatpush1.msra.mxu0 %v624
      %2535 = vmatprep.subr.mxu0 0.0
      %2536 = vmatpush1.msra.mxu0 %v625
      %2537 = vmatprep.subr.mxu0 0.0
      %2538 = vmatpush1.msra.mxu0 0.0
      %2539 = vmatprep.subr.mxu0 0.0
      %2540 = vmatpush1.msra.mxu0 0.0
      %2541 = vmatprep.subr.mxu0 0.0
      %2542 = vmatpush1.msra.mxu0 0.0
      %2543 = vmatprep.subr.mxu0 0.0
      %2544 = vmatpush1.msra.mxu0 0.0
      %2545 = vmatprep.subr.mxu0 0.0
      %2546 = vmatpush1.msra.mxu0 0.0
      %2547 = vmatprep.subr.mxu0 0.0
      %2548 = vmatpush1.msra.mxu0 0.0
      %2549 = vmatprep.subr.mxu0 0.0
      %2550 = vmatpush1.msra.mxu0 0.0
      %2551 = vmatprep.subr.mxu0 0.0
      %2552 = vmatpush1.msra.mxu0 0.0
      %2553 = vmatprep.subr.mxu0 0.0
      %2554 = vmatpush1.msra.mxu0 0.0
      %2555 = vmatprep.subr.mxu0 0.0
      %2556 = vmatpush1.msra.mxu0 0.0
      %2557 = vmatprep.subr.mxu0 0.0
      %2558 = vmatpush1.msra.mxu0 0.0
      %2559 = vmatprep.subr.mxu0 0.0
      %2560 = vmatpush1.msra.mxu0 0.0
      %2561 = vmatprep.subr.mxu0 0.0
      %2562 = vmatpush1.msra.mxu0 0.0
      %2563 = vmatprep.subr.mxu0 0.0
      %2564 = vmatpush1.msra.mxu0 0.0
      %2565 = vmatprep.subr.mxu0 0.0
      %2566 = vmatpush1.msra.mxu0 0.0
      %2567 = vmatprep.subr.mxu0 0.0
      %2568 = vmatpush1.msra.mxu0 0.0
      %2569 = vmatprep.mubr.f32.mxu0 0.0
      %2570 = vmatmul.mubr.f32.gmra.mrb[0].mxu0 %v707
      %v2571 = vpop.f32.mrb[0].mxu0
      %v2572 = vadd.f32 0.0, %v2571
      %v2573 = vpop.f32.mrb[0].mxu0
      %2574 = vdwg.mxu0
      %2576 = vrot.lane.b32.xlu0 %v2432, 112
      %v2577 = vpop.permute.xlu0 %2576
      %2578 = vrot.lane.b32.xlu0 %v2432, 96
      %v2579 = vpop.permute.xlu0 %2578
      %2580 = vrot.lane.b32.xlu0 %v2432, 80
      %v2581 = vpop.permute.xlu0 %2580
      %2582 = vrot.lane.b32.xlu0 %v2432, 64
      %v2583 = vpop.permute.xlu0 %2582
      %2584 = vrot.lane.b32.xlu0 %v2432, 48
      %v2585 = vpop.permute.xlu0 %2584
      %2586 = vrot.lane.b32.xlu0 %v2432, 32
      %v2587 = vpop.permute.xlu0 %2586
      %2588 = vrot.lane.b32.xlu0 %v2432, 16
      %v2589 = vpop.permute.xlu0 %2588
      %2591 = vrot.lane.b32.xlu0 %v2502, 112
      %v2592 = vpop.permute.xlu0 %2591
      %2593 = vrot.lane.b32.xlu0 %v2502, 96
      %v2594 = vpop.permute.xlu0 %2593
      %2595 = vrot.lane.b32.xlu0 %v2502, 80
      %v2596 = vpop.permute.xlu0 %2595
      %2597 = vrot.lane.b32.xlu0 %v2502, 64
      %v2598 = vpop.permute.xlu0 %2597
      %2599 = vrot.lane.b32.xlu0 %v2502, 48
      %v2600 = vpop.permute.xlu0 %2599
      %2601 = vrot.lane.b32.xlu0 %v2502, 32
      %v2602 = vpop.permute.xlu0 %2601
      %2603 = vrot.lane.b32.xlu0 %v2502, 16
      %v2604 = vpop.permute.xlu0 %2603
      %2606 = vrot.lane.b32.xlu0 %v2572, 112
      %v2607 = vpop.permute.xlu0 %2606
      %2609 = vrot.lane.b32.xlu0 %v2572, 96
      %v2610 = vpop.permute.xlu0 %2609
      %2612 = vrot.lane.b32.xlu0 %v2572, 80
      %v2613 = vpop.permute.xlu0 %2612
      %2615 = vrot.lane.b32.xlu0 %v2572, 64
      %v2616 = vpop.permute.xlu0 %2615
      %2618 = vrot.lane.b32.xlu0 %v2572, 48
      %v2619 = vpop.permute.xlu0 %2618
      %2621 = vrot.lane.b32.xlu0 %v2572, 32
      %v2622 = vpop.permute.xlu0 %2621
      %2624 = vrot.lane.b32.xlu0 %v2572, 16
      %v2625 = vpop.permute.xlu0 %2624
      %v2627 = vsel %vm971, %v2432, 0
      %v2629 = vsel %vm971, %v2502, 0
      %2631 = vmatprep.subr.mxu0 0.0
      %2632 = vmatpush1.xpose.msra.mxu0 %v2629
      %2633 = vmatprep.subr.mxu0 0.0
      %2634 = vmatpush1.xpose.msra.mxu0 0.0
      %2635 = vmatprep.subr.mxu0 0.0
      %2636 = vmatpush1.xpose.msra.mxu0 0.0
      %2637 = vmatprep.subr.mxu0 0.0
      %2638 = vmatpush1.xpose.msra.mxu0 0.0
      %2639 = vmatprep.subr.mxu0 0.0
      %2640 = vmatpush1.xpose.msra.mxu0 0.0
      %2641 = vmatprep.subr.mxu0 0.0
      %2642 = vmatpush1.xpose.msra.mxu0 0.0
      %2643 = vmatprep.subr.mxu0 0.0
      %2644 = vmatpush1.xpose.msra.mxu0 0.0
      %2645 = vmatprep.subr.mxu0 0.0
      %2646 = vmatpush1.xpose.msra.mxu0 0.0
      %2647 = vmatprep.subr.mxu0 0.0
      %2648 = vmatpush1.xpose.msra.mxu0 0.0
      %2649 = vmatprep.subr.mxu0 0.0
      %2650 = vmatpush1.xpose.msra.mxu0 0.0
      %2651 = vmatprep.subr.mxu0 0.0
      %2652 = vmatpush1.xpose.msra.mxu0 0.0
      %2653 = vmatprep.subr.mxu0 0.0
      %2654 = vmatpush1.xpose.msra.mxu0 0.0
      %2655 = vmatprep.subr.mxu0 0.0
      %2656 = vmatpush1.xpose.msra.mxu0 0.0
      %2657 = vmatprep.subr.mxu0 0.0
      %2658 = vmatpush1.xpose.msra.mxu0 0.0
      %2659 = vmatprep.subr.mxu0 0.0
      %2660 = vmatpush1.xpose.msra.mxu0 0.0
      %2661 = vmatprep.subr.mxu0 0.0
      %2662 = vmatpush1.xpose.msra.mxu0 0.0
      %2663 = vmatprep.subr.mxu0 0.0
      %2664 = vmatpush1.xpose.msra.mxu0 0.0
      %2665 = vmatprep.subr.mxu0 0.0
      %2666 = vmatpush1.xpose.msra.mxu0 0.0
      %2667 = vmatprep.subr.mxu0 0.0
      %2668 = vmatpush1.xpose.msra.mxu0 0.0
      %2669 = vmatprep.subr.mxu0 0.0
      %2670 = vmatpush1.xpose.msra.mxu0 0.0
      %2671 = vmatprep.subr.mxu0 0.0
      %2672 = vmatpush1.xpose.msra.mxu0 0.0
      %2673 = vmatprep.subr.mxu0 0.0
      %2674 = vmatpush1.xpose.msra.mxu0 0.0
      %2675 = vmatprep.subr.mxu0 0.0
      %2676 = vmatpush1.xpose.msra.mxu0 0.0
      %2677 = vmatprep.subr.mxu0 0.0
      %2678 = vmatpush1.xpose.msra.mxu0 0.0
      %2679 = vmatprep.subr.mxu0 0.0
      %2680 = vmatpush1.xpose.msra.mxu0 0.0
      %2681 = vmatprep.subr.mxu0 0.0
      %2682 = vmatpush1.xpose.msra.mxu0 0.0
      %2683 = vmatprep.subr.mxu0 0.0
      %2684 = vmatpush1.xpose.msra.mxu0 0.0
      %2685 = vmatprep.subr.mxu0 0.0
      %2686 = vmatpush1.xpose.msra.mxu0 0.0
      %2687 = vmatprep.subr.mxu0 0.0
      %2688 = vmatpush1.xpose.msra.mxu0 0.0
      %2689 = vmatprep.subr.mxu0 0.0
      %2690 = vmatpush1.xpose.msra.mxu0 0.0
      %2691 = vmatprep.subr.mxu0 0.0
      %2692 = vmatpush1.xpose.msra.mxu0 0.0
      %2693 = vmatprep.subr.mxu0 0.0
      %2694 = vmatpush1.xpose.msra.mxu0 0.0
      %2695 = vmatprep.mubr.f32.mxu0 0.0
      %2696 = vmatmul.mubr.f32.gmra.mrb[0].mxu0 %v2627
      %v2697 = vpop.f32.mrb[0].mxu0
      %v2698 = vadd.f32 %v2364, %v2697
      %v2699 = vpop.f32.mrb[0].mxu0
      %2700 = vdwg.mxu0
      %v2701 = vsel %vm971, %v2577, 0
      %v2703 = vsel %vm971, %v2592, 0
      %2705 = vmatprep.subr.mxu0 0.0
      %2706 = vmatpush1.xpose.msra.mxu0 %v2703
      %2707 = vmatprep.subr.mxu0 0.0
      %2708 = vmatpush1.xpose.msra.mxu0 0.0
      %2709 = vmatprep.subr.mxu0 0.0
      %2710 = vmatpush1.xpose.msra.mxu0 0.0
      %2711 = vmatprep.subr.mxu0 0.0
      %2712 = vmatpush1.xpose.msra.mxu0 0.0
      %2713 = vmatprep.subr.mxu0 0.0
      %2714 = vmatpush1.xpose.msra.mxu0 0.0
      %2715 = vmatprep.subr.mxu0 0.0
      %2716 = vmatpush1.xpose.msra.mxu0 0.0
      %2717 = vmatprep.subr.mxu0 0.0
      %2718 = vmatpush1.xpose.msra.mxu0 0.0
      %2719 = vmatprep.subr.mxu0 0.0
      %2720 = vmatpush1.xpose.msra.mxu0 0.0
      %2721 = vmatprep.subr.mxu0 0.0
      %2722 = vmatpush1.xpose.msra.mxu0 0.0
      %2723 = vmatprep.subr.mxu0 0.0
      %2724 = vmatpush1.xpose.msra.mxu0 0.0
      %2725 = vmatprep.subr.mxu0 0.0
      %2726 = vmatpush1.xpose.msra.mxu0 0.0
      %2727 = vmatprep.subr.mxu0 0.0
      %2728 = vmatpush1.xpose.msra.mxu0 0.0
      %2729 = vmatprep.subr.mxu0 0.0
      %2730 = vmatpush1.xpose.msra.mxu0 0.0
      %2731 = vmatprep.subr.mxu0 0.0
      %2732 = vmatpush1.xpose.msra.mxu0 0.0
      %2733 = vmatprep.subr.mxu0 0.0
      %2734 = vmatpush1.xpose.msra.mxu0 0.0
      %2735 = vmatprep.subr.mxu0 0.0
      %2736 = vmatpush1.xpose.msra.mxu0 0.0
      %2737 = vmatprep.subr.mxu0 0.0
      %2738 = vmatpush1.xpose.msra.mxu0 0.0
      %2739 = vmatprep.subr.mxu0 0.0
      %2740 = vmatpush1.xpose.msra.mxu0 0.0
      %2741 = vmatprep.subr.mxu0 0.0
      %2742 = vmatpush1.xpose.msra.mxu0 0.0
      %2743 = vmatprep.subr.mxu0 0.0
      %2744 = vmatpush1.xpose.msra.mxu0 0.0
      %2745 = vmatprep.subr.mxu0 0.0
      %2746 = vmatpush1.xpose.msra.mxu0 0.0
      %2747 = vmatprep.subr.mxu0 0.0
      %2748 = vmatpush1.xpose.msra.mxu0 0.0
      %2749 = vmatprep.subr.mxu0 0.0
      %2750 = vmatpush1.xpose.msra.mxu0 0.0
      %2751 = vmatprep.subr.mxu0 0.0
      %2752 = vmatpush1.xpose.msra.mxu0 0.0
      %2753 = vmatprep.subr.mxu0 0.0
      %2754 = vmatpush1.xpose.msra.mxu0 0.0
      %2755 = vmatprep.subr.mxu0 0.0
      %2756 = vmatpush1.xpose.msra.mxu0 0.0
      %2757 = vmatprep.subr.mxu0 0.0
      %2758 = vmatpush1.xpose.msra.mxu0 0.0
      %2759 = vmatprep.subr.mxu0 0.0
      %2760 = vmatpush1.xpose.msra.mxu0 0.0
      %2761 = vmatprep.subr.mxu0 0.0
      %2762 = vmatpush1.xpose.msra.mxu0 0.0
      %2763 = vmatprep.subr.mxu0 0.0
      %2764 = vmatpush1.xpose.msra.mxu0 0.0
      %2765 = vmatprep.subr.mxu0 0.0
      %2766 = vmatpush1.xpose.msra.mxu0 0.0
      %2767 = vmatprep.subr.mxu0 0.0
      %2768 = vmatpush1.xpose.msra.mxu0 0.0
      %2769 = vmatprep.mubr.f32.mxu0 0.0
      %2770 = vmatmul.mubr.f32.gmra.mrb[0].mxu0 %v2701
      %v2771 = vpop.f32.mrb[0].mxu0
      %v2772 = vadd.f32 %v2364, %v2771
      %v2773 = vpop.f32.mrb[0].mxu0
      %2774 = vdwg.mxu0
      %v2775 = vsel %vm971, %v2579, 0
      %v2777 = vsel %vm971, %v2594, 0
      %2779 = vmatprep.subr.mxu0 0.0
      %2780 = vmatpush1.xpose.msra.mxu0 %v2777
      %2781 = vmatprep.subr.mxu0 0.0
      %2782 = vmatpush1.xpose.msra.mxu0 0.0
      %2783 = vmatprep.subr.mxu0 0.0
      %2784 = vmatpush1.xpose.msra.mxu0 0.0
      %2785 = vmatprep.subr.mxu0 0.0
      %2786 = vmatpush1.xpose.msra.mxu0 0.0
      %2787 = vmatprep.subr.mxu0 0.0
      %2788 = vmatpush1.xpose.msra.mxu0 0.0
      %2789 = vmatprep.subr.mxu0 0.0
      %2790 = vmatpush1.xpose.msra.mxu0 0.0
      %2791 = vmatprep.subr.mxu0 0.0
      %2792 = vmatpush1.xpose.msra.mxu0 0.0
      %2793 = vmatprep.subr.mxu0 0.0
      %2794 = vmatpush1.xpose.msra.mxu0 0.0
      %2795 = vmatprep.subr.mxu0 0.0
      %2796 = vmatpush1.xpose.msra.mxu0 0.0
      %2797 = vmatprep.subr.mxu0 0.0
      %2798 = vmatpush1.xpose.msra.mxu0 0.0
      %2799 = vmatprep.subr.mxu0 0.0
      %2800 = vmatpush1.xpose.msra.mxu0 0.0
      %2801 = vmatprep.subr.mxu0 0.0
      %2802 = vmatpush1.xpose.msra.mxu0 0.0
      %2803 = vmatprep.subr.mxu0 0.0
      %2804 = vmatpush1.xpose.msra.mxu0 0.0
      %2805 = vmatprep.subr.mxu0 0.0
      %2806 = vmatpush1.xpose.msra.mxu0 0.0
      %2807 = vmatprep.subr.mxu0 0.0
      %2808 = vmatpush1.xpose.msra.mxu0 0.0
      %2809 = vmatprep.subr.mxu0 0.0
      %2810 = vmatpush1.xpose.msra.mxu0 0.0
      %2811 = vmatprep.subr.mxu0 0.0
      %2812 = vmatpush1.xpose.msra.mxu0 0.0
      %2813 = vmatprep.subr.mxu0 0.0
      %2814 = vmatpush1.xpose.msra.mxu0 0.0
      %2815 = vmatprep.subr.mxu0 0.0
      %2816 = vmatpush1.xpose.msra.mxu0 0.0
      %2817 = vmatprep.subr.mxu0 0.0
      %2818 = vmatpush1.xpose.msra.mxu0 0.0
      %2819 = vmatprep.subr.mxu0 0.0
      %2820 = vmatpush1.xpose.msra.mxu0 0.0
      %2821 = vmatprep.subr.mxu0 0.0
      %2822 = vmatpush1.xpose.msra.mxu0 0.0
      %2823 = vmatprep.subr.mxu0 0.0
      %2824 = vmatpush1.xpose.msra.mxu0 0.0
      %2825 = vmatprep.subr.mxu0 0.0
      %2826 = vmatpush1.xpose.msra.mxu0 0.0
      %2827 = vmatprep.subr.mxu0 0.0
      %2828 = vmatpush1.xpose.msra.mxu0 0.0
      %2829 = vmatprep.subr.mxu0 0.0
      %2830 = vmatpush1.xpose.msra.mxu0 0.0
      %2831 = vmatprep.subr.mxu0 0.0
      %2832 = vmatpush1.xpose.msra.mxu0 0.0
      %2833 = vmatprep.subr.mxu0 0.0
      %2834 = vmatpush1.xpose.msra.mxu0 0.0
      %2835 = vmatprep.subr.mxu0 0.0
      %2836 = vmatpush1.xpose.msra.mxu0 0.0
      %2837 = vmatprep.subr.mxu0 0.0
      %2838 = vmatpush1.xpose.msra.mxu0 0.0
      %2839 = vmatprep.subr.mxu0 0.0
      %2840 = vmatpush1.xpose.msra.mxu0 0.0
      %2841 = vmatprep.subr.mxu0 0.0
      %2842 = vmatpush1.xpose.msra.mxu0 0.0
      %2843 = vmatprep.mubr.f32.mxu0 0.0
      %2844 = vmatmul.mubr.f32.gmra.mrb[0].mxu0 %v2775
      %v2845 = vpop.f32.mrb[0].mxu0
      %v2846 = vadd.f32 %v2364, %v2845
      %v2847 = vpop.f32.mrb[0].mxu0
      %2848 = vdwg.mxu0
      %v2849 = vsel %vm971, %v2581, 0
      %v2851 = vsel %vm971, %v2596, 0
      %2853 = vmatprep.subr.mxu0 0.0
      %2854 = vmatpush1.xpose.msra.mxu0 %v2851
      %2855 = vmatprep.subr.mxu0 0.0
      %2856 = vmatpush1.xpose.msra.mxu0 0.0
      %2857 = vmatprep.subr.mxu0 0.0
      %2858 = vmatpush1.xpose.msra.mxu0 0.0
      %2859 = vmatprep.subr.mxu0 0.0
      %2860 = vmatpush1.xpose.msra.mxu0 0.0
      %2861 = vmatprep.subr.mxu0 0.0
      %2862 = vmatpush1.xpose.msra.mxu0 0.0
      %2863 = vmatprep.subr.mxu0 0.0
      %2864 = vmatpush1.xpose.msra.mxu0 0.0
      %2865 = vmatprep.subr.mxu0 0.0
      %2866 = vmatpush1.xpose.msra.mxu0 0.0
      %2867 = vmatprep.subr.mxu0 0.0
      %2868 = vmatpush1.xpose.msra.mxu0 0.0
      %2869 = vmatprep.subr.mxu0 0.0
      %2870 = vmatpush1.xpose.msra.mxu0 0.0
      %2871 = vmatprep.subr.mxu0 0.0
      %2872 = vmatpush1.xpose.msra.mxu0 0.0
      %2873 = vmatprep.subr.mxu0 0.0
      %2874 = vmatpush1.xpose.msra.mxu0 0.0
      %2875 = vmatprep.subr.mxu0 0.0
      %2876 = vmatpush1.xpose.msra.mxu0 0.0
      %2877 = vmatprep.subr.mxu0 0.0
      %2878 = vmatpush1.xpose.msra.mxu0 0.0
      %2879 = vmatprep.subr.mxu0 0.0
      %2880 = vmatpush1.xpose.msra.mxu0 0.0
      %2881 = vmatprep.subr.mxu0 0.0
      %2882 = vmatpush1.xpose.msra.mxu0 0.0
      %2883 = vmatprep.subr.mxu0 0.0
      %2884 = vmatpush1.xpose.msra.mxu0 0.0
      %2885 = vmatprep.subr.mxu0 0.0
      %2886 = vmatpush1.xpose.msra.mxu0 0.0
      %2887 = vmatprep.subr.mxu0 0.0
      %2888 = vmatpush1.xpose.msra.mxu0 0.0
      %2889 = vmatprep.subr.mxu0 0.0
      %2890 = vmatpush1.xpose.msra.mxu0 0.0
      %2891 = vmatprep.subr.mxu0 0.0
      %2892 = vmatpush1.xpose.msra.mxu0 0.0
      %2893 = vmatprep.subr.mxu0 0.0
      %2894 = vmatpush1.xpose.msra.mxu0 0.0
      %2895 = vmatprep.subr.mxu0 0.0
      %2896 = vmatpush1.xpose.msra.mxu0 0.0
      %2897 = vmatprep.subr.mxu0 0.0
      %2898 = vmatpush1.xpose.msra.mxu0 0.0
      %2899 = vmatprep.subr.mxu0 0.0
      %2900 = vmatpush1.xpose.msra.mxu0 0.0
      %2901 = vmatprep.subr.mxu0 0.0
      %2902 = vmatpush1.xpose.msra.mxu0 0.0
      %2903 = vmatprep.subr.mxu0 0.0
      %2904 = vmatpush1.xpose.msra.mxu0 0.0
      %2905 = vmatprep.subr.mxu0 0.0
      %2906 = vmatpush1.xpose.msra.mxu0 0.0
      %2907 = vmatprep.subr.mxu0 0.0
      %2908 = vmatpush1.xpose.msra.mxu0 0.0
      %2909 = vmatprep.subr.mxu0 0.0
      %2910 = vmatpush1.xpose.msra.mxu0 0.0
      %2911 = vmatprep.subr.mxu0 0.0
      %2912 = vmatpush1.xpose.msra.mxu0 0.0
      %2913 = vmatprep.subr.mxu0 0.0
      %2914 = vmatpush1.xpose.msra.mxu0 0.0
      %2915 = vmatprep.subr.mxu0 0.0
      %2916 = vmatpush1.xpose.msra.mxu0 0.0
      %2917 = vmatprep.mubr.f32.mxu0 0.0
      %2918 = vmatmul.mubr.f32.gmra.mrb[0].mxu0 %v2849
      %v2919 = vpop.f32.mrb[0].mxu0
      %v2920 = vadd.f32 %v2364, %v2919
      %v2921 = vpop.f32.mrb[0].mxu0
      %2922 = vdwg.mxu0
      %v2923 = vsel %vm971, %v2583, 0
      %v2925 = vsel %vm971, %v2598, 0
      %2927 = vmatprep.subr.mxu0 0.0
      %2928 = vmatpush1.xpose.msra.mxu0 %v2925
      %2929 = vmatprep.subr.mxu0 0.0
      %2930 = vmatpush1.xpose.msra.mxu0 0.0
      %2931 = vmatprep.subr.mxu0 0.0
      %2932 = vmatpush1.xpose.msra.mxu0 0.0
      %2933 = vmatprep.subr.mxu0 0.0
      %2934 = vmatpush1.xpose.msra.mxu0 0.0
      %2935 = vmatprep.subr.mxu0 0.0
      %2936 = vmatpush1.xpose.msra.mxu0 0.0
      %2937 = vmatprep.subr.mxu0 0.0
      %2938 = vmatpush1.xpose.msra.mxu0 0.0
      %2939 = vmatprep.subr.mxu0 0.0
      %2940 = vmatpush1.xpose.msra.mxu0 0.0
      %2941 = vmatprep.subr.mxu0 0.0
      %2942 = vmatpush1.xpose.msra.mxu0 0.0
      %2943 = vmatprep.subr.mxu0 0.0
      %2944 = vmatpush1.xpose.msra.mxu0 0.0
      %2945 = vmatprep.subr.mxu0 0.0
      %2946 = vmatpush1.xpose.msra.mxu0 0.0
      %2947 = vmatprep.subr.mxu0 0.0
      %2948 = vmatpush1.xpose.msra.mxu0 0.0
      %2949 = vmatprep.subr.mxu0 0.0
      %2950 = vmatpush1.xpose.msra.mxu0 0.0
      %2951 = vmatprep.subr.mxu0 0.0
      %2952 = vmatpush1.xpose.msra.mxu0 0.0
      %2953 = vmatprep.subr.mxu0 0.0
      %2954 = vmatpush1.xpose.msra.mxu0 0.0
      %2955 = vmatprep.subr.mxu0 0.0
      %2956 = vmatpush1.xpose.msra.mxu0 0.0
      %2957 = vmatprep.subr.mxu0 0.0
      %2958 = vmatpush1.xpose.msra.mxu0 0.0
      %2959 = vmatprep.subr.mxu0 0.0
      %2960 = vmatpush1.xpose.msra.mxu0 0.0
      %2961 = vmatprep.subr.mxu0 0.0
      %2962 = vmatpush1.xpose.msra.mxu0 0.0
      %2963 = vmatprep.subr.mxu0 0.0
      %2964 = vmatpush1.xpose.msra.mxu0 0.0
      %2965 = vmatprep.subr.mxu0 0.0
      %2966 = vmatpush1.xpose.msra.mxu0 0.0
      %2967 = vmatprep.subr.mxu0 0.0
      %2968 = vmatpush1.xpose.msra.mxu0 0.0
      %2969 = vmatprep.subr.mxu0 0.0
      %2970 = vmatpush1.xpose.msra.mxu0 0.0
      %2971 = vmatprep.subr.mxu0 0.0
      %2972 = vmatpush1.xpose.msra.mxu0 0.0
      %2973 = vmatprep.subr.mxu0 0.0
      %2974 = vmatpush1.xpose.msra.mxu0 0.0
      %2975 = vmatprep.subr.mxu0 0.0
      %2976 = vmatpush1.xpose.msra.mxu0 0.0
      %2977 = vmatprep.subr.mxu0 0.0
      %2978 = vmatpush1.xpose.msra.mxu0 0.0
      %2979 = vmatprep.subr.mxu0 0.0
      %2980 = vmatpush1.xpose.msra.mxu0 0.0
      %2981 = vmatprep.subr.mxu0 0.0
      %2982 = vmatpush1.xpose.msra.mxu0 0.0
      %2983 = vmatprep.subr.mxu0 0.0
      %2984 = vmatpush1.xpose.msra.mxu0 0.0
      %2985 = vmatprep.subr.mxu0 0.0
      %2986 = vmatpush1.xpose.msra.mxu0 0.0
      %2987 = vmatprep.subr.mxu0 0.0
      %2988 = vmatpush1.xpose.msra.mxu0 0.0
      %2989 = vmatprep.subr.mxu0 0.0
      %2990 = vmatpush1.xpose.msra.mxu0 0.0
      %2991 = vmatprep.mubr.f32.mxu0 0.0
      %2992 = vmatmul.mubr.f32.gmra.mrb[0].mxu0 %v2923
      %v2993 = vpop.f32.mrb[0].mxu0
      %v2994 = vadd.f32 %v2364, %v2993
      %v2995 = vpop.f32.mrb[0].mxu0
      %2996 = vdwg.mxu0
      %v2997 = vsel %vm971, %v2585, 0
      %v2999 = vsel %vm971, %v2600, 0
      %3001 = vmatprep.subr.mxu0 0.0
      %3002 = vmatpush1.xpose.msra.mxu0 %v2999
      %3003 = vmatprep.subr.mxu0 0.0
      %3004 = vmatpush1.xpose.msra.mxu0 0.0
      %3005 = vmatprep.subr.mxu0 0.0
      %3006 = vmatpush1.xpose.msra.mxu0 0.0
      %3007 = vmatprep.subr.mxu0 0.0
      %3008 = vmatpush1.xpose.msra.mxu0 0.0
      %3009 = vmatprep.subr.mxu0 0.0
      %3010 = vmatpush1.xpose.msra.mxu0 0.0
      %3011 = vmatprep.subr.mxu0 0.0
      %3012 = vmatpush1.xpose.msra.mxu0 0.0
      %3013 = vmatprep.subr.mxu0 0.0
      %3014 = vmatpush1.xpose.msra.mxu0 0.0
      %3015 = vmatprep.subr.mxu0 0.0
      %3016 = vmatpush1.xpose.msra.mxu0 0.0
      %3017 = vmatprep.subr.mxu0 0.0
      %3018 = vmatpush1.xpose.msra.mxu0 0.0
      %3019 = vmatprep.subr.mxu0 0.0
      %3020 = vmatpush1.xpose.msra.mxu0 0.0
      %3021 = vmatprep.subr.mxu0 0.0
      %3022 = vmatpush1.xpose.msra.mxu0 0.0
      %3023 = vmatprep.subr.mxu0 0.0
      %3024 = vmatpush1.xpose.msra.mxu0 0.0
      %3025 = vmatprep.subr.mxu0 0.0
      %3026 = vmatpush1.xpose.msra.mxu0 0.0
      %3027 = vmatprep.subr.mxu0 0.0
      %3028 = vmatpush1.xpose.msra.mxu0 0.0
      %3029 = vmatprep.subr.mxu0 0.0
      %3030 = vmatpush1.xpose.msra.mxu0 0.0
      %3031 = vmatprep.subr.mxu0 0.0
      %3032 = vmatpush1.xpose.msra.mxu0 0.0
      %3033 = vmatprep.subr.mxu0 0.0
      %3034 = vmatpush1.xpose.msra.mxu0 0.0
      %3035 = vmatprep.subr.mxu0 0.0
      %3036 = vmatpush1.xpose.msra.mxu0 0.0
      %3037 = vmatprep.subr.mxu0 0.0
      %3038 = vmatpush1.xpose.msra.mxu0 0.0
      %3039 = vmatprep.subr.mxu0 0.0
      %3040 = vmatpush1.xpose.msra.mxu0 0.0
      %3041 = vmatprep.subr.mxu0 0.0
      %3042 = vmatpush1.xpose.msra.mxu0 0.0
      %3043 = vmatprep.subr.mxu0 0.0
      %3044 = vmatpush1.xpose.msra.mxu0 0.0
      %3045 = vmatprep.subr.mxu0 0.0
      %3046 = vmatpush1.xpose.msra.mxu0 0.0
      %3047 = vmatprep.subr.mxu0 0.0
      %3048 = vmatpush1.xpose.msra.mxu0 0.0
      %3049 = vmatprep.subr.mxu0 0.0
      %3050 = vmatpush1.xpose.msra.mxu0 0.0
      %3051 = vmatprep.subr.mxu0 0.0
      %3052 = vmatpush1.xpose.msra.mxu0 0.0
      %3053 = vmatprep.subr.mxu0 0.0
      %3054 = vmatpush1.xpose.msra.mxu0 0.0
      %3055 = vmatprep.subr.mxu0 0.0
      %3056 = vmatpush1.xpose.msra.mxu0 0.0
      %3057 = vmatprep.subr.mxu0 0.0
      %3058 = vmatpush1.xpose.msra.mxu0 0.0
      %3059 = vmatprep.subr.mxu0 0.0
      %3060 = vmatpush1.xpose.msra.mxu0 0.0
      %3061 = vmatprep.subr.mxu0 0.0
      %3062 = vmatpush1.xpose.msra.mxu0 0.0
      %3063 = vmatprep.subr.mxu0 0.0
      %3064 = vmatpush1.xpose.msra.mxu0 0.0
      %3065 = vmatprep.mubr.f32.mxu0 0.0
      %3066 = vmatmul.mubr.f32.gmra.mrb[0].mxu0 %v2997
      %v3067 = vpop.f32.mrb[0].mxu0
      %v3068 = vadd.f32 %v2364, %v3067
      %v3069 = vpop.f32.mrb[0].mxu0
      %3070 = vdwg.mxu0
      %v3071 = vsel %vm971, %v2587, 0
      %v3073 = vsel %vm971, %v2602, 0
      %3075 = vmatprep.subr.mxu0 0.0
      %3076 = vmatpush1.xpose.msra.mxu0 %v3073
      %3077 = vmatprep.subr.mxu0 0.0
      %3078 = vmatpush1.xpose.msra.mxu0 0.0
      %3079 = vmatprep.subr.mxu0 0.0
      %3080 = vmatpush1.xpose.msra.mxu0 0.0
      %3081 = vmatprep.subr.mxu0 0.0
      %3082 = vmatpush1.xpose.msra.mxu0 0.0
      %3083 = vmatprep.subr.mxu0 0.0
      %3084 = vmatpush1.xpose.msra.mxu0 0.0
      %3085 = vmatprep.subr.mxu0 0.0
      %3086 = vmatpush1.xpose.msra.mxu0 0.0
      %3087 = vmatprep.subr.mxu0 0.0
      %3088 = vmatpush1.xpose.msra.mxu0 0.0
      %3089 = vmatprep.subr.mxu0 0.0
      %3090 = vmatpush1.xpose.msra.mxu0 0.0
      %3091 = vmatprep.subr.mxu0 0.0
      %3092 = vmatpush1.xpose.msra.mxu0 0.0
      %3093 = vmatprep.subr.mxu0 0.0
      %3094 = vmatpush1.xpose.msra.mxu0 0.0
      %3095 = vmatprep.subr.mxu0 0.0
      %3096 = vmatpush1.xpose.msra.mxu0 0.0
      %3097 = vmatprep.subr.mxu0 0.0
      %3098 = vmatpush1.xpose.msra.mxu0 0.0
      %3099 = vmatprep.subr.mxu0 0.0
      %3100 = vmatpush1.xpose.msra.mxu0 0.0
      %3101 = vmatprep.subr.mxu0 0.0
      %3102 = vmatpush1.xpose.msra.mxu0 0.0
      %3103 = vmatprep.subr.mxu0 0.0
      %3104 = vmatpush1.xpose.msra.mxu0 0.0
      %3105 = vmatprep.subr.mxu0 0.0
      %3106 = vmatpush1.xpose.msra.mxu0 0.0
      %3107 = vmatprep.subr.mxu0 0.0
      %3108 = vmatpush1.xpose.msra.mxu0 0.0
      %3109 = vmatprep.subr.mxu0 0.0
      %3110 = vmatpush1.xpose.msra.mxu0 0.0
      %3111 = vmatprep.subr.mxu0 0.0
      %3112 = vmatpush1.xpose.msra.mxu0 0.0
      %3113 = vmatprep.subr.mxu0 0.0
      %3114 = vmatpush1.xpose.msra.mxu0 0.0
      %3115 = vmatprep.subr.mxu0 0.0
      %3116 = vmatpush1.xpose.msra.mxu0 0.0
      %3117 = vmatprep.subr.mxu0 0.0
      %3118 = vmatpush1.xpose.msra.mxu0 0.0
      %3119 = vmatprep.subr.mxu0 0.0
      %3120 = vmatpush1.xpose.msra.mxu0 0.0
      %3121 = vmatprep.subr.mxu0 0.0
      %3122 = vmatpush1.xpose.msra.mxu0 0.0
      %3123 = vmatprep.subr.mxu0 0.0
      %3124 = vmatpush1.xpose.msra.mxu0 0.0
      %3125 = vmatprep.subr.mxu0 0.0
      %3126 = vmatpush1.xpose.msra.mxu0 0.0
      %3127 = vmatprep.subr.mxu0 0.0
      %3128 = vmatpush1.xpose.msra.mxu0 0.0
      %3129 = vmatprep.subr.mxu0 0.0
      %3130 = vmatpush1.xpose.msra.mxu0 0.0
      %3131 = vmatprep.subr.mxu0 0.0
      %3132 = vmatpush1.xpose.msra.mxu0 0.0
      %3133 = vmatprep.subr.mxu0 0.0
      %3134 = vmatpush1.xpose.msra.mxu0 0.0
      %3135 = vmatprep.subr.mxu0 0.0
      %3136 = vmatpush1.xpose.msra.mxu0 0.0
      %3137 = vmatprep.subr.mxu0 0.0
      %3138 = vmatpush1.xpose.msra.mxu0 0.0
      %3139 = vmatprep.mubr.f32.mxu0 0.0
      %3140 = vmatmul.mubr.f32.gmra.mrb[0].mxu0 %v3071
      %v3141 = vpop.f32.mrb[0].mxu0
      %v3142 = vadd.f32 %v2364, %v3141
      %v3143 = vpop.f32.mrb[0].mxu0
      %3144 = vdwg.mxu0
      %v3145 = vsel %vm971, %v2589, 0
      %v3147 = vsel %vm971, %v2604, 0
      %3149 = vmatprep.subr.mxu0 0.0
      %3150 = vmatpush1.xpose.msra.mxu0 %v3147
      %3151 = vmatprep.subr.mxu0 0.0
      %3152 = vmatpush1.xpose.msra.mxu0 0.0
      %3153 = vmatprep.subr.mxu0 0.0
      %3154 = vmatpush1.xpose.msra.mxu0 0.0
      %3155 = vmatprep.subr.mxu0 0.0
      %3156 = vmatpush1.xpose.msra.mxu0 0.0
      %3157 = vmatprep.subr.mxu0 0.0
      %3158 = vmatpush1.xpose.msra.mxu0 0.0
      %3159 = vmatprep.subr.mxu0 0.0
      %3160 = vmatpush1.xpose.msra.mxu0 0.0
      %3161 = vmatprep.subr.mxu0 0.0
      %3162 = vmatpush1.xpose.msra.mxu0 0.0
      %3163 = vmatprep.subr.mxu0 0.0
      %3164 = vmatpush1.xpose.msra.mxu0 0.0
      %3165 = vmatprep.subr.mxu0 0.0
      %3166 = vmatpush1.xpose.msra.mxu0 0.0
      %3167 = vmatprep.subr.mxu0 0.0
      %3168 = vmatpush1.xpose.msra.mxu0 0.0
      %3169 = vmatprep.subr.mxu0 0.0
      %3170 = vmatpush1.xpose.msra.mxu0 0.0
      %3171 = vmatprep.subr.mxu0 0.0
      %3172 = vmatpush1.xpose.msra.mxu0 0.0
      %3173 = vmatprep.subr.mxu0 0.0
      %3174 = vmatpush1.xpose.msra.mxu0 0.0
      %3175 = vmatprep.subr.mxu0 0.0
      %3176 = vmatpush1.xpose.msra.mxu0 0.0
      %3177 = vmatprep.subr.mxu0 0.0
      %3178 = vmatpush1.xpose.msra.mxu0 0.0
      %3179 = vmatprep.subr.mxu0 0.0
      %3180 = vmatpush1.xpose.msra.mxu0 0.0
      %3181 = vmatprep.subr.mxu0 0.0
      %3182 = vmatpush1.xpose.msra.mxu0 0.0
      %3183 = vmatprep.subr.mxu0 0.0
      %3184 = vmatpush1.xpose.msra.mxu0 0.0
      %3185 = vmatprep.subr.mxu0 0.0
      %3186 = vmatpush1.xpose.msra.mxu0 0.0
      %3187 = vmatprep.subr.mxu0 0.0
      %3188 = vmatpush1.xpose.msra.mxu0 0.0
      %3189 = vmatprep.subr.mxu0 0.0
      %3190 = vmatpush1.xpose.msra.mxu0 0.0
      %3191 = vmatprep.subr.mxu0 0.0
      %3192 = vmatpush1.xpose.msra.mxu0 0.0
      %3193 = vmatprep.subr.mxu0 0.0
      %3194 = vmatpush1.xpose.msra.mxu0 0.0
      %3195 = vmatprep.subr.mxu0 0.0
      %3196 = vmatpush1.xpose.msra.mxu0 0.0
      %3197 = vmatprep.subr.mxu0 0.0
      %3198 = vmatpush1.xpose.msra.mxu0 0.0
      %3199 = vmatprep.subr.mxu0 0.0
      %3200 = vmatpush1.xpose.msra.mxu0 0.0
      %3201 = vmatprep.subr.mxu0 0.0
      %3202 = vmatpush1.xpose.msra.mxu0 0.0
      %3203 = vmatprep.subr.mxu0 0.0
      %3204 = vmatpush1.xpose.msra.mxu0 0.0
      %3205 = vmatprep.subr.mxu0 0.0
      %3206 = vmatpush1.xpose.msra.mxu0 0.0
      %3207 = vmatprep.subr.mxu0 0.0
      %3208 = vmatpush1.xpose.msra.mxu0 0.0
      %3209 = vmatprep.subr.mxu0 0.0
      %3210 = vmatpush1.xpose.msra.mxu0 0.0
      %3211 = vmatprep.subr.mxu0 0.0
      %3212 = vmatpush1.xpose.msra.mxu0 0.0
      %3213 = vmatprep.mubr.f32.mxu0 0.0
      %3214 = vmatmul.mubr.f32.gmra.mrb[0].mxu0 %v3145
      %v3215 = vpop.f32.mrb[0].mxu0
      %v3216 = vadd.f32 %v2364, %v3215
      %v3217 = vpop.f32.mrb[0].mxu0
      %3218 = vdwg.mxu0
      %v3219 = vsel %vm1564, %v2698, -inf
      %3220 = vmax.xlane.f32.xlu0 %v3219
      %v3221 = vpop.xlane.xlu0 %3220
      %v3222 = vsel %vm1564, %v2772, -inf
      %3223 = vmax.xlane.f32.xlu0 %v3222
      %v3224 = vpop.xlane.xlu0 %3223
      %v3225 = vsel %vm1564, %v2846, -inf
      %3226 = vmax.xlane.f32.xlu0 %v3225
      %v3227 = vpop.xlane.xlu0 %3226
      %v3228 = vsel %vm1564, %v2920, -inf
      %3229 = vmax.xlane.f32.xlu0 %v3228
      %v3230 = vpop.xlane.xlu0 %3229
      %v3231 = vsel %vm1564, %v2994, -inf
      %3232 = vmax.xlane.f32.xlu0 %v3231
      %v3233 = vpop.xlane.xlu0 %3232
      %v3234 = vsel %vm1564, %v3068, -inf
      %3235 = vmax.xlane.f32.xlu0 %v3234
      %v3236 = vpop.xlane.xlu0 %3235
      %v3237 = vsel %vm1564, %v3142, -inf
      %3238 = vmax.xlane.f32.xlu0 %v3237
      %v3239 = vpop.xlane.xlu0 %3238
      %v3240 = vsel %vm1564, %v3216, -inf
      %3241 = vmax.xlane.f32.xlu0 %v3240
      %v3242 = vpop.xlane.xlu0 %3241
      %v3243 = vsub.f32 %v2698, %v3221
      %v3244 = vsub.f32 %v2772, %v3224
      %v3245 = vsub.f32 %v2846, %v3227
      %v3246 = vsub.f32 %v2920, %v3230
      %v3247 = vsub.f32 %v2994, %v3233
      %v3248 = vsub.f32 %v3068, %v3236
      %v3249 = vsub.f32 %v3142, %v3239
      %v3250 = vsub.f32 %v3216, %v3242
      %v3251 = vmul.f32 %v3243, 1.442695
      %v3252 = vpow.pop %v3251
      %v3253 = vmul.f32 %v3244, 1.442695
      %v3254 = vpow.pop %v3253
      %v3255 = vmul.f32 %v3245, 1.442695
      %v3256 = vpow.pop %v3255
      %v3257 = vmul.f32 %v3246, 1.442695
      %v3258 = vpow.pop %v3257
      %v3259 = vmul.f32 %v3247, 1.442695
      %v3260 = vpow.pop %v3259
      %v3261 = vmul.f32 %v3248, 1.442695
      %v3262 = vpow.pop %v3261
      %v3263 = vmul.f32 %v3249, 1.442695
      %v3264 = vpow.pop %v3263
      %v3265 = vmul.f32 %v3250, 1.442695
      %v3266 = vpow.pop %v3265
      %v3267 = vsel %vm1564, %v3252, 0.0
      %3268 = vadd.xlane.f32.xlu0 %v3267
      %v3269 = vpop.xlane.xlu0 %3268
      %v3270 = vsel %vm1564, %v3254, 0.0
      %3271 = vadd.xlane.f32.xlu0 %v3270
      %v3272 = vpop.xlane.xlu0 %3271
      %v3273 = vsel %vm1564, %v3256, 0.0
      %3274 = vadd.xlane.f32.xlu0 %v3273
      %v3275 = vpop.xlane.xlu0 %3274
      %v3276 = vsel %vm1564, %v3258, 0.0
      %3277 = vadd.xlane.f32.xlu0 %v3276
      %v3278 = vpop.xlane.xlu0 %3277
      %v3279 = vsel %vm1564, %v3260, 0.0
      %3280 = vadd.xlane.f32.xlu0 %v3279
      %v3281 = vpop.xlane.xlu0 %3280
      %v3282 = vsel %vm1564, %v3262, 0.0
      %3283 = vadd.xlane.f32.xlu0 %v3282
      %v3284 = vpop.xlane.xlu0 %3283
      %v3285 = vsel %vm1564, %v3264, 0.0
      %3286 = vadd.xlane.f32.xlu0 %v3285
      %v3287 = vpop.xlane.xlu0 %3286
      %v3288 = vsel %vm1564, %v3266, 0.0
      %3289 = vadd.xlane.f32.xlu0 %v3288
      %v3290 = vpop.xlane.xlu0 %3289
      %v3291 = vrcp.pop %v3269
      %v3292 = vrcp.pop %v3272
      %v3293 = vrcp.pop %v3275
      %v3294 = vrcp.pop %v3278
      %v3295 = vrcp.pop %v3281
      %v3296 = vrcp.pop %v3284
      %v3297 = vrcp.pop %v3287
      %v3298 = vrcp.pop %v3290
      %v3299 = vmul.f32 %v3252, %v3291
      %v3300 = vmul.f32 %v3254, %v3292
      %v3301 = vmul.f32 %v3256, %v3293
      %v3302 = vmul.f32 %v3258, %v3294
      %v3303 = vmul.f32 %v3260, %v3295
      %v3304 = vmul.f32 %v3262, %v3296
      %v3305 = vmul.f32 %v3264, %v3297
      %v3306 = vmul.f32 %v3266, %v3298
      %v3308 = vsel %vm1564, %v3299, 0
      %3310 = vmatprep.subr.mxu0 0.0
      %3311 = vmatpush1.msra.mxu0 %v2572
      %3312 = vmatprep.subr.mxu0 0.0
      %3313 = vmatpush1.msra.mxu0 0.0
      %3314 = vmatprep.subr.mxu0 0.0
      %3315 = vmatpush1.msra.mxu0 0.0
      %3316 = vmatprep.subr.mxu0 0.0
      %3317 = vmatpush1.msra.mxu0 0.0
      %3318 = vmatprep.subr.mxu0 0.0
      %3319 = vmatpush1.msra.mxu0 0.0
      %3320 = vmatprep.subr.mxu0 0.0
      %3321 = vmatpush1.msra.mxu0 0.0
      %3322 = vmatprep.subr.mxu0 0.0
      %3323 = vmatpush1.msra.mxu0 0.0
      %3324 = vmatprep.subr.mxu0 0.0
      %3325 = vmatpush1.msra.mxu0 0.0
      %3326 = vmatprep.subr.mxu0 0.0
      %3327 = vmatpush1.msra.mxu0 0.0
      %3328 = vmatprep.subr.mxu0 0.0
      %3329 = vmatpush1.msra.mxu0 0.0
      %3330 = vmatprep.subr.mxu0 0.0
      %3331 = vmatpush1.msra.mxu0 0.0
      %3332 = vmatprep.subr.mxu0 0.0
      %3333 = vmatpush1.msra.mxu0 0.0
      %3334 = vmatprep.subr.mxu0 0.0
      %3335 = vmatpush1.msra.mxu0 0.0
      %3336 = vmatprep.subr.mxu0 0.0
      %3337 = vmatpush1.msra.mxu0 0.0
      %3338 = vmatprep.subr.mxu0 0.0
      %3339 = vmatpush1.msra.mxu0 0.0
      %3340 = vmatprep.subr.mxu0 0.0
      %3341 = vmatpush1.msra.mxu0 0.0
      %3342 = vmatprep.subr.mxu0 0.0
      %3343 = vmatpush1.msra.mxu0 0.0
      %3344 = vmatprep.subr.mxu0 0.0
      %3345 = vmatpush1.msra.mxu0 0.0
      %3346 = vmatprep.subr.mxu0 0.0
      %3347 = vmatpush1.msra.mxu0 0.0
      %3348 = vmatprep.subr.mxu0 0.0
      %3349 = vmatpush1.msra.mxu0 0.0
      %3350 = vmatprep.subr.mxu0 0.0
      %3351 = vmatpush1.msra.mxu0 0.0
      %3352 = vmatprep.subr.mxu0 0.0
      %3353 = vmatpush1.msra.mxu0 0.0
      %3354 = vmatprep.subr.mxu0 0.0
      %3355 = vmatpush1.msra.mxu0 0.0
      %3356 = vmatprep.subr.mxu0 0.0
      %3357 = vmatpush1.msra.mxu0 0.0
      %3358 = vmatprep.subr.mxu0 0.0
      %3359 = vmatpush1.msra.mxu0 0.0
      %3360 = vmatprep.subr.mxu0 0.0
      %3361 = vmatpush1.msra.mxu0 0.0
      %3362 = vmatprep.subr.mxu0 0.0
      %3363 = vmatpush1.msra.mxu0 0.0
      %3364 = vmatprep.subr.mxu0 0.0
      %3365 = vmatpush1.msra.mxu0 0.0
      %3366 = vmatprep.subr.mxu0 0.0
      %3367 = vmatpush1.msra.mxu0 0.0
      %3368 = vmatprep.subr.mxu0 0.0
      %3369 = vmatpush1.msra.mxu0 0.0
      %3370 = vmatprep.subr.mxu0 0.0
      %3371 = vmatpush1.msra.mxu0 0.0
      %3372 = vmatprep.subr.mxu0 0.0
      %3373 = vmatpush1.msra.mxu0 0.0
      %3374 = vmatprep.mubr.f32.mxu0 0.0
      %3375 = vmatmul.mubr.f32.gmra.mrb[0].mxu0 %v3308
      %v3376 = vpop.f32.mrb[0].mxu0
      %v3377 = vadd.f32 0.0, %v3376
      %v3378 = vpop.f32.mrb[0].mxu0
      %3379 = vdwg.mxu0
      %v3381 = vsel %vm1564, %v3300, 0
      %3383 = vmatprep.subr.mxu0 0.0
      %3384 = vmatpush1.msra.mxu0 %v2607
      %3385 = vmatprep.subr.mxu0 0.0
      %3386 = vmatpush1.msra.mxu0 0.0
      %3387 = vmatprep.subr.mxu0 0.0
      %3388 = vmatpush1.msra.mxu0 0.0
      %3389 = vmatprep.subr.mxu0 0.0
      %3390 = vmatpush1.msra.mxu0 0.0
      %3391 = vmatprep.subr.mxu0 0.0
      %3392 = vmatpush1.msra.mxu0 0.0
      %3393 = vmatprep.subr.mxu0 0.0
      %3394 = vmatpush1.msra.mxu0 0.0
      %3395 = vmatprep.subr.mxu0 0.0
      %3396 = vmatpush1.msra.mxu0 0.0
      %3397 = vmatprep.subr.mxu0 0.0
      %3398 = vmatpush1.msra.mxu0 0.0
      %3399 = vmatprep.subr.mxu0 0.0
      %3400 = vmatpush1.msra.mxu0 0.0
      %3401 = vmatprep.subr.mxu0 0.0
      %3402 = vmatpush1.msra.mxu0 0.0
      %3403 = vmatprep.subr.mxu0 0.0
      %3404 = vmatpush1.msra.mxu0 0.0
      %3405 = vmatprep.subr.mxu0 0.0
      %3406 = vmatpush1.msra.mxu0 0.0
      %3407 = vmatprep.subr.mxu0 0.0
      %3408 = vmatpush1.msra.mxu0 0.0
      %3409 = vmatprep.subr.mxu0 0.0
      %3410 = vmatpush1.msra.mxu0 0.0
      %3411 = vmatprep.subr.mxu0 0.0
      %3412 = vmatpush1.msra.mxu0 0.0
      %3413 = vmatprep.subr.mxu0 0.0
      %3414 = vmatpush1.msra.mxu0 0.0
      %3415 = vmatprep.subr.mxu0 0.0
      %3416 = vmatpush1.msra.mxu0 0.0
      %3417 = vmatprep.subr.mxu0 0.0
      %3418 = vmatpush1.msra.mxu0 0.0
      %3419 = vmatprep.subr.mxu0 0.0
      %3420 = vmatpush1.msra.mxu0 0.0
      %3421 = vmatprep.subr.mxu0 0.0
      %3422 = vmatpush1.msra.mxu0 0.0
      %3423 = vmatprep.subr.mxu0 0.0
      %3424 = vmatpush1.msra.mxu0 0.0
      %3425 = vmatprep.subr.mxu0 0.0
      %3426 = vmatpush1.msra.mxu0 0.0
      %3427 = vmatprep.subr.mxu0 0.0
      %3428 = vmatpush1.msra.mxu0 0.0
      %3429 = vmatprep.subr.mxu0 0.0
      %3430 = vmatpush1.msra.mxu0 0.0
      %3431 = vmatprep.subr.mxu0 0.0
      %3432 = vmatpush1.msra.mxu0 0.0
      %3433 = vmatprep.subr.mxu0 0.0
      %3434 = vmatpush1.msra.mxu0 0.0
      %3435 = vmatprep.subr.mxu0 0.0
      %3436 = vmatpush1.msra.mxu0 0.0
      %3437 = vmatprep.subr.mxu0 0.0
      %3438 = vmatpush1.msra.mxu0 0.0
      %3439 = vmatprep.subr.mxu0 0.0
      %3440 = vmatpush1.msra.mxu0 0.0
      %3441 = vmatprep.subr.mxu0 0.0
      %3442 = vmatpush1.msra.mxu0 0.0
      %3443 = vmatprep.subr.mxu0 0.0
      %3444 = vmatpush1.msra.mxu0 0.0
      %3445 = vmatprep.subr.mxu0 0.0
      %3446 = vmatpush1.msra.mxu0 0.0
      %3447 = vmatprep.mubr.f32.mxu0 0.0
      %3448 = vmatmul.mubr.f32.gmra.mrb[0].mxu0 %v3381
      %v3449 = vpop.f32.mrb[0].mxu0
      %v3450 = vadd.f32 0.0, %v3449
      %v3451 = vpop.f32.mrb[0].mxu0
      %3452 = vdwg.mxu0
      %v3454 = vsel %vm1564, %v3301, 0
      %3456 = vmatprep.subr.mxu0 0.0
      %3457 = vmatpush1.msra.mxu0 %v2610
      %3458 = vmatprep.subr.mxu0 0.0
      %3459 = vmatpush1.msra.mxu0 0.0
      %3460 = vmatprep.subr.mxu0 0.0
      %3461 = vmatpush1.msra.mxu0 0.0
      %3462 = vmatprep.subr.mxu0 0.0
      %3463 = vmatpush1.msra.mxu0 0.0
      %3464 = vmatprep.subr.mxu0 0.0
      %3465 = vmatpush1.msra.mxu0 0.0
      %3466 = vmatprep.subr.mxu0 0.0
      %3467 = vmatpush1.msra.mxu0 0.0
      %3468 = vmatprep.subr.mxu0 0.0
      %3469 = vmatpush1.msra.mxu0 0.0
      %3470 = vmatprep.subr.mxu0 0.0
      %3471 = vmatpush1.msra.mxu0 0.0
      %3472 = vmatprep.subr.mxu0 0.0
      %3473 = vmatpush1.msra.mxu0 0.0
      %3474 = vmatprep.subr.mxu0 0.0
      %3475 = vmatpush1.msra.mxu0 0.0
      %3476 = vmatprep.subr.mxu0 0.0
      %3477 = vmatpush1.msra.mxu0 0.0
      %3478 = vmatprep.subr.mxu0 0.0
      %3479 = vmatpush1.msra.mxu0 0.0
      %3480 = vmatprep.subr.mxu0 0.0
      %3481 = vmatpush1.msra.mxu0 0.0
      %3482 = vmatprep.subr.mxu0 0.0
      %3483 = vmatpush1.msra.mxu0 0.0
      %3484 = vmatprep.subr.mxu0 0.0
      %3485 = vmatpush1.msra.mxu0 0.0
      %3486 = vmatprep.subr.mxu0 0.0
      %3487 = vmatpush1.msra.mxu0 0.0
      %3488 = vmatprep.subr.mxu0 0.0
      %3489 = vmatpush1.msra.mxu0 0.0
      %3490 = vmatprep.subr.mxu0 0.0
      %3491 = vmatpush1.msra.mxu0 0.0
      %3492 = vmatprep.subr.mxu0 0.0
      %3493 = vmatpush1.msra.mxu0 0.0
      %3494 = vmatprep.subr.mxu0 0.0
      %3495 = vmatpush1.msra.mxu0 0.0
      %3496 = vmatprep.subr.mxu0 0.0
      %3497 = vmatpush1.msra.mxu0 0.0
      %3498 = vmatprep.subr.mxu0 0.0
      %3499 = vmatpush1.msra.mxu0 0.0
      %3500 = vmatprep.subr.mxu0 0.0
      %3501 = vmatpush1.msra.mxu0 0.0
      %3502 = vmatprep.subr.mxu0 0.0
      %3503 = vmatpush1.msra.mxu0 0.0
      %3504 = vmatprep.subr.mxu0 0.0
      %3505 = vmatpush1.msra.mxu0 0.0
      %3506 = vmatprep.subr.mxu0 0.0
      %3507 = vmatpush1.msra.mxu0 0.0
      %3508 = vmatprep.subr.mxu0 0.0
      %3509 = vmatpush1.msra.mxu0 0.0
      %3510 = vmatprep.subr.mxu0 0.0
      %3511 = vmatpush1.msra.mxu0 0.0
      %3512 = vmatprep.subr.mxu0 0.0
      %3513 = vmatpush1.msra.mxu0 0.0
      %3514 = vmatprep.subr.mxu0 0.0
      %3515 = vmatpush1.msra.mxu0 0.0
      %3516 = vmatprep.subr.mxu0 0.0
      %3517 = vmatpush1.msra.mxu0 0.0
      %3518 = vmatprep.subr.mxu0 0.0
      %3519 = vmatpush1.msra.mxu0 0.0
      %3520 = vmatprep.mubr.f32.mxu0 0.0
      %3521 = vmatmul.mubr.f32.gmra.mrb[0].mxu0 %v3454
      %v3522 = vpop.f32.mrb[0].mxu0
      %v3523 = vadd.f32 0.0, %v3522
      %v3524 = vpop.f32.mrb[0].mxu0
      %3525 = vdwg.mxu0
      %v3527 = vsel %vm1564, %v3302, 0
      %3529 = vmatprep.subr.mxu0 0.0
      %3530 = vmatpush1.msra.mxu0 %v2613
      %3531 = vmatprep.subr.mxu0 0.0
      %3532 = vmatpush1.msra.mxu0 0.0
      %3533 = vmatprep.subr.mxu0 0.0
      %3534 = vmatpush1.msra.mxu0 0.0
      %3535 = vmatprep.subr.mxu0 0.0
      %3536 = vmatpush1.msra.mxu0 0.0
      %3537 = vmatprep.subr.mxu0 0.0
      %3538 = vmatpush1.msra.mxu0 0.0
      %3539 = vmatprep.subr.mxu0 0.0
      %3540 = vmatpush1.msra.mxu0 0.0
      %3541 = vmatprep.subr.mxu0 0.0
      %3542 = vmatpush1.msra.mxu0 0.0
      %3543 = vmatprep.subr.mxu0 0.0
      %3544 = vmatpush1.msra.mxu0 0.0
      %3545 = vmatprep.subr.mxu0 0.0
      %3546 = vmatpush1.msra.mxu0 0.0
      %3547 = vmatprep.subr.mxu0 0.0
      %3548 = vmatpush1.msra.mxu0 0.0
      %3549 = vmatprep.subr.mxu0 0.0
      %3550 = vmatpush1.msra.mxu0 0.0
      %3551 = vmatprep.subr.mxu0 0.0
      %3552 = vmatpush1.msra.mxu0 0.0
      %3553 = vmatprep.subr.mxu0 0.0
      %3554 = vmatpush1.msra.mxu0 0.0
      %3555 = vmatprep.subr.mxu0 0.0
      %3556 = vmatpush1.msra.mxu0 0.0
      %3557 = vmatprep.subr.mxu0 0.0
      %3558 = vmatpush1.msra.mxu0 0.0
      %3559 = vmatprep.subr.mxu0 0.0
      %3560 = vmatpush1.msra.mxu0 0.0
      %3561 = vmatprep.subr.mxu0 0.0
      %3562 = vmatpush1.msra.mxu0 0.0
      %3563 = vmatprep.subr.mxu0 0.0
      %3564 = vmatpush1.msra.mxu0 0.0
      %3565 = vmatprep.subr.mxu0 0.0
      %3566 = vmatpush1.msra.mxu0 0.0
      %3567 = vmatprep.subr.mxu0 0.0
      %3568 = vmatpush1.msra.mxu0 0.0
      %3569 = vmatprep.subr.mxu0 0.0
      %3570 = vmatpush1.msra.mxu0 0.0
      %3571 = vmatprep.subr.mxu0 0.0
      %3572 = vmatpush1.msra.mxu0 0.0
      %3573 = vmatprep.subr.mxu0 0.0
      %3574 = vmatpush1.msra.mxu0 0.0
      %3575 = vmatprep.subr.mxu0 0.0
      %3576 = vmatpush1.msra.mxu0 0.0
      %3577 = vmatprep.subr.mxu0 0.0
      %3578 = vmatpush1.msra.mxu0 0.0
      %3579 = vmatprep.subr.mxu0 0.0
      %3580 = vmatpush1.msra.mxu0 0.0
      %3581 = vmatprep.subr.mxu0 0.0
      %3582 = vmatpush1.msra.mxu0 0.0
      %3583 = vmatprep.subr.mxu0 0.0
      %3584 = vmatpush1.msra.mxu0 0.0
      %3585 = vmatprep.subr.mxu0 0.0
      %3586 = vmatpush1.msra.mxu0 0.0
      %3587 = vmatprep.subr.mxu0 0.0
      %3588 = vmatpush1.msra.mxu0 0.0
      %3589 = vmatprep.subr.mxu0 0.0
      %3590 = vmatpush1.msra.mxu0 0.0
      %3591 = vmatprep.subr.mxu0 0.0
      %3592 = vmatpush1.msra.mxu0 0.0
      %3593 = vmatprep.mubr.f32.mxu0 0.0
      %3594 = vmatmul.mubr.f32.gmra.mrb[0].mxu0 %v3527
      %v3595 = vpop.f32.mrb[0].mxu0
      %v3596 = vadd.f32 0.0, %v3595
      %v3597 = vpop.f32.mrb[0].mxu0
      %3598 = vdwg.mxu0
      %v3600 = vsel %vm1564, %v3303, 0
      %3602 = vmatprep.subr.mxu0 0.0
      %3603 = vmatpush1.msra.mxu0 %v2616
      %3604 = vmatprep.subr.mxu0 0.0
      %3605 = vmatpush1.msra.mxu0 0.0
      %3606 = vmatprep.subr.mxu0 0.0
      %3607 = vmatpush1.msra.mxu0 0.0
      %3608 = vmatprep.subr.mxu0 0.0
      %3609 = vmatpush1.msra.mxu0 0.0
      %3610 = vmatprep.subr.mxu0 0.0
      %3611 = vmatpush1.msra.mxu0 0.0
      %3612 = vmatprep.subr.mxu0 0.0
      %3613 = vmatpush1.msra.mxu0 0.0
      %3614 = vmatprep.subr.mxu0 0.0
      %3615 = vmatpush1.msra.mxu0 0.0
      %3616 = vmatprep.subr.mxu0 0.0
      %3617 = vmatpush1.msra.mxu0 0.0
      %3618 = vmatprep.subr.mxu0 0.0
      %3619 = vmatpush1.msra.mxu0 0.0
      %3620 = vmatprep.subr.mxu0 0.0
      %3621 = vmatpush1.msra.mxu0 0.0
      %3622 = vmatprep.subr.mxu0 0.0
      %3623 = vmatpush1.msra.mxu0 0.0
      %3624 = vmatprep.subr.mxu0 0.0
      %3625 = vmatpush1.msra.mxu0 0.0
      %3626 = vmatprep.subr.mxu0 0.0
      %3627 = vmatpush1.msra.mxu0 0.0
      %3628 = vmatprep.subr.mxu0 0.0
      %3629 = vmatpush1.msra.mxu0 0.0
      %3630 = vmatprep.subr.mxu0 0.0
      %3631 = vmatpush1.msra.mxu0 0.0
      %3632 = vmatprep.subr.mxu0 0.0
      %3633 = vmatpush1.msra.mxu0 0.0
      %3634 = vmatprep.subr.mxu0 0.0
      %3635 = vmatpush1.msra.mxu0 0.0
      %3636 = vmatprep.subr.mxu0 0.0
      %3637 = vmatpush1.msra.mxu0 0.0
      %3638 = vmatprep.subr.mxu0 0.0
      %3639 = vmatpush1.msra.mxu0 0.0
      %3640 = vmatprep.subr.mxu0 0.0
      %3641 = vmatpush1.msra.mxu0 0.0
      %3642 = vmatprep.subr.mxu0 0.0
      %3643 = vmatpush1.msra.mxu0 0.0
      %3644 = vmatprep.subr.mxu0 0.0
      %3645 = vmatpush1.msra.mxu0 0.0
      %3646 = vmatprep.subr.mxu0 0.0
      %3647 = vmatpush1.msra.mxu0 0.0
      %3648 = vmatprep.subr.mxu0 0.0
      %3649 = vmatpush1.msra.mxu0 0.0
      %3650 = vmatprep.subr.mxu0 0.0
      %3651 = vmatpush1.msra.mxu0 0.0
      %3652 = vmatprep.subr.mxu0 0.0
      %3653 = vmatpush1.msra.mxu0 0.0
      %3654 = vmatprep.subr.mxu0 0.0
      %3655 = vmatpush1.msra.mxu0 0.0
      %3656 = vmatprep.subr.mxu0 0.0
      %3657 = vmatpush1.msra.mxu0 0.0
      %3658 = vmatprep.subr.mxu0 0.0
      %3659 = vmatpush1.msra.mxu0 0.0
      %3660 = vmatprep.subr.mxu0 0.0
      %3661 = vmatpush1.msra.mxu0 0.0
      %3662 = vmatprep.subr.mxu0 0.0
      %3663 = vmatpush1.msra.mxu0 0.0
      %3664 = vmatprep.subr.mxu0 0.0
      %3665 = vmatpush1.msra.mxu0 0.0
      %3666 = vmatprep.mubr.f32.mxu0 0.0
      %3667 = vmatmul.mubr.f32.gmra.mrb[0].mxu0 %v3600
      %v3668 = vpop.f32.mrb[0].mxu0
      %v3669 = vadd.f32 0.0, %v3668
      %v3670 = vpop.f32.mrb[0].mxu0
      %3671 = vdwg.mxu0
      %v3673 = vsel %vm1564, %v3304, 0
      %3675 = vmatprep.subr.mxu0 0.0
      %3676 = vmatpush1.msra.mxu0 %v2619
      %3677 = vmatprep.subr.mxu0 0.0
      %3678 = vmatpush1.msra.mxu0 0.0
      %3679 = vmatprep.subr.mxu0 0.0
      %3680 = vmatpush1.msra.mxu0 0.0
      %3681 = vmatprep.subr.mxu0 0.0
      %3682 = vmatpush1.msra.mxu0 0.0
      %3683 = vmatprep.subr.mxu0 0.0
      %3684 = vmatpush1.msra.mxu0 0.0
      %3685 = vmatprep.subr.mxu0 0.0
      %3686 = vmatpush1.msra.mxu0 0.0
      %3687 = vmatprep.subr.mxu0 0.0
      %3688 = vmatpush1.msra.mxu0 0.0
      %3689 = vmatprep.subr.mxu0 0.0
      %3690 = vmatpush1.msra.mxu0 0.0
      %3691 = vmatprep.subr.mxu0 0.0
      %3692 = vmatpush1.msra.mxu0 0.0
      %3693 = vmatprep.subr.mxu0 0.0
      %3694 = vmatpush1.msra.mxu0 0.0
      %3695 = vmatprep.subr.mxu0 0.0
      %3696 = vmatpush1.msra.mxu0 0.0
      %3697 = vmatprep.subr.mxu0 0.0
      %3698 = vmatpush1.msra.mxu0 0.0
      %3699 = vmatprep.subr.mxu0 0.0
      %3700 = vmatpush1.msra.mxu0 0.0
      %3701 = vmatprep.subr.mxu0 0.0
      %3702 = vmatpush1.msra.mxu0 0.0
      %3703 = vmatprep.subr.mxu0 0.0
      %3704 = vmatpush1.msra.mxu0 0.0
      %3705 = vmatprep.subr.mxu0 0.0
      %3706 = vmatpush1.msra.mxu0 0.0
      %3707 = vmatprep.subr.mxu0 0.0
      %3708 = vmatpush1.msra.mxu0 0.0
      %3709 = vmatprep.subr.mxu0 0.0
      %3710 = vmatpush1.msra.mxu0 0.0
      %3711 = vmatprep.subr.mxu0 0.0
      %3712 = vmatpush1.msra.mxu0 0.0
      %3713 = vmatprep.subr.mxu0 0.0
      %3714 = vmatpush1.msra.mxu0 0.0
      %3715 = vmatprep.subr.mxu0 0.0
      %3716 = vmatpush1.msra.mxu0 0.0
      %3717 = vmatprep.subr.mxu0 0.0
      %3718 = vmatpush1.msra.mxu0 0.0
      %3719 = vmatprep.subr.mxu0 0.0
      %3720 = vmatpush1.msra.mxu0 0.0
      %3721 = vmatprep.subr.mxu0 0.0
      %3722 = vmatpush1.msra.mxu0 0.0
      %3723 = vmatprep.subr.mxu0 0.0
      %3724 = vmatpush1.msra.mxu0 0.0
      %3725 = vmatprep.subr.mxu0 0.0
      %3726 = vmatpush1.msra.mxu0 0.0
      %3727 = vmatprep.subr.mxu0 0.0
      %3728 = vmatpush1.msra.mxu0 0.0
      %3729 = vmatprep.subr.mxu0 0.0
      %3730 = vmatpush1.msra.mxu0 0.0
      %3731 = vmatprep.subr.mxu0 0.0
      %3732 = vmatpush1.msra.mxu0 0.0
      %3733 = vmatprep.subr.mxu0 0.0
      %3734 = vmatpush1.msra.mxu0 0.0
      %3735 = vmatprep.subr.mxu0 0.0
      %3736 = vmatpush1.msra.mxu0 0.0
      %3737 = vmatprep.subr.mxu0 0.0
      %3738 = vmatpush1.msra.mxu0 0.0
      %3739 = vmatprep.mubr.f32.mxu0 0.0
      %3740 = vmatmul.mubr.f32.gmra.mrb[0].mxu0 %v3673
      %v3741 = vpop.f32.mrb[0].mxu0
      %v3742 = vadd.f32 0.0, %v3741
      %v3743 = vpop.f32.mrb[0].mxu0
      %3744 = vdwg.mxu0
      %v3746 = vsel %vm1564, %v3305, 0
      %3748 = vmatprep.subr.mxu0 0.0
      %3749 = vmatpush1.msra.mxu0 %v2622
      %3750 = vmatprep.subr.mxu0 0.0
      %3751 = vmatpush1.msra.mxu0 0.0
      %3752 = vmatprep.subr.mxu0 0.0
      %3753 = vmatpush1.msra.mxu0 0.0
      %3754 = vmatprep.subr.mxu0 0.0
      %3755 = vmatpush1.msra.mxu0 0.0
      %3756 = vmatprep.subr.mxu0 0.0
      %3757 = vmatpush1.msra.mxu0 0.0
      %3758 = vmatprep.subr.mxu0 0.0
      %3759 = vmatpush1.msra.mxu0 0.0
      %3760 = vmatprep.subr.mxu0 0.0
      %3761 = vmatpush1.msra.mxu0 0.0
      %3762 = vmatprep.subr.mxu0 0.0
      %3763 = vmatpush1.msra.mxu0 0.0
      %3764 = vmatprep.subr.mxu0 0.0
      %3765 = vmatpush1.msra.mxu0 0.0
      %3766 = vmatprep.subr.mxu0 0.0
      %3767 = vmatpush1.msra.mxu0 0.0
      %3768 = vmatprep.subr.mxu0 0.0
      %3769 = vmatpush1.msra.mxu0 0.0
      %3770 = vmatprep.subr.mxu0 0.0
      %3771 = vmatpush1.msra.mxu0 0.0
      %3772 = vmatprep.subr.mxu0 0.0
      %3773 = vmatpush1.msra.mxu0 0.0
      %3774 = vmatprep.subr.mxu0 0.0
      %3775 = vmatpush1.msra.mxu0 0.0
      %3776 = vmatprep.subr.mxu0 0.0
      %3777 = vmatpush1.msra.mxu0 0.0
      %3778 = vmatprep.subr.mxu0 0.0
      %3779 = vmatpush1.msra.mxu0 0.0
      %3780 = vmatprep.subr.mxu0 0.0
      %3781 = vmatpush1.msra.mxu0 0.0
      %3782 = vmatprep.subr.mxu0 0.0
      %3783 = vmatpush1.msra.mxu0 0.0
      %3784 = vmatprep.subr.mxu0 0.0
      %3785 = vmatpush1.msra.mxu0 0.0
      %3786 = vmatprep.subr.mxu0 0.0
      %3787 = vmatpush1.msra.mxu0 0.0
      %3788 = vmatprep.subr.mxu0 0.0
      %3789 = vmatpush1.msra.mxu0 0.0
      %3790 = vmatprep.subr.mxu0 0.0
      %3791 = vmatpush1.msra.mxu0 0.0
      %3792 = vmatprep.subr.mxu0 0.0
      %3793 = vmatpush1.msra.mxu0 0.0
      %3794 = vmatprep.subr.mxu0 0.0
      %3795 = vmatpush1.msra.mxu0 0.0
      %3796 = vmatprep.subr.mxu0 0.0
      %3797 = vmatpush1.msra.mxu0 0.0
      %3798 = vmatprep.subr.mxu0 0.0
      %3799 = vmatpush1.msra.mxu0 0.0
      %3800 = vmatprep.subr.mxu0 0.0
      %3801 = vmatpush1.msra.mxu0 0.0
      %3802 = vmatprep.subr.mxu0 0.0
      %3803 = vmatpush1.msra.mxu0 0.0
      %3804 = vmatprep.subr.mxu0 0.0
      %3805 = vmatpush1.msra.mxu0 0.0
      %3806 = vmatprep.subr.mxu0 0.0
      %3807 = vmatpush1.msra.mxu0 0.0
      %3808 = vmatprep.subr.mxu0 0.0
      %3809 = vmatpush1.msra.mxu0 0.0
      %3810 = vmatprep.subr.mxu0 0.0
      %3811 = vmatpush1.msra.mxu0 0.0
      %3812 = vmatprep.mubr.f32.mxu0 0.0
      %3813 = vmatmul.mubr.f32.gmra.mrb[0].mxu0 %v3746
      %v3814 = vpop.f32.mrb[0].mxu0
      %v3815 = vadd.f32 0.0, %v3814
      %v3816 = vpop.f32.mrb[0].mxu0
      %3817 = vdwg.mxu0
      %v3819 = vsel %vm1564, %v3306, 0
      %3821 = vmatprep.subr.mxu0 0.0
      %3822 = vmatpush1.msra.mxu0 %v2625
      %3823 = vmatprep.subr.mxu0 0.0
      %3824 = vmatpush1.msra.mxu0 0.0
      %3825 = vmatprep.subr.mxu0 0.0
      %3826 = vmatpush1.msra.mxu0 0.0
      %3827 = vmatprep.subr.mxu0 0.0
      %3828 = vmatpush1.msra.mxu0 0.0
      %3829 = vmatprep.subr.mxu0 0.0
      %3830 = vmatpush1.msra.mxu0 0.0
      %3831 = vmatprep.subr.mxu0 0.0
      %3832 = vmatpush1.msra.mxu0 0.0
      %3833 = vmatprep.subr.mxu0 0.0
      %3834 = vmatpush1.msra.mxu0 0.0
      %3835 = vmatprep.subr.mxu0 0.0
      %3836 = vmatpush1.msra.mxu0 0.0
      %3837 = vmatprep.subr.mxu0 0.0
      %3838 = vmatpush1.msra.mxu0 0.0
      %3839 = vmatprep.subr.mxu0 0.0
      %3840 = vmatpush1.msra.mxu0 0.0
      %3841 = vmatprep.subr.mxu0 0.0
      %3842 = vmatpush1.msra.mxu0 0.0
      %3843 = vmatprep.subr.mxu0 0.0
      %3844 = vmatpush1.msra.mxu0 0.0
      %3845 = vmatprep.subr.mxu0 0.0
      %3846 = vmatpush1.msra.mxu0 0.0
      %3847 = vmatprep.subr.mxu0 0.0
      %3848 = vmatpush1.msra.mxu0 0.0
      %3849 = vmatprep.subr.mxu0 0.0
      %3850 = vmatpush1.msra.mxu0 0.0
      %3851 = vmatprep.subr.mxu0 0.0
      %3852 = vmatpush1.msra.mxu0 0.0
      %3853 = vmatprep.subr.mxu0 0.0
      %3854 = vmatpush1.msra.mxu0 0.0
      %3855 = vmatprep.subr.mxu0 0.0
      %3856 = vmatpush1.msra.mxu0 0.0
      %3857 = vmatprep.subr.mxu0 0.0
      %3858 = vmatpush1.msra.mxu0 0.0
      %3859 = vmatprep.subr.mxu0 0.0
      %3860 = vmatpush1.msra.mxu0 0.0
      %3861 = vmatprep.subr.mxu0 0.0
      %3862 = vmatpush1.msra.mxu0 0.0
      %3863 = vmatprep.subr.mxu0 0.0
      %3864 = vmatpush1.msra.mxu0 0.0
      %3865 = vmatprep.subr.mxu0 0.0
      %3866 = vmatpush1.msra.mxu0 0.0
      %3867 = vmatprep.subr.mxu0 0.0
      %3868 = vmatpush1.msra.mxu0 0.0
      %3869 = vmatprep.subr.mxu0 0.0
      %3870 = vmatpush1.msra.mxu0 0.0
      %3871 = vmatprep.subr.mxu0 0.0
      %3872 = vmatpush1.msra.mxu0 0.0
      %3873 = vmatprep.subr.mxu0 0.0
      %3874 = vmatpush1.msra.mxu0 0.0
      %3875 = vmatprep.subr.mxu0 0.0
      %3876 = vmatpush1.msra.mxu0 0.0
      %3877 = vmatprep.subr.mxu0 0.0
      %3878 = vmatpush1.msra.mxu0 0.0
      %3879 = vmatprep.subr.mxu0 0.0
      %3880 = vmatpush1.msra.mxu0 0.0
      %3881 = vmatprep.subr.mxu0 0.0
      %3882 = vmatpush1.msra.mxu0 0.0
      %3883 = vmatprep.subr.mxu0 0.0
      %3884 = vmatpush1.msra.mxu0 0.0
      %3885 = vmatprep.mubr.f32.mxu0 0.0
      %3886 = vmatmul.mubr.f32.gmra.mrb[0].mxu0 %v3819
      %v3887 = vpop.f32.mrb[0].mxu0
      %v3888 = vadd.f32 0.0, %v3887
      %v3889 = vpop.f32.mrb[0].mxu0
      %3890 = vdwg.mxu0
      %3891 = vst.msk [vmem:[#allocation2] sm:$0xff] %vm971, %v3377
      %3893 = vrot.lane.b32.xlu0 %v3450, 16
      %v3894 = vpop.permute.xlu0 %3893
      %3896 = vst.msk [vmem:[#allocation2] sm:$0xff] %vm2242, %v3894
      %3898 = vrot.lane.b32.xlu0 %v3523, 32
      %v3899 = vpop.permute.xlu0 %3898
      %3901 = vst.msk [vmem:[#allocation2] sm:$0xff] %vm2248, %v3899
      %3903 = vrot.lane.b32.xlu0 %v3596, 48
      %v3904 = vpop.permute.xlu0 %3903
      %3906 = vst.msk [vmem:[#allocation2] sm:$0xff] %vm2254, %v3904
      %3908 = vrot.lane.b32.xlu0 %v3669, 64
      %v3909 = vpop.permute.xlu0 %3908
      %3911 = vst.msk [vmem:[#allocation2] sm:$0xff] %vm2260, %v3909
      %3913 = vrot.lane.b32.xlu0 %v3742, 80
      %v3914 = vpop.permute.xlu0 %3913
      %3916 = vst.msk [vmem:[#allocation2] sm:$0xff] %vm2266, %v3914
      %3918 = vrot.lane.b32.xlu0 %v3815, 96
      %v3919 = vpop.permute.xlu0 %3918
      %3921 = vst.msk [vmem:[#allocation2] sm:$0xff] %vm2272, %v3919
      %3923 = vrot.lane.b32.xlu0 %v3888, 112
      %v3924 = vpop.permute.xlu0 %3923
      %3926 = vst.msk [vmem:[#allocation2] sm:$0xff] %vm2278, %v3924
      %v3927 = vld [vmem:[#allocation2] sm:$0xff]
      %3928 = vmatprep.subr.mxu0 0.0
      %3929 = vmatpush1.msra.mxu0 %v626
      %3930 = vmatprep.subr.mxu0 0.0
      %3931 = vmatpush1.msra.mxu0 %v627
      %3932 = vmatprep.subr.mxu0 0.0
      %3933 = vmatpush1.msra.mxu0 %v628
      %3934 = vmatprep.subr.mxu0 0.0
      %3935 = vmatpush1.msra.mxu0 %v629
      %3936 = vmatprep.subr.mxu0 0.0
      %3937 = vmatpush1.msra.mxu0 %v630
      %3938 = vmatprep.subr.mxu0 0.0
      %3939 = vmatpush1.msra.mxu0 %v631
      %3940 = vmatprep.subr.mxu0 0.0
      %3941 = vmatpush1.msra.mxu0 %v632
      %3942 = vmatprep.subr.mxu0 0.0
      %3943 = vmatpush1.msra.mxu0 %v633
      %3944 = vmatprep.subr.mxu0 0.0
      %3945 = vmatpush1.msra.mxu0 %v634
      %3946 = vmatprep.subr.mxu0 0.0
      %3947 = vmatpush1.msra.mxu0 %v635
      %3948 = vmatprep.subr.mxu0 0.0
      %3949 = vmatpush1.msra.mxu0 %v636
      %3950 = vmatprep.subr.mxu0 0.0
      %3951 = vmatpush1.msra.mxu0 %v637
      %3952 = vmatprep.subr.mxu0 0.0
      %3953 = vmatpush1.msra.mxu0 %v638
      %3954 = vmatprep.subr.mxu0 0.0
      %3955 = vmatpush1.msra.mxu0 %v639
      %3956 = vmatprep.subr.mxu0 0.0
      %3957 = vmatpush1.msra.mxu0 %v640
      %3958 = vmatprep.subr.mxu0 0.0
      %3959 = vmatpush1.msra.mxu0 %v641
      %3960 = vmatprep.subr.mxu0 0.0
      %3961 = vmatpush1.msra.mxu0 0.0
      %3962 = vmatprep.subr.mxu0 0.0
      %3963 = vmatpush1.msra.mxu0 0.0
      %3964 = vmatprep.subr.mxu0 0.0
      %3965 = vmatpush1.msra.mxu0 0.0
      %3966 = vmatprep.subr.mxu0 0.0
      %3967 = vmatpush1.msra.mxu0 0.0
      %3968 = vmatprep.subr.mxu0 0.0
      %3969 = vmatpush1.msra.mxu0 0.0
      %3970 = vmatprep.subr.mxu0 0.0
      %3971 = vmatpush1.msra.mxu0 0.0
      %3972 = vmatprep.subr.mxu0 0.0
      %3973 = vmatpush1.msra.mxu0 0.0
      %3974 = vmatprep.subr.mxu0 0.0
      %3975 = vmatpush1.msra.mxu0 0.0
      %3976 = vmatprep.subr.mxu0 0.0
      %3977 = vmatpush1.msra.mxu0 0.0
      %3978 = vmatprep.subr.mxu0 0.0
      %3979 = vmatpush1.msra.mxu0 0.0
      %3980 = vmatprep.subr.mxu0 0.0
      %3981 = vmatpush1.msra.mxu0 0.0
      %3982 = vmatprep.subr.mxu0 0.0
      %3983 = vmatpush1.msra.mxu0 0.0
      %3984 = vmatprep.subr.mxu0 0.0
      %3985 = vmatpush1.msra.mxu0 0.0
      %3986 = vmatprep.subr.mxu0 0.0
      %3987 = vmatpush1.msra.mxu0 0.0
      %3988 = vmatprep.subr.mxu0 0.0
      %3989 = vmatpush1.msra.mxu0 0.0
      %3990 = vmatprep.subr.mxu0 0.0
      %3991 = vmatpush1.msra.mxu0 0.0
      %3992 = vmatprep.mubr.f32.mxu0 0.0
      %3993 = vmatmul.mubr.f32.gmra.mrb[0].mxu0 %v3927
      %v3994 = vpop.f32.mrb[0].mxu0
      %v3995 = vadd.f32 0.0, %v3994
      %v3996 = vpop.f32.mrb[0].mxu0
      %3997 = vdwg.mxu0
      %v3998 = vadd.f32 %v2363, %v3995
      %3999 = vadd.xlane.f32.xlu0 %v3998
      %v4000 = vpop.xlane.xlu0 %3999
      %v4001 = vmul.f32 %v4000, %v2354
      %v4002 = vsub.f32 %v3998, %v4001
      %v4003 = vmul.f32 %v4002, %v4002
      %4004 = vadd.xlane.f32.xlu0 %v4003
      %v4005 = vpop.xlane.xlu0 %4004
      %v4006 = vmul.f32 %v4005, %v2354
      %v4007 = vadd.f32 %v4006, 1e-05
      %v4008 = vrsqrt.pop %v4007
      %v4009 = vmul.f32 %v4002, %v4008
      %4010 = vmatprep.subr.mxu0 %v643
      %4011 = vmatpush1.msra.mxu0 %v642
      %4012 = vmatprep.subr.mxu0 %v645
      %4013 = vmatpush1.msra.mxu0 %v644
      %4014 = vmatprep.subr.mxu0 %v647
      %4015 = vmatpush1.msra.mxu0 %v646
      %4016 = vmatprep.subr.mxu0 %v649
      %4017 = vmatpush1.msra.mxu0 %v648
      %4018 = vmatprep.subr.mxu0 %v651
      %4019 = vmatpush1.msra.mxu0 %v650
      %4020 = vmatprep.subr.mxu0 %v653
      %4021 = vmatpush1.msra.mxu0 %v652
      %4022 = vmatprep.subr.mxu0 %v655
      %4023 = vmatpush1.msra.mxu0 %v654
      %4024 = vmatprep.subr.mxu0 %v657
      %4025 = vmatpush1.msra.mxu0 %v656
      %4026 = vmatprep.subr.mxu0 %v659
      %4027 = vmatpush1.msra.mxu0 %v658
      %4028 = vmatprep.subr.mxu0 %v661
      %4029 = vmatpush1.msra.mxu0 %v660
      %4030 = vmatprep.subr.mxu0 %v663
      %4031 = vmatpush1.msra.mxu0 %v662
      %4032 = vmatprep.subr.mxu0 %v665
      %4033 = vmatpush1.msra.mxu0 %v664
      %4034 = vmatprep.subr.mxu0 %v667
      %4035 = vmatpush1.msra.mxu0 %v666
      %4036 = vmatprep.subr.mxu0 %v669
      %4037 = vmatpush1.msra.mxu0 %v668
      %4038 = vmatprep.subr.mxu0 %v671
      %4039 = vmatpush1.msra.mxu0 %v670
      %4040 = vmatprep.subr.mxu0 %v673
      %4041 = vmatpush1.msra.mxu0 %v672
      %4042 = vmatprep.subr.mxu0 0.0
      %4043 = vmatpush1.msra.mxu0 0.0
      %4044 = vmatprep.subr.mxu0 0.0
      %4045 = vmatpush1.msra.mxu0 0.0
      %4046 = vmatprep.subr.mxu0 0.0
      %4047 = vmatpush1.msra.mxu0 0.0
      %4048 = vmatprep.subr.mxu0 0.0
      %4049 = vmatpush1.msra.mxu0 0.0
      %4050 = vmatprep.subr.mxu0 0.0
      %4051 = vmatpush1.msra.mxu0 0.0
      %4052 = vmatprep.subr.mxu0 0.0
      %4053 = vmatpush1.msra.mxu0 0.0
      %4054 = vmatprep.subr.mxu0 0.0
      %4055 = vmatpush1.msra.mxu0 0.0
      %4056 = vmatprep.subr.mxu0 0.0
      %4057 = vmatpush1.msra.mxu0 0.0
      %4058 = vmatprep.subr.mxu0 0.0
      %4059 = vmatpush1.msra.mxu0 0.0
      %4060 = vmatprep.subr.mxu0 0.0
      %4061 = vmatpush1.msra.mxu0 0.0
      %4062 = vmatprep.subr.mxu0 0.0
      %4063 = vmatpush1.msra.mxu0 0.0
      %4064 = vmatprep.subr.mxu0 0.0
      %4065 = vmatpush1.msra.mxu0 0.0
      %4066 = vmatprep.subr.mxu0 0.0
      %4067 = vmatpush1.msra.mxu0 0.0
      %4068 = vmatprep.subr.mxu0 0.0
      %4069 = vmatpush1.msra.mxu0 0.0
      %4070 = vmatprep.subr.mxu0 0.0
      %4071 = vmatpush1.msra.mxu0 0.0
      %4072 = vmatprep.subr.mxu0 0.0
      %4073 = vmatpush1.msra.mxu0 0.0
      %4074 = vmatprep.mubr.f32.mxu0 0.0
      %4075 = vmatmul.mubr.f32.gmra.mrb[0].mxu0 %v4009
      %v4076 = vpop.f32.mrb[0].mxu0
      %v4077 = vadd.f32 0.0, %v4076
      %v4078 = vpop.f32.mrb[0].mxu0
      %v4079 = vadd.f32 0.0, %v4078
      %4080 = vdwg.mxu0
      %v4081 = vmax.f32 %v4077, 0.0
      %v4082 = vmax.f32 %v4079, 0.0
      %4083 = vmatprep.subr.mxu0 0.0
      %4084 = vmatpush1.msra.mxu0 %v674
      %4085 = vmatprep.subr.mxu0 0.0
      %4086 = vmatpush1.msra.mxu0 %v675
      %4087 = vmatprep.subr.mxu0 0.0
      %4088 = vmatpush1.msra.mxu0 %v676
      %4089 = vmatprep.subr.mxu0 0.0
      %4090 = vmatpush1.msra.mxu0 %v677
      %4091 = vmatprep.subr.mxu0 0.0
      %4092 = vmatpush1.msra.mxu0 %v678
      %4093 = vmatprep.subr.mxu0 0.0
      %4094 = vmatpush1.msra.mxu0 %v679
      %4095 = vmatprep.subr.mxu0 0.0
      %4096 = vmatpush1.msra.mxu0 %v680
      %4097 = vmatprep.subr.mxu0 0.0
      %4098 = vmatpush1.msra.mxu0 %v681
      %4099 = vmatprep.subr.mxu0 0.0
      %4100 = vmatpush1.msra.mxu0 %v682
      %4101 = vmatprep.subr.mxu0 0.0
      %4102 = vmatpush1.msra.mxu0 %v683
      %4103 = vmatprep.subr.mxu0 0.0
      %4104 = vmatpush1.msra.mxu0 %v684
      %4105 = vmatprep.subr.mxu0 0.0
      %4106 = vmatpush1.msra.mxu0 %v685
      %4107 = vmatprep.subr.mxu0 0.0
      %4108 = vmatpush1.msra.mxu0 %v686
      %4109 = vmatprep.subr.mxu0 0.0
      %4110 = vmatpush1.msra.mxu0 %v687
      %4111 = vmatprep.subr.mxu0 0.0
      %4112 = vmatpush1.msra.mxu0 %v688
      %4113 = vmatprep.subr.mxu0 0.0
      %4114 = vmatpush1.msra.mxu0 %v689
      %4115 = vmatprep.subr.mxu0 0.0
      %4116 = vmatpush1.msra.mxu0 %v690
      %4117 = vmatprep.subr.mxu0 0.0
      %4118 = vmatpush1.msra.mxu0 %v691
      %4119 = vmatprep.subr.mxu0 0.0
      %4120 = vmatpush1.msra.mxu0 %v692
      %4121 = vmatprep.subr.mxu0 0.0
      %4122 = vmatpush1.msra.mxu0 %v693
      %4123 = vmatprep.subr.mxu0 0.0
      %4124 = vmatpush1.msra.mxu0 %v694
      %4125 = vmatprep.subr.mxu0 0.0
      %4126 = vmatpush1.msra.mxu0 %v695
      %4127 = vmatprep.subr.mxu0 0.0
      %4128 = vmatpush1.msra.mxu0 %v696
      %4129 = vmatprep.subr.mxu0 0.0
      %4130 = vmatpush1.msra.mxu0 %v697
      %4131 = vmatprep.subr.mxu0 0.0
      %4132 = vmatpush1.msra.mxu0 %v698
      %4133 = vmatprep.subr.mxu0 0.0
      %4134 = vmatpush1.msra.mxu0 %v699
      %4135 = vmatprep.subr.mxu0 0.0
      %4136 = vmatpush1.msra.mxu0 %v700
      %4137 = vmatprep.subr.mxu0 0.0
      %4138 = vmatpush1.msra.mxu0 %v701
      %4139 = vmatprep.subr.mxu0 0.0
      %4140 = vmatpush1.msra.mxu0 %v702
      %4141 = vmatprep.subr.mxu0 0.0
      %4142 = vmatpush1.msra.mxu0 %v703
      %4143 = vmatprep.subr.mxu0 0.0
      %4144 = vmatpush1.msra.mxu0 %v704
      %4145 = vmatprep.subr.mxu0 0.0
      %4146 = vmatpush1.msra.mxu0 %v705
      %4147 = vmatprep.mubr.f32.mxu0 %v4082
      %4148 = vmatmul.mubr.f32.gmra.mrb[0].mxu0 %v4081
      %v4149 = vpop.f32.mrb[0].mxu0
      %v4150 = vadd.f32 0.0, %v4149
      %v4151 = vpop.f32.mrb[0].mxu0
      %4152 = vdwg.mxu0
      %v4153 = vadd.f32 %v4009, %v4150
      %4154 = vadd.xlane.f32.xlu0 %v4153
      %v4155 = vpop.xlane.xlu0 %4154
      %v4156 = vmul.f32 %v4155, %v2354
      %v4157 = vsub.f32 %v4153, %v4156
      %v4158 = vmul.f32 %v4157, %v4157
      %4159 = vadd.xlane.f32.xlu0 %v4158
      %v4160 = vpop.xlane.xlu0 %4159
      %v4161 = vmul.f32 %v4160, %v2354
      %v4162 = vadd.f32 %v4161, 1e-05
      %v4163 = vrsqrt.pop %v4162
      %v4164 = vmul.f32 %v4157, %v4163
      %4165 = vst [vmem:[%s513] sm:$0xff] %v4164
      %p4166 = scmp.lt.s32.totalorder %s25, 1
      %s4167 = scalar_select %p4166, %s25, 1
      %s4168 = smul.addr %s4167, 8
      %s4169 = scalar_lea.vmem %s14, %s4168
      // Predicated region
      $region77: #{transformer_forward.4} parent=75 // pred_check
        %p4170 = pneg %p357
      $region78: #{transformer_forward.4} parent=75 // pred_check_branch
        %4172 = sbr.rel (%p4170) target = $region80
      $region79: #{transformer_forward.4} parent=75 // pred_region
        _
      $region80: #{transformer_forward.4} parent=75 // pred_fallthru
        _
    $region76: #{transformer_forward.4} parent=5 // pred_fallthru
      _
    %p4173 = scmp.le.s32.totalorder 2, %s20
    // Predicated region
    $region81: #{transformer_forward.4} parent=5 // pred_check
      %p4174 = pneg %p4173
    $region82: #{transformer_forward.4} parent=5 // pred_check_branch
      %4176 = sbr.rel (%p4174) target = $region84
    $region83: #{transformer_forward.4} parent=5 // pred_region
      %s4177 = ssub.s32 %s20, 2
      // Predicated region
      $region85: #{transformer_forward.4} parent=83 // pred_check
        %p4178 = pneg %p363
      $region86: #{transformer_forward.4} parent=83 // pred_check_branch
        %4180 = sbr.rel (%p4178) target = $region88
      $region87: #{transformer_forward.4} parent=83 // pred_region
        %p4181 = scmp.lt.s32.totalorder %s26, 1
        %s4182 = scalar_select %p4181, %s26, 1
        %s4183 = smul.addr %s4182, 8
        %s4184 = scalar_lea.vmem %s14, %s4183
      $region88: #{transformer_forward.4} parent=83 // pred_fallthru
        _
    $region84: #{transformer_forward.4} parent=5 // pred_fallthru
      _
  $region6: #{transformer_forward.4} parent=0 // loop_footer
    %s24 = sadd.s32 1, %s20
  $region7: #{transformer_forward.4} parent=0 // loop_footer_branch
    %19 = sbr.rel target = $region3
  $region8: #{transformer_forward.4} parent=0 // loop_exit
    _

</llo_original>
